<compile_context>
chip_gen: v7x
topology: tpu7x:2x2x1
jax: 0.10.0
libtpu: 0.0.40
codegen_flags: <defaults>
</compile_context>

<pallas_src>
import math
from functools import partial

import jax
import jax.numpy as jnp
from jax.experimental import pallas as pl
from jax.experimental.pallas import tpu as pltpu

_BN_EPS = 1e-5   # eval-mode BatchNorm3d with weight=1, bias=0, rm=0, rv=1
_MAX_TM = 1024   # max rows (of N*Do*Ho*Wo) per block; fits VMEM on v5e/v6e/v7x


def _pick_tm(m):
    """Largest M-tile <= _MAX_TM that exactly divides m (falls back to m)."""
    if m <= _MAX_TM:
        return m
    for tm in (1024, 512, 256, 128, 64, 32, 16, 8):
        if m % tm == 0:
            return tm
    return m  # TODO(synk): pad M for awkward sizes instead of one big block.


# ----------------------------------------------------------------------------
# Pallas kernels: fused (M, K) @ (K, C) matmul + ReLU (+ skip add).
# ----------------------------------------------------------------------------
def _mm_kernel(x_ref, w_ref, o_ref, *, relu):
    acc = jnp.dot(x_ref[...], w_ref[...], preferred_element_type=jnp.float32)
    if relu:
        acc = jnp.maximum(acc, 0.0)
    o_ref[...] = acc.astype(o_ref.dtype)


def _mm_res_kernel(x_ref, w_ref, r_ref, o_ref, *, relu):
    acc = jnp.dot(x_ref[...], w_ref[...], preferred_element_type=jnp.float32)
    if relu:
        acc = jnp.maximum(acc, 0.0)
    # skip connection is added AFTER the ReLU (out = block + relu(bn(deconv)))
    acc = acc + r_ref[...].astype(jnp.float32)
    o_ref[...] = acc.astype(o_ref.dtype)


def _fused_matmul(x, w, *, relu, residual=None, out_dtype=jnp.bfloat16):
    """bf16 (M, K) @ (K, C) with f32 accumulation, fused ReLU / skip-add."""
    m, k = x.shape
    c = w.shape[-1]
    tm = _pick_tm(m)
    grid = (m // tm,)
    x = x.astype(jnp.bfloat16)
    w = w.astype(jnp.bfloat16)
    in_specs = [
        pl.BlockSpec((tm, k), lambda i: (i, 0)),
        pl.BlockSpec((k, c), lambda i: (0, 0)),    # all 27 weight taps resident
    ]
    args = [x, w]
    if residual is None:
        kernel = partial(_mm_kernel, relu=relu)
    else:
        kernel = partial(_mm_res_kernel, relu=relu)
        in_specs.append(pl.BlockSpec((tm, c), lambda i: (i, 0)))
        args.append(residual)
    return pl.pallas_call(
        kernel,
        out_shape=jax.ShapeDtypeStruct((m, c), out_dtype),
        grid=grid,
        in_specs=in_specs,
        out_specs=pl.BlockSpec((tm, c), lambda i: (i, 0)),
        compiler_params=pltpu.CompilerParams(
            dimension_semantics=("parallel",)),
    )(*args)


# ----------------------------------------------------------------------------
# Conv3d(k=3, padding=1, stride) as a K-packed im2col matmul.
# ----------------------------------------------------------------------------
def conv3d(x, w, *, stride=1, relu=True, out_dtype=jnp.bfloat16):
    """NDHWC conv, w: (3,3,3,Cin,Cout), bias-free (BN folded into w)."""
    n, d, h, wdt, cin = x.shape
    cout = w.shape[-1]
    do = (d - 1) // stride + 1
    ho = (h - 1) // stride + 1
    wo = (wdt - 1) // stride + 1
    xp = jnp.pad(x, ((0, 0), (1, 1), (1, 1), (1, 1), (0, 0)))
    taps = []
    for kd in range(3):
        for kh in range(3):
            for kw in range(3):
                v = xp[:, kd::stride, kh::stride, kw::stride, :]
                v = v[:, :do, :ho, :wo, :]
                taps.append(v.reshape(-1, cin))
    x_taps = jnp.concatenate(taps, axis=-1)            # (M, 27*Cin)
    w2 = w.reshape(27 * cin, cout)                     # row = tap*Cin + cin
    out = _fused_matmul(x_taps, w2, relu=relu, out_dtype=out_dtype)
    return out.reshape(n, do, ho, wo, cout)


# ----------------------------------------------------------------------------
# ConvTranspose3d(k=3, stride=2, padding=1, output_padding=1, bias=False)
# via sub-pixel (parity) decomposition, fused with ReLU + U-Net skip add.
# ----------------------------------------------------------------------------
# per-dim (output parity, input tap offset) -> ConvTranspose kernel index
_DECONV_KMAP = {(0, 0): 1, (0, 1): None, (1, 0): 2, (1, 1): 0}
_OFFSETS = [(a, b, c) for a in (0, 1) for b in (0, 1) for c in (0, 1)]


def conv_transpose3d(x, w, residual, *, relu=True, out_dtype=jnp.bfloat16):
    """w: (3,3,3,Cin,Cout) in direct ConvTranspose kernel-index order.
    (Real PyTorch weights (Cin,Cout,kD,kH,kW) would need a permute at load.)
    residual: (N, 2D, 2H, 2W, Cout), added after the ReLU."""
    n, d, h, wdt, cin = x.shape
    cout = w.shape[-1]

    # Input taps: the 8 unit offsets of the end-padded input -> (M, 8*Cin).
    xp = jnp.pad(x, ((0, 0), (0, 1), (0, 1), (0, 1), (0, 0)))
    taps = [xp[:, od:od + d, oh:oh + h, ow:ow + wdt, :].reshape(-1, cin)
            for od, oh, ow in _OFFSETS]
    x_taps = jnp.concatenate(taps, axis=-1)                       # (M, 8*Cin)

    # Block weight: rows = the 8 tap offsets, cols = the 8 output parities.
    zero = jnp.zeros((cin, cout), w.dtype)
    row_blocks = []
    for od, oh, ow in _OFFSETS:
        cols = []
        for pd, ph, pw in _OFFSETS:          # parity order = channel blocks
            kd = _DECONV_KMAP[(pd, od)]
            kh = _DECONV_KMAP[(ph, oh)]
            kw = _DECONV_KMAP[(pw, ow)]
            cols.append(zero if None in (kd, kh, kw) else w[kd, kh, kw])
        row_blocks.append(jnp.concatenate(cols, axis=1))          # (Cin, 8*Cout)
    w_big = jnp.concatenate(row_blocks, axis=0)                   # (8*Cin, 8*Cout)

    # Skip connection, sliced per output parity, packed along channels.
    res = jnp.concatenate(
        [residual[:, pd::2, ph::2, pw::2, :].reshape(-1, cout)
         for pd, ph, pw in _OFFSETS], axis=-1)                    # (M, 8*Cout)

    out = _fused_matmul(x_taps, w_big, relu=relu, residual=res,
                        out_dtype=out_dtype)                      # (M, 8*Cout)

    # Un-shuffle parities into the 2x upsampled volume.
    out = out.reshape(n, d, h, wdt, 2, 2, 2, cout)
    out = out.transpose(0, 1, 4, 2, 5, 3, 6, 7)                   # N,D,pd,H,ph,W,pw,C
    return out.reshape(n, 2 * d, 2 * h, 2 * wdt, cout)


# ----------------------------------------------------------------------------
# Final prob layer: Conv3d(Cin, 1, 3, padding=1) with bias.  Cout == 1, so the
# matmul is transposed (M on the lane axis) to keep stores lane-dense.
# ----------------------------------------------------------------------------
def _prob_kernel(x_ref, w_ref, b_ref, o_ref):
    acc = jnp.dot(w_ref[...], x_ref[...], preferred_element_type=jnp.float32)
    o_ref[...] = acc + b_ref[...]


def _pick_tl(m):
    if m <= 4096:
        return m
    for tl in (4096, 2048, 1024, 512, 256, 128):
        if m % tl == 0:
            return tl
    return m


def prob_conv3d(x, w, b):
    """x: (N,D,H,W,Cin) bf16, w: (3,3,3,Cin,1), b: (1,) -> (N, 1, D, H, W)."""
    n, d, h, wdt, cin = x.shape
    m = n * d * h * wdt
    k = 27 * cin
    xp = jnp.pad(x, ((0, 0), (1, 1), (1, 1), (1, 1), (0, 0)))
    taps = []
    for kd in range(3):
        for kh in range(3):
            for kw in range(3):
                v = xp[:, kd:kd + d, kh:kh + h, kw:kw + wdt, :]   # (N,D,H,W,Cin)
                taps.append(jnp.moveaxis(v, -1, 0).reshape(cin, m))
    x_t = jnp.concatenate(taps, axis=0).astype(jnp.bfloat16)      # (27*Cin, M)
    w_t = w.reshape(k, 1).T.astype(jnp.bfloat16)                  # (1, 27*Cin)
    tl = _pick_tl(m)
    out = pl.pallas_call(
        _prob_kernel,
        out_shape=jax.ShapeDtypeStruct((1, m), jnp.float32),
        grid=(m // tl,),
        in_specs=[
            pl.BlockSpec((k, tl), lambda i: (0, i)),
            pl.BlockSpec((1, k), lambda i: (0, 0)),
            pl.BlockSpec((1, 1), lambda i: (0, 0)),
        ],
        out_specs=pl.BlockSpec((1, tl), lambda i: (0, i)),
        compiler_params=pltpu.CompilerParams(
            dimension_semantics=("parallel",)),
    )(x_t, w_t, b.reshape(1, 1).astype(jnp.float32))
    return out.reshape(n, d, h, wdt)[:, None]                     # (N,1,D,H,W)


# ----------------------------------------------------------------------------
# Parameters (deterministic, synthetic init; kaiming-normal-like, fan_out).
# ----------------------------------------------------------------------------
def init_params(key):
    def kaiming(k, cin, cout):
        fan_out = cout * 27
        std = math.sqrt(2.0 / fan_out)
        return std * jax.random.normal(k, (3, 3, 3, cin, cout), jnp.float32)

    specs = {
        "l1": (32, 8), "l2": (8, 16), "l3": (16, 16), "l4": (16, 32),
        "l5": (32, 32), "l6": (32, 64), "l7": (64, 64),
        "u1": (64, 32), "u2": (32, 16), "u3": (16, 8),
        "prob": (8, 1),
    }
    keys = jax.random.split(key, len(specs))
    params = {}
    for kk, (name, (cin, cout)) in zip(keys, specs.items()):
        params[name + "_w"] = kaiming(kk, cin, cout)
    params["prob_b"] = jnp.zeros((1,), jnp.float32)
    return params


# ----------------------------------------------------------------------------
# CostReg forward.
# ----------------------------------------------------------------------------
def cost_reg_forward(params, x):
    """x: (N, D, H, W, 32) NDHWC cost volume -> (N, 1, D, H, W)."""
    bn = 1.0 / math.sqrt(1.0 + _BN_EPS)   # folded eval-mode BatchNorm3d
    x = x.astype(jnp.bfloat16)

    # TODO(synk): `Super0Net` is undefined in the reference; each Bottleneck
    # branch is modeled as Conv3d(C_in, 1, 3, stride, 1, bias=False)+BN+ReLU,
    # so Bottleneck(C_in, C_out) == Conv3d(C_in, C_out) + per-channel BN + ReLU.
    block1 = conv3d(x, params["l1_w"] * bn, stride=1)
    hid = conv3d(block1, params["l2_w"] * bn, stride=2)
    block2 = conv3d(hid, params["l3_w"] * bn, stride=1)
    hid = conv3d(block2, params["l4_w"] * bn, stride=2)
    block3 = conv3d(hid, params["l5_w"] * bn, stride=1)
    hid = conv3d(block3, params["l6_w"] * bn, stride=2)
    block4 = conv3d(hid, params["l7_w"] * bn, stride=1)

    out = conv_transpose3d(block4, params["u1_w"] * bn, block3)
    out = conv_transpose3d(out, params["u2_w"] * bn, block2)
    out = conv_transpose3d(out, params["u3_w"] * bn, block1)

    return prob_conv3d(out, params["prob_w"], params["prob_b"])


if __name__ == "__main__":
    key = jax.random.PRNGKey(0)
    pkey, xkey = jax.random.split(key)
    params = init_params(pkey)

    # PyTorch-convention cost volume: (N=1, C=32, D=8, H=16, W=16)
    x_ncdhw = jax.random.normal(xkey, (1, 32, 8, 16, 16), jnp.float32)
    x = jnp.transpose(x_ncdhw, (0, 2, 3, 4, 1))  # -> NDHWC

    fwd = jax.jit(cost_reg_forward)
    out = jax.block_until_ready(fwd(params, x))
    assert out.shape == (1, 1, 8, 16, 16), out.shape
    assert jnp.all(jnp.isfinite(out))
    print("KERNEL_OK")
</pallas_src>

<mosaic_0001>
module attributes {stable_mosaic.version = 11 : i64} {
  func.func @_mm_kernel(%arg0: i32, %arg1: memref<1024x864xbf16, #tpu.memory_space<vmem>>, %arg2: memref<864x8xbf16, #tpu.memory_space<vmem>>, %arg3: memref<1024x8xbf16, #tpu.memory_space<vmem>>) attributes {dimension_semantics = [#tpu.dimension_semantics<parallel>], iteration_bounds = array<i64: 2>, scalar_prefetch = 0 : i64, scratch_operands = 0 : i64, tpu.core_type = #tpu.core_type<tc>, window_params = [{transform_indices = @transform_0, window_bounds = array<i64: 1024, 864>}, {pipeline_mode = #tpu.pipeline_mode<synchronous>, transform_indices = @transform_1, window_bounds = array<i64: 864, 8>}, {transform_indices = @transform_2, window_bounds = array<i64: 1024, 8>}]} {
    %c0 = arith.constant 0 : index
    %c0_0 = arith.constant 0 : index
    %0 = vector.load %arg1[%c0, %c0_0] : memref<1024x864xbf16, #tpu.memory_space<vmem>>, vector<1024x864xbf16>
    %c0_1 = arith.constant 0 : index
    %c0_2 = arith.constant 0 : index
    %1 = vector.load %arg2[%c0_1, %c0_2] : memref<864x8xbf16, #tpu.memory_space<vmem>>, vector<864x8xbf16>
    %cst = arith.constant dense<0.000000e+00> : vector<1024x8xf32>
    %2 = tpu.matmul %0, %1, %cst {dimension_numbers = #tpu.dot_dimension_numbers<[1], [0], [0], [1], [0, 0, 1, 1], [], []>} : vector<1024x864xbf16>, vector<864x8xbf16>, vector<1024x8xf32> -> vector<1024x8xf32>
    %cst_3 = arith.constant 0.000000e+00 : f32
    %3 = vector.broadcast %cst_3 : f32 to vector<1024x8xf32>
    %4 = arith.maximumf %2, %3 : vector<1024x8xf32>
    %5 = arith.truncf %4 : vector<1024x8xf32> to vector<1024x8xbf16>
    %c0_4 = arith.constant 0 : index
    %c0_5 = arith.constant 0 : index
    %6 = vector.load %arg3[%c0_4, %c0_5] : memref<1024x8xbf16, #tpu.memory_space<vmem>>, vector<1024x8xbf16>
    tpu.vector_store %arg3[%c0_4, %c0_5], %5 {strides = array<i32>} : memref<1024x8xbf16, #tpu.memory_space<vmem>>, vector<1024x8xbf16>,
    return
  }
  func.func @transform_0(%arg0: i32) -> (i32, i32) {
    %c0_i32 = arith.constant 0 : i32
    %c0_i32_0 = arith.constant 0 : i32
    return %arg0, %c0_i32 : i32, i32
  }
  func.func @transform_1(%arg0: i32) -> (i32, i32) {
    %c0_i32 = arith.constant 0 : i32
    %c0_i32_0 = arith.constant 0 : i32
    %c0_i32_1 = arith.constant 0 : i32
    return %c0_i32, %c0_i32_0 : i32, i32
  }
  func.func @transform_2(%arg0: i32) -> (i32, i32) {
    %c0_i32 = arith.constant 0 : i32
    %c0_i32_0 = arith.constant 0 : i32
    return %arg0, %c0_i32 : i32, i32
  }
}

module attributes {stable_mosaic.version = 11 : i64} {
  func.func @_mm_kernel(%arg0: i32, %arg1: memref<256x216xbf16, #tpu.memory_space<vmem>>, %arg2: memref<216x16xbf16, #tpu.memory_space<vmem>>, %arg3: memref<256x16xbf16, #tpu.memory_space<vmem>>) attributes {dimension_semantics = [#tpu.dimension_semantics<parallel>], iteration_bounds = array<i64: 1>, scalar_prefetch = 0 : i64, scratch_operands = 0 : i64, tpu.core_type = #tpu.core_type<tc>, window_params = [{transform_indices = @transform_0, window_bounds = array<i64: 256, 216>}, {pipeline_mode = #tpu.pipeline_mode<synchronous>, transform_indices = @transform_1, window_bounds = array<i64: 216, 16>}, {transform_indices = @transform_2, window_bounds = array<i64: 256, 16>}]} {
    %c0 = arith.constant 0 : index
    %c0_0 = arith.constant 0 : index
    %0 = vector.load %arg1[%c0, %c0_0] : memref<256x216xbf16, #tpu.memory_space<vmem>>, vector<256x216xbf16>
    %c0_1 = arith.constant 0 : index
    %c0_2 = arith.constant 0 : index
    %1 = vector.load %arg2[%c0_1, %c0_2] : memref<216x16xbf16, #tpu.memory_space<vmem>>, vector<216x16xbf16>
    %cst = arith.constant dense<0.000000e+00> : vector<256x16xf32>
    %2 = tpu.matmul %0, %1, %cst {dimension_numbers = #tpu.dot_dimension_numbers<[1], [0], [0], [1], [0, 0, 1, 1], [], []>} : vector<256x216xbf16>, vector<216x16xbf16>, vector<256x16xf32> -> vector<256x16xf32>
    %cst_3 = arith.constant 0.000000e+00 : f32
    %3 = vector.broadcast %cst_3 : f32 to vector<256x16xf32>
    %4 = arith.maximumf %2, %3 : vector<256x16xf32>
    %5 = arith.truncf %4 : vector<256x16xf32> to vector<256x16xbf16>
    %c0_4 = arith.constant 0 : index
    %c0_5 = arith.constant 0 : index
    %6 = vector.load %arg3[%c0_4, %c0_5] : memref<256x16xbf16, #tpu.memory_space<vmem>>, vector<256x16xbf16>
    tpu.vector_store %arg3[%c0_4, %c0_5], %5 {strides = array<i32>} : memref<256x16xbf16, #tpu.memory_space<vmem>>, vector<256x16xbf16>,
    return
  }
  func.func @transform_0(%arg0: i32) -> (i32, i32) {
    %c0_i32 = arith.constant 0 : i32
    %c0_i32_0 = arith.constant 0 : i32
    return %arg0, %c0_i32 : i32, i32
  }
  func.func @transform_1(%arg0: i32) -> (i32, i32) {
    %c0_i32 = arith.constant 0 : i32
    %c0_i32_0 = arith.constant 0 : i32
    %c0_i32_1 = arith.constant 0 : i32
    return %c0_i32, %c0_i32_0 : i32, i32
  }
  func.func @transform_2(%arg0: i32) -> (i32, i32) {
    %c0_i32 = arith.constant 0 : i32
    %c0_i32_0 = arith.constant 0 : i32
    return %arg0, %c0_i32 : i32, i32
  }
}

module attributes {stable_mosaic.version = 11 : i64} {
  func.func @_mm_kernel(%arg0: i32, %arg1: memref<256x432xbf16, #tpu.memory_space<vmem>>, %arg2: memref<432x16xbf16, #tpu.memory_space<vmem>>, %arg3: memref<256x16xbf16, #tpu.memory_space<vmem>>) attributes {dimension_semantics = [#tpu.dimension_semantics<parallel>], iteration_bounds = array<i64: 1>, scalar_prefetch = 0 : i64, scratch_operands = 0 : i64, tpu.core_type = #tpu.core_type<tc>, window_params = [{transform_indices = @transform_0, window_bounds = array<i64: 256, 432>}, {pipeline_mode = #tpu.pipeline_mode<synchronous>, transform_indices = @transform_1, window_bounds = array<i64: 432, 16>}, {transform_indices = @transform_2, window_bounds = array<i64: 256, 16>}]} {
    %c0 = arith.constant 0 : index
    %c0_0 = arith.constant 0 : index
    %0 = vector.load %arg1[%c0, %c0_0] : memref<256x432xbf16, #tpu.memory_space<vmem>>, vector<256x432xbf16>
    %c0_1 = arith.constant 0 : index
    %c0_2 = arith.constant 0 : index
    %1 = vector.load %arg2[%c0_1, %c0_2] : memref<432x16xbf16, #tpu.memory_space<vmem>>, vector<432x16xbf16>
    %cst = arith.constant dense<0.000000e+00> : vector<256x16xf32>
    %2 = tpu.matmul %0, %1, %cst {dimension_numbers = #tpu.dot_dimension_numbers<[1], [0], [0], [1], [0, 0, 1, 1], [], []>} : vector<256x432xbf16>, vector<432x16xbf16>, vector<256x16xf32> -> vector<256x16xf32>
    %cst_3 = arith.constant 0.000000e+00 : f32
    %3 = vector.broadcast %cst_3 : f32 to vector<256x16xf32>
    %4 = arith.maximumf %2, %3 : vector<256x16xf32>
    %5 = arith.truncf %4 : vector<256x16xf32> to vector<256x16xbf16>
    %c0_4 = arith.constant 0 : index
    %c0_5 = arith.constant 0 : index
    %6 = vector.load %arg3[%c0_4, %c0_5] : memref<256x16xbf16, #tpu.memory_space<vmem>>, vector<256x16xbf16>
    tpu.vector_store %arg3[%c0_4, %c0_5], %5 {strides = array<i32>} : memref<256x16xbf16, #tpu.memory_space<vmem>>, vector<256x16xbf16>,
    return
  }
  func.func @transform_0(%arg0: i32) -> (i32, i32) {
    %c0_i32 = arith.constant 0 : i32
    %c0_i32_0 = arith.constant 0 : i32
    return %arg0, %c0_i32 : i32, i32
  }
  func.func @transform_1(%arg0: i32) -> (i32, i32) {
    %c0_i32 = arith.constant 0 : i32
    %c0_i32_0 = arith.constant 0 : i32
    %c0_i32_1 = arith.constant 0 : i32
    return %c0_i32, %c0_i32_0 : i32, i32
  }
  func.func @transform_2(%arg0: i32) -> (i32, i32) {
    %c0_i32 = arith.constant 0 : i32
    %c0_i32_0 = arith.constant 0 : i32
    return %arg0, %c0_i32 : i32, i32
  }
}

module attributes {stable_mosaic.version = 11 : i64} {
  func.func @_mm_kernel(%arg0: i32, %arg1: memref<32x432xbf16, #tpu.memory_space<vmem>>, %arg2: memref<432x32xbf16, #tpu.memory_space<vmem>>, %arg3: memref<32x32xbf16, #tpu.memory_space<vmem>>) attributes {dimension_semantics = [#tpu.dimension_semantics<parallel>], iteration_bounds = array<i64: 1>, scalar_prefetch = 0 : i64, scratch_operands = 0 : i64, tpu.core_type = #tpu.core_type<tc>, window_params = [{transform_indices = @transform_0, window_bounds = array<i64: 32, 432>}, {pipeline_mode = #tpu.pipeline_mode<synchronous>, transform_indices = @transform_1, window_bounds = array<i64: 432, 32>}, {transform_indices = @transform_2, window_bounds = array<i64: 32, 32>}]} {
    %c0 = arith.constant 0 : index
    %c0_0 = arith.constant 0 : index
    %0 = vector.load %arg1[%c0, %c0_0] : memref<32x432xbf16, #tpu.memory_space<vmem>>, vector<32x432xbf16>
    %c0_1 = arith.constant 0 : index
    %c0_2 = arith.constant 0 : index
    %1 = vector.load %arg2[%c0_1, %c0_2] : memref<432x32xbf16, #tpu.memory_space<vmem>>, vector<432x32xbf16>
    %cst = arith.constant dense<0.000000e+00> : vector<32x32xf32>
    %2 = tpu.matmul %0, %1, %cst {dimension_numbers = #tpu.dot_dimension_numbers<[1], [0], [0], [1], [0, 0, 1, 1], [], []>} : vector<32x432xbf16>, vector<432x32xbf16>, vector<32x32xf32> -> vector<32x32xf32>
    %cst_3 = arith.constant 0.000000e+00 : f32
    %3 = vector.broadcast %cst_3 : f32 to vector<32x32xf32>
    %4 = arith.maximumf %2, %3 : vector<32x32xf32>
    %5 = arith.truncf %4 : vector<32x32xf32> to vector<32x32xbf16>
    %c0_4 = arith.constant 0 : index
    %c0_5 = arith.constant 0 : index
    %6 = vector.load %arg3[%c0_4, %c0_5] : memref<32x32xbf16, #tpu.memory_space<vmem>>, vector<32x32xbf16>
    tpu.vector_store %arg3[%c0_4, %c0_5], %5 {strides = array<i32>} : memref<32x32xbf16, #tpu.memory_space<vmem>>, vector<32x32xbf16>,
    return
  }
  func.func @transform_0(%arg0: i32) -> (i32, i32) {
    %c0_i32 = arith.constant 0 : i32
    %c0_i32_0 = arith.constant 0 : i32
    return %arg0, %c0_i32 : i32, i32
  }
  func.func @transform_1(%arg0: i32) -> (i32, i32) {
    %c0_i32 = arith.constant 0 : i32
    %c0_i32_0 = arith.constant 0 : i32
    %c0_i32_1 = arith.constant 0 : i32
    return %c0_i32, %c0_i32_0 : i32, i32
  }
  func.func @transform_2(%arg0: i32) -> (i32, i32) {
    %c0_i32 = arith.constant 0 : i32
    %c0_i32_0 = arith.constant 0 : i32
    return %arg0, %c0_i32 : i32, i32
  }
}

module attributes {stable_mosaic.version = 11 : i64} {
  func.func @_mm_kernel(%arg0: i32, %arg1: memref<32x864xbf16, #tpu.memory_space<vmem>>, %arg2: memref<864x32xbf16, #tpu.memory_space<vmem>>, %arg3: memref<32x32xbf16, #tpu.memory_space<vmem>>) attributes {dimension_semantics = [#tpu.dimension_semantics<parallel>], iteration_bounds = array<i64: 1>, scalar_prefetch = 0 : i64, scratch_operands = 0 : i64, tpu.core_type = #tpu.core_type<tc>, window_params = [{transform_indices = @transform_0, window_bounds = array<i64: 32, 864>}, {pipeline_mode = #tpu.pipeline_mode<synchronous>, transform_indices = @transform_1, window_bounds = array<i64: 864, 32>}, {transform_indices = @transform_2, window_bounds = array<i64: 32, 32>}]} {
    %c0 = arith.constant 0 : index
    %c0_0 = arith.constant 0 : index
    %0 = vector.load %arg1[%c0, %c0_0] : memref<32x864xbf16, #tpu.memory_space<vmem>>, vector<32x864xbf16>
    %c0_1 = arith.constant 0 : index
    %c0_2 = arith.constant 0 : index
    %1 = vector.load %arg2[%c0_1, %c0_2] : memref<864x32xbf16, #tpu.memory_space<vmem>>, vector<864x32xbf16>
    %cst = arith.constant dense<0.000000e+00> : vector<32x32xf32>
    %2 = tpu.matmul %0, %1, %cst {dimension_numbers = #tpu.dot_dimension_numbers<[1], [0], [0], [1], [0, 0, 1, 1], [], []>} : vector<32x864xbf16>, vector<864x32xbf16>, vector<32x32xf32> -> vector<32x32xf32>
    %cst_3 = arith.constant 0.000000e+00 : f32
    %3 = vector.broadcast %cst_3 : f32 to vector<32x32xf32>
    %4 = arith.maximumf %2, %3 : vector<32x32xf32>
    %5 = arith.truncf %4 : vector<32x32xf32> to vector<32x32xbf16>
    %c0_4 = arith.constant 0 : index
    %c0_5 = arith.constant 0 : index
    %6 = vector.load %arg3[%c0_4, %c0_5] : memref<32x32xbf16, #tpu.memory_space<vmem>>, vector<32x32xbf16>
    tpu.vector_store %arg3[%c0_4, %c0_5], %5 {strides = array<i32>} : memref<32x32xbf16, #tpu.memory_space<vmem>>, vector<32x32xbf16>,
    return
  }
  func.func @transform_0(%arg0: i32) -> (i32, i32) {
    %c0_i32 = arith.constant 0 : i32
    %c0_i32_0 = arith.constant 0 : i32
    return %arg0, %c0_i32 : i32, i32
  }
  func.func @transform_1(%arg0: i32) -> (i32, i32) {
    %c0_i32 = arith.constant 0 : i32
    %c0_i32_0 = arith.constant 0 : i32
    %c0_i32_1 = arith.constant 0 : i32
    return %c0_i32, %c0_i32_0 : i32, i32
  }
  func.func @transform_2(%arg0: i32) -> (i32, i32) {
    %c0_i32 = arith.constant 0 : i32
    %c0_i32_0 = arith.constant 0 : i32
    return %arg0, %c0_i32 : i32, i32
  }
}

module attributes {stable_mosaic.version = 11 : i64} {
  func.func @_mm_kernel(%arg0: i32, %arg1: memref<4x864xbf16, #tpu.memory_space<vmem>>, %arg2: memref<864x64xbf16, #tpu.memory_space<vmem>>, %arg3: memref<4x64xbf16, #tpu.memory_space<vmem>>) attributes {dimension_semantics = [#tpu.dimension_semantics<parallel>], iteration_bounds = array<i64: 1>, scalar_prefetch = 0 : i64, scratch_operands = 0 : i64, tpu.core_type = #tpu.core_type<tc>, window_params = [{transform_indices = @transform_0, window_bounds = array<i64: 4, 864>}, {pipeline_mode = #tpu.pipeline_mode<synchronous>, transform_indices = @transform_1, window_bounds = array<i64: 864, 64>}, {transform_indices = @transform_2, window_bounds = array<i64: 4, 64>}]} {
    %c0 = arith.constant 0 : index
    %c0_0 = arith.constant 0 : index
    %0 = vector.load %arg1[%c0, %c0_0] : memref<4x864xbf16, #tpu.memory_space<vmem>>, vector<4x864xbf16>
    %c0_1 = arith.constant 0 : index
    %c0_2 = arith.constant 0 : index
    %1 = vector.load %arg2[%c0_1, %c0_2] : memref<864x64xbf16, #tpu.memory_space<vmem>>, vector<864x64xbf16>
    %cst = arith.constant dense<0.000000e+00> : vector<4x64xf32>
    %2 = tpu.matmul %0, %1, %cst {dimension_numbers = #tpu.dot_dimension_numbers<[1], [0], [0], [1], [0, 0, 1, 1], [], []>} : vector<4x864xbf16>, vector<864x64xbf16>, vector<4x64xf32> -> vector<4x64xf32>
    %cst_3 = arith.constant 0.000000e+00 : f32
    %3 = vector.broadcast %cst_3 : f32 to vector<4x64xf32>
    %4 = arith.maximumf %2, %3 : vector<4x64xf32>
    %5 = arith.truncf %4 : vector<4x64xf32> to vector<4x64xbf16>
    %c0_4 = arith.constant 0 : index
    %c0_5 = arith.constant 0 : index
    %6 = vector.load %arg3[%c0_4, %c0_5] : memref<4x64xbf16, #tpu.memory_space<vmem>>, vector<4x64xbf16>
    tpu.vector_store %arg3[%c0_4, %c0_5], %5 {strides = array<i32>} : memref<4x64xbf16, #tpu.memory_space<vmem>>, vector<4x64xbf16>,
    return
  }
  func.func @transform_0(%arg0: i32) -> (i32, i32) {
    %c0_i32 = arith.constant 0 : i32
    %c0_i32_0 = arith.constant 0 : i32
    return %arg0, %c0_i32 : i32, i32
  }
  func.func @transform_1(%arg0: i32) -> (i32, i32) {
    %c0_i32 = arith.constant 0 : i32
    %c0_i32_0 = arith.constant 0 : i32
    %c0_i32_1 = arith.constant 0 : i32
    return %c0_i32, %c0_i32_0 : i32, i32
  }
  func.func @transform_2(%arg0: i32) -> (i32, i32) {
    %c0_i32 = arith.constant 0 : i32
    %c0_i32_0 = arith.constant 0 : i32
    return %arg0, %c0_i32 : i32, i32
  }
}

module attributes {stable_mosaic.version = 11 : i64} {
  func.func @_mm_kernel(%arg0: i32, %arg1: memref<4x1728xbf16, #tpu.memory_space<vmem>>, %arg2: memref<1728x64xbf16, #tpu.memory_space<vmem>>, %arg3: memref<4x64xbf16, #tpu.memory_space<vmem>>) attributes {dimension_semantics = [#tpu.dimension_semantics<parallel>], iteration_bounds = array<i64: 1>, scalar_prefetch = 0 : i64, scratch_operands = 0 : i64, tpu.core_type = #tpu.core_type<tc>, window_params = [{transform_indices = @transform_0, window_bounds = array<i64: 4, 1728>}, {pipeline_mode = #tpu.pipeline_mode<synchronous>, transform_indices = @transform_1, window_bounds = array<i64: 1728, 64>}, {transform_indices = @transform_2, window_bounds = array<i64: 4, 64>}]} {
    %c0 = arith.constant 0 : index
    %c0_0 = arith.constant 0 : index
    %0 = vector.load %arg1[%c0, %c0_0] : memref<4x1728xbf16, #tpu.memory_space<vmem>>, vector<4x1728xbf16>
    %c0_1 = arith.constant 0 : index
    %c0_2 = arith.constant 0 : index
    %1 = vector.load %arg2[%c0_1, %c0_2] : memref<1728x64xbf16, #tpu.memory_space<vmem>>, vector<1728x64xbf16>
    %cst = arith.constant dense<0.000000e+00> : vector<4x64xf32>
    %2 = tpu.matmul %0, %1, %cst {dimension_numbers = #tpu.dot_dimension_numbers<[1], [0], [0], [1], [0, 0, 1, 1], [], []>} : vector<4x1728xbf16>, vector<1728x64xbf16>, vector<4x64xf32> -> vector<4x64xf32>
    %cst_3 = arith.constant 0.000000e+00 : f32
    %3 = vector.broadcast %cst_3 : f32 to vector<4x64xf32>
    %4 = arith.maximumf %2, %3 : vector<4x64xf32>
    %5 = arith.truncf %4 : vector<4x64xf32> to vector<4x64xbf16>
    %c0_4 = arith.constant 0 : index
    %c0_5 = arith.constant 0 : index
    %6 = vector.load %arg3[%c0_4, %c0_5] : memref<4x64xbf16, #tpu.memory_space<vmem>>, vector<4x64xbf16>
    tpu.vector_store %arg3[%c0_4, %c0_5], %5 {strides = array<i32>} : memref<4x64xbf16, #tpu.memory_space<vmem>>, vector<4x64xbf16>,
    return
  }
  func.func @transform_0(%arg0: i32) -> (i32, i32) {
    %c0_i32 = arith.constant 0 : i32
    %c0_i32_0 = arith.constant 0 : i32
    return %arg0, %c0_i32 : i32, i32
  }
  func.func @transform_1(%arg0: i32) -> (i32, i32) {
    %c0_i32 = arith.constant 0 : i32
    %c0_i32_0 = arith.constant 0 : i32
    %c0_i32_1 = arith.constant 0 : i32
    return %c0_i32, %c0_i32_0 : i32, i32
  }
  func.func @transform_2(%arg0: i32) -> (i32, i32) {
    %c0_i32 = arith.constant 0 : i32
    %c0_i32_0 = arith.constant 0 : i32
    return %arg0, %c0_i32 : i32, i32
  }
}

module attributes {stable_mosaic.version = 11 : i64} {
  func.func @_mm_res_kernel(%arg0: i32, %arg1: memref<4x512xbf16, #tpu.memory_space<vmem>>, %arg2: memref<512x256xbf16, #tpu.memory_space<vmem>>, %arg3: memref<4x256xbf16, #tpu.memory_space<vmem>>, %arg4: memref<4x256xbf16, #tpu.memory_space<vmem>>) attributes {dimension_semantics = [#tpu.dimension_semantics<parallel>], iteration_bounds = array<i64: 1>, scalar_prefetch = 0 : i64, scratch_operands = 0 : i64, tpu.core_type = #tpu.core_type<tc>, window_params = [{transform_indices = @transform_0, window_bounds = array<i64: 4, 512>}, {pipeline_mode = #tpu.pipeline_mode<synchronous>, transform_indices = @transform_1, window_bounds = array<i64: 512, 256>}, {transform_indices = @transform_2, window_bounds = array<i64: 4, 256>}, {transform_indices = @transform_3, window_bounds = array<i64: 4, 256>}]} {
    %c0 = arith.constant 0 : index
    %c0_0 = arith.constant 0 : index
    %0 = vector.load %arg1[%c0, %c0_0] : memref<4x512xbf16, #tpu.memory_space<vmem>>, vector<4x512xbf16>
    %c0_1 = arith.constant 0 : index
    %c0_2 = arith.constant 0 : index
    %1 = vector.load %arg2[%c0_1, %c0_2] : memref<512x256xbf16, #tpu.memory_space<vmem>>, vector<512x256xbf16>
    %cst = arith.constant dense<0.000000e+00> : vector<4x256xf32>
    %2 = tpu.matmul %0, %1, %cst {dimension_numbers = #tpu.dot_dimension_numbers<[1], [0], [0], [1], [0, 0, 1, 1], [], []>} : vector<4x512xbf16>, vector<512x256xbf16>, vector<4x256xf32> -> vector<4x256xf32>
    %cst_3 = arith.constant 0.000000e+00 : f32
    %3 = vector.broadcast %cst_3 : f32 to vector<4x256xf32>
    %4 = arith.maximumf %2, %3 : vector<4x256xf32>
    %c0_4 = arith.constant 0 : index
    %c0_5 = arith.constant 0 : index
    %5 = vector.load %arg3[%c0_4, %c0_5] : memref<4x256xbf16, #tpu.memory_space<vmem>>, vector<4x256xbf16>
    %6 = arith.extf %5 : vector<4x256xbf16> to vector<4x256xf32>
    %7 = arith.addf %4, %6 : vector<4x256xf32>
    %8 = arith.truncf %7 : vector<4x256xf32> to vector<4x256xbf16>
    %c0_6 = arith.constant 0 : index
    %c0_7 = arith.constant 0 : index
    %9 = vector.load %arg4[%c0_6, %c0_7] : memref<4x256xbf16, #tpu.memory_space<vmem>>, vector<4x256xbf16>
    tpu.vector_store %arg4[%c0_6, %c0_7], %8 {strides = array<i32>} : memref<4x256xbf16, #tpu.memory_space<vmem>>, vector<4x256xbf16>,
    return
  }
  func.func @transform_0(%arg0: i32) -> (i32, i32) {
    %c0_i32 = arith.constant 0 : i32
    %c0_i32_0 = arith.constant 0 : i32
    return %arg0, %c0_i32 : i32, i32
  }
  func.func @transform_1(%arg0: i32) -> (i32, i32) {
    %c0_i32 = arith.constant 0 : i32
    %c0_i32_0 = arith.constant 0 : i32
    %c0_i32_1 = arith.constant 0 : i32
    return %c0_i32, %c0_i32_0 : i32, i32
  }
  func.func @transform_2(%arg0: i32) -> (i32, i32) {
    %c0_i32 = arith.constant 0 : i32
    %c0_i32_0 = arith.constant 0 : i32
    return %arg0, %c0_i32 : i32, i32
  }
  func.func @transform_3(%arg0: i32) -> (i32, i32) {
    %c0_i32 = arith.constant 0 : i32
    %c0_i32_0 = arith.constant 0 : i32
    return %arg0, %c0_i32 : i32, i32
  }
}

module attributes {stable_mosaic.version = 11 : i64} {
  func.func @_mm_res_kernel(%arg0: i32, %arg1: memref<32x256xbf16, #tpu.memory_space<vmem>>, %arg2: memref<256x128xbf16, #tpu.memory_space<vmem>>, %arg3: memref<32x128xbf16, #tpu.memory_space<vmem>>, %arg4: memref<32x128xbf16, #tpu.memory_space<vmem>>) attributes {dimension_semantics = [#tpu.dimension_semantics<parallel>], iteration_bounds = array<i64: 1>, scalar_prefetch = 0 : i64, scratch_operands = 0 : i64, tpu.core_type = #tpu.core_type<tc>, window_params = [{transform_indices = @transform_0, window_bounds = array<i64: 32, 256>}, {pipeline_mode = #tpu.pipeline_mode<synchronous>, transform_indices = @transform_1, window_bounds = array<i64: 256, 128>}, {transform_indices = @transform_2, window_bounds = array<i64: 32, 128>}, {transform_indices = @transform_3, window_bounds = array<i64: 32, 128>}]} {
    %c0 = arith.constant 0 : index
    %c0_0 = arith.constant 0 : index
    %0 = vector.load %arg1[%c0, %c0_0] : memref<32x256xbf16, #tpu.memory_space<vmem>>, vector<32x256xbf16>
    %c0_1 = arith.constant 0 : index
    %c0_2 = arith.constant 0 : index
    %1 = vector.load %arg2[%c0_1, %c0_2] : memref<256x128xbf16, #tpu.memory_space<vmem>>, vector<256x128xbf16>
    %cst = arith.constant dense<0.000000e+00> : vector<32x128xf32>
    %2 = tpu.matmul %0, %1, %cst {dimension_numbers = #tpu.dot_dimension_numbers<[1], [0], [0], [1], [0, 0, 1, 1], [], []>} : vector<32x256xbf16>, vector<256x128xbf16>, vector<32x128xf32> -> vector<32x128xf32>
    %cst_3 = arith.constant 0.000000e+00 : f32
    %3 = vector.broadcast %cst_3 : f32 to vector<32x128xf32>
    %4 = arith.maximumf %2, %3 : vector<32x128xf32>
    %c0_4 = arith.constant 0 : index
    %c0_5 = arith.constant 0 : index
    %5 = vector.load %arg3[%c0_4, %c0_5] : memref<32x128xbf16, #tpu.memory_space<vmem>>, vector<32x128xbf16>
    %6 = arith.extf %5 : vector<32x128xbf16> to vector<32x128xf32>
    %7 = arith.addf %4, %6 : vector<32x128xf32>
    %8 = arith.truncf %7 : vector<32x128xf32> to vector<32x128xbf16>
    %c0_6 = arith.constant 0 : index
    %c0_7 = arith.constant 0 : index
    %9 = vector.load %arg4[%c0_6, %c0_7] : memref<32x128xbf16, #tpu.memory_space<vmem>>, vector<32x128xbf16>
    tpu.vector_store %arg4[%c0_6, %c0_7], %8 {strides = array<i32>} : memref<32x128xbf16, #tpu.memory_space<vmem>>, vector<32x128xbf16>,
    return
  }
  func.func @transform_0(%arg0: i32) -> (i32, i32) {
    %c0_i32 = arith.constant 0 : i32
    %c0_i32_0 = arith.constant 0 : i32
    return %arg0, %c0_i32 : i32, i32
  }
  func.func @transform_1(%arg0: i32) -> (i32, i32) {
    %c0_i32 = arith.constant 0 : i32
    %c0_i32_0 = arith.constant 0 : i32
    %c0_i32_1 = arith.constant 0 : i32
    return %c0_i32, %c0_i32_0 : i32, i32
  }
  func.func @transform_2(%arg0: i32) -> (i32, i32) {
    %c0_i32 = arith.constant 0 : i32
    %c0_i32_0 = arith.constant 0 : i32
    return %arg0, %c0_i32 : i32, i32
  }
  func.func @transform_3(%arg0: i32) -> (i32, i32) {
    %c0_i32 = arith.constant 0 : i32
    %c0_i32_0 = arith.constant 0 : i32
    return %arg0, %c0_i32 : i32, i32
  }
}

module attributes {stable_mosaic.version = 11 : i64} {
  func.func @_mm_res_kernel(%arg0: i32, %arg1: memref<256x128xbf16, #tpu.memory_space<vmem>>, %arg2: memref<128x64xbf16, #tpu.memory_space<vmem>>, %arg3: memref<256x64xbf16, #tpu.memory_space<vmem>>, %arg4: memref<256x64xbf16, #tpu.memory_space<vmem>>) attributes {dimension_semantics = [#tpu.dimension_semantics<parallel>], iteration_bounds = array<i64: 1>, scalar_prefetch = 0 : i64, scratch_operands = 0 : i64, tpu.core_type = #tpu.core_type<tc>, window_params = [{transform_indices = @transform_0, window_bounds = array<i64: 256, 128>}, {pipeline_mode = #tpu.pipeline_mode<synchronous>, transform_indices = @transform_1, window_bounds = array<i64: 128, 64>}, {transform_indices = @transform_2, window_bounds = array<i64: 256, 64>}, {transform_indices = @transform_3, window_bounds = array<i64: 256, 64>}]} {
    %c0 = arith.constant 0 : index
    %c0_0 = arith.constant 0 : index
    %0 = vector.load %arg1[%c0, %c0_0] : memref<256x128xbf16, #tpu.memory_space<vmem>>, vector<256x128xbf16>
    %c0_1 = arith.constant 0 : index
    %c0_2 = arith.constant 0 : index
    %1 = vector.load %arg2[%c0_1, %c0_2] : memref<128x64xbf16, #tpu.memory_space<vmem>>, vector<128x64xbf16>
    %cst = arith.constant dense<0.000000e+00> : vector<256x64xf32>
    %2 = tpu.matmul %0, %1, %cst {dimension_numbers = #tpu.dot_dimension_numbers<[1], [0], [0], [1], [0, 0, 1, 1], [], []>} : vector<256x128xbf16>, vector<128x64xbf16>, vector<256x64xf32> -> vector<256x64xf32>
    %cst_3 = arith.constant 0.000000e+00 : f32
    %3 = vector.broadcast %cst_3 : f32 to vector<256x64xf32>
    %4 = arith.maximumf %2, %3 : vector<256x64xf32>
    %c0_4 = arith.constant 0 : index
    %c0_5 = arith.constant 0 : index
    %5 = vector.load %arg3[%c0_4, %c0_5] : memref<256x64xbf16, #tpu.memory_space<vmem>>, vector<256x64xbf16>
    %6 = arith.extf %5 : vector<256x64xbf16> to vector<256x64xf32>
    %7 = arith.addf %4, %6 : vector<256x64xf32>
    %8 = arith.truncf %7 : vector<256x64xf32> to vector<256x64xbf16>
    %c0_6 = arith.constant 0 : index
    %c0_7 = arith.constant 0 : index
    %9 = vector.load %arg4[%c0_6, %c0_7] : memref<256x64xbf16, #tpu.memory_space<vmem>>, vector<256x64xbf16>
    tpu.vector_store %arg4[%c0_6, %c0_7], %8 {strides = array<i32>} : memref<256x64xbf16, #tpu.memory_space<vmem>>, vector<256x64xbf16>,
    return
  }
  func.func @transform_0(%arg0: i32) -> (i32, i32) {
    %c0_i32 = arith.constant 0 : i32
    %c0_i32_0 = arith.constant 0 : i32
    return %arg0, %c0_i32 : i32, i32
  }
  func.func @transform_1(%arg0: i32) -> (i32, i32) {
    %c0_i32 = arith.constant 0 : i32
    %c0_i32_0 = arith.constant 0 : i32
    %c0_i32_1 = arith.constant 0 : i32
    return %c0_i32, %c0_i32_0 : i32, i32
  }
  func.func @transform_2(%arg0: i32) -> (i32, i32) {
    %c0_i32 = arith.constant 0 : i32
    %c0_i32_0 = arith.constant 0 : i32
    return %arg0, %c0_i32 : i32, i32
  }
  func.func @transform_3(%arg0: i32) -> (i32, i32) {
    %c0_i32 = arith.constant 0 : i32
    %c0_i32_0 = arith.constant 0 : i32
    return %arg0, %c0_i32 : i32, i32
  }
}

module attributes {stable_mosaic.version = 11 : i64} {
  func.func @_prob_kernel(%arg0: i32, %arg1: memref<216x2048xbf16, #tpu.memory_space<vmem>>, %arg2: memref<1x216xbf16, #tpu.memory_space<vmem>>, %arg3: memref<1x1xf32, #tpu.memory_space<vmem>>, %arg4: memref<1x2048xf32, #tpu.memory_space<vmem>>) attributes {dimension_semantics = [#tpu.dimension_semantics<parallel>], iteration_bounds = array<i64: 1>, scalar_prefetch = 0 : i64, scratch_operands = 0 : i64, tpu.core_type = #tpu.core_type<tc>, window_params = [{transform_indices = @transform_0, window_bounds = array<i64: 216, 2048>}, {pipeline_mode = #tpu.pipeline_mode<synchronous>, transform_indices = @transform_1, window_bounds = array<i64: 1, 216>}, {pipeline_mode = #tpu.pipeline_mode<synchronous>, transform_indices = @transform_2, window_bounds = array<i64: 1, 1>}, {transform_indices = @transform_3, window_bounds = array<i64: 1, 2048>}]} {
    %c0 = arith.constant 0 : index
    %c0_0 = arith.constant 0 : index
    %0 = vector.load %arg2[%c0, %c0_0] : memref<1x216xbf16, #tpu.memory_space<vmem>>, vector<1x216xbf16>
    %c0_1 = arith.constant 0 : index
    %c0_2 = arith.constant 0 : index
    %1 = vector.load %arg1[%c0_1, %c0_2] : memref<216x2048xbf16, #tpu.memory_space<vmem>>, vector<216x2048xbf16>
    %cst = arith.constant dense<0.000000e+00> : vector<1x2048xf32>
    %2 = tpu.matmul %0, %1, %cst {dimension_numbers = #tpu.dot_dimension_numbers<[1], [0], [0], [1], [0, 0, 1, 1], [], []>} : vector<1x216xbf16>, vector<216x2048xbf16>, vector<1x2048xf32> -> vector<1x2048xf32>
    %c0_3 = arith.constant 0 : index
    %c0_4 = arith.constant 0 : index
    %3 = vector.load %arg3[%c0_3, %c0_4] : memref<1x1xf32, #tpu.memory_space<vmem>>, vector<1x1xf32>
    %4 = vector.broadcast %3 : vector<1x1xf32> to vector<1x2048xf32>
    %5 = arith.addf %2, %4 : vector<1x2048xf32>
    %c0_5 = arith.constant 0 : index
    %c0_6 = arith.constant 0 : index
    %6 = vector.load %arg4[%c0_5, %c0_6] : memref<1x2048xf32, #tpu.memory_space<vmem>>, vector<1x2048xf32>
    tpu.vector_store %arg4[%c0_5, %c0_6], %5 {strides = array<i32>} : memref<1x2048xf32, #tpu.memory_space<vmem>>, vector<1x2048xf32>,
    return
  }
  func.func @transform_0(%arg0: i32) -> (i32, i32) {
    %c0_i32 = arith.constant 0 : i32
    %c0_i32_0 = arith.constant 0 : i32
    return %c0_i32, %arg0 : i32, i32
  }
  func.func @transform_1(%arg0: i32) -> (i32, i32) {
    %c0_i32 = arith.constant 0 : i32
    %c0_i32_0 = arith.constant 0 : i32
    %c0_i32_1 = arith.constant 0 : i32
    return %c0_i32, %c0_i32_0 : i32, i32
  }
  func.func @transform_2(%arg0: i32) -> (i32, i32) {
    %c0_i32 = arith.constant 0 : i32
    %c0_i32_0 = arith.constant 0 : i32
    %c0_i32_1 = arith.constant 0 : i32
    return %c0_i32, %c0_i32_0 : i32, i32
  }
  func.func @transform_3(%arg0: i32) -> (i32, i32) {
    %c0_i32 = arith.constant 0 : i32
    %c0_i32_0 = arith.constant 0 : i32
    return %c0_i32, %arg0 : i32, i32
  }
}

</mosaic_0001>

<llo_original>
// kernel: cost_reg_forward.11
$region0: #{cost_reg_forward.11}
  #allocation0 [shape = 'u32[]', space=smem, size = 0x4, offset = 0x4, fixed_abs, tag = 'smem constant byte address 0x4 - core index']
  #allocation1 [shape = 'u32[144,128]{1,0:T(1,128)}', space=vmem, size = 0x12000, scoped, tag = 'internal scratch']
  %s0 = inlined_call_operand.vmem [shape: bf16[2048,864], index: 0, kind: input, shape index: {}]
  %s1 = inlined_call_operand.vmem [shape: bf16[864,8], index: 1, kind: input, shape index: {}]
  %s2 = inlined_call_operand.vmem [shape: bf16[2048,8], index: 2, kind: output, shape index: {}]
  %s3 = sld [smem:[#allocation0]]
  $region41: #{cost_reg_forward.11} parent=0
    _
  %s5 = ssub.s32 1, %s3
  %s6 = scalar_select 0, %s5, %s3
  loop: start=0, step=1, limit=4
  $region2: #{cost_reg_forward.11} parent=0 // loop_pre_header
    _
  $region3: #{cost_reg_forward.11} parent=0 // loop_header
    %s8 = sphi 0, %s12
    %p9 = scmp.ge.s32.totalorder %s8, 4
    %s18 = sphi 0, %s20
    %s21 = sphi 0, %s18
    %s22 = sphi 0, %s21
    %s38 = sphi 0, %s22
    %s42 = sphi 0, %s42
    %s44 = sphi 0, %s42
    %s45 = sphi 0, %s44
    %s59 = sphi 0, %s45
    %s65 = sphi 0, %s67
    %s68 = sphi 0, %s65
    %s69 = sphi 0, %s68
    %s85 = sphi 0, %s69
  $region4: #{cost_reg_forward.11} parent=0 // loop_header_branch
    %11 = sbr.rel (%p9) target = $region8
  $region5: #{cost_reg_forward.11} parent=0 // loop_body
    %s13 = ssub.s32 %s8, 1
    %s14 = ssub.s32 %s8, 2
    %s15 = sadd.s32 %s8, 1
    %s16 = ssub.s32 %s8, %s15
    %p17 = scmp.eq.s32.totalorder %s16, 0
    %s19 = sadd.s32 %s18, 1
    %s20 = scalar_select %p17, %s18, %s19
    %p23 = pneg %p17
    %p24 = scmp.eq.s32.totalorder %s8, 1
    %p25 = por %p23, %p24
    %p26 = scmp.ne.s32.totalorder %s18, %s21
    %p27 = scmp.eq.s32.totalorder %s8, 0
    %p28 = por %p26, %p27
    %p29 = scmp.ne.s32.totalorder %s18, %s21
    %p30 = scmp.eq.s32.totalorder %s13, 1
    %p31 = por %p29, %p30
    %p32 = scmp.ne.s32.totalorder %s21, %s22
    %p33 = scmp.eq.s32.totalorder %s13, 0
    %p34 = por %p32, %p33
    %p35 = scmp.ne.s32.totalorder %s21, %s22
    %p36 = scmp.eq.s32.totalorder %s14, 1
    %p37 = por %p35, %p36
    %p39 = scmp.ne.s32.totalorder %s22, %s38
    %p40 = scmp.eq.s32.totalorder %s14, 0
    %p41 = por %p39, %p40
    %s43 = sadd.s32 %s42, 1
    %p46 = scmp.eq.s32.totalorder %s8, 1
    %p47 = scmp.ne.s32.totalorder %s42, %s44
    %p48 = scmp.eq.s32.totalorder %s8, 0
    %p49 = por %p47, %p48
    %p50 = scmp.ne.s32.totalorder %s42, %s44
    %p51 = scmp.eq.s32.totalorder %s13, 1
    %p52 = por %p50, %p51
    %p53 = scmp.ne.s32.totalorder %s44, %s45
    %p54 = scmp.eq.s32.totalorder %s13, 0
    %p55 = por %p53, %p54
    %p56 = scmp.ne.s32.totalorder %s44, %s45
    %p57 = scmp.eq.s32.totalorder %s14, 1
    %p58 = por %p56, %p57
    %p60 = scmp.ne.s32.totalorder %s45, %s59
    %p61 = scmp.eq.s32.totalorder %s14, 0
    %p62 = por %p60, %p61
    %s63 = ssub.s32 %s8, %s15
    %p64 = scmp.eq.s32.totalorder %s63, 0
    %s66 = sadd.s32 %s65, 1
    %s67 = scalar_select %p64, %s65, %s66
    %p70 = pneg %p64
    %p71 = scmp.eq.s32.totalorder %s8, 1
    %p72 = por %p70, %p71
    %p73 = scmp.ne.s32.totalorder %s65, %s68
    %p74 = scmp.eq.s32.totalorder %s8, 0
    %p75 = por %p73, %p74
    %p76 = scmp.ne.s32.totalorder %s65, %s68
    %p77 = scmp.eq.s32.totalorder %s13, 1
    %p78 = por %p76, %p77
    %p79 = scmp.ne.s32.totalorder %s68, %s69
    %p80 = scmp.eq.s32.totalorder %s13, 0
    %p81 = por %p79, %p80
    %p82 = scmp.ne.s32.totalorder %s68, %s69
    %p83 = scmp.eq.s32.totalorder %s14, 1
    %p84 = por %p82, %p83
    %p86 = scmp.ne.s32.totalorder %s69, %s85
    %p87 = scmp.eq.s32.totalorder %s14, 0
    %p88 = por %p86, %p87
    %p89 = scmp.le.s32.totalorder 1, %s8
    %p90 = scmp.lt.s32.totalorder %s8, 3
    %p91 = pnand %p89, %p90
    %p92 = pneg %p91
    // Predicated region
    $region9: #{cost_reg_forward.11} parent=5 // pred_check
      _
    $region10: #{cost_reg_forward.11} parent=5 // pred_check_branch
      %94 = sbr.rel (%p91) target = $region12
    $region11: #{cost_reg_forward.11} parent=5 // pred_region
      %s95 = ssub.s32 %s8, 1
      // Predicated region
      $region13: #{cost_reg_forward.11} parent=11 // pred_check
        %p96 = pneg %p55
      $region14: #{cost_reg_forward.11} parent=11 // pred_check_branch
        %98 = sbr.rel (%p96) target = $region16
      $region15: #{cost_reg_forward.11} parent=11 // pred_region
        _
      $region16: #{cost_reg_forward.11} parent=11 // pred_fallthru
        _
    $region12: #{cost_reg_forward.11} parent=5 // pred_fallthru
      _
    %p99 = scmp.lt.s32.totalorder %s8, 2
    // Predicated region
    $region17: #{cost_reg_forward.11} parent=5 // pred_check
      %p100 = pneg %p99
    $region18: #{cost_reg_forward.11} parent=5 // pred_check_branch
      %102 = sbr.rel (%p100) target = $region20
    $region19: #{cost_reg_forward.11} parent=5 // pred_region
      // Predicated region
      $region21: #{cost_reg_forward.11} parent=19 // pred_check
        %p103 = pneg %p28
      $region22: #{cost_reg_forward.11} parent=19 // pred_check_branch
        %105 = sbr.rel (%p103) target = $region24
      $region23: #{cost_reg_forward.11} parent=19 // pred_region
        %s106 = smul.u32 128, %s8
        %p107 = scmp.lt.s32.totalorder %s106, 255
        %s108 = scalar_select %p107, %s106, 255
        %s109 = smul.addr %s108, 7
        %s110 = smul.addr %s109, 4
        %s111 = scalar_lea.vmem %s0, %s110
        %s112 = smul.u32 128, %s8
      $region24: #{cost_reg_forward.11} parent=19 // pred_fallthru
        _
    $region20: #{cost_reg_forward.11} parent=5 // pred_fallthru
      _
    %p113 = scmp.le.s32.totalorder 1, %s8
    %p114 = scmp.lt.s32.totalorder %s8, 3
    %p115 = pnand %p113, %p114
    %p116 = pneg %p115
    // Predicated region
    $region25: #{cost_reg_forward.11} parent=5 // pred_check
      _
    $region26: #{cost_reg_forward.11} parent=5 // pred_check_branch
      %118 = sbr.rel (%p115) target = $region28
    $region27: #{cost_reg_forward.11} parent=5 // pred_region
      %s119 = ssub.s32 %s8, 1
      %s120 = smul.u32 128, %s13
      %p121 = scmp.lt.s32.totalorder %s120, 255
      %s122 = scalar_select %p121, %s120, 255
      %s123 = smul.addr %s122, 7
      %s124 = smul.addr %s123, 4
      %s125 = scalar_lea.vmem %s0, %s124
      %p126 = pneg %p34
      %p127 = pneg %p31
      %p128 = pneg %p55
      %p129 = pneg %p52
      %p130 = pneg %p81
      %p131 = pneg %p78
      %s132 = smul.u32 128, %s13
      %p133 = scmp.lt.s32.totalorder %s132, 255
      %s134 = scalar_select %p133, %s132, 255
      %s135 = smul.addr %s134, 4
      %s136 = scalar_lea.vmem %s2, %s135
      %s137 = smul.u32 128, %s13
      %p138 = scmp.lt.s32.totalorder %s137, 255
      %s139 = scalar_select %p138, %s137, 255
      %s140 = smul.addr %s139, 7
      %s141 = smul.addr %s140, 4
      %s142 = scalar_lea.vmem %s0, %s141
      %s143 = smul.u32 128, %s13
      %s144 = smul.u32 128, %s13
      %p145 = scmp.lt.s32.totalorder %s144, 255
      %s146 = scalar_select %p145, %s144, 255
      %s147 = smul.addr %s146, 4
      %s148 = scalar_lea.vmem %s2, %s147
      %s149 = smul.u32 128, %s13
      %v151 = vld [vmem:[%s142] sm:$0xff]
      %v152 = vld [vmem:[%s142 + $0x8] sm:$0xff]
      %v153 = vld [vmem:[%s142 + $0x10] sm:$0xff]
      %v154 = vld [vmem:[%s142 + $0x18] sm:$0xf]
      %v155 = vld [vmem:[%s142 + $0x1c] sm:$0xff]
      %v156 = vld [vmem:[%s142 + $0x24] sm:$0xff]
      %v157 = vld [vmem:[%s142 + $0x2c] sm:$0xff]
      %v158 = vld [vmem:[%s142 + $0x34] sm:$0xf]
      %v159 = vld [vmem:[%s142 + $0x38] sm:$0xff]
      %v160 = vld [vmem:[%s142 + $0x40] sm:$0xff]
      %v161 = vld [vmem:[%s142 + $0x48] sm:$0xff]
      %v162 = vld [vmem:[%s142 + $0x50] sm:$0xf]
      %v163 = vld [vmem:[%s142 + $0x54] sm:$0xff]
      %v164 = vld [vmem:[%s142 + $0x5c] sm:$0xff]
      %v165 = vld [vmem:[%s142 + $0x64] sm:$0xff]
      %v166 = vld [vmem:[%s142 + $0x6c] sm:$0xf]
      %v167 = vld [vmem:[%s142 + $0x70] sm:$0xff]
      %v168 = vld [vmem:[%s142 + $0x78] sm:$0xff]
      %v169 = vld [vmem:[%s142 + $0x80] sm:$0xff]
      %v170 = vld [vmem:[%s142 + $0x88] sm:$0xf]
      %v171 = vld [vmem:[%s142 + $0x8c] sm:$0xff]
      %v172 = vld [vmem:[%s142 + $0x94] sm:$0xff]
      %v173 = vld [vmem:[%s142 + $0x9c] sm:$0xff]
      %v174 = vld [vmem:[%s142 + $0xa4] sm:$0xf]
      %v175 = vld [vmem:[%s142 + $0xa8] sm:$0xff]
      %v176 = vld [vmem:[%s142 + $0xb0] sm:$0xff]
      %v177 = vld [vmem:[%s142 + $0xb8] sm:$0xff]
      %v178 = vld [vmem:[%s142 + $0xc0] sm:$0xf]
      %v179 = vld [vmem:[%s142 + $0xc4] sm:$0xff]
      %v180 = vld [vmem:[%s142 + $0xcc] sm:$0xff]
      %v181 = vld [vmem:[%s142 + $0xd4] sm:$0xff]
      %v182 = vld [vmem:[%s142 + $0xdc] sm:$0xf]
      %v183 = vld [vmem:[%s142 + $0xe0] sm:$0xff]
      %v184 = vld [vmem:[%s142 + $0xe8] sm:$0xff]
      %v185 = vld [vmem:[%s142 + $0xf0] sm:$0xff]
      %v186 = vld [vmem:[%s142 + $0xf8] sm:$0xf]
      %v187 = vld [vmem:[%s142 + $0xfc] sm:$0xff]
      %v188 = vld [vmem:[%s142 + $0x104] sm:$0xff]
      %v189 = vld [vmem:[%s142 + $0x10c] sm:$0xff]
      %v190 = vld [vmem:[%s142 + $0x114] sm:$0xf]
      %v191 = vld [vmem:[%s142 + $0x118] sm:$0xff]
      %v192 = vld [vmem:[%s142 + $0x120] sm:$0xff]
      %v193 = vld [vmem:[%s142 + $0x128] sm:$0xff]
      %v194 = vld [vmem:[%s142 + $0x130] sm:$0xf]
      %v195 = vld [vmem:[%s142 + $0x134] sm:$0xff]
      %v196 = vld [vmem:[%s142 + $0x13c] sm:$0xff]
      %v197 = vld [vmem:[%s142 + $0x144] sm:$0xff]
      %v198 = vld [vmem:[%s142 + $0x14c] sm:$0xf]
      %v199 = vld [vmem:[%s142 + $0x150] sm:$0xff]
      %v200 = vld [vmem:[%s142 + $0x158] sm:$0xff]
      %v201 = vld [vmem:[%s142 + $0x160] sm:$0xff]
      %v202 = vld [vmem:[%s142 + $0x168] sm:$0xf]
      %v203 = vld [vmem:[%s142 + $0x16c] sm:$0xff]
      %v204 = vld [vmem:[%s142 + $0x174] sm:$0xff]
      %v205 = vld [vmem:[%s142 + $0x17c] sm:$0xff]
      %v206 = vld [vmem:[%s142 + $0x184] sm:$0xf]
      %v207 = vld [vmem:[%s142 + $0x188] sm:$0xff]
      %v208 = vld [vmem:[%s142 + $0x190] sm:$0xff]
      %v209 = vld [vmem:[%s142 + $0x198] sm:$0xff]
      %v210 = vld [vmem:[%s142 + $0x1a0] sm:$0xf]
      %v211 = vld [vmem:[%s142 + $0x1a4] sm:$0xff]
      %v212 = vld [vmem:[%s142 + $0x1ac] sm:$0xff]
      %v213 = vld [vmem:[%s142 + $0x1b4] sm:$0xff]
      %v214 = vld [vmem:[%s142 + $0x1bc] sm:$0xf]
      %v215 = vld [vmem:[%s142 + $0x1c0] sm:$0xff]
      %v216 = vld [vmem:[%s142 + $0x1c8] sm:$0xff]
      %v217 = vld [vmem:[%s142 + $0x1d0] sm:$0xff]
      %v218 = vld [vmem:[%s142 + $0x1d8] sm:$0xf]
      %v219 = vld [vmem:[%s142 + $0x1dc] sm:$0xff]
      %v220 = vld [vmem:[%s142 + $0x1e4] sm:$0xff]
      %v221 = vld [vmem:[%s142 + $0x1ec] sm:$0xff]
      %v222 = vld [vmem:[%s142 + $0x1f4] sm:$0xf]
      %v223 = vld [vmem:[%s142 + $0x1f8] sm:$0xff]
      %v224 = vld [vmem:[%s142 + $0x200] sm:$0xff]
      %v225 = vld [vmem:[%s142 + $0x208] sm:$0xff]
      %v226 = vld [vmem:[%s142 + $0x210] sm:$0xf]
      %v227 = vld [vmem:[%s142 + $0x214] sm:$0xff]
      %v228 = vld [vmem:[%s142 + $0x21c] sm:$0xff]
      %v229 = vld [vmem:[%s142 + $0x224] sm:$0xff]
      %v230 = vld [vmem:[%s142 + $0x22c] sm:$0xf]
      %v231 = vld [vmem:[%s142 + $0x230] sm:$0xff]
      %v232 = vld [vmem:[%s142 + $0x238] sm:$0xff]
      %v233 = vld [vmem:[%s142 + $0x240] sm:$0xff]
      %v234 = vld [vmem:[%s142 + $0x248] sm:$0xf]
      %v235 = vld [vmem:[%s142 + $0x24c] sm:$0xff]
      %v236 = vld [vmem:[%s142 + $0x254] sm:$0xff]
      %v237 = vld [vmem:[%s142 + $0x25c] sm:$0xff]
      %v238 = vld [vmem:[%s142 + $0x264] sm:$0xf]
      %v239 = vld [vmem:[%s142 + $0x268] sm:$0xff]
      %v240 = vld [vmem:[%s142 + $0x270] sm:$0xff]
      %v241 = vld [vmem:[%s142 + $0x278] sm:$0xff]
      %v242 = vld [vmem:[%s142 + $0x280] sm:$0xf]
      %v243 = vld [vmem:[%s142 + $0x284] sm:$0xff]
      %v244 = vld [vmem:[%s142 + $0x28c] sm:$0xff]
      %v245 = vld [vmem:[%s142 + $0x294] sm:$0xff]
      %v246 = vld [vmem:[%s142 + $0x29c] sm:$0xf]
      %v247 = vld [vmem:[%s142 + $0x2a0] sm:$0xff]
      %v248 = vld [vmem:[%s142 + $0x2a8] sm:$0xff]
      %v249 = vld [vmem:[%s142 + $0x2b0] sm:$0xff]
      %v250 = vld [vmem:[%s142 + $0x2b8] sm:$0xf]
      %v251 = vld [vmem:[%s142 + $0x2bc] sm:$0xff]
      %v252 = vld [vmem:[%s142 + $0x2c4] sm:$0xff]
      %v253 = vld [vmem:[%s142 + $0x2cc] sm:$0xff]
      %v254 = vld [vmem:[%s142 + $0x2d4] sm:$0xf]
      %v255 = vld [vmem:[%s142 + $0x2d8] sm:$0xff]
      %v256 = vld [vmem:[%s142 + $0x2e0] sm:$0xff]
      %v257 = vld [vmem:[%s142 + $0x2e8] sm:$0xff]
      %v258 = vld [vmem:[%s142 + $0x2f0] sm:$0xf]
      %v259 = vld [vmem:[%s142 + $0x2f4] sm:$0xff]
      %v260 = vld [vmem:[%s142 + $0x2fc] sm:$0xff]
      %v261 = vld [vmem:[%s142 + $0x304] sm:$0xff]
      %v262 = vld [vmem:[%s142 + $0x30c] sm:$0xf]
      %v263 = vld [vmem:[%s142 + $0x310] sm:$0xff]
      %v264 = vld [vmem:[%s142 + $0x318] sm:$0xff]
      %v265 = vld [vmem:[%s142 + $0x320] sm:$0xff]
      %v266 = vld [vmem:[%s142 + $0x328] sm:$0xf]
      %v267 = vld [vmem:[%s142 + $0x32c] sm:$0xff]
      %v268 = vld [vmem:[%s142 + $0x334] sm:$0xff]
      %v269 = vld [vmem:[%s142 + $0x33c] sm:$0xff]
      %v270 = vld [vmem:[%s142 + $0x344] sm:$0xf]
      %v271 = vld [vmem:[%s142 + $0x348] sm:$0xff]
      %v272 = vld [vmem:[%s142 + $0x350] sm:$0xff]
      %v273 = vld [vmem:[%s142 + $0x358] sm:$0xff]
      %v274 = vld [vmem:[%s142 + $0x360] sm:$0xf]
      %v275 = vld [vmem:[%s142 + $0x364] sm:$0xff]
      %v276 = vld [vmem:[%s142 + $0x36c] sm:$0xff]
      %v277 = vld [vmem:[%s142 + $0x374] sm:$0xff]
      %v278 = vld [vmem:[%s142 + $0x37c] sm:$0xf]
      %v279 = vld [vmem:[%s142 + $0x380] sm:$0xff]
      %v280 = vld [vmem:[%s142 + $0x388] sm:$0xff]
      %v281 = vld [vmem:[%s142 + $0x390] sm:$0xff]
      %v282 = vld [vmem:[%s142 + $0x398] sm:$0xf]
      %v283 = vld [vmem:[%s142 + $0x39c] sm:$0xff]
      %v284 = vld [vmem:[%s142 + $0x3a4] sm:$0xff]
      %v285 = vld [vmem:[%s142 + $0x3ac] sm:$0xff]
      %v286 = vld [vmem:[%s142 + $0x3b4] sm:$0xf]
      %v287 = vld [vmem:[%s142 + $0x3b8] sm:$0xff]
      %v288 = vld [vmem:[%s142 + $0x3c0] sm:$0xff]
      %v289 = vld [vmem:[%s142 + $0x3c8] sm:$0xff]
      %v290 = vld [vmem:[%s142 + $0x3d0] sm:$0xf]
      %v291 = vld [vmem:[%s142 + $0x3d4] sm:$0xff]
      %v292 = vld [vmem:[%s142 + $0x3dc] sm:$0xff]
      %v293 = vld [vmem:[%s142 + $0x3e4] sm:$0xff]
      %v294 = vld [vmem:[%s142 + $0x3ec] sm:$0xf]
      %v295 = vld [vmem:[%s142 + $0x3f0] sm:$0xff]
      %v296 = vld [vmem:[%s142 + $0x3f8] sm:$0xff]
      %v297 = vld [vmem:[%s142 + $0x400] sm:$0xff]
      %v298 = vld [vmem:[%s142 + $0x408] sm:$0xf]
      %v299 = vld [vmem:[%s142 + $0x40c] sm:$0xff]
      %v300 = vld [vmem:[%s142 + $0x414] sm:$0xff]
      %v301 = vld [vmem:[%s142 + $0x41c] sm:$0xff]
      %v302 = vld [vmem:[%s142 + $0x424] sm:$0xf]
      %v303 = vld [vmem:[%s142 + $0x428] sm:$0xff]
      %v304 = vld [vmem:[%s142 + $0x430] sm:$0xff]
      %v305 = vld [vmem:[%s142 + $0x438] sm:$0xff]
      %v306 = vld [vmem:[%s142 + $0x440] sm:$0xf]
      %v307 = vld [vmem:[%s142 + $0x444] sm:$0xff]
      %v308 = vld [vmem:[%s142 + $0x44c] sm:$0xff]
      %v309 = vld [vmem:[%s142 + $0x454] sm:$0xff]
      %v310 = vld [vmem:[%s142 + $0x45c] sm:$0xf]
      %v311 = vld [vmem:[%s142 + $0x460] sm:$0xff]
      %v312 = vld [vmem:[%s142 + $0x468] sm:$0xff]
      %v313 = vld [vmem:[%s142 + $0x470] sm:$0xff]
      %v314 = vld [vmem:[%s142 + $0x478] sm:$0xf]
      %v315 = vld [vmem:[%s142 + $0x47c] sm:$0xff]
      %v316 = vld [vmem:[%s142 + $0x484] sm:$0xff]
      %v317 = vld [vmem:[%s142 + $0x48c] sm:$0xff]
      %v318 = vld [vmem:[%s142 + $0x494] sm:$0xf]
      %v319 = vld [vmem:[%s142 + $0x498] sm:$0xff]
      %v320 = vld [vmem:[%s142 + $0x4a0] sm:$0xff]
      %v321 = vld [vmem:[%s142 + $0x4a8] sm:$0xff]
      %v322 = vld [vmem:[%s142 + $0x4b0] sm:$0xf]
      %v323 = vld [vmem:[%s142 + $0x4b4] sm:$0xff]
      %v324 = vld [vmem:[%s142 + $0x4bc] sm:$0xff]
      %v325 = vld [vmem:[%s142 + $0x4c4] sm:$0xff]
      %v326 = vld [vmem:[%s142 + $0x4cc] sm:$0xf]
      %v327 = vld [vmem:[%s142 + $0x4d0] sm:$0xff]
      %v328 = vld [vmem:[%s142 + $0x4d8] sm:$0xff]
      %v329 = vld [vmem:[%s142 + $0x4e0] sm:$0xff]
      %v330 = vld [vmem:[%s142 + $0x4e8] sm:$0xf]
      %v331 = vld [vmem:[%s142 + $0x4ec] sm:$0xff]
      %v332 = vld [vmem:[%s142 + $0x4f4] sm:$0xff]
      %v333 = vld [vmem:[%s142 + $0x4fc] sm:$0xff]
      %v334 = vld [vmem:[%s142 + $0x504] sm:$0xf]
      %v335 = vld [vmem:[%s142 + $0x508] sm:$0xff]
      %v336 = vld [vmem:[%s142 + $0x510] sm:$0xff]
      %v337 = vld [vmem:[%s142 + $0x518] sm:$0xff]
      %v338 = vld [vmem:[%s142 + $0x520] sm:$0xf]
      %v339 = vld [vmem:[%s142 + $0x524] sm:$0xff]
      %v340 = vld [vmem:[%s142 + $0x52c] sm:$0xff]
      %v341 = vld [vmem:[%s142 + $0x534] sm:$0xff]
      %v342 = vld [vmem:[%s142 + $0x53c] sm:$0xf]
      %v343 = vld [vmem:[%s142 + $0x540] sm:$0xff]
      %v344 = vld [vmem:[%s142 + $0x548] sm:$0xff]
      %v345 = vld [vmem:[%s142 + $0x550] sm:$0xff]
      %v346 = vld [vmem:[%s142 + $0x558] sm:$0xf]
      %v347 = vld [vmem:[%s142 + $0x55c] sm:$0xff]
      %v348 = vld [vmem:[%s142 + $0x564] sm:$0xff]
      %v349 = vld [vmem:[%s142 + $0x56c] sm:$0xff]
      %v350 = vld [vmem:[%s142 + $0x574] sm:$0xf]
      %v351 = vld [vmem:[%s142 + $0x578] sm:$0xff]
      %v352 = vld [vmem:[%s142 + $0x580] sm:$0xff]
      %v353 = vld [vmem:[%s142 + $0x588] sm:$0xff]
      %v354 = vld [vmem:[%s142 + $0x590] sm:$0xf]
      %v355 = vld [vmem:[%s142 + $0x594] sm:$0xff]
      %v356 = vld [vmem:[%s142 + $0x59c] sm:$0xff]
      %v357 = vld [vmem:[%s142 + $0x5a4] sm:$0xff]
      %v358 = vld [vmem:[%s142 + $0x5ac] sm:$0xf]
      %v359 = vld [vmem:[%s142 + $0x5b0] sm:$0xff]
      %v360 = vld [vmem:[%s142 + $0x5b8] sm:$0xff]
      %v361 = vld [vmem:[%s142 + $0x5c0] sm:$0xff]
      %v362 = vld [vmem:[%s142 + $0x5c8] sm:$0xf]
      %v363 = vld [vmem:[%s142 + $0x5cc] sm:$0xff]
      %v364 = vld [vmem:[%s142 + $0x5d4] sm:$0xff]
      %v365 = vld [vmem:[%s142 + $0x5dc] sm:$0xff]
      %v366 = vld [vmem:[%s142 + $0x5e4] sm:$0xf]
      %v367 = vld [vmem:[%s142 + $0x5e8] sm:$0xff]
      %v368 = vld [vmem:[%s142 + $0x5f0] sm:$0xff]
      %v369 = vld [vmem:[%s142 + $0x5f8] sm:$0xff]
      %v370 = vld [vmem:[%s142 + $0x600] sm:$0xf]
      %v371 = vld [vmem:[%s142 + $0x604] sm:$0xff]
      %v372 = vld [vmem:[%s142 + $0x60c] sm:$0xff]
      %v373 = vld [vmem:[%s142 + $0x614] sm:$0xff]
      %v374 = vld [vmem:[%s142 + $0x61c] sm:$0xf]
      %v375 = vld [vmem:[%s142 + $0x620] sm:$0xff]
      %v376 = vld [vmem:[%s142 + $0x628] sm:$0xff]
      %v377 = vld [vmem:[%s142 + $0x630] sm:$0xff]
      %v378 = vld [vmem:[%s142 + $0x638] sm:$0xf]
      %v379 = vld [vmem:[%s142 + $0x63c] sm:$0xff]
      %v380 = vld [vmem:[%s142 + $0x644] sm:$0xff]
      %v381 = vld [vmem:[%s142 + $0x64c] sm:$0xff]
      %v382 = vld [vmem:[%s142 + $0x654] sm:$0xf]
      %v383 = vld [vmem:[%s142 + $0x658] sm:$0xff]
      %v384 = vld [vmem:[%s142 + $0x660] sm:$0xff]
      %v385 = vld [vmem:[%s142 + $0x668] sm:$0xff]
      %v386 = vld [vmem:[%s142 + $0x670] sm:$0xf]
      %v387 = vld [vmem:[%s142 + $0x674] sm:$0xff]
      %v388 = vld [vmem:[%s142 + $0x67c] sm:$0xff]
      %v389 = vld [vmem:[%s142 + $0x684] sm:$0xff]
      %v390 = vld [vmem:[%s142 + $0x68c] sm:$0xf]
      %v391 = vld [vmem:[%s142 + $0x690] sm:$0xff]
      %v392 = vld [vmem:[%s142 + $0x698] sm:$0xff]
      %v393 = vld [vmem:[%s142 + $0x6a0] sm:$0xff]
      %v394 = vld [vmem:[%s142 + $0x6a8] sm:$0xf]
      %v395 = vld [vmem:[%s142 + $0x6ac] sm:$0xff]
      %v396 = vld [vmem:[%s142 + $0x6b4] sm:$0xff]
      %v397 = vld [vmem:[%s142 + $0x6bc] sm:$0xff]
      %v398 = vld [vmem:[%s142 + $0x6c4] sm:$0xf]
      %v399 = vld [vmem:[%s142 + $0x6c8] sm:$0xff]
      %v400 = vld [vmem:[%s142 + $0x6d0] sm:$0xff]
      %v401 = vld [vmem:[%s142 + $0x6d8] sm:$0xff]
      %v402 = vld [vmem:[%s142 + $0x6e0] sm:$0xf]
      %v403 = vld [vmem:[%s142 + $0x6e4] sm:$0xff]
      %v404 = vld [vmem:[%s142 + $0x6ec] sm:$0xff]
      %v405 = vld [vmem:[%s142 + $0x6f4] sm:$0xff]
      %v406 = vld [vmem:[%s142 + $0x6fc] sm:$0xf]
      %v407 = vld [vmem:[%s142 + $0x700] sm:$0xff]
      %v408 = vld [vmem:[%s142 + $0x708] sm:$0xff]
      %v409 = vld [vmem:[%s142 + $0x710] sm:$0xff]
      %v410 = vld [vmem:[%s142 + $0x718] sm:$0xf]
      %v411 = vld [vmem:[%s142 + $0x71c] sm:$0xff]
      %v412 = vld [vmem:[%s142 + $0x724] sm:$0xff]
      %v413 = vld [vmem:[%s142 + $0x72c] sm:$0xff]
      %v414 = vld [vmem:[%s142 + $0x734] sm:$0xf]
      %v415 = vld [vmem:[%s142 + $0x738] sm:$0xff]
      %v416 = vld [vmem:[%s142 + $0x740] sm:$0xff]
      %v417 = vld [vmem:[%s142 + $0x748] sm:$0xff]
      %v418 = vld [vmem:[%s142 + $0x750] sm:$0xf]
      %v419 = vld [vmem:[%s142 + $0x754] sm:$0xff]
      %v420 = vld [vmem:[%s142 + $0x75c] sm:$0xff]
      %v421 = vld [vmem:[%s142 + $0x764] sm:$0xff]
      %v422 = vld [vmem:[%s142 + $0x76c] sm:$0xf]
      %v423 = vld [vmem:[%s142 + $0x770] sm:$0xff]
      %v424 = vld [vmem:[%s142 + $0x778] sm:$0xff]
      %v425 = vld [vmem:[%s142 + $0x780] sm:$0xff]
      %v426 = vld [vmem:[%s142 + $0x788] sm:$0xf]
      %v427 = vld [vmem:[%s142 + $0x78c] sm:$0xff]
      %v428 = vld [vmem:[%s142 + $0x794] sm:$0xff]
      %v429 = vld [vmem:[%s142 + $0x79c] sm:$0xff]
      %v430 = vld [vmem:[%s142 + $0x7a4] sm:$0xf]
      %v431 = vld [vmem:[%s142 + $0x7a8] sm:$0xff]
      %v432 = vld [vmem:[%s142 + $0x7b0] sm:$0xff]
      %v433 = vld [vmem:[%s142 + $0x7b8] sm:$0xff]
      %v434 = vld [vmem:[%s142 + $0x7c0] sm:$0xf]
      %v435 = vld [vmem:[%s142 + $0x7c4] sm:$0xff]
      %v436 = vld [vmem:[%s142 + $0x7cc] sm:$0xff]
      %v437 = vld [vmem:[%s142 + $0x7d4] sm:$0xff]
      %v438 = vld [vmem:[%s142 + $0x7dc] sm:$0xf]
      %v439 = vld [vmem:[%s142 + $0x7e0] sm:$0xff]
      %v440 = vld [vmem:[%s142 + $0x7e8] sm:$0xff]
      %v441 = vld [vmem:[%s142 + $0x7f0] sm:$0xff]
      %v442 = vld [vmem:[%s142 + $0x7f8] sm:$0xf]
      %v443 = vld [vmem:[%s142 + $0x7fc] sm:$0xff]
      %v444 = vld [vmem:[%s142 + $0x804] sm:$0xff]
      %v445 = vld [vmem:[%s142 + $0x80c] sm:$0xff]
      %v446 = vld [vmem:[%s142 + $0x814] sm:$0xf]
      %v447 = vld [vmem:[%s142 + $0x818] sm:$0xff]
      %v448 = vld [vmem:[%s142 + $0x820] sm:$0xff]
      %v449 = vld [vmem:[%s142 + $0x828] sm:$0xff]
      %v450 = vld [vmem:[%s142 + $0x830] sm:$0xf]
      %v451 = vld [vmem:[%s142 + $0x834] sm:$0xff]
      %v452 = vld [vmem:[%s142 + $0x83c] sm:$0xff]
      %v453 = vld [vmem:[%s142 + $0x844] sm:$0xff]
      %v454 = vld [vmem:[%s142 + $0x84c] sm:$0xf]
      %v455 = vld [vmem:[%s142 + $0x850] sm:$0xff]
      %v456 = vld [vmem:[%s142 + $0x858] sm:$0xff]
      %v457 = vld [vmem:[%s142 + $0x860] sm:$0xff]
      %v458 = vld [vmem:[%s142 + $0x868] sm:$0xf]
      %v459 = vld [vmem:[%s142 + $0x86c] sm:$0xff]
      %v460 = vld [vmem:[%s142 + $0x874] sm:$0xff]
      %v461 = vld [vmem:[%s142 + $0x87c] sm:$0xff]
      %v462 = vld [vmem:[%s142 + $0x884] sm:$0xf]
      %v463 = vld [vmem:[%s142 + $0x888] sm:$0xff]
      %v464 = vld [vmem:[%s142 + $0x890] sm:$0xff]
      %v465 = vld [vmem:[%s142 + $0x898] sm:$0xff]
      %v466 = vld [vmem:[%s142 + $0x8a0] sm:$0xf]
      %v467 = vld [vmem:[%s142 + $0x8a4] sm:$0xff]
      %v468 = vld [vmem:[%s142 + $0x8ac] sm:$0xff]
      %v469 = vld [vmem:[%s142 + $0x8b4] sm:$0xff]
      %v470 = vld [vmem:[%s142 + $0x8bc] sm:$0xf]
      %v471 = vld [vmem:[%s142 + $0x8c0] sm:$0xff]
      %v472 = vld [vmem:[%s142 + $0x8c8] sm:$0xff]
      %v473 = vld [vmem:[%s142 + $0x8d0] sm:$0xff]
      %v474 = vld [vmem:[%s142 + $0x8d8] sm:$0xf]
      %v475 = vld [vmem:[%s142 + $0x8dc] sm:$0xff]
      %v476 = vld [vmem:[%s142 + $0x8e4] sm:$0xff]
      %v477 = vld [vmem:[%s142 + $0x8ec] sm:$0xff]
      %v478 = vld [vmem:[%s142 + $0x8f4] sm:$0xf]
      %v479 = vld [vmem:[%s142 + $0x8f8] sm:$0xff]
      %v480 = vld [vmem:[%s142 + $0x900] sm:$0xff]
      %v481 = vld [vmem:[%s142 + $0x908] sm:$0xff]
      %v482 = vld [vmem:[%s142 + $0x910] sm:$0xf]
      %v483 = vld [vmem:[%s142 + $0x914] sm:$0xff]
      %v484 = vld [vmem:[%s142 + $0x91c] sm:$0xff]
      %v485 = vld [vmem:[%s142 + $0x924] sm:$0xff]
      %v486 = vld [vmem:[%s142 + $0x92c] sm:$0xf]
      %v487 = vld [vmem:[%s142 + $0x930] sm:$0xff]
      %v488 = vld [vmem:[%s142 + $0x938] sm:$0xff]
      %v489 = vld [vmem:[%s142 + $0x940] sm:$0xff]
      %v490 = vld [vmem:[%s142 + $0x948] sm:$0xf]
      %v491 = vld [vmem:[%s142 + $0x94c] sm:$0xff]
      %v492 = vld [vmem:[%s142 + $0x954] sm:$0xff]
      %v493 = vld [vmem:[%s142 + $0x95c] sm:$0xff]
      %v494 = vld [vmem:[%s142 + $0x964] sm:$0xf]
      %v495 = vld [vmem:[%s142 + $0x968] sm:$0xff]
      %v496 = vld [vmem:[%s142 + $0x970] sm:$0xff]
      %v497 = vld [vmem:[%s142 + $0x978] sm:$0xff]
      %v498 = vld [vmem:[%s142 + $0x980] sm:$0xf]
      %v499 = vld [vmem:[%s142 + $0x984] sm:$0xff]
      %v500 = vld [vmem:[%s142 + $0x98c] sm:$0xff]
      %v501 = vld [vmem:[%s142 + $0x994] sm:$0xff]
      %v502 = vld [vmem:[%s142 + $0x99c] sm:$0xf]
      %v503 = vld [vmem:[%s142 + $0x9a0] sm:$0xff]
      %v504 = vld [vmem:[%s142 + $0x9a8] sm:$0xff]
      %v505 = vld [vmem:[%s142 + $0x9b0] sm:$0xff]
      %v506 = vld [vmem:[%s142 + $0x9b8] sm:$0xf]
      %v507 = vld [vmem:[%s142 + $0x9bc] sm:$0xff]
      %v508 = vld [vmem:[%s142 + $0x9c4] sm:$0xff]
      %v509 = vld [vmem:[%s142 + $0x9cc] sm:$0xff]
      %v510 = vld [vmem:[%s142 + $0x9d4] sm:$0xf]
      %v511 = vld [vmem:[%s142 + $0x9d8] sm:$0xff]
      %v512 = vld [vmem:[%s142 + $0x9e0] sm:$0xff]
      %v513 = vld [vmem:[%s142 + $0x9e8] sm:$0xff]
      %v514 = vld [vmem:[%s142 + $0x9f0] sm:$0xf]
      %v515 = vld [vmem:[%s142 + $0x9f4] sm:$0xff]
      %v516 = vld [vmem:[%s142 + $0x9fc] sm:$0xff]
      %v517 = vld [vmem:[%s142 + $0xa04] sm:$0xff]
      %v518 = vld [vmem:[%s142 + $0xa0c] sm:$0xf]
      %v519 = vld [vmem:[%s142 + $0xa10] sm:$0xff]
      %v520 = vld [vmem:[%s142 + $0xa18] sm:$0xff]
      %v521 = vld [vmem:[%s142 + $0xa20] sm:$0xff]
      %v522 = vld [vmem:[%s142 + $0xa28] sm:$0xf]
      %v523 = vld [vmem:[%s142 + $0xa2c] sm:$0xff]
      %v524 = vld [vmem:[%s142 + $0xa34] sm:$0xff]
      %v525 = vld [vmem:[%s142 + $0xa3c] sm:$0xff]
      %v526 = vld [vmem:[%s142 + $0xa44] sm:$0xf]
      %v527 = vld [vmem:[%s142 + $0xa48] sm:$0xff]
      %v528 = vld [vmem:[%s142 + $0xa50] sm:$0xff]
      %v529 = vld [vmem:[%s142 + $0xa58] sm:$0xff]
      %v530 = vld [vmem:[%s142 + $0xa60] sm:$0xf]
      %v531 = vld [vmem:[%s142 + $0xa64] sm:$0xff]
      %v532 = vld [vmem:[%s142 + $0xa6c] sm:$0xff]
      %v533 = vld [vmem:[%s142 + $0xa74] sm:$0xff]
      %v534 = vld [vmem:[%s142 + $0xa7c] sm:$0xf]
      %v535 = vld [vmem:[%s142 + $0xa80] sm:$0xff]
      %v536 = vld [vmem:[%s142 + $0xa88] sm:$0xff]
      %v537 = vld [vmem:[%s142 + $0xa90] sm:$0xff]
      %v538 = vld [vmem:[%s142 + $0xa98] sm:$0xf]
      %v539 = vld [vmem:[%s142 + $0xa9c] sm:$0xff]
      %v540 = vld [vmem:[%s142 + $0xaa4] sm:$0xff]
      %v541 = vld [vmem:[%s142 + $0xaac] sm:$0xff]
      %v542 = vld [vmem:[%s142 + $0xab4] sm:$0xf]
      %v543 = vld [vmem:[%s142 + $0xab8] sm:$0xff]
      %v544 = vld [vmem:[%s142 + $0xac0] sm:$0xff]
      %v545 = vld [vmem:[%s142 + $0xac8] sm:$0xff]
      %v546 = vld [vmem:[%s142 + $0xad0] sm:$0xf]
      %v547 = vld [vmem:[%s142 + $0xad4] sm:$0xff]
      %v548 = vld [vmem:[%s142 + $0xadc] sm:$0xff]
      %v549 = vld [vmem:[%s142 + $0xae4] sm:$0xff]
      %v550 = vld [vmem:[%s142 + $0xaec] sm:$0xf]
      %v551 = vld [vmem:[%s142 + $0xaf0] sm:$0xff]
      %v552 = vld [vmem:[%s142 + $0xaf8] sm:$0xff]
      %v553 = vld [vmem:[%s142 + $0xb00] sm:$0xff]
      %v554 = vld [vmem:[%s142 + $0xb08] sm:$0xf]
      %v555 = vld [vmem:[%s142 + $0xb0c] sm:$0xff]
      %v556 = vld [vmem:[%s142 + $0xb14] sm:$0xff]
      %v557 = vld [vmem:[%s142 + $0xb1c] sm:$0xff]
      %v558 = vld [vmem:[%s142 + $0xb24] sm:$0xf]
      %v559 = vld [vmem:[%s142 + $0xb28] sm:$0xff]
      %v560 = vld [vmem:[%s142 + $0xb30] sm:$0xff]
      %v561 = vld [vmem:[%s142 + $0xb38] sm:$0xff]
      %v562 = vld [vmem:[%s142 + $0xb40] sm:$0xf]
      %v563 = vld [vmem:[%s142 + $0xb44] sm:$0xff]
      %v564 = vld [vmem:[%s142 + $0xb4c] sm:$0xff]
      %v565 = vld [vmem:[%s142 + $0xb54] sm:$0xff]
      %v566 = vld [vmem:[%s142 + $0xb5c] sm:$0xf]
      %v567 = vld [vmem:[%s142 + $0xb60] sm:$0xff]
      %v568 = vld [vmem:[%s142 + $0xb68] sm:$0xff]
      %v569 = vld [vmem:[%s142 + $0xb70] sm:$0xff]
      %v570 = vld [vmem:[%s142 + $0xb78] sm:$0xf]
      %v571 = vld [vmem:[%s142 + $0xb7c] sm:$0xff]
      %v572 = vld [vmem:[%s142 + $0xb84] sm:$0xff]
      %v573 = vld [vmem:[%s142 + $0xb8c] sm:$0xff]
      %v574 = vld [vmem:[%s142 + $0xb94] sm:$0xf]
      %v575 = vld [vmem:[%s142 + $0xb98] sm:$0xff]
      %v576 = vld [vmem:[%s142 + $0xba0] sm:$0xff]
      %v577 = vld [vmem:[%s142 + $0xba8] sm:$0xff]
      %v578 = vld [vmem:[%s142 + $0xbb0] sm:$0xf]
      %v579 = vld [vmem:[%s142 + $0xbb4] sm:$0xff]
      %v580 = vld [vmem:[%s142 + $0xbbc] sm:$0xff]
      %v581 = vld [vmem:[%s142 + $0xbc4] sm:$0xff]
      %v582 = vld [vmem:[%s142 + $0xbcc] sm:$0xf]
      %v583 = vld [vmem:[%s142 + $0xbd0] sm:$0xff]
      %v584 = vld [vmem:[%s142 + $0xbd8] sm:$0xff]
      %v585 = vld [vmem:[%s142 + $0xbe0] sm:$0xff]
      %v586 = vld [vmem:[%s142 + $0xbe8] sm:$0xf]
      %v587 = vld [vmem:[%s142 + $0xbec] sm:$0xff]
      %v588 = vld [vmem:[%s142 + $0xbf4] sm:$0xff]
      %v589 = vld [vmem:[%s142 + $0xbfc] sm:$0xff]
      %v590 = vld [vmem:[%s142 + $0xc04] sm:$0xf]
      %v591 = vld [vmem:[%s142 + $0xc08] sm:$0xff]
      %v592 = vld [vmem:[%s142 + $0xc10] sm:$0xff]
      %v593 = vld [vmem:[%s142 + $0xc18] sm:$0xff]
      %v594 = vld [vmem:[%s142 + $0xc20] sm:$0xf]
      %v595 = vld [vmem:[%s142 + $0xc24] sm:$0xff]
      %v596 = vld [vmem:[%s142 + $0xc2c] sm:$0xff]
      %v597 = vld [vmem:[%s142 + $0xc34] sm:$0xff]
      %v598 = vld [vmem:[%s142 + $0xc3c] sm:$0xf]
      %v599 = vld [vmem:[%s142 + $0xc40] sm:$0xff]
      %v600 = vld [vmem:[%s142 + $0xc48] sm:$0xff]
      %v601 = vld [vmem:[%s142 + $0xc50] sm:$0xff]
      %v602 = vld [vmem:[%s142 + $0xc58] sm:$0xf]
      %v603 = vld [vmem:[%s142 + $0xc5c] sm:$0xff]
      %v604 = vld [vmem:[%s142 + $0xc64] sm:$0xff]
      %v605 = vld [vmem:[%s142 + $0xc6c] sm:$0xff]
      %v606 = vld [vmem:[%s142 + $0xc74] sm:$0xf]
      %v607 = vld [vmem:[%s142 + $0xc78] sm:$0xff]
      %v608 = vld [vmem:[%s142 + $0xc80] sm:$0xff]
      %v609 = vld [vmem:[%s142 + $0xc88] sm:$0xff]
      %v610 = vld [vmem:[%s142 + $0xc90] sm:$0xf]
      %v611 = vld [vmem:[%s142 + $0xc94] sm:$0xff]
      %v612 = vld [vmem:[%s142 + $0xc9c] sm:$0xff]
      %v613 = vld [vmem:[%s142 + $0xca4] sm:$0xff]
      %v614 = vld [vmem:[%s142 + $0xcac] sm:$0xf]
      %v615 = vld [vmem:[%s142 + $0xcb0] sm:$0xff]
      %v616 = vld [vmem:[%s142 + $0xcb8] sm:$0xff]
      %v617 = vld [vmem:[%s142 + $0xcc0] sm:$0xff]
      %v618 = vld [vmem:[%s142 + $0xcc8] sm:$0xf]
      %v619 = vld [vmem:[%s142 + $0xccc] sm:$0xff]
      %v620 = vld [vmem:[%s142 + $0xcd4] sm:$0xff]
      %v621 = vld [vmem:[%s142 + $0xcdc] sm:$0xff]
      %v622 = vld [vmem:[%s142 + $0xce4] sm:$0xf]
      %v623 = vld [vmem:[%s142 + $0xce8] sm:$0xff]
      %v624 = vld [vmem:[%s142 + $0xcf0] sm:$0xff]
      %v625 = vld [vmem:[%s142 + $0xcf8] sm:$0xff]
      %v626 = vld [vmem:[%s142 + $0xd00] sm:$0xf]
      %v627 = vld [vmem:[%s142 + $0xd04] sm:$0xff]
      %v628 = vld [vmem:[%s142 + $0xd0c] sm:$0xff]
      %v629 = vld [vmem:[%s142 + $0xd14] sm:$0xff]
      %v630 = vld [vmem:[%s142 + $0xd1c] sm:$0xf]
      %v631 = vld [vmem:[%s142 + $0xd20] sm:$0xff]
      %v632 = vld [vmem:[%s142 + $0xd28] sm:$0xff]
      %v633 = vld [vmem:[%s142 + $0xd30] sm:$0xff]
      %v634 = vld [vmem:[%s142 + $0xd38] sm:$0xf]
      %v635 = vld [vmem:[%s142 + $0xd3c] sm:$0xff]
      %v636 = vld [vmem:[%s142 + $0xd44] sm:$0xff]
      %v637 = vld [vmem:[%s142 + $0xd4c] sm:$0xff]
      %v638 = vld [vmem:[%s142 + $0xd54] sm:$0xf]
      %v639 = vld [vmem:[%s142 + $0xd58] sm:$0xff]
      %v640 = vld [vmem:[%s142 + $0xd60] sm:$0xff]
      %v641 = vld [vmem:[%s142 + $0xd68] sm:$0xff]
      %v642 = vld [vmem:[%s142 + $0xd70] sm:$0xf]
      %v643 = vld [vmem:[%s142 + $0xd74] sm:$0xff]
      %v644 = vld [vmem:[%s142 + $0xd7c] sm:$0xff]
      %v645 = vld [vmem:[%s142 + $0xd84] sm:$0xff]
      %v646 = vld [vmem:[%s142 + $0xd8c] sm:$0xf]
      %v647 = vld [vmem:[%s142 + $0xd90] sm:$0xff]
      %v648 = vld [vmem:[%s142 + $0xd98] sm:$0xff]
      %v649 = vld [vmem:[%s142 + $0xda0] sm:$0xff]
      %v650 = vld [vmem:[%s142 + $0xda8] sm:$0xf]
      %v651 = vld [vmem:[%s142 + $0xdac] sm:$0xff]
      %v652 = vld [vmem:[%s142 + $0xdb4] sm:$0xff]
      %v653 = vld [vmem:[%s142 + $0xdbc] sm:$0xff]
      %v654 = vld [vmem:[%s142 + $0xdc4] sm:$0xf]
      %v655 = vld [vmem:[%s142 + $0xdc8] sm:$0xff]
      %v656 = vld [vmem:[%s142 + $0xdd0] sm:$0xff]
      %v657 = vld [vmem:[%s142 + $0xdd8] sm:$0xff]
      %v658 = vld [vmem:[%s142 + $0xde0] sm:$0xf]
      %v659 = vld [vmem:[%s142 + $0xde4] sm:$0xff]
      %v660 = vld [vmem:[%s142 + $0xdec] sm:$0xff]
      %v661 = vld [vmem:[%s142 + $0xdf4] sm:$0xff]
      %v662 = vld [vmem:[%s142 + $0xdfc] sm:$0xf]
      %v663 = vld [vmem:[%s1] sm:$0xf]
      %v664 = vld [vmem:[%s1 + $0x4] sm:$0xf]
      %v665 = vld [vmem:[%s1 + $0x8] sm:$0xf]
      %v666 = vld [vmem:[%s1 + $0xc] sm:$0xf]
      %v667 = vld [vmem:[%s1 + $0x10] sm:$0xf]
      %v668 = vld [vmem:[%s1 + $0x14] sm:$0xf]
      %v669 = vld [vmem:[%s1 + $0x18] sm:$0xf]
      %v670 = vld [vmem:[%s1 + $0x1c] sm:$0xf]
      %v671 = vld [vmem:[%s1 + $0x20] sm:$0xf]
      %v672 = vld [vmem:[%s1 + $0x24] sm:$0xf]
      %v673 = vld [vmem:[%s1 + $0x28] sm:$0xf]
      %v674 = vld [vmem:[%s1 + $0x2c] sm:$0xf]
      %v675 = vld [vmem:[%s1 + $0x30] sm:$0xf]
      %v676 = vld [vmem:[%s1 + $0x34] sm:$0xf]
      %v677 = vld [vmem:[%s1 + $0x38] sm:$0xf]
      %v678 = vld [vmem:[%s1 + $0x3c] sm:$0xf]
      %v679 = vld [vmem:[%s1 + $0x40] sm:$0xf]
      %v680 = vld [vmem:[%s1 + $0x44] sm:$0xf]
      %v681 = vld [vmem:[%s1 + $0x48] sm:$0xf]
      %v682 = vld [vmem:[%s1 + $0x4c] sm:$0xf]
      %v683 = vld [vmem:[%s1 + $0x50] sm:$0xf]
      %v684 = vld [vmem:[%s1 + $0x54] sm:$0xf]
      %v685 = vld [vmem:[%s1 + $0x58] sm:$0xf]
      %v686 = vld [vmem:[%s1 + $0x5c] sm:$0xf]
      %v687 = vld [vmem:[%s1 + $0x60] sm:$0xf]
      %v688 = vld [vmem:[%s1 + $0x64] sm:$0xf]
      %v689 = vld [vmem:[%s1 + $0x68] sm:$0xf]
      %v690 = vld [vmem:[%s1 + $0x6c] sm:$0xf]
      %v691 = vld [vmem:[%s1 + $0x70] sm:$0xf]
      %v692 = vld [vmem:[%s1 + $0x74] sm:$0xf]
      %v693 = vld [vmem:[%s1 + $0x78] sm:$0xf]
      %v694 = vld [vmem:[%s1 + $0x7c] sm:$0xf]
      %v695 = vld [vmem:[%s1 + $0x80] sm:$0xf]
      %v696 = vld [vmem:[%s1 + $0x84] sm:$0xf]
      %v697 = vld [vmem:[%s1 + $0x88] sm:$0xf]
      %v698 = vld [vmem:[%s1 + $0x8c] sm:$0xf]
      %v699 = vld [vmem:[%s1 + $0x90] sm:$0xf]
      %v700 = vld [vmem:[%s1 + $0x94] sm:$0xf]
      %v701 = vld [vmem:[%s1 + $0x98] sm:$0xf]
      %v702 = vld [vmem:[%s1 + $0x9c] sm:$0xf]
      %v703 = vld [vmem:[%s1 + $0xa0] sm:$0xf]
      %v704 = vld [vmem:[%s1 + $0xa4] sm:$0xf]
      %v705 = vld [vmem:[%s1 + $0xa8] sm:$0xf]
      %v706 = vld [vmem:[%s1 + $0xac] sm:$0xf]
      %v707 = vld [vmem:[%s1 + $0xb0] sm:$0xf]
      %v708 = vld [vmem:[%s1 + $0xb4] sm:$0xf]
      %v709 = vld [vmem:[%s1 + $0xb8] sm:$0xf]
      %v710 = vld [vmem:[%s1 + $0xbc] sm:$0xf]
      %v711 = vld [vmem:[%s1 + $0xc0] sm:$0xf]
      %v712 = vld [vmem:[%s1 + $0xc4] sm:$0xf]
      %v713 = vld [vmem:[%s1 + $0xc8] sm:$0xf]
      %v714 = vld [vmem:[%s1 + $0xcc] sm:$0xf]
      %v715 = vld [vmem:[%s1 + $0xd0] sm:$0xf]
      %v716 = vld [vmem:[%s1 + $0xd4] sm:$0xf]
      %v717 = vld [vmem:[%s1 + $0xd8] sm:$0xf]
      %v718 = vld [vmem:[%s1 + $0xdc] sm:$0xf]
      %v719 = vld [vmem:[%s1 + $0xe0] sm:$0xf]
      %v720 = vld [vmem:[%s1 + $0xe4] sm:$0xf]
      %v721 = vld [vmem:[%s1 + $0xe8] sm:$0xf]
      %v722 = vld [vmem:[%s1 + $0xec] sm:$0xf]
      %v723 = vld [vmem:[%s1 + $0xf0] sm:$0xf]
      %v724 = vld [vmem:[%s1 + $0xf4] sm:$0xf]
      %v725 = vld [vmem:[%s1 + $0xf8] sm:$0xf]
      %v726 = vld [vmem:[%s1 + $0xfc] sm:$0xf]
      %v727 = vld [vmem:[%s1 + $0x100] sm:$0xf]
      %v728 = vld [vmem:[%s1 + $0x104] sm:$0xf]
      %v729 = vld [vmem:[%s1 + $0x108] sm:$0xf]
      %v730 = vld [vmem:[%s1 + $0x10c] sm:$0xf]
      %v731 = vld [vmem:[%s1 + $0x110] sm:$0xf]
      %v732 = vld [vmem:[%s1 + $0x114] sm:$0xf]
      %v733 = vld [vmem:[%s1 + $0x118] sm:$0xf]
      %v734 = vld [vmem:[%s1 + $0x11c] sm:$0xf]
      %v735 = vld [vmem:[%s1 + $0x120] sm:$0xf]
      %v736 = vld [vmem:[%s1 + $0x124] sm:$0xf]
      %v737 = vld [vmem:[%s1 + $0x128] sm:$0xf]
      %v738 = vld [vmem:[%s1 + $0x12c] sm:$0xf]
      %v739 = vld [vmem:[%s1 + $0x130] sm:$0xf]
      %v740 = vld [vmem:[%s1 + $0x134] sm:$0xf]
      %v741 = vld [vmem:[%s1 + $0x138] sm:$0xf]
      %v742 = vld [vmem:[%s1 + $0x13c] sm:$0xf]
      %v743 = vld [vmem:[%s1 + $0x140] sm:$0xf]
      %v744 = vld [vmem:[%s1 + $0x144] sm:$0xf]
      %v745 = vld [vmem:[%s1 + $0x148] sm:$0xf]
      %v746 = vld [vmem:[%s1 + $0x14c] sm:$0xf]
      %v747 = vld [vmem:[%s1 + $0x150] sm:$0xf]
      %v748 = vld [vmem:[%s1 + $0x154] sm:$0xf]
      %v749 = vld [vmem:[%s1 + $0x158] sm:$0xf]
      %v750 = vld [vmem:[%s1 + $0x15c] sm:$0xf]
      %v751 = vld [vmem:[%s1 + $0x160] sm:$0xf]
      %v752 = vld [vmem:[%s1 + $0x164] sm:$0xf]
      %v753 = vld [vmem:[%s1 + $0x168] sm:$0xf]
      %v754 = vld [vmem:[%s1 + $0x16c] sm:$0xf]
      %v755 = vld [vmem:[%s1 + $0x170] sm:$0xf]
      %v756 = vld [vmem:[%s1 + $0x174] sm:$0xf]
      %v757 = vld [vmem:[%s1 + $0x178] sm:$0xf]
      %v758 = vld [vmem:[%s1 + $0x17c] sm:$0xf]
      %v759 = vld [vmem:[%s1 + $0x180] sm:$0xf]
      %v760 = vld [vmem:[%s1 + $0x184] sm:$0xf]
      %v761 = vld [vmem:[%s1 + $0x188] sm:$0xf]
      %v762 = vld [vmem:[%s1 + $0x18c] sm:$0xf]
      %v763 = vld [vmem:[%s1 + $0x190] sm:$0xf]
      %v764 = vld [vmem:[%s1 + $0x194] sm:$0xf]
      %v765 = vld [vmem:[%s1 + $0x198] sm:$0xf]
      %v766 = vld [vmem:[%s1 + $0x19c] sm:$0xf]
      %v767 = vld [vmem:[%s1 + $0x1a0] sm:$0xf]
      %v768 = vld [vmem:[%s1 + $0x1a4] sm:$0xf]
      %v769 = vld [vmem:[%s1 + $0x1a8] sm:$0xf]
      %v770 = vld [vmem:[%s1 + $0x1ac] sm:$0xf]
      %v1283 = vunpack.c.l.b16 %v151
      %v1284 = vunpack.c.h.b16 %v151
      %v1285 = vunpack.c.l.b16 %v152
      %v1286 = vunpack.c.h.b16 %v152
      %v1287 = vunpack.c.l.b16 %v153
      %v1288 = vunpack.c.h.b16 %v153
      %v1289 = vunpack.c.l.b16 %v154
      %v1290 = vunpack.c.l.b16 %v155
      %v1291 = vunpack.c.h.b16 %v155
      %v1292 = vunpack.c.l.b16 %v156
      %v1293 = vunpack.c.h.b16 %v156
      %v1294 = vunpack.c.l.b16 %v157
      %v1295 = vunpack.c.h.b16 %v157
      %v1296 = vunpack.c.l.b16 %v158
      %v1297 = vunpack.c.l.b16 %v159
      %v1298 = vunpack.c.h.b16 %v159
      %v1299 = vunpack.c.l.b16 %v160
      %v1300 = vunpack.c.h.b16 %v160
      %v1301 = vunpack.c.l.b16 %v161
      %v1302 = vunpack.c.h.b16 %v161
      %v1303 = vunpack.c.l.b16 %v162
      %v1304 = vunpack.c.l.b16 %v163
      %v1305 = vunpack.c.h.b16 %v163
      %v1306 = vunpack.c.l.b16 %v164
      %v1307 = vunpack.c.h.b16 %v164
      %v1308 = vunpack.c.l.b16 %v165
      %v1309 = vunpack.c.h.b16 %v165
      %v1310 = vunpack.c.l.b16 %v166
      %v1311 = vunpack.c.l.b16 %v167
      %v1312 = vunpack.c.h.b16 %v167
      %v1313 = vunpack.c.l.b16 %v168
      %v1314 = vunpack.c.h.b16 %v168
      %v1315 = vunpack.c.l.b16 %v169
      %v1316 = vunpack.c.h.b16 %v169
      %v1317 = vunpack.c.l.b16 %v170
      %v1318 = vunpack.c.l.b16 %v171
      %v1319 = vunpack.c.h.b16 %v171
      %v1320 = vunpack.c.l.b16 %v172
      %v1321 = vunpack.c.h.b16 %v172
      %v1322 = vunpack.c.l.b16 %v173
      %v1323 = vunpack.c.h.b16 %v173
      %v1324 = vunpack.c.l.b16 %v174
      %v1325 = vunpack.c.l.b16 %v175
      %v1326 = vunpack.c.h.b16 %v175
      %v1327 = vunpack.c.l.b16 %v176
      %v1328 = vunpack.c.h.b16 %v176
      %v1329 = vunpack.c.l.b16 %v177
      %v1330 = vunpack.c.h.b16 %v177
      %v1331 = vunpack.c.l.b16 %v178
      %v1332 = vunpack.c.l.b16 %v179
      %v1333 = vunpack.c.h.b16 %v179
      %v1334 = vunpack.c.l.b16 %v180
      %v1335 = vunpack.c.h.b16 %v180
      %v1336 = vunpack.c.l.b16 %v181
      %v1337 = vunpack.c.h.b16 %v181
      %v1338 = vunpack.c.l.b16 %v182
      %v1339 = vunpack.c.l.b16 %v183
      %v1340 = vunpack.c.h.b16 %v183
      %v1341 = vunpack.c.l.b16 %v184
      %v1342 = vunpack.c.h.b16 %v184
      %v1343 = vunpack.c.l.b16 %v185
      %v1344 = vunpack.c.h.b16 %v185
      %v1345 = vunpack.c.l.b16 %v186
      %v1346 = vunpack.c.l.b16 %v187
      %v1347 = vunpack.c.h.b16 %v187
      %v1348 = vunpack.c.l.b16 %v188
      %v1349 = vunpack.c.h.b16 %v188
      %v1350 = vunpack.c.l.b16 %v189
      %v1351 = vunpack.c.h.b16 %v189
      %v1352 = vunpack.c.l.b16 %v190
      %v1353 = vunpack.c.l.b16 %v191
      %v1354 = vunpack.c.h.b16 %v191
      %v1355 = vunpack.c.l.b16 %v192
      %v1356 = vunpack.c.h.b16 %v192
      %v1357 = vunpack.c.l.b16 %v193
      %v1358 = vunpack.c.h.b16 %v193
      %v1359 = vunpack.c.l.b16 %v194
      %v1360 = vunpack.c.l.b16 %v195
      %v1361 = vunpack.c.h.b16 %v195
      %v1362 = vunpack.c.l.b16 %v196
      %v1363 = vunpack.c.h.b16 %v196
      %v1364 = vunpack.c.l.b16 %v197
      %v1365 = vunpack.c.h.b16 %v197
      %v1366 = vunpack.c.l.b16 %v198
      %v1367 = vunpack.c.l.b16 %v199
      %v1368 = vunpack.c.h.b16 %v199
      %v1369 = vunpack.c.l.b16 %v200
      %v1370 = vunpack.c.h.b16 %v200
      %v1371 = vunpack.c.l.b16 %v201
      %v1372 = vunpack.c.h.b16 %v201
      %v1373 = vunpack.c.l.b16 %v202
      %v1374 = vunpack.c.l.b16 %v203
      %v1375 = vunpack.c.h.b16 %v203
      %v1376 = vunpack.c.l.b16 %v204
      %v1377 = vunpack.c.h.b16 %v204
      %v1378 = vunpack.c.l.b16 %v205
      %v1379 = vunpack.c.h.b16 %v205
      %v1380 = vunpack.c.l.b16 %v206
      %v1381 = vunpack.c.l.b16 %v207
      %v1382 = vunpack.c.h.b16 %v207
      %v1383 = vunpack.c.l.b16 %v208
      %v1384 = vunpack.c.h.b16 %v208
      %v1385 = vunpack.c.l.b16 %v209
      %v1386 = vunpack.c.h.b16 %v209
      %v1387 = vunpack.c.l.b16 %v210
      %v1388 = vunpack.c.l.b16 %v211
      %v1389 = vunpack.c.h.b16 %v211
      %v1390 = vunpack.c.l.b16 %v212
      %v1391 = vunpack.c.h.b16 %v212
      %v1392 = vunpack.c.l.b16 %v213
      %v1393 = vunpack.c.h.b16 %v213
      %v1394 = vunpack.c.l.b16 %v214
      %v1395 = vunpack.c.l.b16 %v215
      %v1396 = vunpack.c.h.b16 %v215
      %v1397 = vunpack.c.l.b16 %v216
      %v1398 = vunpack.c.h.b16 %v216
      %v1399 = vunpack.c.l.b16 %v217
      %v1400 = vunpack.c.h.b16 %v217
      %v1401 = vunpack.c.l.b16 %v218
      %v1402 = vunpack.c.l.b16 %v219
      %v1403 = vunpack.c.h.b16 %v219
      %v1404 = vunpack.c.l.b16 %v220
      %v1405 = vunpack.c.h.b16 %v220
      %v1406 = vunpack.c.l.b16 %v221
      %v1407 = vunpack.c.h.b16 %v221
      %v1408 = vunpack.c.l.b16 %v222
      %v1409 = vunpack.c.l.b16 %v223
      %v1410 = vunpack.c.h.b16 %v223
      %v1411 = vunpack.c.l.b16 %v224
      %v1412 = vunpack.c.h.b16 %v224
      %v1413 = vunpack.c.l.b16 %v225
      %v1414 = vunpack.c.h.b16 %v225
      %v1415 = vunpack.c.l.b16 %v226
      %v1416 = vunpack.c.l.b16 %v227
      %v1417 = vunpack.c.h.b16 %v227
      %v1418 = vunpack.c.l.b16 %v228
      %v1419 = vunpack.c.h.b16 %v228
      %v1420 = vunpack.c.l.b16 %v229
      %v1421 = vunpack.c.h.b16 %v229
      %v1422 = vunpack.c.l.b16 %v230
      %v1423 = vunpack.c.l.b16 %v231
      %v1424 = vunpack.c.h.b16 %v231
      %v1425 = vunpack.c.l.b16 %v232
      %v1426 = vunpack.c.h.b16 %v232
      %v1427 = vunpack.c.l.b16 %v233
      %v1428 = vunpack.c.h.b16 %v233
      %v1429 = vunpack.c.l.b16 %v234
      %v1430 = vunpack.c.l.b16 %v235
      %v1431 = vunpack.c.h.b16 %v235
      %v1432 = vunpack.c.l.b16 %v236
      %v1433 = vunpack.c.h.b16 %v236
      %v1434 = vunpack.c.l.b16 %v237
      %v1435 = vunpack.c.h.b16 %v237
      %v1436 = vunpack.c.l.b16 %v238
      %v1437 = vunpack.c.l.b16 %v239
      %v1438 = vunpack.c.h.b16 %v239
      %v1439 = vunpack.c.l.b16 %v240
      %v1440 = vunpack.c.h.b16 %v240
      %v1441 = vunpack.c.l.b16 %v241
      %v1442 = vunpack.c.h.b16 %v241
      %v1443 = vunpack.c.l.b16 %v242
      %v1444 = vunpack.c.l.b16 %v243
      %v1445 = vunpack.c.h.b16 %v243
      %v1446 = vunpack.c.l.b16 %v244
      %v1447 = vunpack.c.h.b16 %v244
      %v1448 = vunpack.c.l.b16 %v245
      %v1449 = vunpack.c.h.b16 %v245
      %v1450 = vunpack.c.l.b16 %v246
      %v1451 = vunpack.c.l.b16 %v247
      %v1452 = vunpack.c.h.b16 %v247
      %v1453 = vunpack.c.l.b16 %v248
      %v1454 = vunpack.c.h.b16 %v248
      %v1455 = vunpack.c.l.b16 %v249
      %v1456 = vunpack.c.h.b16 %v249
      %v1457 = vunpack.c.l.b16 %v250
      %v1458 = vunpack.c.l.b16 %v251
      %v1459 = vunpack.c.h.b16 %v251
      %v1460 = vunpack.c.l.b16 %v252
      %v1461 = vunpack.c.h.b16 %v252
      %v1462 = vunpack.c.l.b16 %v253
      %v1463 = vunpack.c.h.b16 %v253
      %v1464 = vunpack.c.l.b16 %v254
      %v1465 = vunpack.c.l.b16 %v255
      %v1466 = vunpack.c.h.b16 %v255
      %v1467 = vunpack.c.l.b16 %v256
      %v1468 = vunpack.c.h.b16 %v256
      %v1469 = vunpack.c.l.b16 %v257
      %v1470 = vunpack.c.h.b16 %v257
      %v1471 = vunpack.c.l.b16 %v258
      %v1472 = vunpack.c.l.b16 %v259
      %v1473 = vunpack.c.h.b16 %v259
      %v1474 = vunpack.c.l.b16 %v260
      %v1475 = vunpack.c.h.b16 %v260
      %v1476 = vunpack.c.l.b16 %v261
      %v1477 = vunpack.c.h.b16 %v261
      %v1478 = vunpack.c.l.b16 %v262
      %v1479 = vunpack.c.l.b16 %v263
      %v1480 = vunpack.c.h.b16 %v263
      %v1481 = vunpack.c.l.b16 %v264
      %v1482 = vunpack.c.h.b16 %v264
      %v1483 = vunpack.c.l.b16 %v265
      %v1484 = vunpack.c.h.b16 %v265
      %v1485 = vunpack.c.l.b16 %v266
      %v1486 = vunpack.c.l.b16 %v267
      %v1487 = vunpack.c.h.b16 %v267
      %v1488 = vunpack.c.l.b16 %v268
      %v1489 = vunpack.c.h.b16 %v268
      %v1490 = vunpack.c.l.b16 %v269
      %v1491 = vunpack.c.h.b16 %v269
      %v1492 = vunpack.c.l.b16 %v270
      %v1493 = vunpack.c.l.b16 %v271
      %v1494 = vunpack.c.h.b16 %v271
      %v1495 = vunpack.c.l.b16 %v272
      %v1496 = vunpack.c.h.b16 %v272
      %v1497 = vunpack.c.l.b16 %v273
      %v1498 = vunpack.c.h.b16 %v273
      %v1499 = vunpack.c.l.b16 %v274
      %v1500 = vunpack.c.l.b16 %v275
      %v1501 = vunpack.c.h.b16 %v275
      %v1502 = vunpack.c.l.b16 %v276
      %v1503 = vunpack.c.h.b16 %v276
      %v1504 = vunpack.c.l.b16 %v277
      %v1505 = vunpack.c.h.b16 %v277
      %v1506 = vunpack.c.l.b16 %v278
      %v1507 = vunpack.c.l.b16 %v279
      %v1508 = vunpack.c.h.b16 %v279
      %v1509 = vunpack.c.l.b16 %v280
      %v1510 = vunpack.c.h.b16 %v280
      %v1511 = vunpack.c.l.b16 %v281
      %v1512 = vunpack.c.h.b16 %v281
      %v1513 = vunpack.c.l.b16 %v282
      %v1514 = vunpack.c.l.b16 %v283
      %v1515 = vunpack.c.h.b16 %v283
      %v1516 = vunpack.c.l.b16 %v284
      %v1517 = vunpack.c.h.b16 %v284
      %v1518 = vunpack.c.l.b16 %v285
      %v1519 = vunpack.c.h.b16 %v285
      %v1520 = vunpack.c.l.b16 %v286
      %v1521 = vunpack.c.l.b16 %v287
      %v1522 = vunpack.c.h.b16 %v287
      %v1523 = vunpack.c.l.b16 %v288
      %v1524 = vunpack.c.h.b16 %v288
      %v1525 = vunpack.c.l.b16 %v289
      %v1526 = vunpack.c.h.b16 %v289
      %v1527 = vunpack.c.l.b16 %v290
      %v1528 = vunpack.c.l.b16 %v291
      %v1529 = vunpack.c.h.b16 %v291
      %v1530 = vunpack.c.l.b16 %v292
      %v1531 = vunpack.c.h.b16 %v292
      %v1532 = vunpack.c.l.b16 %v293
      %v1533 = vunpack.c.h.b16 %v293
      %v1534 = vunpack.c.l.b16 %v294
      %v1535 = vunpack.c.l.b16 %v295
      %v1536 = vunpack.c.h.b16 %v295
      %v1537 = vunpack.c.l.b16 %v296
      %v1538 = vunpack.c.h.b16 %v296
      %v1539 = vunpack.c.l.b16 %v297
      %v1540 = vunpack.c.h.b16 %v297
      %v1541 = vunpack.c.l.b16 %v298
      %v1542 = vunpack.c.l.b16 %v299
      %v1543 = vunpack.c.h.b16 %v299
      %v1544 = vunpack.c.l.b16 %v300
      %v1545 = vunpack.c.h.b16 %v300
      %v1546 = vunpack.c.l.b16 %v301
      %v1547 = vunpack.c.h.b16 %v301
      %v1548 = vunpack.c.l.b16 %v302
      %v1549 = vunpack.c.l.b16 %v303
      %v1550 = vunpack.c.h.b16 %v303
      %v1551 = vunpack.c.l.b16 %v304
      %v1552 = vunpack.c.h.b16 %v304
      %v1553 = vunpack.c.l.b16 %v305
      %v1554 = vunpack.c.h.b16 %v305
      %v1555 = vunpack.c.l.b16 %v306
      %v1556 = vunpack.c.l.b16 %v307
      %v1557 = vunpack.c.h.b16 %v307
      %v1558 = vunpack.c.l.b16 %v308
      %v1559 = vunpack.c.h.b16 %v308
      %v1560 = vunpack.c.l.b16 %v309
      %v1561 = vunpack.c.h.b16 %v309
      %v1562 = vunpack.c.l.b16 %v310
      %v1563 = vunpack.c.l.b16 %v311
      %v1564 = vunpack.c.h.b16 %v311
      %v1565 = vunpack.c.l.b16 %v312
      %v1566 = vunpack.c.h.b16 %v312
      %v1567 = vunpack.c.l.b16 %v313
      %v1568 = vunpack.c.h.b16 %v313
      %v1569 = vunpack.c.l.b16 %v314
      %v1570 = vunpack.c.l.b16 %v315
      %v1571 = vunpack.c.h.b16 %v315
      %v1572 = vunpack.c.l.b16 %v316
      %v1573 = vunpack.c.h.b16 %v316
      %v1574 = vunpack.c.l.b16 %v317
      %v1575 = vunpack.c.h.b16 %v317
      %v1576 = vunpack.c.l.b16 %v318
      %v1577 = vunpack.c.l.b16 %v319
      %v1578 = vunpack.c.h.b16 %v319
      %v1579 = vunpack.c.l.b16 %v320
      %v1580 = vunpack.c.h.b16 %v320
      %v1581 = vunpack.c.l.b16 %v321
      %v1582 = vunpack.c.h.b16 %v321
      %v1583 = vunpack.c.l.b16 %v322
      %v1584 = vunpack.c.l.b16 %v323
      %v1585 = vunpack.c.h.b16 %v323
      %v1586 = vunpack.c.l.b16 %v324
      %v1587 = vunpack.c.h.b16 %v324
      %v1588 = vunpack.c.l.b16 %v325
      %v1589 = vunpack.c.h.b16 %v325
      %v1590 = vunpack.c.l.b16 %v326
      %v1591 = vunpack.c.l.b16 %v327
      %v1592 = vunpack.c.h.b16 %v327
      %v1593 = vunpack.c.l.b16 %v328
      %v1594 = vunpack.c.h.b16 %v328
      %v1595 = vunpack.c.l.b16 %v329
      %v1596 = vunpack.c.h.b16 %v329
      %v1597 = vunpack.c.l.b16 %v330
      %v1598 = vunpack.c.l.b16 %v331
      %v1599 = vunpack.c.h.b16 %v331
      %v1600 = vunpack.c.l.b16 %v332
      %v1601 = vunpack.c.h.b16 %v332
      %v1602 = vunpack.c.l.b16 %v333
      %v1603 = vunpack.c.h.b16 %v333
      %v1604 = vunpack.c.l.b16 %v334
      %v1605 = vunpack.c.l.b16 %v335
      %v1606 = vunpack.c.h.b16 %v335
      %v1607 = vunpack.c.l.b16 %v336
      %v1608 = vunpack.c.h.b16 %v336
      %v1609 = vunpack.c.l.b16 %v337
      %v1610 = vunpack.c.h.b16 %v337
      %v1611 = vunpack.c.l.b16 %v338
      %v1612 = vunpack.c.l.b16 %v339
      %v1613 = vunpack.c.h.b16 %v339
      %v1614 = vunpack.c.l.b16 %v340
      %v1615 = vunpack.c.h.b16 %v340
      %v1616 = vunpack.c.l.b16 %v341
      %v1617 = vunpack.c.h.b16 %v341
      %v1618 = vunpack.c.l.b16 %v342
      %v1619 = vunpack.c.l.b16 %v343
      %v1620 = vunpack.c.h.b16 %v343
      %v1621 = vunpack.c.l.b16 %v344
      %v1622 = vunpack.c.h.b16 %v344
      %v1623 = vunpack.c.l.b16 %v345
      %v1624 = vunpack.c.h.b16 %v345
      %v1625 = vunpack.c.l.b16 %v346
      %v1626 = vunpack.c.l.b16 %v347
      %v1627 = vunpack.c.h.b16 %v347
      %v1628 = vunpack.c.l.b16 %v348
      %v1629 = vunpack.c.h.b16 %v348
      %v1630 = vunpack.c.l.b16 %v349
      %v1631 = vunpack.c.h.b16 %v349
      %v1632 = vunpack.c.l.b16 %v350
      %v1633 = vunpack.c.l.b16 %v351
      %v1634 = vunpack.c.h.b16 %v351
      %v1635 = vunpack.c.l.b16 %v352
      %v1636 = vunpack.c.h.b16 %v352
      %v1637 = vunpack.c.l.b16 %v353
      %v1638 = vunpack.c.h.b16 %v353
      %v1639 = vunpack.c.l.b16 %v354
      %v1640 = vunpack.c.l.b16 %v355
      %v1641 = vunpack.c.h.b16 %v355
      %v1642 = vunpack.c.l.b16 %v356
      %v1643 = vunpack.c.h.b16 %v356
      %v1644 = vunpack.c.l.b16 %v357
      %v1645 = vunpack.c.h.b16 %v357
      %v1646 = vunpack.c.l.b16 %v358
      %v1647 = vunpack.c.l.b16 %v359
      %v1648 = vunpack.c.h.b16 %v359
      %v1649 = vunpack.c.l.b16 %v360
      %v1650 = vunpack.c.h.b16 %v360
      %v1651 = vunpack.c.l.b16 %v361
      %v1652 = vunpack.c.h.b16 %v361
      %v1653 = vunpack.c.l.b16 %v362
      %v1654 = vunpack.c.l.b16 %v363
      %v1655 = vunpack.c.h.b16 %v363
      %v1656 = vunpack.c.l.b16 %v364
      %v1657 = vunpack.c.h.b16 %v364
      %v1658 = vunpack.c.l.b16 %v365
      %v1659 = vunpack.c.h.b16 %v365
      %v1660 = vunpack.c.l.b16 %v366
      %v1661 = vunpack.c.l.b16 %v367
      %v1662 = vunpack.c.h.b16 %v367
      %v1663 = vunpack.c.l.b16 %v368
      %v1664 = vunpack.c.h.b16 %v368
      %v1665 = vunpack.c.l.b16 %v369
      %v1666 = vunpack.c.h.b16 %v369
      %v1667 = vunpack.c.l.b16 %v370
      %v1668 = vunpack.c.l.b16 %v371
      %v1669 = vunpack.c.h.b16 %v371
      %v1670 = vunpack.c.l.b16 %v372
      %v1671 = vunpack.c.h.b16 %v372
      %v1672 = vunpack.c.l.b16 %v373
      %v1673 = vunpack.c.h.b16 %v373
      %v1674 = vunpack.c.l.b16 %v374
      %v1675 = vunpack.c.l.b16 %v375
      %v1676 = vunpack.c.h.b16 %v375
      %v1677 = vunpack.c.l.b16 %v376
      %v1678 = vunpack.c.h.b16 %v376
      %v1679 = vunpack.c.l.b16 %v377
      %v1680 = vunpack.c.h.b16 %v377
      %v1681 = vunpack.c.l.b16 %v378
      %v1682 = vunpack.c.l.b16 %v379
      %v1683 = vunpack.c.h.b16 %v379
      %v1684 = vunpack.c.l.b16 %v380
      %v1685 = vunpack.c.h.b16 %v380
      %v1686 = vunpack.c.l.b16 %v381
      %v1687 = vunpack.c.h.b16 %v381
      %v1688 = vunpack.c.l.b16 %v382
      %v1689 = vunpack.c.l.b16 %v383
      %v1690 = vunpack.c.h.b16 %v383
      %v1691 = vunpack.c.l.b16 %v384
      %v1692 = vunpack.c.h.b16 %v384
      %v1693 = vunpack.c.l.b16 %v385
      %v1694 = vunpack.c.h.b16 %v385
      %v1695 = vunpack.c.l.b16 %v386
      %v1696 = vunpack.c.l.b16 %v387
      %v1697 = vunpack.c.h.b16 %v387
      %v1698 = vunpack.c.l.b16 %v388
      %v1699 = vunpack.c.h.b16 %v388
      %v1700 = vunpack.c.l.b16 %v389
      %v1701 = vunpack.c.h.b16 %v389
      %v1702 = vunpack.c.l.b16 %v390
      %v1703 = vunpack.c.l.b16 %v391
      %v1704 = vunpack.c.h.b16 %v391
      %v1705 = vunpack.c.l.b16 %v392
      %v1706 = vunpack.c.h.b16 %v392
      %v1707 = vunpack.c.l.b16 %v393
      %v1708 = vunpack.c.h.b16 %v393
      %v1709 = vunpack.c.l.b16 %v394
      %v1710 = vunpack.c.l.b16 %v395
      %v1711 = vunpack.c.h.b16 %v395
      %v1712 = vunpack.c.l.b16 %v396
      %v1713 = vunpack.c.h.b16 %v396
      %v1714 = vunpack.c.l.b16 %v397
      %v1715 = vunpack.c.h.b16 %v397
      %v1716 = vunpack.c.l.b16 %v398
      %v1717 = vunpack.c.l.b16 %v399
      %v1718 = vunpack.c.h.b16 %v399
      %v1719 = vunpack.c.l.b16 %v400
      %v1720 = vunpack.c.h.b16 %v400
      %v1721 = vunpack.c.l.b16 %v401
      %v1722 = vunpack.c.h.b16 %v401
      %v1723 = vunpack.c.l.b16 %v402
      %v1724 = vunpack.c.l.b16 %v403
      %v1725 = vunpack.c.h.b16 %v403
      %v1726 = vunpack.c.l.b16 %v404
      %v1727 = vunpack.c.h.b16 %v404
      %v1728 = vunpack.c.l.b16 %v405
      %v1729 = vunpack.c.h.b16 %v405
      %v1730 = vunpack.c.l.b16 %v406
      %v1731 = vunpack.c.l.b16 %v407
      %v1732 = vunpack.c.h.b16 %v407
      %v1733 = vunpack.c.l.b16 %v408
      %v1734 = vunpack.c.h.b16 %v408
      %v1735 = vunpack.c.l.b16 %v409
      %v1736 = vunpack.c.h.b16 %v409
      %v1737 = vunpack.c.l.b16 %v410
      %v1738 = vunpack.c.l.b16 %v411
      %v1739 = vunpack.c.h.b16 %v411
      %v1740 = vunpack.c.l.b16 %v412
      %v1741 = vunpack.c.h.b16 %v412
      %v1742 = vunpack.c.l.b16 %v413
      %v1743 = vunpack.c.h.b16 %v413
      %v1744 = vunpack.c.l.b16 %v414
      %v1745 = vunpack.c.l.b16 %v415
      %v1746 = vunpack.c.h.b16 %v415
      %v1747 = vunpack.c.l.b16 %v416
      %v1748 = vunpack.c.h.b16 %v416
      %v1749 = vunpack.c.l.b16 %v417
      %v1750 = vunpack.c.h.b16 %v417
      %v1751 = vunpack.c.l.b16 %v418
      %v1752 = vunpack.c.l.b16 %v419
      %v1753 = vunpack.c.h.b16 %v419
      %v1754 = vunpack.c.l.b16 %v420
      %v1755 = vunpack.c.h.b16 %v420
      %v1756 = vunpack.c.l.b16 %v421
      %v1757 = vunpack.c.h.b16 %v421
      %v1758 = vunpack.c.l.b16 %v422
      %v1759 = vunpack.c.l.b16 %v423
      %v1760 = vunpack.c.h.b16 %v423
      %v1761 = vunpack.c.l.b16 %v424
      %v1762 = vunpack.c.h.b16 %v424
      %v1763 = vunpack.c.l.b16 %v425
      %v1764 = vunpack.c.h.b16 %v425
      %v1765 = vunpack.c.l.b16 %v426
      %v1766 = vunpack.c.l.b16 %v427
      %v1767 = vunpack.c.h.b16 %v427
      %v1768 = vunpack.c.l.b16 %v428
      %v1769 = vunpack.c.h.b16 %v428
      %v1770 = vunpack.c.l.b16 %v429
      %v1771 = vunpack.c.h.b16 %v429
      %v1772 = vunpack.c.l.b16 %v430
      %v1773 = vunpack.c.l.b16 %v431
      %v1774 = vunpack.c.h.b16 %v431
      %v1775 = vunpack.c.l.b16 %v432
      %v1776 = vunpack.c.h.b16 %v432
      %v1777 = vunpack.c.l.b16 %v433
      %v1778 = vunpack.c.h.b16 %v433
      %v1779 = vunpack.c.l.b16 %v434
      %v1780 = vunpack.c.l.b16 %v435
      %v1781 = vunpack.c.h.b16 %v435
      %v1782 = vunpack.c.l.b16 %v436
      %v1783 = vunpack.c.h.b16 %v436
      %v1784 = vunpack.c.l.b16 %v437
      %v1785 = vunpack.c.h.b16 %v437
      %v1786 = vunpack.c.l.b16 %v438
      %v1787 = vunpack.c.l.b16 %v439
      %v1788 = vunpack.c.h.b16 %v439
      %v1789 = vunpack.c.l.b16 %v440
      %v1790 = vunpack.c.h.b16 %v440
      %v1791 = vunpack.c.l.b16 %v441
      %v1792 = vunpack.c.h.b16 %v441
      %v1793 = vunpack.c.l.b16 %v442
      %v1794 = vunpack.c.l.b16 %v443
      %v1795 = vunpack.c.h.b16 %v443
      %v1796 = vunpack.c.l.b16 %v444
      %v1797 = vunpack.c.h.b16 %v444
      %v1798 = vunpack.c.l.b16 %v445
      %v1799 = vunpack.c.h.b16 %v445
      %v1800 = vunpack.c.l.b16 %v446
      %v1801 = vunpack.c.l.b16 %v447
      %v1802 = vunpack.c.h.b16 %v447
      %v1803 = vunpack.c.l.b16 %v448
      %v1804 = vunpack.c.h.b16 %v448
      %v1805 = vunpack.c.l.b16 %v449
      %v1806 = vunpack.c.h.b16 %v449
      %v1807 = vunpack.c.l.b16 %v450
      %v1808 = vunpack.c.l.b16 %v451
      %v1809 = vunpack.c.h.b16 %v451
      %v1810 = vunpack.c.l.b16 %v452
      %v1811 = vunpack.c.h.b16 %v452
      %v1812 = vunpack.c.l.b16 %v453
      %v1813 = vunpack.c.h.b16 %v453
      %v1814 = vunpack.c.l.b16 %v454
      %v1815 = vunpack.c.l.b16 %v455
      %v1816 = vunpack.c.h.b16 %v455
      %v1817 = vunpack.c.l.b16 %v456
      %v1818 = vunpack.c.h.b16 %v456
      %v1819 = vunpack.c.l.b16 %v457
      %v1820 = vunpack.c.h.b16 %v457
      %v1821 = vunpack.c.l.b16 %v458
      %v1822 = vunpack.c.l.b16 %v459
      %v1823 = vunpack.c.h.b16 %v459
      %v1824 = vunpack.c.l.b16 %v460
      %v1825 = vunpack.c.h.b16 %v460
      %v1826 = vunpack.c.l.b16 %v461
      %v1827 = vunpack.c.h.b16 %v461
      %v1828 = vunpack.c.l.b16 %v462
      %v1829 = vunpack.c.l.b16 %v463
      %v1830 = vunpack.c.h.b16 %v463
      %v1831 = vunpack.c.l.b16 %v464
      %v1832 = vunpack.c.h.b16 %v464
      %v1833 = vunpack.c.l.b16 %v465
      %v1834 = vunpack.c.h.b16 %v465
      %v1835 = vunpack.c.l.b16 %v466
      %v1836 = vunpack.c.l.b16 %v467
      %v1837 = vunpack.c.h.b16 %v467
      %v1838 = vunpack.c.l.b16 %v468
      %v1839 = vunpack.c.h.b16 %v468
      %v1840 = vunpack.c.l.b16 %v469
      %v1841 = vunpack.c.h.b16 %v469
      %v1842 = vunpack.c.l.b16 %v470
      %v1843 = vunpack.c.l.b16 %v471
      %v1844 = vunpack.c.h.b16 %v471
      %v1845 = vunpack.c.l.b16 %v472
      %v1846 = vunpack.c.h.b16 %v472
      %v1847 = vunpack.c.l.b16 %v473
      %v1848 = vunpack.c.h.b16 %v473
      %v1849 = vunpack.c.l.b16 %v474
      %v1850 = vunpack.c.l.b16 %v475
      %v1851 = vunpack.c.h.b16 %v475
      %v1852 = vunpack.c.l.b16 %v476
      %v1853 = vunpack.c.h.b16 %v476
      %v1854 = vunpack.c.l.b16 %v477
      %v1855 = vunpack.c.h.b16 %v477
      %v1856 = vunpack.c.l.b16 %v478
      %v1857 = vunpack.c.l.b16 %v479
      %v1858 = vunpack.c.h.b16 %v479
      %v1859 = vunpack.c.l.b16 %v480
      %v1860 = vunpack.c.h.b16 %v480
      %v1861 = vunpack.c.l.b16 %v481
      %v1862 = vunpack.c.h.b16 %v481
      %v1863 = vunpack.c.l.b16 %v482
      %v1864 = vunpack.c.l.b16 %v483
      %v1865 = vunpack.c.h.b16 %v483
      %v1866 = vunpack.c.l.b16 %v484
      %v1867 = vunpack.c.h.b16 %v484
      %v1868 = vunpack.c.l.b16 %v485
      %v1869 = vunpack.c.h.b16 %v485
      %v1870 = vunpack.c.l.b16 %v486
      %v1871 = vunpack.c.l.b16 %v487
      %v1872 = vunpack.c.h.b16 %v487
      %v1873 = vunpack.c.l.b16 %v488
      %v1874 = vunpack.c.h.b16 %v488
      %v1875 = vunpack.c.l.b16 %v489
      %v1876 = vunpack.c.h.b16 %v489
      %v1877 = vunpack.c.l.b16 %v490
      %v1878 = vunpack.c.l.b16 %v491
      %v1879 = vunpack.c.h.b16 %v491
      %v1880 = vunpack.c.l.b16 %v492
      %v1881 = vunpack.c.h.b16 %v492
      %v1882 = vunpack.c.l.b16 %v493
      %v1883 = vunpack.c.h.b16 %v493
      %v1884 = vunpack.c.l.b16 %v494
      %v1885 = vunpack.c.l.b16 %v495
      %v1886 = vunpack.c.h.b16 %v495
      %v1887 = vunpack.c.l.b16 %v496
      %v1888 = vunpack.c.h.b16 %v496
      %v1889 = vunpack.c.l.b16 %v497
      %v1890 = vunpack.c.h.b16 %v497
      %v1891 = vunpack.c.l.b16 %v498
      %v1892 = vunpack.c.l.b16 %v499
      %v1893 = vunpack.c.h.b16 %v499
      %v1894 = vunpack.c.l.b16 %v500
      %v1895 = vunpack.c.h.b16 %v500
      %v1896 = vunpack.c.l.b16 %v501
      %v1897 = vunpack.c.h.b16 %v501
      %v1898 = vunpack.c.l.b16 %v502
      %v1899 = vunpack.c.l.b16 %v503
      %v1900 = vunpack.c.h.b16 %v503
      %v1901 = vunpack.c.l.b16 %v504
      %v1902 = vunpack.c.h.b16 %v504
      %v1903 = vunpack.c.l.b16 %v505
      %v1904 = vunpack.c.h.b16 %v505
      %v1905 = vunpack.c.l.b16 %v506
      %v1906 = vunpack.c.l.b16 %v507
      %v1907 = vunpack.c.h.b16 %v507
      %v1908 = vunpack.c.l.b16 %v508
      %v1909 = vunpack.c.h.b16 %v508
      %v1910 = vunpack.c.l.b16 %v509
      %v1911 = vunpack.c.h.b16 %v509
      %v1912 = vunpack.c.l.b16 %v510
      %v1913 = vunpack.c.l.b16 %v511
      %v1914 = vunpack.c.h.b16 %v511
      %v1915 = vunpack.c.l.b16 %v512
      %v1916 = vunpack.c.h.b16 %v512
      %v1917 = vunpack.c.l.b16 %v513
      %v1918 = vunpack.c.h.b16 %v513
      %v1919 = vunpack.c.l.b16 %v514
      %v1920 = vunpack.c.l.b16 %v515
      %v1921 = vunpack.c.h.b16 %v515
      %v1922 = vunpack.c.l.b16 %v516
      %v1923 = vunpack.c.h.b16 %v516
      %v1924 = vunpack.c.l.b16 %v517
      %v1925 = vunpack.c.h.b16 %v517
      %v1926 = vunpack.c.l.b16 %v518
      %v1927 = vunpack.c.l.b16 %v519
      %v1928 = vunpack.c.h.b16 %v519
      %v1929 = vunpack.c.l.b16 %v520
      %v1930 = vunpack.c.h.b16 %v520
      %v1931 = vunpack.c.l.b16 %v521
      %v1932 = vunpack.c.h.b16 %v521
      %v1933 = vunpack.c.l.b16 %v522
      %v1934 = vunpack.c.l.b16 %v523
      %v1935 = vunpack.c.h.b16 %v523
      %v1936 = vunpack.c.l.b16 %v524
      %v1937 = vunpack.c.h.b16 %v524
      %v1938 = vunpack.c.l.b16 %v525
      %v1939 = vunpack.c.h.b16 %v525
      %v1940 = vunpack.c.l.b16 %v526
      %v1941 = vunpack.c.l.b16 %v527
      %v1942 = vunpack.c.h.b16 %v527
      %v1943 = vunpack.c.l.b16 %v528
      %v1944 = vunpack.c.h.b16 %v528
      %v1945 = vunpack.c.l.b16 %v529
      %v1946 = vunpack.c.h.b16 %v529
      %v1947 = vunpack.c.l.b16 %v530
      %v1948 = vunpack.c.l.b16 %v531
      %v1949 = vunpack.c.h.b16 %v531
      %v1950 = vunpack.c.l.b16 %v532
      %v1951 = vunpack.c.h.b16 %v532
      %v1952 = vunpack.c.l.b16 %v533
      %v1953 = vunpack.c.h.b16 %v533
      %v1954 = vunpack.c.l.b16 %v534
      %v1955 = vunpack.c.l.b16 %v535
      %v1956 = vunpack.c.h.b16 %v535
      %v1957 = vunpack.c.l.b16 %v536
      %v1958 = vunpack.c.h.b16 %v536
      %v1959 = vunpack.c.l.b16 %v537
      %v1960 = vunpack.c.h.b16 %v537
      %v1961 = vunpack.c.l.b16 %v538
      %v1962 = vunpack.c.l.b16 %v539
      %v1963 = vunpack.c.h.b16 %v539
      %v1964 = vunpack.c.l.b16 %v540
      %v1965 = vunpack.c.h.b16 %v540
      %v1966 = vunpack.c.l.b16 %v541
      %v1967 = vunpack.c.h.b16 %v541
      %v1968 = vunpack.c.l.b16 %v542
      %v1969 = vunpack.c.l.b16 %v543
      %v1970 = vunpack.c.h.b16 %v543
      %v1971 = vunpack.c.l.b16 %v544
      %v1972 = vunpack.c.h.b16 %v544
      %v1973 = vunpack.c.l.b16 %v545
      %v1974 = vunpack.c.h.b16 %v545
      %v1975 = vunpack.c.l.b16 %v546
      %v1976 = vunpack.c.l.b16 %v547
      %v1977 = vunpack.c.h.b16 %v547
      %v1978 = vunpack.c.l.b16 %v548
      %v1979 = vunpack.c.h.b16 %v548
      %v1980 = vunpack.c.l.b16 %v549
      %v1981 = vunpack.c.h.b16 %v549
      %v1982 = vunpack.c.l.b16 %v550
      %v1983 = vunpack.c.l.b16 %v551
      %v1984 = vunpack.c.h.b16 %v551
      %v1985 = vunpack.c.l.b16 %v552
      %v1986 = vunpack.c.h.b16 %v552
      %v1987 = vunpack.c.l.b16 %v553
      %v1988 = vunpack.c.h.b16 %v553
      %v1989 = vunpack.c.l.b16 %v554
      %v1990 = vunpack.c.l.b16 %v555
      %v1991 = vunpack.c.h.b16 %v555
      %v1992 = vunpack.c.l.b16 %v556
      %v1993 = vunpack.c.h.b16 %v556
      %v1994 = vunpack.c.l.b16 %v557
      %v1995 = vunpack.c.h.b16 %v557
      %v1996 = vunpack.c.l.b16 %v558
      %v1997 = vunpack.c.l.b16 %v559
      %v1998 = vunpack.c.h.b16 %v559
      %v1999 = vunpack.c.l.b16 %v560
      %v2000 = vunpack.c.h.b16 %v560
      %v2001 = vunpack.c.l.b16 %v561
      %v2002 = vunpack.c.h.b16 %v561
      %v2003 = vunpack.c.l.b16 %v562
      %v2004 = vunpack.c.l.b16 %v563
      %v2005 = vunpack.c.h.b16 %v563
      %v2006 = vunpack.c.l.b16 %v564
      %v2007 = vunpack.c.h.b16 %v564
      %v2008 = vunpack.c.l.b16 %v565
      %v2009 = vunpack.c.h.b16 %v565
      %v2010 = vunpack.c.l.b16 %v566
      %v2011 = vunpack.c.l.b16 %v567
      %v2012 = vunpack.c.h.b16 %v567
      %v2013 = vunpack.c.l.b16 %v568
      %v2014 = vunpack.c.h.b16 %v568
      %v2015 = vunpack.c.l.b16 %v569
      %v2016 = vunpack.c.h.b16 %v569
      %v2017 = vunpack.c.l.b16 %v570
      %v2018 = vunpack.c.l.b16 %v571
      %v2019 = vunpack.c.h.b16 %v571
      %v2020 = vunpack.c.l.b16 %v572
      %v2021 = vunpack.c.h.b16 %v572
      %v2022 = vunpack.c.l.b16 %v573
      %v2023 = vunpack.c.h.b16 %v573
      %v2024 = vunpack.c.l.b16 %v574
      %v2025 = vunpack.c.l.b16 %v575
      %v2026 = vunpack.c.h.b16 %v575
      %v2027 = vunpack.c.l.b16 %v576
      %v2028 = vunpack.c.h.b16 %v576
      %v2029 = vunpack.c.l.b16 %v577
      %v2030 = vunpack.c.h.b16 %v577
      %v2031 = vunpack.c.l.b16 %v578
      %v2032 = vunpack.c.l.b16 %v579
      %v2033 = vunpack.c.h.b16 %v579
      %v2034 = vunpack.c.l.b16 %v580
      %v2035 = vunpack.c.h.b16 %v580
      %v2036 = vunpack.c.l.b16 %v581
      %v2037 = vunpack.c.h.b16 %v581
      %v2038 = vunpack.c.l.b16 %v582
      %v2039 = vunpack.c.l.b16 %v583
      %v2040 = vunpack.c.h.b16 %v583
      %v2041 = vunpack.c.l.b16 %v584
      %v2042 = vunpack.c.h.b16 %v584
      %v2043 = vunpack.c.l.b16 %v585
      %v2044 = vunpack.c.h.b16 %v585
      %v2045 = vunpack.c.l.b16 %v586
      %v2046 = vunpack.c.l.b16 %v587
      %v2047 = vunpack.c.h.b16 %v587
      %v2048 = vunpack.c.l.b16 %v588
      %v2049 = vunpack.c.h.b16 %v588
      %v2050 = vunpack.c.l.b16 %v589
      %v2051 = vunpack.c.h.b16 %v589
      %v2052 = vunpack.c.l.b16 %v590
      %v2053 = vunpack.c.l.b16 %v591
      %v2054 = vunpack.c.h.b16 %v591
      %v2055 = vunpack.c.l.b16 %v592
      %v2056 = vunpack.c.h.b16 %v592
      %v2057 = vunpack.c.l.b16 %v593
      %v2058 = vunpack.c.h.b16 %v593
      %v2059 = vunpack.c.l.b16 %v594
      %v2060 = vunpack.c.l.b16 %v595
      %v2061 = vunpack.c.h.b16 %v595
      %v2062 = vunpack.c.l.b16 %v596
      %v2063 = vunpack.c.h.b16 %v596
      %v2064 = vunpack.c.l.b16 %v597
      %v2065 = vunpack.c.h.b16 %v597
      %v2066 = vunpack.c.l.b16 %v598
      %v2067 = vunpack.c.l.b16 %v599
      %v2068 = vunpack.c.h.b16 %v599
      %v2069 = vunpack.c.l.b16 %v600
      %v2070 = vunpack.c.h.b16 %v600
      %v2071 = vunpack.c.l.b16 %v601
      %v2072 = vunpack.c.h.b16 %v601
      %v2073 = vunpack.c.l.b16 %v602
      %v2074 = vunpack.c.l.b16 %v603
      %v2075 = vunpack.c.h.b16 %v603
      %v2076 = vunpack.c.l.b16 %v604
      %v2077 = vunpack.c.h.b16 %v604
      %v2078 = vunpack.c.l.b16 %v605
      %v2079 = vunpack.c.h.b16 %v605
      %v2080 = vunpack.c.l.b16 %v606
      %v2081 = vunpack.c.l.b16 %v607
      %v2082 = vunpack.c.h.b16 %v607
      %v2083 = vunpack.c.l.b16 %v608
      %v2084 = vunpack.c.h.b16 %v608
      %v2085 = vunpack.c.l.b16 %v609
      %v2086 = vunpack.c.h.b16 %v609
      %v2087 = vunpack.c.l.b16 %v610
      %v2088 = vunpack.c.l.b16 %v611
      %v2089 = vunpack.c.h.b16 %v611
      %v2090 = vunpack.c.l.b16 %v612
      %v2091 = vunpack.c.h.b16 %v612
      %v2092 = vunpack.c.l.b16 %v613
      %v2093 = vunpack.c.h.b16 %v613
      %v2094 = vunpack.c.l.b16 %v614
      %v2095 = vunpack.c.l.b16 %v615
      %v2096 = vunpack.c.h.b16 %v615
      %v2097 = vunpack.c.l.b16 %v616
      %v2098 = vunpack.c.h.b16 %v616
      %v2099 = vunpack.c.l.b16 %v617
      %v2100 = vunpack.c.h.b16 %v617
      %v2101 = vunpack.c.l.b16 %v618
      %v2102 = vunpack.c.l.b16 %v619
      %v2103 = vunpack.c.h.b16 %v619
      %v2104 = vunpack.c.l.b16 %v620
      %v2105 = vunpack.c.h.b16 %v620
      %v2106 = vunpack.c.l.b16 %v621
      %v2107 = vunpack.c.h.b16 %v621
      %v2108 = vunpack.c.l.b16 %v622
      %v2109 = vunpack.c.l.b16 %v623
      %v2110 = vunpack.c.h.b16 %v623
      %v2111 = vunpack.c.l.b16 %v624
      %v2112 = vunpack.c.h.b16 %v624
      %v2113 = vunpack.c.l.b16 %v625
      %v2114 = vunpack.c.h.b16 %v625
      %v2115 = vunpack.c.l.b16 %v626
      %v2116 = vunpack.c.l.b16 %v627
      %v2117 = vunpack.c.h.b16 %v627
      %v2118 = vunpack.c.l.b16 %v628
      %v2119 = vunpack.c.h.b16 %v628
      %v2120 = vunpack.c.l.b16 %v629
      %v2121 = vunpack.c.h.b16 %v629
      %v2122 = vunpack.c.l.b16 %v630
      %v2123 = vunpack.c.l.b16 %v631
      %v2124 = vunpack.c.h.b16 %v631
      %v2125 = vunpack.c.l.b16 %v632
      %v2126 = vunpack.c.h.b16 %v632
      %v2127 = vunpack.c.l.b16 %v633
      %v2128 = vunpack.c.h.b16 %v633
      %v2129 = vunpack.c.l.b16 %v634
      %v2130 = vunpack.c.l.b16 %v635
      %v2131 = vunpack.c.h.b16 %v635
      %v2132 = vunpack.c.l.b16 %v636
      %v2133 = vunpack.c.h.b16 %v636
      %v2134 = vunpack.c.l.b16 %v637
      %v2135 = vunpack.c.h.b16 %v637
      %v2136 = vunpack.c.l.b16 %v638
      %v2137 = vunpack.c.l.b16 %v639
      %v2138 = vunpack.c.h.b16 %v639
      %v2139 = vunpack.c.l.b16 %v640
      %v2140 = vunpack.c.h.b16 %v640
      %v2141 = vunpack.c.l.b16 %v641
      %v2142 = vunpack.c.h.b16 %v641
      %v2143 = vunpack.c.l.b16 %v642
      %v2144 = vunpack.c.l.b16 %v643
      %v2145 = vunpack.c.h.b16 %v643
      %v2146 = vunpack.c.l.b16 %v644
      %v2147 = vunpack.c.h.b16 %v644
      %v2148 = vunpack.c.l.b16 %v645
      %v2149 = vunpack.c.h.b16 %v645
      %v2150 = vunpack.c.l.b16 %v646
      %v2151 = vunpack.c.l.b16 %v647
      %v2152 = vunpack.c.h.b16 %v647
      %v2153 = vunpack.c.l.b16 %v648
      %v2154 = vunpack.c.h.b16 %v648
      %v2155 = vunpack.c.l.b16 %v649
      %v2156 = vunpack.c.h.b16 %v649
      %v2157 = vunpack.c.l.b16 %v650
      %v2158 = vunpack.c.l.b16 %v651
      %v2159 = vunpack.c.h.b16 %v651
      %v2160 = vunpack.c.l.b16 %v652
      %v2161 = vunpack.c.h.b16 %v652
      %v2162 = vunpack.c.l.b16 %v653
      %v2163 = vunpack.c.h.b16 %v653
      %v2164 = vunpack.c.l.b16 %v654
      %v2165 = vunpack.c.l.b16 %v655
      %v2166 = vunpack.c.h.b16 %v655
      %v2167 = vunpack.c.l.b16 %v656
      %v2168 = vunpack.c.h.b16 %v656
      %v2169 = vunpack.c.l.b16 %v657
      %v2170 = vunpack.c.h.b16 %v657
      %v2171 = vunpack.c.l.b16 %v658
      %v2172 = vunpack.c.l.b16 %v659
      %v2173 = vunpack.c.h.b16 %v659
      %v2174 = vunpack.c.l.b16 %v660
      %v2175 = vunpack.c.h.b16 %v660
      %v2176 = vunpack.c.l.b16 %v661
      %v2177 = vunpack.c.h.b16 %v661
      %v2178 = vunpack.c.l.b16 %v662
      %v2179 = vpack.c.b16 %v1290, %v1283
      %v2180 = vpack.c.b16 %v1291, %v1284
      %v2181 = vpack.c.b16 %v1292, %v1285
      %v2182 = vpack.c.b16 %v1293, %v1286
      %v2183 = vpack.c.b16 %v1294, %v1287
      %v2184 = vpack.c.b16 %v1295, %v1288
      %v2185 = vpack.c.b16 %v1296, %v1289
      %v2186 = vpack.c.b16 %v1304, %v1297
      %v2187 = vpack.c.b16 %v1305, %v1298
      %v2188 = vpack.c.b16 %v1306, %v1299
      %v2189 = vpack.c.b16 %v1307, %v1300
      %v2190 = vpack.c.b16 %v1308, %v1301
      %v2191 = vpack.c.b16 %v1309, %v1302
      %v2192 = vpack.c.b16 %v1310, %v1303
      %v2193 = vpack.c.b16 %v1318, %v1311
      %v2194 = vpack.c.b16 %v1319, %v1312
      %v2195 = vpack.c.b16 %v1320, %v1313
      %v2196 = vpack.c.b16 %v1321, %v1314
      %v2197 = vpack.c.b16 %v1322, %v1315
      %v2198 = vpack.c.b16 %v1323, %v1316
      %v2199 = vpack.c.b16 %v1324, %v1317
      %v2200 = vpack.c.b16 %v1332, %v1325
      %v2201 = vpack.c.b16 %v1333, %v1326
      %v2202 = vpack.c.b16 %v1334, %v1327
      %v2203 = vpack.c.b16 %v1335, %v1328
      %v2204 = vpack.c.b16 %v1336, %v1329
      %v2205 = vpack.c.b16 %v1337, %v1330
      %v2206 = vpack.c.b16 %v1338, %v1331
      %v2207 = vpack.c.b16 %v1346, %v1339
      %v2208 = vpack.c.b16 %v1347, %v1340
      %v2209 = vpack.c.b16 %v1348, %v1341
      %v2210 = vpack.c.b16 %v1349, %v1342
      %v2211 = vpack.c.b16 %v1350, %v1343
      %v2212 = vpack.c.b16 %v1351, %v1344
      %v2213 = vpack.c.b16 %v1352, %v1345
      %v2214 = vpack.c.b16 %v1360, %v1353
      %v2215 = vpack.c.b16 %v1361, %v1354
      %v2216 = vpack.c.b16 %v1362, %v1355
      %v2217 = vpack.c.b16 %v1363, %v1356
      %v2218 = vpack.c.b16 %v1364, %v1357
      %v2219 = vpack.c.b16 %v1365, %v1358
      %v2220 = vpack.c.b16 %v1366, %v1359
      %v2221 = vpack.c.b16 %v1374, %v1367
      %v2222 = vpack.c.b16 %v1375, %v1368
      %v2223 = vpack.c.b16 %v1376, %v1369
      %v2224 = vpack.c.b16 %v1377, %v1370
      %v2225 = vpack.c.b16 %v1378, %v1371
      %v2226 = vpack.c.b16 %v1379, %v1372
      %v2227 = vpack.c.b16 %v1380, %v1373
      %v2228 = vpack.c.b16 %v1388, %v1381
      %v2229 = vpack.c.b16 %v1389, %v1382
      %v2230 = vpack.c.b16 %v1390, %v1383
      %v2231 = vpack.c.b16 %v1391, %v1384
      %v2232 = vpack.c.b16 %v1392, %v1385
      %v2233 = vpack.c.b16 %v1393, %v1386
      %v2234 = vpack.c.b16 %v1394, %v1387
      %v2235 = vpack.c.b16 %v1402, %v1395
      %v2236 = vpack.c.b16 %v1403, %v1396
      %v2237 = vpack.c.b16 %v1404, %v1397
      %v2238 = vpack.c.b16 %v1405, %v1398
      %v2239 = vpack.c.b16 %v1406, %v1399
      %v2240 = vpack.c.b16 %v1407, %v1400
      %v2241 = vpack.c.b16 %v1408, %v1401
      %v2242 = vpack.c.b16 %v1416, %v1409
      %v2243 = vpack.c.b16 %v1417, %v1410
      %v2244 = vpack.c.b16 %v1418, %v1411
      %v2245 = vpack.c.b16 %v1419, %v1412
      %v2246 = vpack.c.b16 %v1420, %v1413
      %v2247 = vpack.c.b16 %v1421, %v1414
      %v2248 = vpack.c.b16 %v1422, %v1415
      %v2249 = vpack.c.b16 %v1430, %v1423
      %v2250 = vpack.c.b16 %v1431, %v1424
      %v2251 = vpack.c.b16 %v1432, %v1425
      %v2252 = vpack.c.b16 %v1433, %v1426
      %v2253 = vpack.c.b16 %v1434, %v1427
      %v2254 = vpack.c.b16 %v1435, %v1428
      %v2255 = vpack.c.b16 %v1436, %v1429
      %v2256 = vpack.c.b16 %v1444, %v1437
      %v2257 = vpack.c.b16 %v1445, %v1438
      %v2258 = vpack.c.b16 %v1446, %v1439
      %v2259 = vpack.c.b16 %v1447, %v1440
      %v2260 = vpack.c.b16 %v1448, %v1441
      %v2261 = vpack.c.b16 %v1449, %v1442
      %v2262 = vpack.c.b16 %v1450, %v1443
      %v2263 = vpack.c.b16 %v1458, %v1451
      %v2264 = vpack.c.b16 %v1459, %v1452
      %v2265 = vpack.c.b16 %v1460, %v1453
      %v2266 = vpack.c.b16 %v1461, %v1454
      %v2267 = vpack.c.b16 %v1462, %v1455
      %v2268 = vpack.c.b16 %v1463, %v1456
      %v2269 = vpack.c.b16 %v1464, %v1457
      %v2270 = vpack.c.b16 %v1472, %v1465
      %v2271 = vpack.c.b16 %v1473, %v1466
      %v2272 = vpack.c.b16 %v1474, %v1467
      %v2273 = vpack.c.b16 %v1475, %v1468
      %v2274 = vpack.c.b16 %v1476, %v1469
      %v2275 = vpack.c.b16 %v1477, %v1470
      %v2276 = vpack.c.b16 %v1478, %v1471
      %v2277 = vpack.c.b16 %v1486, %v1479
      %v2278 = vpack.c.b16 %v1487, %v1480
      %v2279 = vpack.c.b16 %v1488, %v1481
      %v2280 = vpack.c.b16 %v1489, %v1482
      %v2281 = vpack.c.b16 %v1490, %v1483
      %v2282 = vpack.c.b16 %v1491, %v1484
      %v2283 = vpack.c.b16 %v1492, %v1485
      %v2284 = vpack.c.b16 %v1500, %v1493
      %v2285 = vpack.c.b16 %v1501, %v1494
      %v2286 = vpack.c.b16 %v1502, %v1495
      %v2287 = vpack.c.b16 %v1503, %v1496
      %v2288 = vpack.c.b16 %v1504, %v1497
      %v2289 = vpack.c.b16 %v1505, %v1498
      %v2290 = vpack.c.b16 %v1506, %v1499
      %v2291 = vpack.c.b16 %v1514, %v1507
      %v2292 = vpack.c.b16 %v1515, %v1508
      %v2293 = vpack.c.b16 %v1516, %v1509
      %v2294 = vpack.c.b16 %v1517, %v1510
      %v2295 = vpack.c.b16 %v1518, %v1511
      %v2296 = vpack.c.b16 %v1519, %v1512
      %v2297 = vpack.c.b16 %v1520, %v1513
      %v2298 = vpack.c.b16 %v1528, %v1521
      %v2299 = vpack.c.b16 %v1529, %v1522
      %v2300 = vpack.c.b16 %v1530, %v1523
      %v2301 = vpack.c.b16 %v1531, %v1524
      %v2302 = vpack.c.b16 %v1532, %v1525
      %v2303 = vpack.c.b16 %v1533, %v1526
      %v2304 = vpack.c.b16 %v1534, %v1527
      %v2305 = vpack.c.b16 %v1542, %v1535
      %v2306 = vpack.c.b16 %v1543, %v1536
      %v2307 = vpack.c.b16 %v1544, %v1537
      %v2308 = vpack.c.b16 %v1545, %v1538
      %v2309 = vpack.c.b16 %v1546, %v1539
      %v2310 = vpack.c.b16 %v1547, %v1540
      %v2311 = vpack.c.b16 %v1548, %v1541
      %v2312 = vpack.c.b16 %v1556, %v1549
      %v2313 = vpack.c.b16 %v1557, %v1550
      %v2314 = vpack.c.b16 %v1558, %v1551
      %v2315 = vpack.c.b16 %v1559, %v1552
      %v2316 = vpack.c.b16 %v1560, %v1553
      %v2317 = vpack.c.b16 %v1561, %v1554
      %v2318 = vpack.c.b16 %v1562, %v1555
      %v2319 = vpack.c.b16 %v1570, %v1563
      %v2320 = vpack.c.b16 %v1571, %v1564
      %v2321 = vpack.c.b16 %v1572, %v1565
      %v2322 = vpack.c.b16 %v1573, %v1566
      %v2323 = vpack.c.b16 %v1574, %v1567
      %v2324 = vpack.c.b16 %v1575, %v1568
      %v2325 = vpack.c.b16 %v1576, %v1569
      %v2326 = vpack.c.b16 %v1584, %v1577
      %v2327 = vpack.c.b16 %v1585, %v1578
      %v2328 = vpack.c.b16 %v1586, %v1579
      %v2329 = vpack.c.b16 %v1587, %v1580
      %v2330 = vpack.c.b16 %v1588, %v1581
      %v2331 = vpack.c.b16 %v1589, %v1582
      %v2332 = vpack.c.b16 %v1590, %v1583
      %v2333 = vpack.c.b16 %v1598, %v1591
      %v2334 = vpack.c.b16 %v1599, %v1592
      %v2335 = vpack.c.b16 %v1600, %v1593
      %v2336 = vpack.c.b16 %v1601, %v1594
      %v2337 = vpack.c.b16 %v1602, %v1595
      %v2338 = vpack.c.b16 %v1603, %v1596
      %v2339 = vpack.c.b16 %v1604, %v1597
      %v2340 = vpack.c.b16 %v1612, %v1605
      %v2341 = vpack.c.b16 %v1613, %v1606
      %v2342 = vpack.c.b16 %v1614, %v1607
      %v2343 = vpack.c.b16 %v1615, %v1608
      %v2344 = vpack.c.b16 %v1616, %v1609
      %v2345 = vpack.c.b16 %v1617, %v1610
      %v2346 = vpack.c.b16 %v1618, %v1611
      %v2347 = vpack.c.b16 %v1626, %v1619
      %v2348 = vpack.c.b16 %v1627, %v1620
      %v2349 = vpack.c.b16 %v1628, %v1621
      %v2350 = vpack.c.b16 %v1629, %v1622
      %v2351 = vpack.c.b16 %v1630, %v1623
      %v2352 = vpack.c.b16 %v1631, %v1624
      %v2353 = vpack.c.b16 %v1632, %v1625
      %v2354 = vpack.c.b16 %v1640, %v1633
      %v2355 = vpack.c.b16 %v1641, %v1634
      %v2356 = vpack.c.b16 %v1642, %v1635
      %v2357 = vpack.c.b16 %v1643, %v1636
      %v2358 = vpack.c.b16 %v1644, %v1637
      %v2359 = vpack.c.b16 %v1645, %v1638
      %v2360 = vpack.c.b16 %v1646, %v1639
      %v2361 = vpack.c.b16 %v1654, %v1647
      %v2362 = vpack.c.b16 %v1655, %v1648
      %v2363 = vpack.c.b16 %v1656, %v1649
      %v2364 = vpack.c.b16 %v1657, %v1650
      %v2365 = vpack.c.b16 %v1658, %v1651
      %v2366 = vpack.c.b16 %v1659, %v1652
      %v2367 = vpack.c.b16 %v1660, %v1653
      %v2368 = vpack.c.b16 %v1668, %v1661
      %v2369 = vpack.c.b16 %v1669, %v1662
      %v2370 = vpack.c.b16 %v1670, %v1663
      %v2371 = vpack.c.b16 %v1671, %v1664
      %v2372 = vpack.c.b16 %v1672, %v1665
      %v2373 = vpack.c.b16 %v1673, %v1666
      %v2374 = vpack.c.b16 %v1674, %v1667
      %v2375 = vpack.c.b16 %v1682, %v1675
      %v2376 = vpack.c.b16 %v1683, %v1676
      %v2377 = vpack.c.b16 %v1684, %v1677
      %v2378 = vpack.c.b16 %v1685, %v1678
      %v2379 = vpack.c.b16 %v1686, %v1679
      %v2380 = vpack.c.b16 %v1687, %v1680
      %v2381 = vpack.c.b16 %v1688, %v1681
      %v2382 = vpack.c.b16 %v1696, %v1689
      %v2383 = vpack.c.b16 %v1697, %v1690
      %v2384 = vpack.c.b16 %v1698, %v1691
      %v2385 = vpack.c.b16 %v1699, %v1692
      %v2386 = vpack.c.b16 %v1700, %v1693
      %v2387 = vpack.c.b16 %v1701, %v1694
      %v2388 = vpack.c.b16 %v1702, %v1695
      %v2389 = vpack.c.b16 %v1710, %v1703
      %v2390 = vpack.c.b16 %v1711, %v1704
      %v2391 = vpack.c.b16 %v1712, %v1705
      %v2392 = vpack.c.b16 %v1713, %v1706
      %v2393 = vpack.c.b16 %v1714, %v1707
      %v2394 = vpack.c.b16 %v1715, %v1708
      %v2395 = vpack.c.b16 %v1716, %v1709
      %v2396 = vpack.c.b16 %v1724, %v1717
      %v2397 = vpack.c.b16 %v1725, %v1718
      %v2398 = vpack.c.b16 %v1726, %v1719
      %v2399 = vpack.c.b16 %v1727, %v1720
      %v2400 = vpack.c.b16 %v1728, %v1721
      %v2401 = vpack.c.b16 %v1729, %v1722
      %v2402 = vpack.c.b16 %v1730, %v1723
      %v2403 = vpack.c.b16 %v1738, %v1731
      %v2404 = vpack.c.b16 %v1739, %v1732
      %v2405 = vpack.c.b16 %v1740, %v1733
      %v2406 = vpack.c.b16 %v1741, %v1734
      %v2407 = vpack.c.b16 %v1742, %v1735
      %v2408 = vpack.c.b16 %v1743, %v1736
      %v2409 = vpack.c.b16 %v1744, %v1737
      %v2410 = vpack.c.b16 %v1752, %v1745
      %v2411 = vpack.c.b16 %v1753, %v1746
      %v2412 = vpack.c.b16 %v1754, %v1747
      %v2413 = vpack.c.b16 %v1755, %v1748
      %v2414 = vpack.c.b16 %v1756, %v1749
      %v2415 = vpack.c.b16 %v1757, %v1750
      %v2416 = vpack.c.b16 %v1758, %v1751
      %v2417 = vpack.c.b16 %v1766, %v1759
      %v2418 = vpack.c.b16 %v1767, %v1760
      %v2419 = vpack.c.b16 %v1768, %v1761
      %v2420 = vpack.c.b16 %v1769, %v1762
      %v2421 = vpack.c.b16 %v1770, %v1763
      %v2422 = vpack.c.b16 %v1771, %v1764
      %v2423 = vpack.c.b16 %v1772, %v1765
      %v2424 = vpack.c.b16 %v1780, %v1773
      %v2425 = vpack.c.b16 %v1781, %v1774
      %v2426 = vpack.c.b16 %v1782, %v1775
      %v2427 = vpack.c.b16 %v1783, %v1776
      %v2428 = vpack.c.b16 %v1784, %v1777
      %v2429 = vpack.c.b16 %v1785, %v1778
      %v2430 = vpack.c.b16 %v1786, %v1779
      %v2431 = vpack.c.b16 %v1794, %v1787
      %v2432 = vpack.c.b16 %v1795, %v1788
      %v2433 = vpack.c.b16 %v1796, %v1789
      %v2434 = vpack.c.b16 %v1797, %v1790
      %v2435 = vpack.c.b16 %v1798, %v1791
      %v2436 = vpack.c.b16 %v1799, %v1792
      %v2437 = vpack.c.b16 %v1800, %v1793
      %v2438 = vpack.c.b16 %v1808, %v1801
      %v2439 = vpack.c.b16 %v1809, %v1802
      %v2440 = vpack.c.b16 %v1810, %v1803
      %v2441 = vpack.c.b16 %v1811, %v1804
      %v2442 = vpack.c.b16 %v1812, %v1805
      %v2443 = vpack.c.b16 %v1813, %v1806
      %v2444 = vpack.c.b16 %v1814, %v1807
      %v2445 = vpack.c.b16 %v1822, %v1815
      %v2446 = vpack.c.b16 %v1823, %v1816
      %v2447 = vpack.c.b16 %v1824, %v1817
      %v2448 = vpack.c.b16 %v1825, %v1818
      %v2449 = vpack.c.b16 %v1826, %v1819
      %v2450 = vpack.c.b16 %v1827, %v1820
      %v2451 = vpack.c.b16 %v1828, %v1821
      %v2452 = vpack.c.b16 %v1836, %v1829
      %v2453 = vpack.c.b16 %v1837, %v1830
      %v2454 = vpack.c.b16 %v1838, %v1831
      %v2455 = vpack.c.b16 %v1839, %v1832
      %v2456 = vpack.c.b16 %v1840, %v1833
      %v2457 = vpack.c.b16 %v1841, %v1834
      %v2458 = vpack.c.b16 %v1842, %v1835
      %v2459 = vpack.c.b16 %v1850, %v1843
      %v2460 = vpack.c.b16 %v1851, %v1844
      %v2461 = vpack.c.b16 %v1852, %v1845
      %v2462 = vpack.c.b16 %v1853, %v1846
      %v2463 = vpack.c.b16 %v1854, %v1847
      %v2464 = vpack.c.b16 %v1855, %v1848
      %v2465 = vpack.c.b16 %v1856, %v1849
      %v2466 = vpack.c.b16 %v1864, %v1857
      %v2467 = vpack.c.b16 %v1865, %v1858
      %v2468 = vpack.c.b16 %v1866, %v1859
      %v2469 = vpack.c.b16 %v1867, %v1860
      %v2470 = vpack.c.b16 %v1868, %v1861
      %v2471 = vpack.c.b16 %v1869, %v1862
      %v2472 = vpack.c.b16 %v1870, %v1863
      %v2473 = vpack.c.b16 %v1878, %v1871
      %v2474 = vpack.c.b16 %v1879, %v1872
      %v2475 = vpack.c.b16 %v1880, %v1873
      %v2476 = vpack.c.b16 %v1881, %v1874
      %v2477 = vpack.c.b16 %v1882, %v1875
      %v2478 = vpack.c.b16 %v1883, %v1876
      %v2479 = vpack.c.b16 %v1884, %v1877
      %v2480 = vpack.c.b16 %v1892, %v1885
      %v2481 = vpack.c.b16 %v1893, %v1886
      %v2482 = vpack.c.b16 %v1894, %v1887
      %v2483 = vpack.c.b16 %v1895, %v1888
      %v2484 = vpack.c.b16 %v1896, %v1889
      %v2485 = vpack.c.b16 %v1897, %v1890
      %v2486 = vpack.c.b16 %v1898, %v1891
      %v2487 = vpack.c.b16 %v1906, %v1899
      %v2488 = vpack.c.b16 %v1907, %v1900
      %v2489 = vpack.c.b16 %v1908, %v1901
      %v2490 = vpack.c.b16 %v1909, %v1902
      %v2491 = vpack.c.b16 %v1910, %v1903
      %v2492 = vpack.c.b16 %v1911, %v1904
      %v2493 = vpack.c.b16 %v1912, %v1905
      %v2494 = vpack.c.b16 %v1920, %v1913
      %v2495 = vpack.c.b16 %v1921, %v1914
      %v2496 = vpack.c.b16 %v1922, %v1915
      %v2497 = vpack.c.b16 %v1923, %v1916
      %v2498 = vpack.c.b16 %v1924, %v1917
      %v2499 = vpack.c.b16 %v1925, %v1918
      %v2500 = vpack.c.b16 %v1926, %v1919
      %v2501 = vpack.c.b16 %v1934, %v1927
      %v2502 = vpack.c.b16 %v1935, %v1928
      %v2503 = vpack.c.b16 %v1936, %v1929
      %v2504 = vpack.c.b16 %v1937, %v1930
      %v2505 = vpack.c.b16 %v1938, %v1931
      %v2506 = vpack.c.b16 %v1939, %v1932
      %v2507 = vpack.c.b16 %v1940, %v1933
      %v2508 = vpack.c.b16 %v1948, %v1941
      %v2509 = vpack.c.b16 %v1949, %v1942
      %v2510 = vpack.c.b16 %v1950, %v1943
      %v2511 = vpack.c.b16 %v1951, %v1944
      %v2512 = vpack.c.b16 %v1952, %v1945
      %v2513 = vpack.c.b16 %v1953, %v1946
      %v2514 = vpack.c.b16 %v1954, %v1947
      %v2515 = vpack.c.b16 %v1962, %v1955
      %v2516 = vpack.c.b16 %v1963, %v1956
      %v2517 = vpack.c.b16 %v1964, %v1957
      %v2518 = vpack.c.b16 %v1965, %v1958
      %v2519 = vpack.c.b16 %v1966, %v1959
      %v2520 = vpack.c.b16 %v1967, %v1960
      %v2521 = vpack.c.b16 %v1968, %v1961
      %v2522 = vpack.c.b16 %v1976, %v1969
      %v2523 = vpack.c.b16 %v1977, %v1970
      %v2524 = vpack.c.b16 %v1978, %v1971
      %v2525 = vpack.c.b16 %v1979, %v1972
      %v2526 = vpack.c.b16 %v1980, %v1973
      %v2527 = vpack.c.b16 %v1981, %v1974
      %v2528 = vpack.c.b16 %v1982, %v1975
      %v2529 = vpack.c.b16 %v1990, %v1983
      %v2530 = vpack.c.b16 %v1991, %v1984
      %v2531 = vpack.c.b16 %v1992, %v1985
      %v2532 = vpack.c.b16 %v1993, %v1986
      %v2533 = vpack.c.b16 %v1994, %v1987
      %v2534 = vpack.c.b16 %v1995, %v1988
      %v2535 = vpack.c.b16 %v1996, %v1989
      %v2536 = vpack.c.b16 %v2004, %v1997
      %v2537 = vpack.c.b16 %v2005, %v1998
      %v2538 = vpack.c.b16 %v2006, %v1999
      %v2539 = vpack.c.b16 %v2007, %v2000
      %v2540 = vpack.c.b16 %v2008, %v2001
      %v2541 = vpack.c.b16 %v2009, %v2002
      %v2542 = vpack.c.b16 %v2010, %v2003
      %v2543 = vpack.c.b16 %v2018, %v2011
      %v2544 = vpack.c.b16 %v2019, %v2012
      %v2545 = vpack.c.b16 %v2020, %v2013
      %v2546 = vpack.c.b16 %v2021, %v2014
      %v2547 = vpack.c.b16 %v2022, %v2015
      %v2548 = vpack.c.b16 %v2023, %v2016
      %v2549 = vpack.c.b16 %v2024, %v2017
      %v2550 = vpack.c.b16 %v2032, %v2025
      %v2551 = vpack.c.b16 %v2033, %v2026
      %v2552 = vpack.c.b16 %v2034, %v2027
      %v2553 = vpack.c.b16 %v2035, %v2028
      %v2554 = vpack.c.b16 %v2036, %v2029
      %v2555 = vpack.c.b16 %v2037, %v2030
      %v2556 = vpack.c.b16 %v2038, %v2031
      %v2557 = vpack.c.b16 %v2046, %v2039
      %v2558 = vpack.c.b16 %v2047, %v2040
      %v2559 = vpack.c.b16 %v2048, %v2041
      %v2560 = vpack.c.b16 %v2049, %v2042
      %v2561 = vpack.c.b16 %v2050, %v2043
      %v2562 = vpack.c.b16 %v2051, %v2044
      %v2563 = vpack.c.b16 %v2052, %v2045
      %v2564 = vpack.c.b16 %v2060, %v2053
      %v2565 = vpack.c.b16 %v2061, %v2054
      %v2566 = vpack.c.b16 %v2062, %v2055
      %v2567 = vpack.c.b16 %v2063, %v2056
      %v2568 = vpack.c.b16 %v2064, %v2057
      %v2569 = vpack.c.b16 %v2065, %v2058
      %v2570 = vpack.c.b16 %v2066, %v2059
      %v2571 = vpack.c.b16 %v2074, %v2067
      %v2572 = vpack.c.b16 %v2075, %v2068
      %v2573 = vpack.c.b16 %v2076, %v2069
      %v2574 = vpack.c.b16 %v2077, %v2070
      %v2575 = vpack.c.b16 %v2078, %v2071
      %v2576 = vpack.c.b16 %v2079, %v2072
      %v2577 = vpack.c.b16 %v2080, %v2073
      %v2578 = vpack.c.b16 %v2088, %v2081
      %v2579 = vpack.c.b16 %v2089, %v2082
      %v2580 = vpack.c.b16 %v2090, %v2083
      %v2581 = vpack.c.b16 %v2091, %v2084
      %v2582 = vpack.c.b16 %v2092, %v2085
      %v2583 = vpack.c.b16 %v2093, %v2086
      %v2584 = vpack.c.b16 %v2094, %v2087
      %v2585 = vpack.c.b16 %v2102, %v2095
      %v2586 = vpack.c.b16 %v2103, %v2096
      %v2587 = vpack.c.b16 %v2104, %v2097
      %v2588 = vpack.c.b16 %v2105, %v2098
      %v2589 = vpack.c.b16 %v2106, %v2099
      %v2590 = vpack.c.b16 %v2107, %v2100
      %v2591 = vpack.c.b16 %v2108, %v2101
      %v2592 = vpack.c.b16 %v2116, %v2109
      %v2593 = vpack.c.b16 %v2117, %v2110
      %v2594 = vpack.c.b16 %v2118, %v2111
      %v2595 = vpack.c.b16 %v2119, %v2112
      %v2596 = vpack.c.b16 %v2120, %v2113
      %v2597 = vpack.c.b16 %v2121, %v2114
      %v2598 = vpack.c.b16 %v2122, %v2115
      %v2599 = vpack.c.b16 %v2130, %v2123
      %v2600 = vpack.c.b16 %v2131, %v2124
      %v2601 = vpack.c.b16 %v2132, %v2125
      %v2602 = vpack.c.b16 %v2133, %v2126
      %v2603 = vpack.c.b16 %v2134, %v2127
      %v2604 = vpack.c.b16 %v2135, %v2128
      %v2605 = vpack.c.b16 %v2136, %v2129
      %v2606 = vpack.c.b16 %v2144, %v2137
      %v2607 = vpack.c.b16 %v2145, %v2138
      %v2608 = vpack.c.b16 %v2146, %v2139
      %v2609 = vpack.c.b16 %v2147, %v2140
      %v2610 = vpack.c.b16 %v2148, %v2141
      %v2611 = vpack.c.b16 %v2149, %v2142
      %v2612 = vpack.c.b16 %v2150, %v2143
      %v2613 = vpack.c.b16 %v2158, %v2151
      %v2614 = vpack.c.b16 %v2159, %v2152
      %v2615 = vpack.c.b16 %v2160, %v2153
      %v2616 = vpack.c.b16 %v2161, %v2154
      %v2617 = vpack.c.b16 %v2162, %v2155
      %v2618 = vpack.c.b16 %v2163, %v2156
      %v2619 = vpack.c.b16 %v2164, %v2157
      %v2620 = vpack.c.b16 %v2172, %v2165
      %v2621 = vpack.c.b16 %v2173, %v2166
      %v2622 = vpack.c.b16 %v2174, %v2167
      %v2623 = vpack.c.b16 %v2175, %v2168
      %v2624 = vpack.c.b16 %v2176, %v2169
      %v2625 = vpack.c.b16 %v2177, %v2170
      %v2626 = vpack.c.b16 %v2178, %v2171
      %v3119 = vunpack.c.l.b16 %v663
      %v3120 = vunpack.c.l.b16 %v664
      %v3121 = vunpack.c.l.b16 %v665
      %v3122 = vunpack.c.l.b16 %v666
      %v3123 = vunpack.c.l.b16 %v667
      %v3124 = vunpack.c.l.b16 %v668
      %v3125 = vunpack.c.l.b16 %v669
      %v3126 = vunpack.c.l.b16 %v670
      %v3127 = vunpack.c.l.b16 %v671
      %v3128 = vunpack.c.l.b16 %v672
      %v3129 = vunpack.c.l.b16 %v673
      %v3130 = vunpack.c.l.b16 %v674
      %v3131 = vunpack.c.l.b16 %v675
      %v3132 = vunpack.c.l.b16 %v676
      %v3133 = vunpack.c.l.b16 %v677
      %v3134 = vunpack.c.l.b16 %v678
      %v3135 = vunpack.c.l.b16 %v679
      %v3136 = vunpack.c.l.b16 %v680
      %v3137 = vunpack.c.l.b16 %v681
      %v3138 = vunpack.c.l.b16 %v682
      %v3139 = vunpack.c.l.b16 %v683
      %v3140 = vunpack.c.l.b16 %v684
      %v3141 = vunpack.c.l.b16 %v685
      %v3142 = vunpack.c.l.b16 %v686
      %v3143 = vunpack.c.l.b16 %v687
      %v3144 = vunpack.c.l.b16 %v688
      %v3145 = vunpack.c.l.b16 %v689
      %v3146 = vunpack.c.l.b16 %v690
      %v3147 = vunpack.c.l.b16 %v691
      %v3148 = vunpack.c.l.b16 %v692
      %v3149 = vunpack.c.l.b16 %v693
      %v3150 = vunpack.c.l.b16 %v694
      %v3151 = vunpack.c.l.b16 %v695
      %v3152 = vunpack.c.l.b16 %v696
      %v3153 = vunpack.c.l.b16 %v697
      %v3154 = vunpack.c.l.b16 %v698
      %v3155 = vunpack.c.l.b16 %v699
      %v3156 = vunpack.c.l.b16 %v700
      %v3157 = vunpack.c.l.b16 %v701
      %v3158 = vunpack.c.l.b16 %v702
      %v3159 = vunpack.c.l.b16 %v703
      %v3160 = vunpack.c.l.b16 %v704
      %v3161 = vunpack.c.l.b16 %v705
      %v3162 = vunpack.c.l.b16 %v706
      %v3163 = vunpack.c.l.b16 %v707
      %v3164 = vunpack.c.l.b16 %v708
      %v3165 = vunpack.c.l.b16 %v709
      %v3166 = vunpack.c.l.b16 %v710
      %v3167 = vunpack.c.l.b16 %v711
      %v3168 = vunpack.c.l.b16 %v712
      %v3169 = vunpack.c.l.b16 %v713
      %v3170 = vunpack.c.l.b16 %v714
      %v3171 = vunpack.c.l.b16 %v715
      %v3172 = vunpack.c.l.b16 %v716
      %v3173 = vunpack.c.l.b16 %v717
      %v3174 = vunpack.c.l.b16 %v718
      %v3175 = vunpack.c.l.b16 %v719
      %v3176 = vunpack.c.l.b16 %v720
      %v3177 = vunpack.c.l.b16 %v721
      %v3178 = vunpack.c.l.b16 %v722
      %v3179 = vunpack.c.l.b16 %v723
      %v3180 = vunpack.c.l.b16 %v724
      %v3181 = vunpack.c.l.b16 %v725
      %v3182 = vunpack.c.l.b16 %v726
      %v3183 = vunpack.c.l.b16 %v727
      %v3184 = vunpack.c.l.b16 %v728
      %v3185 = vunpack.c.l.b16 %v729
      %v3186 = vunpack.c.l.b16 %v730
      %v3187 = vunpack.c.l.b16 %v731
      %v3188 = vunpack.c.l.b16 %v732
      %v3189 = vunpack.c.l.b16 %v733
      %v3190 = vunpack.c.l.b16 %v734
      %v3191 = vunpack.c.l.b16 %v735
      %v3192 = vunpack.c.l.b16 %v736
      %v3193 = vunpack.c.l.b16 %v737
      %v3194 = vunpack.c.l.b16 %v738
      %v3195 = vunpack.c.l.b16 %v739
      %v3196 = vunpack.c.l.b16 %v740
      %v3197 = vunpack.c.l.b16 %v741
      %v3198 = vunpack.c.l.b16 %v742
      %v3199 = vunpack.c.l.b16 %v743
      %v3200 = vunpack.c.l.b16 %v744
      %v3201 = vunpack.c.l.b16 %v745
      %v3202 = vunpack.c.l.b16 %v746
      %v3203 = vunpack.c.l.b16 %v747
      %v3204 = vunpack.c.l.b16 %v748
      %v3205 = vunpack.c.l.b16 %v749
      %v3206 = vunpack.c.l.b16 %v750
      %v3207 = vunpack.c.l.b16 %v751
      %v3208 = vunpack.c.l.b16 %v752
      %v3209 = vunpack.c.l.b16 %v753
      %v3210 = vunpack.c.l.b16 %v754
      %v3211 = vunpack.c.l.b16 %v755
      %v3212 = vunpack.c.l.b16 %v756
      %v3213 = vunpack.c.l.b16 %v757
      %v3214 = vunpack.c.l.b16 %v758
      %v3215 = vunpack.c.l.b16 %v759
      %v3216 = vunpack.c.l.b16 %v760
      %v3217 = vunpack.c.l.b16 %v761
      %v3218 = vunpack.c.l.b16 %v762
      %v3219 = vunpack.c.l.b16 %v763
      %v3220 = vunpack.c.l.b16 %v764
      %v3221 = vunpack.c.l.b16 %v765
      %v3222 = vunpack.c.l.b16 %v766
      %v3223 = vunpack.c.l.b16 %v767
      %v3224 = vunpack.c.l.b16 %v768
      %v3225 = vunpack.c.l.b16 %v769
      %v3226 = vunpack.c.l.b16 %v770
      %v3227 = vpack.c.b16 %v3120, %v3119
      %v3228 = vpack.c.b16 %v3122, %v3121
      %v3229 = vpack.c.b16 %v3124, %v3123
      %v3230 = vpack.c.b16 %v3126, %v3125
      %v3231 = vpack.c.b16 %v3128, %v3127
      %v3232 = vpack.c.b16 %v3130, %v3129
      %v3233 = vpack.c.b16 %v3132, %v3131
      %v3234 = vpack.c.b16 %v3134, %v3133
      %v3235 = vpack.c.b16 %v3136, %v3135
      %v3236 = vpack.c.b16 %v3138, %v3137
      %v3237 = vpack.c.b16 %v3140, %v3139
      %v3238 = vpack.c.b16 %v3142, %v3141
      %v3239 = vpack.c.b16 %v3144, %v3143
      %v3240 = vpack.c.b16 %v3146, %v3145
      %v3241 = vpack.c.b16 %v3148, %v3147
      %v3242 = vpack.c.b16 %v3150, %v3149
      %v3243 = vpack.c.b16 %v3152, %v3151
      %v3244 = vpack.c.b16 %v3154, %v3153
      %v3245 = vpack.c.b16 %v3156, %v3155
      %v3246 = vpack.c.b16 %v3158, %v3157
      %v3247 = vpack.c.b16 %v3160, %v3159
      %v3248 = vpack.c.b16 %v3162, %v3161
      %v3249 = vpack.c.b16 %v3164, %v3163
      %v3250 = vpack.c.b16 %v3166, %v3165
      %v3251 = vpack.c.b16 %v3168, %v3167
      %v3252 = vpack.c.b16 %v3170, %v3169
      %v3253 = vpack.c.b16 %v3172, %v3171
      %v3254 = vpack.c.b16 %v3174, %v3173
      %v3255 = vpack.c.b16 %v3176, %v3175
      %v3256 = vpack.c.b16 %v3178, %v3177
      %v3257 = vpack.c.b16 %v3180, %v3179
      %v3258 = vpack.c.b16 %v3182, %v3181
      %v3259 = vpack.c.b16 %v3184, %v3183
      %v3260 = vpack.c.b16 %v3186, %v3185
      %v3261 = vpack.c.b16 %v3188, %v3187
      %v3262 = vpack.c.b16 %v3190, %v3189
      %v3263 = vpack.c.b16 %v3192, %v3191
      %v3264 = vpack.c.b16 %v3194, %v3193
      %v3265 = vpack.c.b16 %v3196, %v3195
      %v3266 = vpack.c.b16 %v3198, %v3197
      %v3267 = vpack.c.b16 %v3200, %v3199
      %v3268 = vpack.c.b16 %v3202, %v3201
      %v3269 = vpack.c.b16 %v3204, %v3203
      %v3270 = vpack.c.b16 %v3206, %v3205
      %v3271 = vpack.c.b16 %v3208, %v3207
      %v3272 = vpack.c.b16 %v3210, %v3209
      %v3273 = vpack.c.b16 %v3212, %v3211
      %v3274 = vpack.c.b16 %v3214, %v3213
      %v3275 = vpack.c.b16 %v3216, %v3215
      %v3276 = vpack.c.b16 %v3218, %v3217
      %v3277 = vpack.c.b16 %v3220, %v3219
      %v3278 = vpack.c.b16 %v3222, %v3221
      %v3279 = vpack.c.b16 %v3224, %v3223
      %v3280 = vpack.c.b16 %v3226, %v3225
      %vm3335 = vcmask 785408
      %v3337 = vsel %vm3335, %v2185, 0
      %v3340 = vsel %vm3335, %v2192, 0
      %v3343 = vsel %vm3335, %v2199, 0
      %v3346 = vsel %vm3335, %v2206, 0
      %v3349 = vsel %vm3335, %v2213, 0
      %v3352 = vsel %vm3335, %v2220, 0
      %v3355 = vsel %vm3335, %v2227, 0
      %v3358 = vsel %vm3335, %v2234, 0
      %v3361 = vsel %vm3335, %v2241, 0
      %v3364 = vsel %vm3335, %v2248, 0
      %v3367 = vsel %vm3335, %v2255, 0
      %v3370 = vsel %vm3335, %v2262, 0
      %v3373 = vsel %vm3335, %v2269, 0
      %v3376 = vsel %vm3335, %v2276, 0
      %v3379 = vsel %vm3335, %v2283, 0
      %v3382 = vsel %vm3335, %v2290, 0
      %v3385 = vsel %vm3335, %v2297, 0
      %v3388 = vsel %vm3335, %v2304, 0
      %v3391 = vsel %vm3335, %v2311, 0
      %v3394 = vsel %vm3335, %v2318, 0
      %v3397 = vsel %vm3335, %v2325, 0
      %v3400 = vsel %vm3335, %v2332, 0
      %v3403 = vsel %vm3335, %v2339, 0
      %v3406 = vsel %vm3335, %v2346, 0
      %v3409 = vsel %vm3335, %v2353, 0
      %v3412 = vsel %vm3335, %v2360, 0
      %v3415 = vsel %vm3335, %v2367, 0
      %v3418 = vsel %vm3335, %v2374, 0
      %v3421 = vsel %vm3335, %v2381, 0
      %v3424 = vsel %vm3335, %v2388, 0
      %v3427 = vsel %vm3335, %v2395, 0
      %v3430 = vsel %vm3335, %v2402, 0
      %v3433 = vsel %vm3335, %v2409, 0
      %v3436 = vsel %vm3335, %v2416, 0
      %v3439 = vsel %vm3335, %v2423, 0
      %v3442 = vsel %vm3335, %v2430, 0
      %v3445 = vsel %vm3335, %v2437, 0
      %v3448 = vsel %vm3335, %v2444, 0
      %v3451 = vsel %vm3335, %v2451, 0
      %v3454 = vsel %vm3335, %v2458, 0
      %v3457 = vsel %vm3335, %v2465, 0
      %v3460 = vsel %vm3335, %v2472, 0
      %v3463 = vsel %vm3335, %v2479, 0
      %v3466 = vsel %vm3335, %v2486, 0
      %v3469 = vsel %vm3335, %v2493, 0
      %v3472 = vsel %vm3335, %v2500, 0
      %v3475 = vsel %vm3335, %v2507, 0
      %v3478 = vsel %vm3335, %v2514, 0
      %v3481 = vsel %vm3335, %v2521, 0
      %v3484 = vsel %vm3335, %v2528, 0
      %v3487 = vsel %vm3335, %v2535, 0
      %v3490 = vsel %vm3335, %v2542, 0
      %v3493 = vsel %vm3335, %v2549, 0
      %v3496 = vsel %vm3335, %v2556, 0
      %v3499 = vsel %vm3335, %v2563, 0
      %v3502 = vsel %vm3335, %v2570, 0
      %v3505 = vsel %vm3335, %v2577, 0
      %v3508 = vsel %vm3335, %v2584, 0
      %v3511 = vsel %vm3335, %v2591, 0
      %v3514 = vsel %vm3335, %v2598, 0
      %v3517 = vsel %vm3335, %v2605, 0
      %v3520 = vsel %vm3335, %v2612, 0
      %v3523 = vsel %vm3335, %v2619, 0
      %v3526 = vsel %vm3335, %v2626, 0
      %3528 = vmatprep.subr.bf16.mxu0 0
      %3529 = vmatpush1.bf16.msra.mxu0 %v3227
      %3530 = vmatprep.subr.bf16.mxu0 0
      %3531 = vmatpush1.bf16.msra.mxu0 %v3228
      %3532 = vmatprep.subr.bf16.mxu0 0
      %3533 = vmatpush1.bf16.msra.mxu0 %v3229
      %3534 = vmatprep.subr.bf16.mxu0 0
      %3535 = vmatpush1.bf16.msra.mxu0 %v3230
      %3536 = vmatprep.subr.bf16.mxu0 0
      %3537 = vmatpush1.bf16.msra.mxu0 %v3231
      %3538 = vmatprep.subr.bf16.mxu0 0
      %3539 = vmatpush1.bf16.msra.mxu0 %v3232
      %3540 = vmatprep.subr.bf16.mxu0 0
      %3541 = vmatpush1.bf16.msra.mxu0 %v3233
      %3542 = vmatprep.subr.bf16.mxu0 0
      %3543 = vmatpush1.bf16.msra.mxu0 %v3234
      %3544 = vmatprep.subr.bf16.mxu0 0
      %3545 = vmatpush1.bf16.msra.mxu0 %v3235
      %3546 = vmatprep.subr.bf16.mxu0 0
      %3547 = vmatpush1.bf16.msra.mxu0 %v3236
      %3548 = vmatprep.subr.bf16.mxu0 0
      %3549 = vmatpush1.bf16.msra.mxu0 %v3237
      %3550 = vmatprep.subr.bf16.mxu0 0
      %3551 = vmatpush1.bf16.msra.mxu0 %v3238
      %3552 = vmatprep.subr.bf16.mxu0 0
      %3553 = vmatpush1.bf16.msra.mxu0 %v3239
      %3554 = vmatprep.subr.bf16.mxu0 0
      %3555 = vmatpush1.bf16.msra.mxu0 %v3240
      %3556 = vmatprep.subr.bf16.mxu0 0
      %3557 = vmatpush1.bf16.msra.mxu0 %v3241
      %3558 = vmatprep.subr.bf16.mxu0 0
      %3559 = vmatpush1.bf16.msra.mxu0 %v3242
      %3560 = vmatprep.mubr.bf16.mxu0 %v2180
      %3561 = vmatmul.mubr.bf16.gmra.mrb[0].mxu0 %v2179
      %v3562 = vpop.f32.mrb[0].mxu0
      %v3563 = vadd.f32 0.0, %v3562
      %v3564 = vpop.f32.mrb[0].mxu0
      %v3565 = vpop.f32.mrb[0].mxu0
      %v3566 = vadd.f32 0.0, %v3565
      %v3567 = vpop.f32.mrb[0].mxu0
      %3568 = vmatprep.mubr.bf16.mxu0 %v2187
      %3569 = vmatmul.mubr.bf16.gmra.mrb[0].mxu0 %v2186
      %v3570 = vpop.f32.mrb[0].mxu0
      %v3571 = vadd.f32 0.0, %v3570
      %v3572 = vpop.f32.mrb[0].mxu0
      %v3573 = vpop.f32.mrb[0].mxu0
      %v3574 = vadd.f32 0.0, %v3573
      %v3575 = vpop.f32.mrb[0].mxu0
      %3576 = vmatprep.mubr.bf16.mxu0 %v2194
      %3577 = vmatmul.mubr.bf16.gmra.mrb[0].mxu0 %v2193
      %v3578 = vpop.f32.mrb[0].mxu0
      %v3579 = vadd.f32 0.0, %v3578
      %v3580 = vpop.f32.mrb[0].mxu0
      %v3581 = vpop.f32.mrb[0].mxu0
      %v3582 = vadd.f32 0.0, %v3581
      %v3583 = vpop.f32.mrb[0].mxu0
      %3584 = vmatprep.mubr.bf16.mxu0 %v2201
      %3585 = vmatmul.mubr.bf16.gmra.mrb[0].mxu0 %v2200
      %v3586 = vpop.f32.mrb[0].mxu0
      %v3587 = vadd.f32 0.0, %v3586
      %v3588 = vpop.f32.mrb[0].mxu0
      %v3589 = vpop.f32.mrb[0].mxu0
      %v3590 = vadd.f32 0.0, %v3589
      %v3591 = vpop.f32.mrb[0].mxu0
      %3592 = vmatprep.mubr.bf16.mxu0 %v2208
      %3593 = vmatmul.mubr.bf16.gmra.mrb[0].mxu0 %v2207
      %v3594 = vpop.f32.mrb[0].mxu0
      %v3595 = vadd.f32 0.0, %v3594
      %v3596 = vpop.f32.mrb[0].mxu0
      %v3597 = vpop.f32.mrb[0].mxu0
      %v3598 = vadd.f32 0.0, %v3597
      %v3599 = vpop.f32.mrb[0].mxu0
      %3600 = vmatprep.mubr.bf16.mxu0 %v2215
      %3601 = vmatmul.mubr.bf16.gmra.mrb[0].mxu0 %v2214
      %v3602 = vpop.f32.mrb[0].mxu0
      %v3603 = vadd.f32 0.0, %v3602
      %v3604 = vpop.f32.mrb[0].mxu0
      %v3605 = vpop.f32.mrb[0].mxu0
      %v3606 = vadd.f32 0.0, %v3605
      %v3607 = vpop.f32.mrb[0].mxu0
      %3608 = vmatprep.mubr.bf16.mxu0 %v2222
      %3609 = vmatmul.mubr.bf16.gmra.mrb[0].mxu0 %v2221
      %v3610 = vpop.f32.mrb[0].mxu0
      %v3611 = vadd.f32 0.0, %v3610
      %v3612 = vpop.f32.mrb[0].mxu0
      %v3613 = vpop.f32.mrb[0].mxu0
      %v3614 = vadd.f32 0.0, %v3613
      %v3615 = vpop.f32.mrb[0].mxu0
      %3616 = vmatprep.mubr.bf16.mxu0 %v2229
      %3617 = vmatmul.mubr.bf16.gmra.mrb[0].mxu0 %v2228
      %v3618 = vpop.f32.mrb[0].mxu0
      %v3619 = vadd.f32 0.0, %v3618
      %v3620 = vpop.f32.mrb[0].mxu0
      %v3621 = vpop.f32.mrb[0].mxu0
      %v3622 = vadd.f32 0.0, %v3621
      %v3623 = vpop.f32.mrb[0].mxu0
      %3624 = vmatprep.mubr.bf16.mxu0 %v2236
      %3625 = vmatmul.mubr.bf16.gmra.mrb[0].mxu0 %v2235
      %v3626 = vpop.f32.mrb[0].mxu0
      %v3627 = vadd.f32 0.0, %v3626
      %v3628 = vpop.f32.mrb[0].mxu0
      %v3629 = vpop.f32.mrb[0].mxu0
      %v3630 = vadd.f32 0.0, %v3629
      %v3631 = vpop.f32.mrb[0].mxu0
      %3632 = vmatprep.mubr.bf16.mxu0 %v2243
      %3633 = vmatmul.mubr.bf16.gmra.mrb[0].mxu0 %v2242
      %v3634 = vpop.f32.mrb[0].mxu0
      %v3635 = vadd.f32 0.0, %v3634
      %v3636 = vpop.f32.mrb[0].mxu0
      %v3637 = vpop.f32.mrb[0].mxu0
      %v3638 = vadd.f32 0.0, %v3637
      %v3639 = vpop.f32.mrb[0].mxu0
      %3640 = vmatprep.mubr.bf16.mxu0 %v2250
      %3641 = vmatmul.mubr.bf16.gmra.mrb[0].mxu0 %v2249
      %v3642 = vpop.f32.mrb[0].mxu0
      %v3643 = vadd.f32 0.0, %v3642
      %v3644 = vpop.f32.mrb[0].mxu0
      %v3645 = vpop.f32.mrb[0].mxu0
      %v3646 = vadd.f32 0.0, %v3645
      %v3647 = vpop.f32.mrb[0].mxu0
      %3648 = vmatprep.mubr.bf16.mxu0 %v2257
      %3649 = vmatmul.mubr.bf16.gmra.mrb[0].mxu0 %v2256
      %v3650 = vpop.f32.mrb[0].mxu0
      %v3651 = vadd.f32 0.0, %v3650
      %v3652 = vpop.f32.mrb[0].mxu0
      %v3653 = vpop.f32.mrb[0].mxu0
      %v3654 = vadd.f32 0.0, %v3653
      %v3655 = vpop.f32.mrb[0].mxu0
      %3656 = vmatprep.mubr.bf16.mxu0 %v2264
      %3657 = vmatmul.mubr.bf16.gmra.mrb[0].mxu0 %v2263
      %v3658 = vpop.f32.mrb[0].mxu0
      %v3659 = vadd.f32 0.0, %v3658
      %v3660 = vpop.f32.mrb[0].mxu0
      %v3661 = vpop.f32.mrb[0].mxu0
      %v3662 = vadd.f32 0.0, %v3661
      %v3663 = vpop.f32.mrb[0].mxu0
      %3664 = vmatprep.mubr.bf16.mxu0 %v2271
      %3665 = vmatmul.mubr.bf16.gmra.mrb[0].mxu0 %v2270
      %v3666 = vpop.f32.mrb[0].mxu0
      %v3667 = vadd.f32 0.0, %v3666
      %v3668 = vpop.f32.mrb[0].mxu0
      %v3669 = vpop.f32.mrb[0].mxu0
      %v3670 = vadd.f32 0.0, %v3669
      %v3671 = vpop.f32.mrb[0].mxu0
      %3672 = vmatprep.mubr.bf16.mxu0 %v2278
      %3673 = vmatmul.mubr.bf16.gmra.mrb[0].mxu0 %v2277
      %v3674 = vpop.f32.mrb[0].mxu0
      %v3675 = vadd.f32 0.0, %v3674
      %v3676 = vpop.f32.mrb[0].mxu0
      %v3677 = vpop.f32.mrb[0].mxu0
      %v3678 = vadd.f32 0.0, %v3677
      %v3679 = vpop.f32.mrb[0].mxu0
      %3680 = vmatprep.mubr.bf16.mxu0 %v2285
      %3681 = vmatmul.mubr.bf16.gmra.mrb[0].mxu0 %v2284
      %v3682 = vpop.f32.mrb[0].mxu0
      %v3683 = vadd.f32 0.0, %v3682
      %v3684 = vpop.f32.mrb[0].mxu0
      %v3685 = vpop.f32.mrb[0].mxu0
      %v3686 = vadd.f32 0.0, %v3685
      %v3687 = vpop.f32.mrb[0].mxu0
      %3688 = vmatprep.mubr.bf16.mxu0 %v2292
      %3689 = vmatmul.mubr.bf16.gmra.mrb[0].mxu0 %v2291
      %v3690 = vpop.f32.mrb[0].mxu0
      %v3691 = vadd.f32 0.0, %v3690
      %v3692 = vpop.f32.mrb[0].mxu0
      %v3693 = vpop.f32.mrb[0].mxu0
      %v3694 = vadd.f32 0.0, %v3693
      %v3695 = vpop.f32.mrb[0].mxu0
      %3696 = vmatprep.mubr.bf16.mxu0 %v2299
      %3697 = vmatmul.mubr.bf16.gmra.mrb[0].mxu0 %v2298
      %v3698 = vpop.f32.mrb[0].mxu0
      %v3699 = vadd.f32 0.0, %v3698
      %v3700 = vpop.f32.mrb[0].mxu0
      %v3701 = vpop.f32.mrb[0].mxu0
      %v3702 = vadd.f32 0.0, %v3701
      %v3703 = vpop.f32.mrb[0].mxu0
      %3704 = vmatprep.mubr.bf16.mxu0 %v2306
      %3705 = vmatmul.mubr.bf16.gmra.mrb[0].mxu0 %v2305
      %v3706 = vpop.f32.mrb[0].mxu0
      %v3707 = vadd.f32 0.0, %v3706
      %v3708 = vpop.f32.mrb[0].mxu0
      %v3709 = vpop.f32.mrb[0].mxu0
      %v3710 = vadd.f32 0.0, %v3709
      %v3711 = vpop.f32.mrb[0].mxu0
      %3712 = vmatprep.mubr.bf16.mxu0 %v2313
      %3713 = vmatmul.mubr.bf16.gmra.mrb[0].mxu0 %v2312
      %v3714 = vpop.f32.mrb[0].mxu0
      %v3715 = vadd.f32 0.0, %v3714
      %v3716 = vpop.f32.mrb[0].mxu0
      %v3717 = vpop.f32.mrb[0].mxu0
      %v3718 = vadd.f32 0.0, %v3717
      %v3719 = vpop.f32.mrb[0].mxu0
      %3720 = vmatprep.mubr.bf16.mxu0 %v2320
      %3721 = vmatmul.mubr.bf16.gmra.mrb[0].mxu0 %v2319
      %v3722 = vpop.f32.mrb[0].mxu0
      %v3723 = vadd.f32 0.0, %v3722
      %v3724 = vpop.f32.mrb[0].mxu0
      %v3725 = vpop.f32.mrb[0].mxu0
      %v3726 = vadd.f32 0.0, %v3725
      %v3727 = vpop.f32.mrb[0].mxu0
      %3728 = vmatprep.mubr.bf16.mxu0 %v2327
      %3729 = vmatmul.mubr.bf16.gmra.mrb[0].mxu0 %v2326
      %v3730 = vpop.f32.mrb[0].mxu0
      %v3731 = vadd.f32 0.0, %v3730
      %v3732 = vpop.f32.mrb[0].mxu0
      %v3733 = vpop.f32.mrb[0].mxu0
      %v3734 = vadd.f32 0.0, %v3733
      %v3735 = vpop.f32.mrb[0].mxu0
      %3736 = vmatprep.mubr.bf16.mxu0 %v2334
      %3737 = vmatmul.mubr.bf16.gmra.mrb[0].mxu0 %v2333
      %v3738 = vpop.f32.mrb[0].mxu0
      %v3739 = vadd.f32 0.0, %v3738
      %v3740 = vpop.f32.mrb[0].mxu0
      %v3741 = vpop.f32.mrb[0].mxu0
      %v3742 = vadd.f32 0.0, %v3741
      %v3743 = vpop.f32.mrb[0].mxu0
      %3744 = vmatprep.mubr.bf16.mxu0 %v2341
      %3745 = vmatmul.mubr.bf16.gmra.mrb[0].mxu0 %v2340
      %v3746 = vpop.f32.mrb[0].mxu0
      %v3747 = vadd.f32 0.0, %v3746
      %v3748 = vpop.f32.mrb[0].mxu0
      %v3749 = vpop.f32.mrb[0].mxu0
      %v3750 = vadd.f32 0.0, %v3749
      %v3751 = vpop.f32.mrb[0].mxu0
      %3752 = vmatprep.mubr.bf16.mxu0 %v2348
      %3753 = vmatmul.mubr.bf16.gmra.mrb[0].mxu0 %v2347
      %v3754 = vpop.f32.mrb[0].mxu0
      %v3755 = vadd.f32 0.0, %v3754
      %v3756 = vpop.f32.mrb[0].mxu0
      %v3757 = vpop.f32.mrb[0].mxu0
      %v3758 = vadd.f32 0.0, %v3757
      %v3759 = vpop.f32.mrb[0].mxu0
      %3760 = vmatprep.mubr.bf16.mxu0 %v2355
      %3761 = vmatmul.mubr.bf16.gmra.mrb[0].mxu0 %v2354
      %v3762 = vpop.f32.mrb[0].mxu0
      %v3763 = vadd.f32 0.0, %v3762
      %v3764 = vpop.f32.mrb[0].mxu0
      %v3765 = vpop.f32.mrb[0].mxu0
      %v3766 = vadd.f32 0.0, %v3765
      %v3767 = vpop.f32.mrb[0].mxu0
      %3768 = vmatprep.mubr.bf16.mxu0 %v2362
      %3769 = vmatmul.mubr.bf16.gmra.mrb[0].mxu0 %v2361
      %v3770 = vpop.f32.mrb[0].mxu0
      %v3771 = vadd.f32 0.0, %v3770
      %v3772 = vpop.f32.mrb[0].mxu0
      %v3773 = vpop.f32.mrb[0].mxu0
      %v3774 = vadd.f32 0.0, %v3773
      %v3775 = vpop.f32.mrb[0].mxu0
      %3776 = vmatprep.mubr.bf16.mxu0 %v2369
      %3777 = vmatmul.mubr.bf16.gmra.mrb[0].mxu0 %v2368
      %v3778 = vpop.f32.mrb[0].mxu0
      %v3779 = vadd.f32 0.0, %v3778
      %v3780 = vpop.f32.mrb[0].mxu0
      %v3781 = vpop.f32.mrb[0].mxu0
      %v3782 = vadd.f32 0.0, %v3781
      %v3783 = vpop.f32.mrb[0].mxu0
      %3784 = vmatprep.mubr.bf16.mxu0 %v2376
      %3785 = vmatmul.mubr.bf16.gmra.mrb[0].mxu0 %v2375
      %v3786 = vpop.f32.mrb[0].mxu0
      %v3787 = vadd.f32 0.0, %v3786
      %v3788 = vpop.f32.mrb[0].mxu0
      %v3789 = vpop.f32.mrb[0].mxu0
      %v3790 = vadd.f32 0.0, %v3789
      %v3791 = vpop.f32.mrb[0].mxu0
      %3792 = vmatprep.mubr.bf16.mxu0 %v2383
      %3793 = vmatmul.mubr.bf16.gmra.mrb[0].mxu0 %v2382
      %v3794 = vpop.f32.mrb[0].mxu0
      %v3795 = vadd.f32 0.0, %v3794
      %v3796 = vpop.f32.mrb[0].mxu0
      %v3797 = vpop.f32.mrb[0].mxu0
      %v3798 = vadd.f32 0.0, %v3797
      %v3799 = vpop.f32.mrb[0].mxu0
      %3800 = vmatprep.mubr.bf16.mxu0 %v2390
      %3801 = vmatmul.mubr.bf16.gmra.mrb[0].mxu0 %v2389
      %v3802 = vpop.f32.mrb[0].mxu0
      %v3803 = vadd.f32 0.0, %v3802
      %v3804 = vpop.f32.mrb[0].mxu0
      %v3805 = vpop.f32.mrb[0].mxu0
      %v3806 = vadd.f32 0.0, %v3805
      %v3807 = vpop.f32.mrb[0].mxu0
      %3808 = vmatprep.mubr.bf16.mxu0 %v2397
      %3809 = vmatmul.mubr.bf16.gmra.mrb[0].mxu0 %v2396
      %v3810 = vpop.f32.mrb[0].mxu0
      %v3811 = vadd.f32 0.0, %v3810
      %v3812 = vpop.f32.mrb[0].mxu0
      %v3813 = vpop.f32.mrb[0].mxu0
      %v3814 = vadd.f32 0.0, %v3813
      %v3815 = vpop.f32.mrb[0].mxu0
      %3816 = vmatprep.mubr.bf16.mxu0 %v2404
      %3817 = vmatmul.mubr.bf16.gmra.mrb[0].mxu0 %v2403
      %v3818 = vpop.f32.mrb[0].mxu0
      %v3819 = vadd.f32 0.0, %v3818
      %v3820 = vpop.f32.mrb[0].mxu0
      %v3821 = vpop.f32.mrb[0].mxu0
      %v3822 = vadd.f32 0.0, %v3821
      %v3823 = vpop.f32.mrb[0].mxu0
      %3824 = vmatprep.mubr.bf16.mxu0 %v2411
      %3825 = vmatmul.mubr.bf16.gmra.mrb[0].mxu0 %v2410
      %v3826 = vpop.f32.mrb[0].mxu0
      %v3827 = vadd.f32 0.0, %v3826
      %v3828 = vpop.f32.mrb[0].mxu0
      %v3829 = vpop.f32.mrb[0].mxu0
      %v3830 = vadd.f32 0.0, %v3829
      %v3831 = vpop.f32.mrb[0].mxu0
      %3832 = vmatprep.mubr.bf16.mxu0 %v2418
      %3833 = vmatmul.mubr.bf16.gmra.mrb[0].mxu0 %v2417
      %v3834 = vpop.f32.mrb[0].mxu0
      %v3835 = vadd.f32 0.0, %v3834
      %v3836 = vpop.f32.mrb[0].mxu0
      %v3837 = vpop.f32.mrb[0].mxu0
      %v3838 = vadd.f32 0.0, %v3837
      %v3839 = vpop.f32.mrb[0].mxu0
      %3840 = vmatprep.mubr.bf16.mxu0 %v2425
      %3841 = vmatmul.mubr.bf16.gmra.mrb[0].mxu0 %v2424
      %v3842 = vpop.f32.mrb[0].mxu0
      %v3843 = vadd.f32 0.0, %v3842
      %v3844 = vpop.f32.mrb[0].mxu0
      %v3845 = vpop.f32.mrb[0].mxu0
      %v3846 = vadd.f32 0.0, %v3845
      %v3847 = vpop.f32.mrb[0].mxu0
      %3848 = vmatprep.mubr.bf16.mxu0 %v2432
      %3849 = vmatmul.mubr.bf16.gmra.mrb[0].mxu0 %v2431
      %v3850 = vpop.f32.mrb[0].mxu0
      %v3851 = vadd.f32 0.0, %v3850
      %v3852 = vpop.f32.mrb[0].mxu0
      %v3853 = vpop.f32.mrb[0].mxu0
      %v3854 = vadd.f32 0.0, %v3853
      %v3855 = vpop.f32.mrb[0].mxu0
      %3856 = vmatprep.mubr.bf16.mxu0 %v2439
      %3857 = vmatmul.mubr.bf16.gmra.mrb[0].mxu0 %v2438
      %v3858 = vpop.f32.mrb[0].mxu0
      %v3859 = vadd.f32 0.0, %v3858
      %v3860 = vpop.f32.mrb[0].mxu0
      %v3861 = vpop.f32.mrb[0].mxu0
      %v3862 = vadd.f32 0.0, %v3861
      %v3863 = vpop.f32.mrb[0].mxu0
      %3864 = vmatprep.mubr.bf16.mxu0 %v2446
      %3865 = vmatmul.mubr.bf16.gmra.mrb[0].mxu0 %v2445
      %v3866 = vpop.f32.mrb[0].mxu0
      %v3867 = vadd.f32 0.0, %v3866
      %v3868 = vpop.f32.mrb[0].mxu0
      %v3869 = vpop.f32.mrb[0].mxu0
      %v3870 = vadd.f32 0.0, %v3869
      %v3871 = vpop.f32.mrb[0].mxu0
      %3872 = vmatprep.mubr.bf16.mxu0 %v2453
      %3873 = vmatmul.mubr.bf16.gmra.mrb[0].mxu0 %v2452
      %v3874 = vpop.f32.mrb[0].mxu0
      %v3875 = vadd.f32 0.0, %v3874
      %v3876 = vpop.f32.mrb[0].mxu0
      %v3877 = vpop.f32.mrb[0].mxu0
      %v3878 = vadd.f32 0.0, %v3877
      %v3879 = vpop.f32.mrb[0].mxu0
      %3880 = vmatprep.mubr.bf16.mxu0 %v2460
      %3881 = vmatmul.mubr.bf16.gmra.mrb[0].mxu0 %v2459
      %v3882 = vpop.f32.mrb[0].mxu0
      %v3883 = vadd.f32 0.0, %v3882
      %v3884 = vpop.f32.mrb[0].mxu0
      %v3885 = vpop.f32.mrb[0].mxu0
      %v3886 = vadd.f32 0.0, %v3885
      %v3887 = vpop.f32.mrb[0].mxu0
      %3888 = vmatprep.mubr.bf16.mxu0 %v2467
      %3889 = vmatmul.mubr.bf16.gmra.mrb[0].mxu0 %v2466
      %v3890 = vpop.f32.mrb[0].mxu0
      %v3891 = vadd.f32 0.0, %v3890
      %v3892 = vpop.f32.mrb[0].mxu0
      %v3893 = vpop.f32.mrb[0].mxu0
      %v3894 = vadd.f32 0.0, %v3893
      %v3895 = vpop.f32.mrb[0].mxu0
      %3896 = vmatprep.mubr.bf16.mxu0 %v2474
      %3897 = vmatmul.mubr.bf16.gmra.mrb[0].mxu0 %v2473
      %v3898 = vpop.f32.mrb[0].mxu0
      %v3899 = vadd.f32 0.0, %v3898
      %v3900 = vpop.f32.mrb[0].mxu0
      %v3901 = vpop.f32.mrb[0].mxu0
      %v3902 = vadd.f32 0.0, %v3901
      %v3903 = vpop.f32.mrb[0].mxu0
      %3904 = vmatprep.mubr.bf16.mxu0 %v2481
      %3905 = vmatmul.mubr.bf16.gmra.mrb[0].mxu0 %v2480
      %v3906 = vpop.f32.mrb[0].mxu0
      %v3907 = vadd.f32 0.0, %v3906
      %v3908 = vpop.f32.mrb[0].mxu0
      %v3909 = vpop.f32.mrb[0].mxu0
      %v3910 = vadd.f32 0.0, %v3909
      %v3911 = vpop.f32.mrb[0].mxu0
      %3912 = vmatprep.mubr.bf16.mxu0 %v2488
      %3913 = vmatmul.mubr.bf16.gmra.mrb[0].mxu0 %v2487
      %v3914 = vpop.f32.mrb[0].mxu0
      %v3915 = vadd.f32 0.0, %v3914
      %v3916 = vpop.f32.mrb[0].mxu0
      %v3917 = vpop.f32.mrb[0].mxu0
      %v3918 = vadd.f32 0.0, %v3917
      %v3919 = vpop.f32.mrb[0].mxu0
      %3920 = vmatprep.mubr.bf16.mxu0 %v2495
      %3921 = vmatmul.mubr.bf16.gmra.mrb[0].mxu0 %v2494
      %v3922 = vpop.f32.mrb[0].mxu0
      %v3923 = vadd.f32 0.0, %v3922
      %v3924 = vpop.f32.mrb[0].mxu0
      %v3925 = vpop.f32.mrb[0].mxu0
      %v3926 = vadd.f32 0.0, %v3925
      %v3927 = vpop.f32.mrb[0].mxu0
      %3928 = vmatprep.mubr.bf16.mxu0 %v2502
      %3929 = vmatmul.mubr.bf16.gmra.mrb[0].mxu0 %v2501
      %v3930 = vpop.f32.mrb[0].mxu0
      %v3931 = vadd.f32 0.0, %v3930
      %v3932 = vpop.f32.mrb[0].mxu0
      %v3933 = vpop.f32.mrb[0].mxu0
      %v3934 = vadd.f32 0.0, %v3933
      %v3935 = vpop.f32.mrb[0].mxu0
      %3936 = vmatprep.mubr.bf16.mxu0 %v2509
      %3937 = vmatmul.mubr.bf16.gmra.mrb[0].mxu0 %v2508
      %v3938 = vpop.f32.mrb[0].mxu0
      %v3939 = vadd.f32 0.0, %v3938
      %v3940 = vpop.f32.mrb[0].mxu0
      %v3941 = vpop.f32.mrb[0].mxu0
      %v3942 = vadd.f32 0.0, %v3941
      %v3943 = vpop.f32.mrb[0].mxu0
      %3944 = vmatprep.mubr.bf16.mxu0 %v2516
      %3945 = vmatmul.mubr.bf16.gmra.mrb[0].mxu0 %v2515
      %v3946 = vpop.f32.mrb[0].mxu0
      %v3947 = vadd.f32 0.0, %v3946
      %v3948 = vpop.f32.mrb[0].mxu0
      %v3949 = vpop.f32.mrb[0].mxu0
      %v3950 = vadd.f32 0.0, %v3949
      %v3951 = vpop.f32.mrb[0].mxu0
      %3952 = vmatprep.mubr.bf16.mxu0 %v2523
      %3953 = vmatmul.mubr.bf16.gmra.mrb[0].mxu0 %v2522
      %v3954 = vpop.f32.mrb[0].mxu0
      %v3955 = vadd.f32 0.0, %v3954
      %v3956 = vpop.f32.mrb[0].mxu0
      %v3957 = vpop.f32.mrb[0].mxu0
      %v3958 = vadd.f32 0.0, %v3957
      %v3959 = vpop.f32.mrb[0].mxu0
      %3960 = vmatprep.mubr.bf16.mxu0 %v2530
      %3961 = vmatmul.mubr.bf16.gmra.mrb[0].mxu0 %v2529
      %v3962 = vpop.f32.mrb[0].mxu0
      %v3963 = vadd.f32 0.0, %v3962
      %v3964 = vpop.f32.mrb[0].mxu0
      %v3965 = vpop.f32.mrb[0].mxu0
      %v3966 = vadd.f32 0.0, %v3965
      %v3967 = vpop.f32.mrb[0].mxu0
      %3968 = vmatprep.mubr.bf16.mxu0 %v2537
      %3969 = vmatmul.mubr.bf16.gmra.mrb[0].mxu0 %v2536
      %v3970 = vpop.f32.mrb[0].mxu0
      %v3971 = vadd.f32 0.0, %v3970
      %v3972 = vpop.f32.mrb[0].mxu0
      %v3973 = vpop.f32.mrb[0].mxu0
      %v3974 = vadd.f32 0.0, %v3973
      %v3975 = vpop.f32.mrb[0].mxu0
      %3976 = vmatprep.mubr.bf16.mxu0 %v2544
      %3977 = vmatmul.mubr.bf16.gmra.mrb[0].mxu0 %v2543
      %v3978 = vpop.f32.mrb[0].mxu0
      %v3979 = vadd.f32 0.0, %v3978
      %v3980 = vpop.f32.mrb[0].mxu0
      %v3981 = vpop.f32.mrb[0].mxu0
      %v3982 = vadd.f32 0.0, %v3981
      %v3983 = vpop.f32.mrb[0].mxu0
      %3984 = vmatprep.mubr.bf16.mxu0 %v2551
      %3985 = vmatmul.mubr.bf16.gmra.mrb[0].mxu0 %v2550
      %v3986 = vpop.f32.mrb[0].mxu0
      %v3987 = vadd.f32 0.0, %v3986
      %v3988 = vpop.f32.mrb[0].mxu0
      %v3989 = vpop.f32.mrb[0].mxu0
      %v3990 = vadd.f32 0.0, %v3989
      %v3991 = vpop.f32.mrb[0].mxu0
      %3992 = vmatprep.mubr.bf16.mxu0 %v2558
      %3993 = vmatmul.mubr.bf16.gmra.mrb[0].mxu0 %v2557
      %v3994 = vpop.f32.mrb[0].mxu0
      %v3995 = vadd.f32 0.0, %v3994
      %v3996 = vpop.f32.mrb[0].mxu0
      %v3997 = vpop.f32.mrb[0].mxu0
      %v3998 = vadd.f32 0.0, %v3997
      %v3999 = vpop.f32.mrb[0].mxu0
      %4000 = vmatprep.mubr.bf16.mxu0 %v2565
      %4001 = vmatmul.mubr.bf16.gmra.mrb[0].mxu0 %v2564
      %v4002 = vpop.f32.mrb[0].mxu0
      %v4003 = vadd.f32 0.0, %v4002
      %v4004 = vpop.f32.mrb[0].mxu0
      %v4005 = vpop.f32.mrb[0].mxu0
      %v4006 = vadd.f32 0.0, %v4005
      %v4007 = vpop.f32.mrb[0].mxu0
      %4008 = vmatprep.mubr.bf16.mxu0 %v2572
      %4009 = vmatmul.mubr.bf16.gmra.mrb[0].mxu0 %v2571
      %v4010 = vpop.f32.mrb[0].mxu0
      %v4011 = vadd.f32 0.0, %v4010
      %v4012 = vpop.f32.mrb[0].mxu0
      %v4013 = vpop.f32.mrb[0].mxu0
      %v4014 = vadd.f32 0.0, %v4013
      %v4015 = vpop.f32.mrb[0].mxu0
      %4016 = vmatprep.mubr.bf16.mxu0 %v2579
      %4017 = vmatmul.mubr.bf16.gmra.mrb[0].mxu0 %v2578
      %v4018 = vpop.f32.mrb[0].mxu0
      %v4019 = vadd.f32 0.0, %v4018
      %v4020 = vpop.f32.mrb[0].mxu0
      %v4021 = vpop.f32.mrb[0].mxu0
      %v4022 = vadd.f32 0.0, %v4021
      %v4023 = vpop.f32.mrb[0].mxu0
      %4024 = vmatprep.mubr.bf16.mxu0 %v2586
      %4025 = vmatmul.mubr.bf16.gmra.mrb[0].mxu0 %v2585
      %v4026 = vpop.f32.mrb[0].mxu0
      %v4027 = vadd.f32 0.0, %v4026
      %v4028 = vpop.f32.mrb[0].mxu0
      %v4029 = vpop.f32.mrb[0].mxu0
      %v4030 = vadd.f32 0.0, %v4029
      %v4031 = vpop.f32.mrb[0].mxu0
      %4032 = vmatprep.mubr.bf16.mxu0 %v2593
      %4033 = vmatmul.mubr.bf16.gmra.mrb[0].mxu0 %v2592
      %v4034 = vpop.f32.mrb[0].mxu0
      %v4035 = vadd.f32 0.0, %v4034
      %v4036 = vpop.f32.mrb[0].mxu0
      %v4037 = vpop.f32.mrb[0].mxu0
      %v4038 = vadd.f32 0.0, %v4037
      %v4039 = vpop.f32.mrb[0].mxu0
      %4040 = vmatprep.mubr.bf16.mxu0 %v2600
      %4041 = vmatmul.mubr.bf16.gmra.mrb[0].mxu0 %v2599
      %v4042 = vpop.f32.mrb[0].mxu0
      %v4043 = vadd.f32 0.0, %v4042
      %v4044 = vpop.f32.mrb[0].mxu0
      %v4045 = vpop.f32.mrb[0].mxu0
      %v4046 = vadd.f32 0.0, %v4045
      %v4047 = vpop.f32.mrb[0].mxu0
      %4048 = vmatprep.mubr.bf16.mxu0 %v2607
      %4049 = vmatmul.mubr.bf16.gmra.mrb[0].mxu0 %v2606
      %v4050 = vpop.f32.mrb[0].mxu0
      %v4051 = vadd.f32 0.0, %v4050
      %v4052 = vpop.f32.mrb[0].mxu0
      %v4053 = vpop.f32.mrb[0].mxu0
      %v4054 = vadd.f32 0.0, %v4053
      %v4055 = vpop.f32.mrb[0].mxu0
      %4056 = vmatprep.mubr.bf16.mxu0 %v2614
      %4057 = vmatmul.mubr.bf16.gmra.mrb[0].mxu0 %v2613
      %v4058 = vpop.f32.mrb[0].mxu0
      %v4059 = vadd.f32 0.0, %v4058
      %v4060 = vpop.f32.mrb[0].mxu0
      %v4061 = vpop.f32.mrb[0].mxu0
      %v4062 = vadd.f32 0.0, %v4061
      %v4063 = vpop.f32.mrb[0].mxu0
      %4064 = vmatprep.mubr.bf16.mxu0 %v2621
      %4065 = vmatmul.mubr.bf16.gmra.mrb[0].mxu0 %v2620
      %v4066 = vpop.f32.mrb[0].mxu0
      %v4067 = vadd.f32 0.0, %v4066
      %v4068 = vpop.f32.mrb[0].mxu0
      %v4069 = vpop.f32.mrb[0].mxu0
      %v4070 = vadd.f32 0.0, %v4069
      %v4071 = vpop.f32.mrb[0].mxu0
      %4072 = vdwg.mxu0
      %4073 = vmatprep.subr.bf16.mxu0 0
      %4074 = vmatpush1.bf16.msra.mxu0 %v3243
      %4075 = vmatprep.subr.bf16.mxu0 0
      %4076 = vmatpush1.bf16.msra.mxu0 %v3244
      %4077 = vmatprep.subr.bf16.mxu0 0
      %4078 = vmatpush1.bf16.msra.mxu0 %v3245
      %4079 = vmatprep.subr.bf16.mxu0 0
      %4080 = vmatpush1.bf16.msra.mxu0 %v3246
      %4081 = vmatprep.subr.bf16.mxu0 0
      %4082 = vmatpush1.bf16.msra.mxu0 %v3247
      %4083 = vmatprep.subr.bf16.mxu0 0
      %4084 = vmatpush1.bf16.msra.mxu0 %v3248
      %4085 = vmatprep.subr.bf16.mxu0 0
      %4086 = vmatpush1.bf16.msra.mxu0 %v3249
      %4087 = vmatprep.subr.bf16.mxu0 0
      %4088 = vmatpush1.bf16.msra.mxu0 %v3250
      %4089 = vmatprep.subr.bf16.mxu0 0
      %4090 = vmatpush1.bf16.msra.mxu0 %v3251
      %4091 = vmatprep.subr.bf16.mxu0 0
      %4092 = vmatpush1.bf16.msra.mxu0 %v3252
      %4093 = vmatprep.subr.bf16.mxu0 0
      %4094 = vmatpush1.bf16.msra.mxu0 %v3253
      %4095 = vmatprep.subr.bf16.mxu0 0
      %4096 = vmatpush1.bf16.msra.mxu0 %v3254
      %4097 = vmatprep.subr.bf16.mxu0 0
      %4098 = vmatpush1.bf16.msra.mxu0 %v3255
      %4099 = vmatprep.subr.bf16.mxu0 0
      %4100 = vmatpush1.bf16.msra.mxu0 %v3256
      %4101 = vmatprep.subr.bf16.mxu0 0
      %4102 = vmatpush1.bf16.msra.mxu0 %v3257
      %4103 = vmatprep.subr.bf16.mxu0 0
      %4104 = vmatpush1.bf16.msra.mxu0 %v3258
      %4105 = vmatprep.mubr.bf16.mxu0 %v2182
      %4106 = vmatmul.mubr.bf16.gmra.mrb[0].mxu0 %v2181
      %v4107 = vpop.f32.mrb[0].mxu0
      %v4108 = vadd.f32 %v3563, %v4107
      %v4109 = vpop.f32.mrb[0].mxu0
      %v4110 = vpop.f32.mrb[0].mxu0
      %v4111 = vadd.f32 %v3566, %v4110
      %v4112 = vpop.f32.mrb[0].mxu0
      %4113 = vmatprep.mubr.bf16.mxu0 %v2189
      %4114 = vmatmul.mubr.bf16.gmra.mrb[0].mxu0 %v2188
      %v4115 = vpop.f32.mrb[0].mxu0
      %v4116 = vadd.f32 %v3571, %v4115
      %v4117 = vpop.f32.mrb[0].mxu0
      %v4118 = vpop.f32.mrb[0].mxu0
      %v4119 = vadd.f32 %v3574, %v4118
      %v4120 = vpop.f32.mrb[0].mxu0
      %4121 = vmatprep.mubr.bf16.mxu0 %v2196
      %4122 = vmatmul.mubr.bf16.gmra.mrb[0].mxu0 %v2195
      %v4123 = vpop.f32.mrb[0].mxu0
      %v4124 = vadd.f32 %v3579, %v4123
      %v4125 = vpop.f32.mrb[0].mxu0
      %v4126 = vpop.f32.mrb[0].mxu0
      %v4127 = vadd.f32 %v3582, %v4126
      %v4128 = vpop.f32.mrb[0].mxu0
      %4129 = vmatprep.mubr.bf16.mxu0 %v2203
      %4130 = vmatmul.mubr.bf16.gmra.mrb[0].mxu0 %v2202
      %v4131 = vpop.f32.mrb[0].mxu0
      %v4132 = vadd.f32 %v3587, %v4131
      %v4133 = vpop.f32.mrb[0].mxu0
      %v4134 = vpop.f32.mrb[0].mxu0
      %v4135 = vadd.f32 %v3590, %v4134
      %v4136 = vpop.f32.mrb[0].mxu0
      %4137 = vmatprep.mubr.bf16.mxu0 %v2210
      %4138 = vmatmul.mubr.bf16.gmra.mrb[0].mxu0 %v2209
      %v4139 = vpop.f32.mrb[0].mxu0
      %v4140 = vadd.f32 %v3595, %v4139
      %v4141 = vpop.f32.mrb[0].mxu0
      %v4142 = vpop.f32.mrb[0].mxu0
      %v4143 = vadd.f32 %v3598, %v4142
      %v4144 = vpop.f32.mrb[0].mxu0
      %4145 = vmatprep.mubr.bf16.mxu0 %v2217
      %4146 = vmatmul.mubr.bf16.gmra.mrb[0].mxu0 %v2216
      %v4147 = vpop.f32.mrb[0].mxu0
      %v4148 = vadd.f32 %v3603, %v4147
      %v4149 = vpop.f32.mrb[0].mxu0
      %v4150 = vpop.f32.mrb[0].mxu0
      %v4151 = vadd.f32 %v3606, %v4150
      %v4152 = vpop.f32.mrb[0].mxu0
      %4153 = vmatprep.mubr.bf16.mxu0 %v2224
      %4154 = vmatmul.mubr.bf16.gmra.mrb[0].mxu0 %v2223
      %v4155 = vpop.f32.mrb[0].mxu0
      %v4156 = vadd.f32 %v3611, %v4155
      %v4157 = vpop.f32.mrb[0].mxu0
      %v4158 = vpop.f32.mrb[0].mxu0
      %v4159 = vadd.f32 %v3614, %v4158
      %v4160 = vpop.f32.mrb[0].mxu0
      %4161 = vmatprep.mubr.bf16.mxu0 %v2231
      %4162 = vmatmul.mubr.bf16.gmra.mrb[0].mxu0 %v2230
      %v4163 = vpop.f32.mrb[0].mxu0
      %v4164 = vadd.f32 %v3619, %v4163
      %v4165 = vpop.f32.mrb[0].mxu0
      %v4166 = vpop.f32.mrb[0].mxu0
      %v4167 = vadd.f32 %v3622, %v4166
      %v4168 = vpop.f32.mrb[0].mxu0
      %4169 = vmatprep.mubr.bf16.mxu0 %v2238
      %4170 = vmatmul.mubr.bf16.gmra.mrb[0].mxu0 %v2237
      %v4171 = vpop.f32.mrb[0].mxu0
      %v4172 = vadd.f32 %v3627, %v4171
      %v4173 = vpop.f32.mrb[0].mxu0
      %v4174 = vpop.f32.mrb[0].mxu0
      %v4175 = vadd.f32 %v3630, %v4174
      %v4176 = vpop.f32.mrb[0].mxu0
      %4177 = vmatprep.mubr.bf16.mxu0 %v2245
      %4178 = vmatmul.mubr.bf16.gmra.mrb[0].mxu0 %v2244
      %v4179 = vpop.f32.mrb[0].mxu0
      %v4180 = vadd.f32 %v3635, %v4179
      %v4181 = vpop.f32.mrb[0].mxu0
      %v4182 = vpop.f32.mrb[0].mxu0
      %v4183 = vadd.f32 %v3638, %v4182
      %v4184 = vpop.f32.mrb[0].mxu0
      %4185 = vmatprep.mubr.bf16.mxu0 %v2252
      %4186 = vmatmul.mubr.bf16.gmra.mrb[0].mxu0 %v2251
      %v4187 = vpop.f32.mrb[0].mxu0
      %v4188 = vadd.f32 %v3643, %v4187
      %v4189 = vpop.f32.mrb[0].mxu0
      %v4190 = vpop.f32.mrb[0].mxu0
      %v4191 = vadd.f32 %v3646, %v4190
      %v4192 = vpop.f32.mrb[0].mxu0
      %4193 = vmatprep.mubr.bf16.mxu0 %v2259
      %4194 = vmatmul.mubr.bf16.gmra.mrb[0].mxu0 %v2258
      %v4195 = vpop.f32.mrb[0].mxu0
      %v4196 = vadd.f32 %v3651, %v4195
      %v4197 = vpop.f32.mrb[0].mxu0
      %v4198 = vpop.f32.mrb[0].mxu0
      %v4199 = vadd.f32 %v3654, %v4198
      %v4200 = vpop.f32.mrb[0].mxu0
      %4201 = vmatprep.mubr.bf16.mxu0 %v2266
      %4202 = vmatmul.mubr.bf16.gmra.mrb[0].mxu0 %v2265
      %v4203 = vpop.f32.mrb[0].mxu0
      %v4204 = vadd.f32 %v3659, %v4203
      %v4205 = vpop.f32.mrb[0].mxu0
      %v4206 = vpop.f32.mrb[0].mxu0
      %v4207 = vadd.f32 %v3662, %v4206
      %v4208 = vpop.f32.mrb[0].mxu0
      %4209 = vmatprep.mubr.bf16.mxu0 %v2273
      %4210 = vmatmul.mubr.bf16.gmra.mrb[0].mxu0 %v2272
      %v4211 = vpop.f32.mrb[0].mxu0
      %v4212 = vadd.f32 %v3667, %v4211
      %v4213 = vpop.f32.mrb[0].mxu0
      %v4214 = vpop.f32.mrb[0].mxu0
      %v4215 = vadd.f32 %v3670, %v4214
      %v4216 = vpop.f32.mrb[0].mxu0
      %4217 = vmatprep.mubr.bf16.mxu0 %v2280
      %4218 = vmatmul.mubr.bf16.gmra.mrb[0].mxu0 %v2279
      %v4219 = vpop.f32.mrb[0].mxu0
      %v4220 = vadd.f32 %v3675, %v4219
      %v4221 = vpop.f32.mrb[0].mxu0
      %v4222 = vpop.f32.mrb[0].mxu0
      %v4223 = vadd.f32 %v3678, %v4222
      %v4224 = vpop.f32.mrb[0].mxu0
      %4225 = vmatprep.mubr.bf16.mxu0 %v2287
      %4226 = vmatmul.mubr.bf16.gmra.mrb[0].mxu0 %v2286
      %v4227 = vpop.f32.mrb[0].mxu0
      %v4228 = vadd.f32 %v3683, %v4227
      %v4229 = vpop.f32.mrb[0].mxu0
      %v4230 = vpop.f32.mrb[0].mxu0
      %v4231 = vadd.f32 %v3686, %v4230
      %v4232 = vpop.f32.mrb[0].mxu0
      %4233 = vmatprep.mubr.bf16.mxu0 %v2294
      %4234 = vmatmul.mubr.bf16.gmra.mrb[0].mxu0 %v2293
      %v4235 = vpop.f32.mrb[0].mxu0
      %v4236 = vadd.f32 %v3691, %v4235
      %v4237 = vpop.f32.mrb[0].mxu0
      %v4238 = vpop.f32.mrb[0].mxu0
      %v4239 = vadd.f32 %v3694, %v4238
      %v4240 = vpop.f32.mrb[0].mxu0
      %4241 = vmatprep.mubr.bf16.mxu0 %v2301
      %4242 = vmatmul.mubr.bf16.gmra.mrb[0].mxu0 %v2300
      %v4243 = vpop.f32.mrb[0].mxu0
      %v4244 = vadd.f32 %v3699, %v4243
      %v4245 = vpop.f32.mrb[0].mxu0
      %v4246 = vpop.f32.mrb[0].mxu0
      %v4247 = vadd.f32 %v3702, %v4246
      %v4248 = vpop.f32.mrb[0].mxu0
      %4249 = vmatprep.mubr.bf16.mxu0 %v2308
      %4250 = vmatmul.mubr.bf16.gmra.mrb[0].mxu0 %v2307
      %v4251 = vpop.f32.mrb[0].mxu0
      %v4252 = vadd.f32 %v3707, %v4251
      %v4253 = vpop.f32.mrb[0].mxu0
      %v4254 = vpop.f32.mrb[0].mxu0
      %v4255 = vadd.f32 %v3710, %v4254
      %v4256 = vpop.f32.mrb[0].mxu0
      %4257 = vmatprep.mubr.bf16.mxu0 %v2315
      %4258 = vmatmul.mubr.bf16.gmra.mrb[0].mxu0 %v2314
      %v4259 = vpop.f32.mrb[0].mxu0
      %v4260 = vadd.f32 %v3715, %v4259
      %v4261 = vpop.f32.mrb[0].mxu0
      %v4262 = vpop.f32.mrb[0].mxu0
      %v4263 = vadd.f32 %v3718, %v4262
      %v4264 = vpop.f32.mrb[0].mxu0
      %4265 = vmatprep.mubr.bf16.mxu0 %v2322
      %4266 = vmatmul.mubr.bf16.gmra.mrb[0].mxu0 %v2321
      %v4267 = vpop.f32.mrb[0].mxu0
      %v4268 = vadd.f32 %v3723, %v4267
      %v4269 = vpop.f32.mrb[0].mxu0
      %v4270 = vpop.f32.mrb[0].mxu0
      %v4271 = vadd.f32 %v3726, %v4270
      %v4272 = vpop.f32.mrb[0].mxu0
      %4273 = vmatprep.mubr.bf16.mxu0 %v2329
      %4274 = vmatmul.mubr.bf16.gmra.mrb[0].mxu0 %v2328
      %v4275 = vpop.f32.mrb[0].mxu0
      %v4276 = vadd.f32 %v3731, %v4275
      %v4277 = vpop.f32.mrb[0].mxu0
      %v4278 = vpop.f32.mrb[0].mxu0
      %v4279 = vadd.f32 %v3734, %v4278
      %v4280 = vpop.f32.mrb[0].mxu0
      %4281 = vmatprep.mubr.bf16.mxu0 %v2336
      %4282 = vmatmul.mubr.bf16.gmra.mrb[0].mxu0 %v2335
      %v4283 = vpop.f32.mrb[0].mxu0
      %v4284 = vadd.f32 %v3739, %v4283
      %v4285 = vpop.f32.mrb[0].mxu0
      %v4286 = vpop.f32.mrb[0].mxu0
      %v4287 = vadd.f32 %v3742, %v4286
      %v4288 = vpop.f32.mrb[0].mxu0
      %4289 = vmatprep.mubr.bf16.mxu0 %v2343
      %4290 = vmatmul.mubr.bf16.gmra.mrb[0].mxu0 %v2342
      %v4291 = vpop.f32.mrb[0].mxu0
      %v4292 = vadd.f32 %v3747, %v4291
      %v4293 = vpop.f32.mrb[0].mxu0
      %v4294 = vpop.f32.mrb[0].mxu0
      %v4295 = vadd.f32 %v3750, %v4294
      %v4296 = vpop.f32.mrb[0].mxu0
      %4297 = vmatprep.mubr.bf16.mxu0 %v2350
      %4298 = vmatmul.mubr.bf16.gmra.mrb[0].mxu0 %v2349
      %v4299 = vpop.f32.mrb[0].mxu0
      %v4300 = vadd.f32 %v3755, %v4299
      %v4301 = vpop.f32.mrb[0].mxu0
      %v4302 = vpop.f32.mrb[0].mxu0
      %v4303 = vadd.f32 %v3758, %v4302
      %v4304 = vpop.f32.mrb[0].mxu0
      %4305 = vmatprep.mubr.bf16.mxu0 %v2357
      %4306 = vmatmul.mubr.bf16.gmra.mrb[0].mxu0 %v2356
      %v4307 = vpop.f32.mrb[0].mxu0
      %v4308 = vadd.f32 %v3763, %v4307
      %v4309 = vpop.f32.mrb[0].mxu0
      %v4310 = vpop.f32.mrb[0].mxu0
      %v4311 = vadd.f32 %v3766, %v4310
      %v4312 = vpop.f32.mrb[0].mxu0
      %4313 = vmatprep.mubr.bf16.mxu0 %v2364
      %4314 = vmatmul.mubr.bf16.gmra.mrb[0].mxu0 %v2363
      %v4315 = vpop.f32.mrb[0].mxu0
      %v4316 = vadd.f32 %v3771, %v4315
      %v4317 = vpop.f32.mrb[0].mxu0
      %v4318 = vpop.f32.mrb[0].mxu0
      %v4319 = vadd.f32 %v3774, %v4318
      %v4320 = vpop.f32.mrb[0].mxu0
      %4321 = vmatprep.mubr.bf16.mxu0 %v2371
      %4322 = vmatmul.mubr.bf16.gmra.mrb[0].mxu0 %v2370
      %v4323 = vpop.f32.mrb[0].mxu0
      %v4324 = vadd.f32 %v3779, %v4323
      %v4325 = vpop.f32.mrb[0].mxu0
      %v4326 = vpop.f32.mrb[0].mxu0
      %v4327 = vadd.f32 %v3782, %v4326
      %v4328 = vpop.f32.mrb[0].mxu0
      %4329 = vmatprep.mubr.bf16.mxu0 %v2378
      %4330 = vmatmul.mubr.bf16.gmra.mrb[0].mxu0 %v2377
      %v4331 = vpop.f32.mrb[0].mxu0
      %v4332 = vadd.f32 %v3787, %v4331
      %v4333 = vpop.f32.mrb[0].mxu0
      %v4334 = vpop.f32.mrb[0].mxu0
      %v4335 = vadd.f32 %v3790, %v4334
      %v4336 = vpop.f32.mrb[0].mxu0
      %4337 = vmatprep.mubr.bf16.mxu0 %v2385
      %4338 = vmatmul.mubr.bf16.gmra.mrb[0].mxu0 %v2384
      %v4339 = vpop.f32.mrb[0].mxu0
      %v4340 = vadd.f32 %v3795, %v4339
      %v4341 = vpop.f32.mrb[0].mxu0
      %v4342 = vpop.f32.mrb[0].mxu0
      %v4343 = vadd.f32 %v3798, %v4342
      %v4344 = vpop.f32.mrb[0].mxu0
      %4345 = vmatprep.mubr.bf16.mxu0 %v2392
      %4346 = vmatmul.mubr.bf16.gmra.mrb[0].mxu0 %v2391
      %v4347 = vpop.f32.mrb[0].mxu0
      %v4348 = vadd.f32 %v3803, %v4347
      %v4349 = vpop.f32.mrb[0].mxu0
      %v4350 = vpop.f32.mrb[0].mxu0
      %v4351 = vadd.f32 %v3806, %v4350
      %v4352 = vpop.f32.mrb[0].mxu0
      %4353 = vmatprep.mubr.bf16.mxu0 %v2399
      %4354 = vmatmul.mubr.bf16.gmra.mrb[0].mxu0 %v2398
      %v4355 = vpop.f32.mrb[0].mxu0
      %v4356 = vadd.f32 %v3811, %v4355
      %v4357 = vpop.f32.mrb[0].mxu0
      %v4358 = vpop.f32.mrb[0].mxu0
      %v4359 = vadd.f32 %v3814, %v4358
      %v4360 = vpop.f32.mrb[0].mxu0
      %4361 = vmatprep.mubr.bf16.mxu0 %v2406
      %4362 = vmatmul.mubr.bf16.gmra.mrb[0].mxu0 %v2405
      %v4363 = vpop.f32.mrb[0].mxu0
      %v4364 = vadd.f32 %v3819, %v4363
      %v4365 = vpop.f32.mrb[0].mxu0
      %v4366 = vpop.f32.mrb[0].mxu0
      %v4367 = vadd.f32 %v3822, %v4366
      %v4368 = vpop.f32.mrb[0].mxu0
      %4369 = vmatprep.mubr.bf16.mxu0 %v2413
      %4370 = vmatmul.mubr.bf16.gmra.mrb[0].mxu0 %v2412
      %v4371 = vpop.f32.mrb[0].mxu0
      %v4372 = vadd.f32 %v3827, %v4371
      %v4373 = vpop.f32.mrb[0].mxu0
      %v4374 = vpop.f32.mrb[0].mxu0
      %v4375 = vadd.f32 %v3830, %v4374
      %v4376 = vpop.f32.mrb[0].mxu0
      %4377 = vmatprep.mubr.bf16.mxu0 %v2420
      %4378 = vmatmul.mubr.bf16.gmra.mrb[0].mxu0 %v2419
      %v4379 = vpop.f32.mrb[0].mxu0
      %v4380 = vadd.f32 %v3835, %v4379
      %v4381 = vpop.f32.mrb[0].mxu0
      %v4382 = vpop.f32.mrb[0].mxu0
      %v4383 = vadd.f32 %v3838, %v4382
      %v4384 = vpop.f32.mrb[0].mxu0
      %4385 = vmatprep.mubr.bf16.mxu0 %v2427
      %4386 = vmatmul.mubr.bf16.gmra.mrb[0].mxu0 %v2426
      %v4387 = vpop.f32.mrb[0].mxu0
      %v4388 = vadd.f32 %v3843, %v4387
      %v4389 = vpop.f32.mrb[0].mxu0
      %v4390 = vpop.f32.mrb[0].mxu0
      %v4391 = vadd.f32 %v3846, %v4390
      %v4392 = vpop.f32.mrb[0].mxu0
      %4393 = vmatprep.mubr.bf16.mxu0 %v2434
      %4394 = vmatmul.mubr.bf16.gmra.mrb[0].mxu0 %v2433
      %v4395 = vpop.f32.mrb[0].mxu0
      %v4396 = vadd.f32 %v3851, %v4395
      %v4397 = vpop.f32.mrb[0].mxu0
      %v4398 = vpop.f32.mrb[0].mxu0
      %v4399 = vadd.f32 %v3854, %v4398
      %v4400 = vpop.f32.mrb[0].mxu0
      %4401 = vmatprep.mubr.bf16.mxu0 %v2441
      %4402 = vmatmul.mubr.bf16.gmra.mrb[0].mxu0 %v2440
      %v4403 = vpop.f32.mrb[0].mxu0
      %v4404 = vadd.f32 %v3859, %v4403
      %v4405 = vpop.f32.mrb[0].mxu0
      %v4406 = vpop.f32.mrb[0].mxu0
      %v4407 = vadd.f32 %v3862, %v4406
      %v4408 = vpop.f32.mrb[0].mxu0
      %4409 = vmatprep.mubr.bf16.mxu0 %v2448
      %4410 = vmatmul.mubr.bf16.gmra.mrb[0].mxu0 %v2447
      %v4411 = vpop.f32.mrb[0].mxu0
      %v4412 = vadd.f32 %v3867, %v4411
      %v4413 = vpop.f32.mrb[0].mxu0
      %v4414 = vpop.f32.mrb[0].mxu0
      %v4415 = vadd.f32 %v3870, %v4414
      %v4416 = vpop.f32.mrb[0].mxu0
      %4417 = vmatprep.mubr.bf16.mxu0 %v2455
      %4418 = vmatmul.mubr.bf16.gmra.mrb[0].mxu0 %v2454
      %v4419 = vpop.f32.mrb[0].mxu0
      %v4420 = vadd.f32 %v3875, %v4419
      %v4421 = vpop.f32.mrb[0].mxu0
      %v4422 = vpop.f32.mrb[0].mxu0
      %v4423 = vadd.f32 %v3878, %v4422
      %v4424 = vpop.f32.mrb[0].mxu0
      %4425 = vmatprep.mubr.bf16.mxu0 %v2462
      %4426 = vmatmul.mubr.bf16.gmra.mrb[0].mxu0 %v2461
      %v4427 = vpop.f32.mrb[0].mxu0
      %v4428 = vadd.f32 %v3883, %v4427
      %v4429 = vpop.f32.mrb[0].mxu0
      %v4430 = vpop.f32.mrb[0].mxu0
      %v4431 = vadd.f32 %v3886, %v4430
      %v4432 = vpop.f32.mrb[0].mxu0
      %4433 = vmatprep.mubr.bf16.mxu0 %v2469
      %4434 = vmatmul.mubr.bf16.gmra.mrb[0].mxu0 %v2468
      %v4435 = vpop.f32.mrb[0].mxu0
      %v4436 = vadd.f32 %v3891, %v4435
      %v4437 = vpop.f32.mrb[0].mxu0
      %v4438 = vpop.f32.mrb[0].mxu0
      %v4439 = vadd.f32 %v3894, %v4438
      %v4440 = vpop.f32.mrb[0].mxu0
      %4441 = vmatprep.mubr.bf16.mxu0 %v2476
      %4442 = vmatmul.mubr.bf16.gmra.mrb[0].mxu0 %v2475
      %v4443 = vpop.f32.mrb[0].mxu0
      %v4444 = vadd.f32 %v3899, %v4443
      %v4445 = vpop.f32.mrb[0].mxu0
      %v4446 = vpop.f32.mrb[0].mxu0
      %v4447 = vadd.f32 %v3902, %v4446
      %v4448 = vpop.f32.mrb[0].mxu0
      %4449 = vmatprep.mubr.bf16.mxu0 %v2483
      %4450 = vmatmul.mubr.bf16.gmra.mrb[0].mxu0 %v2482
      %v4451 = vpop.f32.mrb[0].mxu0
      %v4452 = vadd.f32 %v3907, %v4451
      %v4453 = vpop.f32.mrb[0].mxu0
      %v4454 = vpop.f32.mrb[0].mxu0
      %v4455 = vadd.f32 %v3910, %v4454
      %v4456 = vpop.f32.mrb[0].mxu0
      %4457 = vmatprep.mubr.bf16.mxu0 %v2490
      %4458 = vmatmul.mubr.bf16.gmra.mrb[0].mxu0 %v2489
      %v4459 = vpop.f32.mrb[0].mxu0
      %v4460 = vadd.f32 %v3915, %v4459
      %v4461 = vpop.f32.mrb[0].mxu0
      %v4462 = vpop.f32.mrb[0].mxu0
      %v4463 = vadd.f32 %v3918, %v4462
      %v4464 = vpop.f32.mrb[0].mxu0
      %4465 = vmatprep.mubr.bf16.mxu0 %v2497
      %4466 = vmatmul.mubr.bf16.gmra.mrb[0].mxu0 %v2496
      %v4467 = vpop.f32.mrb[0].mxu0
      %v4468 = vadd.f32 %v3923, %v4467
      %v4469 = vpop.f32.mrb[0].mxu0
      %v4470 = vpop.f32.mrb[0].mxu0
      %v4471 = vadd.f32 %v3926, %v4470
      %v4472 = vpop.f32.mrb[0].mxu0
      %4473 = vmatprep.mubr.bf16.mxu0 %v2504
      %4474 = vmatmul.mubr.bf16.gmra.mrb[0].mxu0 %v2503
      %v4475 = vpop.f32.mrb[0].mxu0
      %v4476 = vadd.f32 %v3931, %v4475
      %v4477 = vpop.f32.mrb[0].mxu0
      %v4478 = vpop.f32.mrb[0].mxu0
      %v4479 = vadd.f32 %v3934, %v4478
      %v4480 = vpop.f32.mrb[0].mxu0
      %4481 = vmatprep.mubr.bf16.mxu0 %v2511
      %4482 = vmatmul.mubr.bf16.gmra.mrb[0].mxu0 %v2510
      %v4483 = vpop.f32.mrb[0].mxu0
      %v4484 = vadd.f32 %v3939, %v4483
      %v4485 = vpop.f32.mrb[0].mxu0
      %v4486 = vpop.f32.mrb[0].mxu0
      %v4487 = vadd.f32 %v3942, %v4486
      %v4488 = vpop.f32.mrb[0].mxu0
      %4489 = vmatprep.mubr.bf16.mxu0 %v2518
      %4490 = vmatmul.mubr.bf16.gmra.mrb[0].mxu0 %v2517
      %v4491 = vpop.f32.mrb[0].mxu0
      %v4492 = vadd.f32 %v3947, %v4491
      %v4493 = vpop.f32.mrb[0].mxu0
      %v4494 = vpop.f32.mrb[0].mxu0
      %v4495 = vadd.f32 %v3950, %v4494
      %v4496 = vpop.f32.mrb[0].mxu0
      %4497 = vmatprep.mubr.bf16.mxu0 %v2525
      %4498 = vmatmul.mubr.bf16.gmra.mrb[0].mxu0 %v2524
      %v4499 = vpop.f32.mrb[0].mxu0
      %v4500 = vadd.f32 %v3955, %v4499
      %v4501 = vpop.f32.mrb[0].mxu0
      %v4502 = vpop.f32.mrb[0].mxu0
      %v4503 = vadd.f32 %v3958, %v4502
      %v4504 = vpop.f32.mrb[0].mxu0
      %4505 = vmatprep.mubr.bf16.mxu0 %v2532
      %4506 = vmatmul.mubr.bf16.gmra.mrb[0].mxu0 %v2531
      %v4507 = vpop.f32.mrb[0].mxu0
      %v4508 = vadd.f32 %v3963, %v4507
      %v4509 = vpop.f32.mrb[0].mxu0
      %v4510 = vpop.f32.mrb[0].mxu0
      %v4511 = vadd.f32 %v3966, %v4510
      %v4512 = vpop.f32.mrb[0].mxu0
      %4513 = vmatprep.mubr.bf16.mxu0 %v2539
      %4514 = vmatmul.mubr.bf16.gmra.mrb[0].mxu0 %v2538
      %v4515 = vpop.f32.mrb[0].mxu0
      %v4516 = vadd.f32 %v3971, %v4515
      %v4517 = vpop.f32.mrb[0].mxu0
      %v4518 = vpop.f32.mrb[0].mxu0
      %v4519 = vadd.f32 %v3974, %v4518
      %v4520 = vpop.f32.mrb[0].mxu0
      %4521 = vmatprep.mubr.bf16.mxu0 %v2546
      %4522 = vmatmul.mubr.bf16.gmra.mrb[0].mxu0 %v2545
      %v4523 = vpop.f32.mrb[0].mxu0
      %v4524 = vadd.f32 %v3979, %v4523
      %v4525 = vpop.f32.mrb[0].mxu0
      %v4526 = vpop.f32.mrb[0].mxu0
      %v4527 = vadd.f32 %v3982, %v4526
      %v4528 = vpop.f32.mrb[0].mxu0
      %4529 = vmatprep.mubr.bf16.mxu0 %v2553
      %4530 = vmatmul.mubr.bf16.gmra.mrb[0].mxu0 %v2552
      %v4531 = vpop.f32.mrb[0].mxu0
      %v4532 = vadd.f32 %v3987, %v4531
      %v4533 = vpop.f32.mrb[0].mxu0
      %v4534 = vpop.f32.mrb[0].mxu0
      %v4535 = vadd.f32 %v3990, %v4534
      %v4536 = vpop.f32.mrb[0].mxu0
      %4537 = vmatprep.mubr.bf16.mxu0 %v2560
      %4538 = vmatmul.mubr.bf16.gmra.mrb[0].mxu0 %v2559
      %v4539 = vpop.f32.mrb[0].mxu0
      %v4540 = vadd.f32 %v3995, %v4539
      %v4541 = vpop.f32.mrb[0].mxu0
      %v4542 = vpop.f32.mrb[0].mxu0
      %v4543 = vadd.f32 %v3998, %v4542
      %v4544 = vpop.f32.mrb[0].mxu0
      %4545 = vmatprep.mubr.bf16.mxu0 %v2567
      %4546 = vmatmul.mubr.bf16.gmra.mrb[0].mxu0 %v2566
      %v4547 = vpop.f32.mrb[0].mxu0
      %v4548 = vadd.f32 %v4003, %v4547
      %v4549 = vpop.f32.mrb[0].mxu0
      %v4550 = vpop.f32.mrb[0].mxu0
      %v4551 = vadd.f32 %v4006, %v4550
      %v4552 = vpop.f32.mrb[0].mxu0
      %4553 = vmatprep.mubr.bf16.mxu0 %v2574
      %4554 = vmatmul.mubr.bf16.gmra.mrb[0].mxu0 %v2573
      %v4555 = vpop.f32.mrb[0].mxu0
      %v4556 = vadd.f32 %v4011, %v4555
      %v4557 = vpop.f32.mrb[0].mxu0
      %v4558 = vpop.f32.mrb[0].mxu0
      %v4559 = vadd.f32 %v4014, %v4558
      %v4560 = vpop.f32.mrb[0].mxu0
      %4561 = vmatprep.mubr.bf16.mxu0 %v2581
      %4562 = vmatmul.mubr.bf16.gmra.mrb[0].mxu0 %v2580
      %v4563 = vpop.f32.mrb[0].mxu0
      %v4564 = vadd.f32 %v4019, %v4563
      %v4565 = vpop.f32.mrb[0].mxu0
      %v4566 = vpop.f32.mrb[0].mxu0
      %v4567 = vadd.f32 %v4022, %v4566
      %v4568 = vpop.f32.mrb[0].mxu0
      %4569 = vmatprep.mubr.bf16.mxu0 %v2588
      %4570 = vmatmul.mubr.bf16.gmra.mrb[0].mxu0 %v2587
      %v4571 = vpop.f32.mrb[0].mxu0
      %v4572 = vadd.f32 %v4027, %v4571
      %v4573 = vpop.f32.mrb[0].mxu0
      %v4574 = vpop.f32.mrb[0].mxu0
      %v4575 = vadd.f32 %v4030, %v4574
      %v4576 = vpop.f32.mrb[0].mxu0
      %4577 = vmatprep.mubr.bf16.mxu0 %v2595
      %4578 = vmatmul.mubr.bf16.gmra.mrb[0].mxu0 %v2594
      %v4579 = vpop.f32.mrb[0].mxu0
      %v4580 = vadd.f32 %v4035, %v4579
      %v4581 = vpop.f32.mrb[0].mxu0
      %v4582 = vpop.f32.mrb[0].mxu0
      %v4583 = vadd.f32 %v4038, %v4582
      %v4584 = vpop.f32.mrb[0].mxu0
      %4585 = vmatprep.mubr.bf16.mxu0 %v2602
      %4586 = vmatmul.mubr.bf16.gmra.mrb[0].mxu0 %v2601
      %v4587 = vpop.f32.mrb[0].mxu0
      %v4588 = vadd.f32 %v4043, %v4587
      %v4589 = vpop.f32.mrb[0].mxu0
      %v4590 = vpop.f32.mrb[0].mxu0
      %v4591 = vadd.f32 %v4046, %v4590
      %v4592 = vpop.f32.mrb[0].mxu0
      %4593 = vmatprep.mubr.bf16.mxu0 %v2609
      %4594 = vmatmul.mubr.bf16.gmra.mrb[0].mxu0 %v2608
      %v4595 = vpop.f32.mrb[0].mxu0
      %v4596 = vadd.f32 %v4051, %v4595
      %v4597 = vpop.f32.mrb[0].mxu0
      %v4598 = vpop.f32.mrb[0].mxu0
      %v4599 = vadd.f32 %v4054, %v4598
      %v4600 = vpop.f32.mrb[0].mxu0
      %4601 = vmatprep.mubr.bf16.mxu0 %v2616
      %4602 = vmatmul.mubr.bf16.gmra.mrb[0].mxu0 %v2615
      %v4603 = vpop.f32.mrb[0].mxu0
      %v4604 = vadd.f32 %v4059, %v4603
      %v4605 = vpop.f32.mrb[0].mxu0
      %v4606 = vpop.f32.mrb[0].mxu0
      %v4607 = vadd.f32 %v4062, %v4606
      %v4608 = vpop.f32.mrb[0].mxu0
      %4609 = vmatprep.mubr.bf16.mxu0 %v2623
      %4610 = vmatmul.mubr.bf16.gmra.mrb[0].mxu0 %v2622
      %v4611 = vpop.f32.mrb[0].mxu0
      %v4612 = vadd.f32 %v4067, %v4611
      %v4613 = vpop.f32.mrb[0].mxu0
      %v4614 = vpop.f32.mrb[0].mxu0
      %v4615 = vadd.f32 %v4070, %v4614
      %v4616 = vpop.f32.mrb[0].mxu0
      %4617 = vdwg.mxu0
      %4618 = vmatprep.subr.bf16.mxu0 0
      %4619 = vmatpush1.bf16.msra.mxu0 %v3259
      %4620 = vmatprep.subr.bf16.mxu0 0
      %4621 = vmatpush1.bf16.msra.mxu0 %v3260
      %4622 = vmatprep.subr.bf16.mxu0 0
      %4623 = vmatpush1.bf16.msra.mxu0 %v3261
      %4624 = vmatprep.subr.bf16.mxu0 0
      %4625 = vmatpush1.bf16.msra.mxu0 %v3262
      %4626 = vmatprep.subr.bf16.mxu0 0
      %4627 = vmatpush1.bf16.msra.mxu0 %v3263
      %4628 = vmatprep.subr.bf16.mxu0 0
      %4629 = vmatpush1.bf16.msra.mxu0 %v3264
      %4630 = vmatprep.subr.bf16.mxu0 0
      %4631 = vmatpush1.bf16.msra.mxu0 %v3265
      %4632 = vmatprep.subr.bf16.mxu0 0
      %4633 = vmatpush1.bf16.msra.mxu0 %v3266
      %4634 = vmatprep.subr.bf16.mxu0 0
      %4635 = vmatpush1.bf16.msra.mxu0 %v3267
      %4636 = vmatprep.subr.bf16.mxu0 0
      %4637 = vmatpush1.bf16.msra.mxu0 %v3268
      %4638 = vmatprep.subr.bf16.mxu0 0
      %4639 = vmatpush1.bf16.msra.mxu0 %v3269
      %4640 = vmatprep.subr.bf16.mxu0 0
      %4641 = vmatpush1.bf16.msra.mxu0 %v3270
      %4642 = vmatprep.subr.bf16.mxu0 0
      %4643 = vmatpush1.bf16.msra.mxu0 %v3271
      %4644 = vmatprep.subr.bf16.mxu0 0
      %4645 = vmatpush1.bf16.msra.mxu0 %v3272
      %4646 = vmatprep.subr.bf16.mxu0 0
      %4647 = vmatpush1.bf16.msra.mxu0 %v3273
      %4648 = vmatprep.subr.bf16.mxu0 0
      %4649 = vmatpush1.bf16.msra.mxu0 %v3274
      %4650 = vmatprep.mubr.bf16.mxu0 %v2184
      %4651 = vmatmul.mubr.bf16.gmra.mrb[0].mxu0 %v2183
      %v4652 = vpop.f32.mrb[0].mxu0
      %v4653 = vadd.f32 %v4108, %v4652
      %v4654 = vpop.f32.mrb[0].mxu0
      %v4655 = vpop.f32.mrb[0].mxu0
      %v4656 = vadd.f32 %v4111, %v4655
      %v4657 = vpop.f32.mrb[0].mxu0
      %4658 = vmatprep.mubr.bf16.mxu0 %v2191
      %4659 = vmatmul.mubr.bf16.gmra.mrb[0].mxu0 %v2190
      %v4660 = vpop.f32.mrb[0].mxu0
      %v4661 = vadd.f32 %v4116, %v4660
      %v4662 = vpop.f32.mrb[0].mxu0
      %v4663 = vpop.f32.mrb[0].mxu0
      %v4664 = vadd.f32 %v4119, %v4663
      %v4665 = vpop.f32.mrb[0].mxu0
      %4666 = vmatprep.mubr.bf16.mxu0 %v2198
      %4667 = vmatmul.mubr.bf16.gmra.mrb[0].mxu0 %v2197
      %v4668 = vpop.f32.mrb[0].mxu0
      %v4669 = vadd.f32 %v4124, %v4668
      %v4670 = vpop.f32.mrb[0].mxu0
      %v4671 = vpop.f32.mrb[0].mxu0
      %v4672 = vadd.f32 %v4127, %v4671
      %v4673 = vpop.f32.mrb[0].mxu0
      %4674 = vmatprep.mubr.bf16.mxu0 %v2205
      %4675 = vmatmul.mubr.bf16.gmra.mrb[0].mxu0 %v2204
      %v4676 = vpop.f32.mrb[0].mxu0
      %v4677 = vadd.f32 %v4132, %v4676
      %v4678 = vpop.f32.mrb[0].mxu0
      %v4679 = vpop.f32.mrb[0].mxu0
      %v4680 = vadd.f32 %v4135, %v4679
      %v4681 = vpop.f32.mrb[0].mxu0
      %4682 = vmatprep.mubr.bf16.mxu0 %v2212
      %4683 = vmatmul.mubr.bf16.gmra.mrb[0].mxu0 %v2211
      %v4684 = vpop.f32.mrb[0].mxu0
      %v4685 = vadd.f32 %v4140, %v4684
      %v4686 = vpop.f32.mrb[0].mxu0
      %v4687 = vpop.f32.mrb[0].mxu0
      %v4688 = vadd.f32 %v4143, %v4687
      %v4689 = vpop.f32.mrb[0].mxu0
      %4690 = vmatprep.mubr.bf16.mxu0 %v2219
      %4691 = vmatmul.mubr.bf16.gmra.mrb[0].mxu0 %v2218
      %v4692 = vpop.f32.mrb[0].mxu0
      %v4693 = vadd.f32 %v4148, %v4692
      %v4694 = vpop.f32.mrb[0].mxu0
      %v4695 = vpop.f32.mrb[0].mxu0
      %v4696 = vadd.f32 %v4151, %v4695
      %v4697 = vpop.f32.mrb[0].mxu0
      %4698 = vmatprep.mubr.bf16.mxu0 %v2226
      %4699 = vmatmul.mubr.bf16.gmra.mrb[0].mxu0 %v2225
      %v4700 = vpop.f32.mrb[0].mxu0
      %v4701 = vadd.f32 %v4156, %v4700
      %v4702 = vpop.f32.mrb[0].mxu0
      %v4703 = vpop.f32.mrb[0].mxu0
      %v4704 = vadd.f32 %v4159, %v4703
      %v4705 = vpop.f32.mrb[0].mxu0
      %4706 = vmatprep.mubr.bf16.mxu0 %v2233
      %4707 = vmatmul.mubr.bf16.gmra.mrb[0].mxu0 %v2232
      %v4708 = vpop.f32.mrb[0].mxu0
      %v4709 = vadd.f32 %v4164, %v4708
      %v4710 = vpop.f32.mrb[0].mxu0
      %v4711 = vpop.f32.mrb[0].mxu0
      %v4712 = vadd.f32 %v4167, %v4711
      %v4713 = vpop.f32.mrb[0].mxu0
      %4714 = vmatprep.mubr.bf16.mxu0 %v2240
      %4715 = vmatmul.mubr.bf16.gmra.mrb[0].mxu0 %v2239
      %v4716 = vpop.f32.mrb[0].mxu0
      %v4717 = vadd.f32 %v4172, %v4716
      %v4718 = vpop.f32.mrb[0].mxu0
      %v4719 = vpop.f32.mrb[0].mxu0
      %v4720 = vadd.f32 %v4175, %v4719
      %v4721 = vpop.f32.mrb[0].mxu0
      %4722 = vmatprep.mubr.bf16.mxu0 %v2247
      %4723 = vmatmul.mubr.bf16.gmra.mrb[0].mxu0 %v2246
      %v4724 = vpop.f32.mrb[0].mxu0
      %v4725 = vadd.f32 %v4180, %v4724
      %v4726 = vpop.f32.mrb[0].mxu0
      %v4727 = vpop.f32.mrb[0].mxu0
      %v4728 = vadd.f32 %v4183, %v4727
      %v4729 = vpop.f32.mrb[0].mxu0
      %4730 = vmatprep.mubr.bf16.mxu0 %v2254
      %4731 = vmatmul.mubr.bf16.gmra.mrb[0].mxu0 %v2253
      %v4732 = vpop.f32.mrb[0].mxu0
      %v4733 = vadd.f32 %v4188, %v4732
      %v4734 = vpop.f32.mrb[0].mxu0
      %v4735 = vpop.f32.mrb[0].mxu0
      %v4736 = vadd.f32 %v4191, %v4735
      %v4737 = vpop.f32.mrb[0].mxu0
      %4738 = vmatprep.mubr.bf16.mxu0 %v2261
      %4739 = vmatmul.mubr.bf16.gmra.mrb[0].mxu0 %v2260
      %v4740 = vpop.f32.mrb[0].mxu0
      %v4741 = vadd.f32 %v4196, %v4740
      %v4742 = vpop.f32.mrb[0].mxu0
      %v4743 = vpop.f32.mrb[0].mxu0
      %v4744 = vadd.f32 %v4199, %v4743
      %v4745 = vpop.f32.mrb[0].mxu0
      %4746 = vmatprep.mubr.bf16.mxu0 %v2268
      %4747 = vmatmul.mubr.bf16.gmra.mrb[0].mxu0 %v2267
      %v4748 = vpop.f32.mrb[0].mxu0
      %v4749 = vadd.f32 %v4204, %v4748
      %v4750 = vpop.f32.mrb[0].mxu0
      %v4751 = vpop.f32.mrb[0].mxu0
      %v4752 = vadd.f32 %v4207, %v4751
      %v4753 = vpop.f32.mrb[0].mxu0
      %4754 = vmatprep.mubr.bf16.mxu0 %v2275
      %4755 = vmatmul.mubr.bf16.gmra.mrb[0].mxu0 %v2274
      %v4756 = vpop.f32.mrb[0].mxu0
      %v4757 = vadd.f32 %v4212, %v4756
      %v4758 = vpop.f32.mrb[0].mxu0
      %v4759 = vpop.f32.mrb[0].mxu0
      %v4760 = vadd.f32 %v4215, %v4759
      %v4761 = vpop.f32.mrb[0].mxu0
      %4762 = vmatprep.mubr.bf16.mxu0 %v2282
      %4763 = vmatmul.mubr.bf16.gmra.mrb[0].mxu0 %v2281
      %v4764 = vpop.f32.mrb[0].mxu0
      %v4765 = vadd.f32 %v4220, %v4764
      %v4766 = vpop.f32.mrb[0].mxu0
      %v4767 = vpop.f32.mrb[0].mxu0
      %v4768 = vadd.f32 %v4223, %v4767
      %v4769 = vpop.f32.mrb[0].mxu0
      %4770 = vmatprep.mubr.bf16.mxu0 %v2289
      %4771 = vmatmul.mubr.bf16.gmra.mrb[0].mxu0 %v2288
      %v4772 = vpop.f32.mrb[0].mxu0
      %v4773 = vadd.f32 %v4228, %v4772
      %v4774 = vpop.f32.mrb[0].mxu0
      %v4775 = vpop.f32.mrb[0].mxu0
      %v4776 = vadd.f32 %v4231, %v4775
      %v4777 = vpop.f32.mrb[0].mxu0
      %4778 = vmatprep.mubr.bf16.mxu0 %v2296
      %4779 = vmatmul.mubr.bf16.gmra.mrb[0].mxu0 %v2295
      %v4780 = vpop.f32.mrb[0].mxu0
      %v4781 = vadd.f32 %v4236, %v4780
      %v4782 = vpop.f32.mrb[0].mxu0
      %v4783 = vpop.f32.mrb[0].mxu0
      %v4784 = vadd.f32 %v4239, %v4783
      %v4785 = vpop.f32.mrb[0].mxu0
      %4786 = vmatprep.mubr.bf16.mxu0 %v2303
      %4787 = vmatmul.mubr.bf16.gmra.mrb[0].mxu0 %v2302
      %v4788 = vpop.f32.mrb[0].mxu0
      %v4789 = vadd.f32 %v4244, %v4788
      %v4790 = vpop.f32.mrb[0].mxu0
      %v4791 = vpop.f32.mrb[0].mxu0
      %v4792 = vadd.f32 %v4247, %v4791
      %v4793 = vpop.f32.mrb[0].mxu0
      %4794 = vmatprep.mubr.bf16.mxu0 %v2310
      %4795 = vmatmul.mubr.bf16.gmra.mrb[0].mxu0 %v2309
      %v4796 = vpop.f32.mrb[0].mxu0
      %v4797 = vadd.f32 %v4252, %v4796
      %v4798 = vpop.f32.mrb[0].mxu0
      %v4799 = vpop.f32.mrb[0].mxu0
      %v4800 = vadd.f32 %v4255, %v4799
      %v4801 = vpop.f32.mrb[0].mxu0
      %4802 = vmatprep.mubr.bf16.mxu0 %v2317
      %4803 = vmatmul.mubr.bf16.gmra.mrb[0].mxu0 %v2316
      %v4804 = vpop.f32.mrb[0].mxu0
      %v4805 = vadd.f32 %v4260, %v4804
      %v4806 = vpop.f32.mrb[0].mxu0
      %v4807 = vpop.f32.mrb[0].mxu0
      %v4808 = vadd.f32 %v4263, %v4807
      %v4809 = vpop.f32.mrb[0].mxu0
      %4810 = vmatprep.mubr.bf16.mxu0 %v2324
      %4811 = vmatmul.mubr.bf16.gmra.mrb[0].mxu0 %v2323
      %v4812 = vpop.f32.mrb[0].mxu0
      %v4813 = vadd.f32 %v4268, %v4812
      %v4814 = vpop.f32.mrb[0].mxu0
      %v4815 = vpop.f32.mrb[0].mxu0
      %v4816 = vadd.f32 %v4271, %v4815
      %v4817 = vpop.f32.mrb[0].mxu0
      %4818 = vmatprep.mubr.bf16.mxu0 %v2331
      %4819 = vmatmul.mubr.bf16.gmra.mrb[0].mxu0 %v2330
      %v4820 = vpop.f32.mrb[0].mxu0
      %v4821 = vadd.f32 %v4276, %v4820
      %v4822 = vpop.f32.mrb[0].mxu0
      %v4823 = vpop.f32.mrb[0].mxu0
      %v4824 = vadd.f32 %v4279, %v4823
      %v4825 = vpop.f32.mrb[0].mxu0
      %4826 = vmatprep.mubr.bf16.mxu0 %v2338
      %4827 = vmatmul.mubr.bf16.gmra.mrb[0].mxu0 %v2337
      %v4828 = vpop.f32.mrb[0].mxu0
      %v4829 = vadd.f32 %v4284, %v4828
      %v4830 = vpop.f32.mrb[0].mxu0
      %v4831 = vpop.f32.mrb[0].mxu0
      %v4832 = vadd.f32 %v4287, %v4831
      %v4833 = vpop.f32.mrb[0].mxu0
      %4834 = vmatprep.mubr.bf16.mxu0 %v2345
      %4835 = vmatmul.mubr.bf16.gmra.mrb[0].mxu0 %v2344
      %v4836 = vpop.f32.mrb[0].mxu0
      %v4837 = vadd.f32 %v4292, %v4836
      %v4838 = vpop.f32.mrb[0].mxu0
      %v4839 = vpop.f32.mrb[0].mxu0
      %v4840 = vadd.f32 %v4295, %v4839
      %v4841 = vpop.f32.mrb[0].mxu0
      %4842 = vmatprep.mubr.bf16.mxu0 %v2352
      %4843 = vmatmul.mubr.bf16.gmra.mrb[0].mxu0 %v2351
      %v4844 = vpop.f32.mrb[0].mxu0
      %v4845 = vadd.f32 %v4300, %v4844
      %v4846 = vpop.f32.mrb[0].mxu0
      %v4847 = vpop.f32.mrb[0].mxu0
      %v4848 = vadd.f32 %v4303, %v4847
      %v4849 = vpop.f32.mrb[0].mxu0
      %4850 = vmatprep.mubr.bf16.mxu0 %v2359
      %4851 = vmatmul.mubr.bf16.gmra.mrb[0].mxu0 %v2358
      %v4852 = vpop.f32.mrb[0].mxu0
      %v4853 = vadd.f32 %v4308, %v4852
      %v4854 = vpop.f32.mrb[0].mxu0
      %v4855 = vpop.f32.mrb[0].mxu0
      %v4856 = vadd.f32 %v4311, %v4855
      %v4857 = vpop.f32.mrb[0].mxu0
      %4858 = vmatprep.mubr.bf16.mxu0 %v2366
      %4859 = vmatmul.mubr.bf16.gmra.mrb[0].mxu0 %v2365
      %v4860 = vpop.f32.mrb[0].mxu0
      %v4861 = vadd.f32 %v4316, %v4860
      %v4862 = vpop.f32.mrb[0].mxu0
      %v4863 = vpop.f32.mrb[0].mxu0
      %v4864 = vadd.f32 %v4319, %v4863
      %v4865 = vpop.f32.mrb[0].mxu0
      %4866 = vmatprep.mubr.bf16.mxu0 %v2373
      %4867 = vmatmul.mubr.bf16.gmra.mrb[0].mxu0 %v2372
      %v4868 = vpop.f32.mrb[0].mxu0
      %v4869 = vadd.f32 %v4324, %v4868
      %v4870 = vpop.f32.mrb[0].mxu0
      %v4871 = vpop.f32.mrb[0].mxu0
      %v4872 = vadd.f32 %v4327, %v4871
      %v4873 = vpop.f32.mrb[0].mxu0
      %4874 = vmatprep.mubr.bf16.mxu0 %v2380
      %4875 = vmatmul.mubr.bf16.gmra.mrb[0].mxu0 %v2379
      %v4876 = vpop.f32.mrb[0].mxu0
      %v4877 = vadd.f32 %v4332, %v4876
      %v4878 = vpop.f32.mrb[0].mxu0
      %v4879 = vpop.f32.mrb[0].mxu0
      %v4880 = vadd.f32 %v4335, %v4879
      %v4881 = vpop.f32.mrb[0].mxu0
      %4882 = vmatprep.mubr.bf16.mxu0 %v2387
      %4883 = vmatmul.mubr.bf16.gmra.mrb[0].mxu0 %v2386
      %v4884 = vpop.f32.mrb[0].mxu0
      %v4885 = vadd.f32 %v4340, %v4884
      %v4886 = vpop.f32.mrb[0].mxu0
      %v4887 = vpop.f32.mrb[0].mxu0
      %v4888 = vadd.f32 %v4343, %v4887
      %v4889 = vpop.f32.mrb[0].mxu0
      %4890 = vmatprep.mubr.bf16.mxu0 %v2394
      %4891 = vmatmul.mubr.bf16.gmra.mrb[0].mxu0 %v2393
      %v4892 = vpop.f32.mrb[0].mxu0
      %v4893 = vadd.f32 %v4348, %v4892
      %v4894 = vpop.f32.mrb[0].mxu0
      %v4895 = vpop.f32.mrb[0].mxu0
      %v4896 = vadd.f32 %v4351, %v4895
      %v4897 = vpop.f32.mrb[0].mxu0
      %4898 = vmatprep.mubr.bf16.mxu0 %v2401
      %4899 = vmatmul.mubr.bf16.gmra.mrb[0].mxu0 %v2400
      %v4900 = vpop.f32.mrb[0].mxu0
      %v4901 = vadd.f32 %v4356, %v4900
      %v4902 = vpop.f32.mrb[0].mxu0
      %v4903 = vpop.f32.mrb[0].mxu0
      %v4904 = vadd.f32 %v4359, %v4903
      %v4905 = vpop.f32.mrb[0].mxu0
      %4906 = vmatprep.mubr.bf16.mxu0 %v2408
      %4907 = vmatmul.mubr.bf16.gmra.mrb[0].mxu0 %v2407
      %v4908 = vpop.f32.mrb[0].mxu0
      %v4909 = vadd.f32 %v4364, %v4908
      %v4910 = vpop.f32.mrb[0].mxu0
      %v4911 = vpop.f32.mrb[0].mxu0
      %v4912 = vadd.f32 %v4367, %v4911
      %v4913 = vpop.f32.mrb[0].mxu0
      %4914 = vmatprep.mubr.bf16.mxu0 %v2415
      %4915 = vmatmul.mubr.bf16.gmra.mrb[0].mxu0 %v2414
      %v4916 = vpop.f32.mrb[0].mxu0
      %v4917 = vadd.f32 %v4372, %v4916
      %v4918 = vpop.f32.mrb[0].mxu0
      %v4919 = vpop.f32.mrb[0].mxu0
      %v4920 = vadd.f32 %v4375, %v4919
      %v4921 = vpop.f32.mrb[0].mxu0
      %4922 = vmatprep.mubr.bf16.mxu0 %v2422
      %4923 = vmatmul.mubr.bf16.gmra.mrb[0].mxu0 %v2421
      %v4924 = vpop.f32.mrb[0].mxu0
      %v4925 = vadd.f32 %v4380, %v4924
      %v4926 = vpop.f32.mrb[0].mxu0
      %v4927 = vpop.f32.mrb[0].mxu0
      %v4928 = vadd.f32 %v4383, %v4927
      %v4929 = vpop.f32.mrb[0].mxu0
      %4930 = vmatprep.mubr.bf16.mxu0 %v2429
      %4931 = vmatmul.mubr.bf16.gmra.mrb[0].mxu0 %v2428
      %v4932 = vpop.f32.mrb[0].mxu0
      %v4933 = vadd.f32 %v4388, %v4932
      %v4934 = vpop.f32.mrb[0].mxu0
      %v4935 = vpop.f32.mrb[0].mxu0
      %v4936 = vadd.f32 %v4391, %v4935
      %v4937 = vpop.f32.mrb[0].mxu0
      %4938 = vmatprep.mubr.bf16.mxu0 %v2436
      %4939 = vmatmul.mubr.bf16.gmra.mrb[0].mxu0 %v2435
      %v4940 = vpop.f32.mrb[0].mxu0
      %v4941 = vadd.f32 %v4396, %v4940
      %v4942 = vpop.f32.mrb[0].mxu0
      %v4943 = vpop.f32.mrb[0].mxu0
      %v4944 = vadd.f32 %v4399, %v4943
      %v4945 = vpop.f32.mrb[0].mxu0
      %4946 = vmatprep.mubr.bf16.mxu0 %v2443
      %4947 = vmatmul.mubr.bf16.gmra.mrb[0].mxu0 %v2442
      %v4948 = vpop.f32.mrb[0].mxu0
      %v4949 = vadd.f32 %v4404, %v4948
      %v4950 = vpop.f32.mrb[0].mxu0
      %v4951 = vpop.f32.mrb[0].mxu0
      %v4952 = vadd.f32 %v4407, %v4951
      %v4953 = vpop.f32.mrb[0].mxu0
      %4954 = vmatprep.mubr.bf16.mxu0 %v2450
      %4955 = vmatmul.mubr.bf16.gmra.mrb[0].mxu0 %v2449
      %v4956 = vpop.f32.mrb[0].mxu0
      %v4957 = vadd.f32 %v4412, %v4956
      %v4958 = vpop.f32.mrb[0].mxu0
      %v4959 = vpop.f32.mrb[0].mxu0
      %v4960 = vadd.f32 %v4415, %v4959
      %v4961 = vpop.f32.mrb[0].mxu0
      %4962 = vmatprep.mubr.bf16.mxu0 %v2457
      %4963 = vmatmul.mubr.bf16.gmra.mrb[0].mxu0 %v2456
      %v4964 = vpop.f32.mrb[0].mxu0
      %v4965 = vadd.f32 %v4420, %v4964
      %v4966 = vpop.f32.mrb[0].mxu0
      %v4967 = vpop.f32.mrb[0].mxu0
      %v4968 = vadd.f32 %v4423, %v4967
      %v4969 = vpop.f32.mrb[0].mxu0
      %4970 = vmatprep.mubr.bf16.mxu0 %v2464
      %4971 = vmatmul.mubr.bf16.gmra.mrb[0].mxu0 %v2463
      %v4972 = vpop.f32.mrb[0].mxu0
      %v4973 = vadd.f32 %v4428, %v4972
      %v4974 = vpop.f32.mrb[0].mxu0
      %v4975 = vpop.f32.mrb[0].mxu0
      %v4976 = vadd.f32 %v4431, %v4975
      %v4977 = vpop.f32.mrb[0].mxu0
      %4978 = vmatprep.mubr.bf16.mxu0 %v2471
      %4979 = vmatmul.mubr.bf16.gmra.mrb[0].mxu0 %v2470
      %v4980 = vpop.f32.mrb[0].mxu0
      %v4981 = vadd.f32 %v4436, %v4980
      %v4982 = vpop.f32.mrb[0].mxu0
      %v4983 = vpop.f32.mrb[0].mxu0
      %v4984 = vadd.f32 %v4439, %v4983
      %v4985 = vpop.f32.mrb[0].mxu0
      %4986 = vmatprep.mubr.bf16.mxu0 %v2478
      %4987 = vmatmul.mubr.bf16.gmra.mrb[0].mxu0 %v2477
      %v4988 = vpop.f32.mrb[0].mxu0
      %v4989 = vadd.f32 %v4444, %v4988
      %v4990 = vpop.f32.mrb[0].mxu0
      %v4991 = vpop.f32.mrb[0].mxu0
      %v4992 = vadd.f32 %v4447, %v4991
      %v4993 = vpop.f32.mrb[0].mxu0
      %4994 = vmatprep.mubr.bf16.mxu0 %v2485
      %4995 = vmatmul.mubr.bf16.gmra.mrb[0].mxu0 %v2484
      %v4996 = vpop.f32.mrb[0].mxu0
      %v4997 = vadd.f32 %v4452, %v4996
      %v4998 = vpop.f32.mrb[0].mxu0
      %v4999 = vpop.f32.mrb[0].mxu0
      %v5000 = vadd.f32 %v4455, %v4999
      %v5001 = vpop.f32.mrb[0].mxu0
      %5002 = vmatprep.mubr.bf16.mxu0 %v2492
      %5003 = vmatmul.mubr.bf16.gmra.mrb[0].mxu0 %v2491
      %v5004 = vpop.f32.mrb[0].mxu0
      %v5005 = vadd.f32 %v4460, %v5004
      %v5006 = vpop.f32.mrb[0].mxu0
      %v5007 = vpop.f32.mrb[0].mxu0
      %v5008 = vadd.f32 %v4463, %v5007
      %v5009 = vpop.f32.mrb[0].mxu0
      %5010 = vmatprep.mubr.bf16.mxu0 %v2499
      %5011 = vmatmul.mubr.bf16.gmra.mrb[0].mxu0 %v2498
      %v5012 = vpop.f32.mrb[0].mxu0
      %v5013 = vadd.f32 %v4468, %v5012
      %v5014 = vpop.f32.mrb[0].mxu0
      %v5015 = vpop.f32.mrb[0].mxu0
      %v5016 = vadd.f32 %v4471, %v5015
      %v5017 = vpop.f32.mrb[0].mxu0
      %5018 = vmatprep.mubr.bf16.mxu0 %v2506
      %5019 = vmatmul.mubr.bf16.gmra.mrb[0].mxu0 %v2505
      %v5020 = vpop.f32.mrb[0].mxu0
      %v5021 = vadd.f32 %v4476, %v5020
      %v5022 = vpop.f32.mrb[0].mxu0
      %v5023 = vpop.f32.mrb[0].mxu0
      %v5024 = vadd.f32 %v4479, %v5023
      %v5025 = vpop.f32.mrb[0].mxu0
      %5026 = vmatprep.mubr.bf16.mxu0 %v2513
      %5027 = vmatmul.mubr.bf16.gmra.mrb[0].mxu0 %v2512
      %v5028 = vpop.f32.mrb[0].mxu0
      %v5029 = vadd.f32 %v4484, %v5028
      %v5030 = vpop.f32.mrb[0].mxu0
      %v5031 = vpop.f32.mrb[0].mxu0
      %v5032 = vadd.f32 %v4487, %v5031
      %v5033 = vpop.f32.mrb[0].mxu0
      %5034 = vmatprep.mubr.bf16.mxu0 %v2520
      %5035 = vmatmul.mubr.bf16.gmra.mrb[0].mxu0 %v2519
      %v5036 = vpop.f32.mrb[0].mxu0
      %v5037 = vadd.f32 %v4492, %v5036
      %v5038 = vpop.f32.mrb[0].mxu0
      %v5039 = vpop.f32.mrb[0].mxu0
      %v5040 = vadd.f32 %v4495, %v5039
      %v5041 = vpop.f32.mrb[0].mxu0
      %5042 = vmatprep.mubr.bf16.mxu0 %v2527
      %5043 = vmatmul.mubr.bf16.gmra.mrb[0].mxu0 %v2526
      %v5044 = vpop.f32.mrb[0].mxu0
      %v5045 = vadd.f32 %v4500, %v5044
      %v5046 = vpop.f32.mrb[0].mxu0
      %v5047 = vpop.f32.mrb[0].mxu0
      %v5048 = vadd.f32 %v4503, %v5047
      %v5049 = vpop.f32.mrb[0].mxu0
      %5050 = vmatprep.mubr.bf16.mxu0 %v2534
      %5051 = vmatmul.mubr.bf16.gmra.mrb[0].mxu0 %v2533
      %v5052 = vpop.f32.mrb[0].mxu0
      %v5053 = vadd.f32 %v4508, %v5052
      %v5054 = vpop.f32.mrb[0].mxu0
      %v5055 = vpop.f32.mrb[0].mxu0
      %v5056 = vadd.f32 %v4511, %v5055
      %v5057 = vpop.f32.mrb[0].mxu0
      %5058 = vmatprep.mubr.bf16.mxu0 %v2541
      %5059 = vmatmul.mubr.bf16.gmra.mrb[0].mxu0 %v2540
      %v5060 = vpop.f32.mrb[0].mxu0
      %v5061 = vadd.f32 %v4516, %v5060
      %v5062 = vpop.f32.mrb[0].mxu0
      %v5063 = vpop.f32.mrb[0].mxu0
      %v5064 = vadd.f32 %v4519, %v5063
      %v5065 = vpop.f32.mrb[0].mxu0
      %5066 = vmatprep.mubr.bf16.mxu0 %v2548
      %5067 = vmatmul.mubr.bf16.gmra.mrb[0].mxu0 %v2547
      %v5068 = vpop.f32.mrb[0].mxu0
      %v5069 = vadd.f32 %v4524, %v5068
      %v5070 = vpop.f32.mrb[0].mxu0
      %v5071 = vpop.f32.mrb[0].mxu0
      %v5072 = vadd.f32 %v4527, %v5071
      %v5073 = vpop.f32.mrb[0].mxu0
      %5074 = vmatprep.mubr.bf16.mxu0 %v2555
      %5075 = vmatmul.mubr.bf16.gmra.mrb[0].mxu0 %v2554
      %v5076 = vpop.f32.mrb[0].mxu0
      %v5077 = vadd.f32 %v4532, %v5076
      %v5078 = vpop.f32.mrb[0].mxu0
      %v5079 = vpop.f32.mrb[0].mxu0
      %v5080 = vadd.f32 %v4535, %v5079
      %v5081 = vpop.f32.mrb[0].mxu0
      %5082 = vmatprep.mubr.bf16.mxu0 %v2562
      %5083 = vmatmul.mubr.bf16.gmra.mrb[0].mxu0 %v2561
      %v5084 = vpop.f32.mrb[0].mxu0
      %v5085 = vadd.f32 %v4540, %v5084
      %v5086 = vpop.f32.mrb[0].mxu0
      %v5087 = vpop.f32.mrb[0].mxu0
      %v5088 = vadd.f32 %v4543, %v5087
      %v5089 = vpop.f32.mrb[0].mxu0
      %5090 = vmatprep.mubr.bf16.mxu0 %v2569
      %5091 = vmatmul.mubr.bf16.gmra.mrb[0].mxu0 %v2568
      %v5092 = vpop.f32.mrb[0].mxu0
      %v5093 = vadd.f32 %v4548, %v5092
      %v5094 = vpop.f32.mrb[0].mxu0
      %v5095 = vpop.f32.mrb[0].mxu0
      %v5096 = vadd.f32 %v4551, %v5095
      %v5097 = vpop.f32.mrb[0].mxu0
      %5098 = vmatprep.mubr.bf16.mxu0 %v2576
      %5099 = vmatmul.mubr.bf16.gmra.mrb[0].mxu0 %v2575
      %v5100 = vpop.f32.mrb[0].mxu0
      %v5101 = vadd.f32 %v4556, %v5100
      %v5102 = vpop.f32.mrb[0].mxu0
      %v5103 = vpop.f32.mrb[0].mxu0
      %v5104 = vadd.f32 %v4559, %v5103
      %v5105 = vpop.f32.mrb[0].mxu0
      %5106 = vmatprep.mubr.bf16.mxu0 %v2583
      %5107 = vmatmul.mubr.bf16.gmra.mrb[0].mxu0 %v2582
      %v5108 = vpop.f32.mrb[0].mxu0
      %v5109 = vadd.f32 %v4564, %v5108
      %v5110 = vpop.f32.mrb[0].mxu0
      %v5111 = vpop.f32.mrb[0].mxu0
      %v5112 = vadd.f32 %v4567, %v5111
      %v5113 = vpop.f32.mrb[0].mxu0
      %5114 = vmatprep.mubr.bf16.mxu0 %v2590
      %5115 = vmatmul.mubr.bf16.gmra.mrb[0].mxu0 %v2589
      %v5116 = vpop.f32.mrb[0].mxu0
      %v5117 = vadd.f32 %v4572, %v5116
      %v5118 = vpop.f32.mrb[0].mxu0
      %v5119 = vpop.f32.mrb[0].mxu0
      %v5120 = vadd.f32 %v4575, %v5119
      %v5121 = vpop.f32.mrb[0].mxu0
      %5122 = vmatprep.mubr.bf16.mxu0 %v2597
      %5123 = vmatmul.mubr.bf16.gmra.mrb[0].mxu0 %v2596
      %v5124 = vpop.f32.mrb[0].mxu0
      %v5125 = vadd.f32 %v4580, %v5124
      %v5126 = vpop.f32.mrb[0].mxu0
      %v5127 = vpop.f32.mrb[0].mxu0
      %v5128 = vadd.f32 %v4583, %v5127
      %v5129 = vpop.f32.mrb[0].mxu0
      %5130 = vmatprep.mubr.bf16.mxu0 %v2604
      %5131 = vmatmul.mubr.bf16.gmra.mrb[0].mxu0 %v2603
      %v5132 = vpop.f32.mrb[0].mxu0
      %v5133 = vadd.f32 %v4588, %v5132
      %v5134 = vpop.f32.mrb[0].mxu0
      %v5135 = vpop.f32.mrb[0].mxu0
      %v5136 = vadd.f32 %v4591, %v5135
      %v5137 = vpop.f32.mrb[0].mxu0
      %5138 = vmatprep.mubr.bf16.mxu0 %v2611
      %5139 = vmatmul.mubr.bf16.gmra.mrb[0].mxu0 %v2610
      %v5140 = vpop.f32.mrb[0].mxu0
      %v5141 = vadd.f32 %v4596, %v5140
      %v5142 = vpop.f32.mrb[0].mxu0
      %v5143 = vpop.f32.mrb[0].mxu0
      %v5144 = vadd.f32 %v4599, %v5143
      %v5145 = vpop.f32.mrb[0].mxu0
      %5146 = vmatprep.mubr.bf16.mxu0 %v2618
      %5147 = vmatmul.mubr.bf16.gmra.mrb[0].mxu0 %v2617
      %v5148 = vpop.f32.mrb[0].mxu0
      %v5149 = vadd.f32 %v4604, %v5148
      %v5150 = vpop.f32.mrb[0].mxu0
      %v5151 = vpop.f32.mrb[0].mxu0
      %v5152 = vadd.f32 %v4607, %v5151
      %v5153 = vpop.f32.mrb[0].mxu0
      %5154 = vmatprep.mubr.bf16.mxu0 %v2625
      %5155 = vmatmul.mubr.bf16.gmra.mrb[0].mxu0 %v2624
      %v5156 = vpop.f32.mrb[0].mxu0
      %v5157 = vadd.f32 %v4612, %v5156
      %v5158 = vpop.f32.mrb[0].mxu0
      %v5159 = vpop.f32.mrb[0].mxu0
      %v5160 = vadd.f32 %v4615, %v5159
      %v5161 = vpop.f32.mrb[0].mxu0
      %5162 = vdwg.mxu0
      %5163 = vmatprep.subr.bf16.mxu0 0
      %5164 = vmatpush1.bf16.msra.mxu0 %v3275
      %5165 = vmatprep.subr.bf16.mxu0 0
      %5166 = vmatpush1.bf16.msra.mxu0 %v3276
      %5167 = vmatprep.subr.bf16.mxu0 0
      %5168 = vmatpush1.bf16.msra.mxu0 %v3277
      %5169 = vmatprep.subr.bf16.mxu0 0
      %5170 = vmatpush1.bf16.msra.mxu0 %v3278
      %5171 = vmatprep.subr.bf16.mxu0 0
      %5172 = vmatpush1.bf16.msra.mxu0 %v3279
      %5173 = vmatprep.subr.bf16.mxu0 0
      %5174 = vmatpush1.bf16.msra.mxu0 %v3280
      %5175 = vmatprep.subr.bf16.mxu0 0
      %5176 = vmatpush1.bf16.msra.mxu0 0
      %5177 = vmatprep.subr.bf16.mxu0 0
      %5178 = vmatpush1.bf16.msra.mxu0 0
      %5179 = vmatprep.subr.bf16.mxu0 0
      %5180 = vmatpush1.bf16.msra.mxu0 0
      %5181 = vmatprep.subr.bf16.mxu0 0
      %5182 = vmatpush1.bf16.msra.mxu0 0
      %5183 = vmatprep.subr.bf16.mxu0 0
      %5184 = vmatpush1.bf16.msra.mxu0 0
      %5185 = vmatprep.subr.bf16.mxu0 0
      %5186 = vmatpush1.bf16.msra.mxu0 0
      %5187 = vmatprep.subr.bf16.mxu0 0
      %5188 = vmatpush1.bf16.msra.mxu0 0
      %5189 = vmatprep.subr.bf16.mxu0 0
      %5190 = vmatpush1.bf16.msra.mxu0 0
      %5191 = vmatprep.subr.bf16.mxu0 0
      %5192 = vmatpush1.bf16.msra.mxu0 0
      %5193 = vmatprep.subr.bf16.mxu0 0
      %5194 = vmatpush1.bf16.msra.mxu0 0
      %5195 = vmatprep.mubr.bf16.mxu0 0
      %5196 = vmatmul.mubr.bf16.gmra.mrb[0].mxu0 %v3337
      %v5197 = vpop.f32.mrb[0].mxu0
      %v5198 = vadd.f32 %v4653, %v5197
      %v5199 = vpop.f32.mrb[0].mxu0
      %v5200 = vpop.f32.mrb[0].mxu0
      %v5201 = vadd.f32 %v4656, %v5200
      %v5202 = vpop.f32.mrb[0].mxu0
      %5203 = vmatprep.mubr.bf16.mxu0 0
      %5204 = vmatmul.mubr.bf16.gmra.mrb[0].mxu0 %v3340
      %v5205 = vpop.f32.mrb[0].mxu0
      %v5206 = vadd.f32 %v4661, %v5205
      %v5207 = vpop.f32.mrb[0].mxu0
      %v5208 = vpop.f32.mrb[0].mxu0
      %v5209 = vadd.f32 %v4664, %v5208
      %v5210 = vpop.f32.mrb[0].mxu0
      %5211 = vmatprep.mubr.bf16.mxu0 0
      %5212 = vmatmul.mubr.bf16.gmra.mrb[0].mxu0 %v3343
      %v5213 = vpop.f32.mrb[0].mxu0
      %v5214 = vadd.f32 %v4669, %v5213
      %v5215 = vpop.f32.mrb[0].mxu0
      %v5216 = vpop.f32.mrb[0].mxu0
      %v5217 = vadd.f32 %v4672, %v5216
      %v5218 = vpop.f32.mrb[0].mxu0
      %5219 = vmatprep.mubr.bf16.mxu0 0
      %5220 = vmatmul.mubr.bf16.gmra.mrb[0].mxu0 %v3346
      %v5221 = vpop.f32.mrb[0].mxu0
      %v5222 = vadd.f32 %v4677, %v5221
      %v5223 = vpop.f32.mrb[0].mxu0
      %v5224 = vpop.f32.mrb[0].mxu0
      %v5225 = vadd.f32 %v4680, %v5224
      %v5226 = vpop.f32.mrb[0].mxu0
      %5227 = vmatprep.mubr.bf16.mxu0 0
      %5228 = vmatmul.mubr.bf16.gmra.mrb[0].mxu0 %v3349
      %v5229 = vpop.f32.mrb[0].mxu0
      %v5230 = vadd.f32 %v4685, %v5229
      %v5231 = vpop.f32.mrb[0].mxu0
      %v5232 = vpop.f32.mrb[0].mxu0
      %v5233 = vadd.f32 %v4688, %v5232
      %v5234 = vpop.f32.mrb[0].mxu0
      %5235 = vmatprep.mubr.bf16.mxu0 0
      %5236 = vmatmul.mubr.bf16.gmra.mrb[0].mxu0 %v3352
      %v5237 = vpop.f32.mrb[0].mxu0
      %v5238 = vadd.f32 %v4693, %v5237
      %v5239 = vpop.f32.mrb[0].mxu0
      %v5240 = vpop.f32.mrb[0].mxu0
      %v5241 = vadd.f32 %v4696, %v5240
      %v5242 = vpop.f32.mrb[0].mxu0
      %5243 = vmatprep.mubr.bf16.mxu0 0
      %5244 = vmatmul.mubr.bf16.gmra.mrb[0].mxu0 %v3355
      %v5245 = vpop.f32.mrb[0].mxu0
      %v5246 = vadd.f32 %v4701, %v5245
      %v5247 = vpop.f32.mrb[0].mxu0
      %v5248 = vpop.f32.mrb[0].mxu0
      %v5249 = vadd.f32 %v4704, %v5248
      %v5250 = vpop.f32.mrb[0].mxu0
      %5251 = vmatprep.mubr.bf16.mxu0 0
      %5252 = vmatmul.mubr.bf16.gmra.mrb[0].mxu0 %v3358
      %v5253 = vpop.f32.mrb[0].mxu0
      %v5254 = vadd.f32 %v4709, %v5253
      %v5255 = vpop.f32.mrb[0].mxu0
      %v5256 = vpop.f32.mrb[0].mxu0
      %v5257 = vadd.f32 %v4712, %v5256
      %v5258 = vpop.f32.mrb[0].mxu0
      %5259 = vmatprep.mubr.bf16.mxu0 0
      %5260 = vmatmul.mubr.bf16.gmra.mrb[0].mxu0 %v3361
      %v5261 = vpop.f32.mrb[0].mxu0
      %v5262 = vadd.f32 %v4717, %v5261
      %v5263 = vpop.f32.mrb[0].mxu0
      %v5264 = vpop.f32.mrb[0].mxu0
      %v5265 = vadd.f32 %v4720, %v5264
      %v5266 = vpop.f32.mrb[0].mxu0
      %5267 = vmatprep.mubr.bf16.mxu0 0
      %5268 = vmatmul.mubr.bf16.gmra.mrb[0].mxu0 %v3364
      %v5269 = vpop.f32.mrb[0].mxu0
      %v5270 = vadd.f32 %v4725, %v5269
      %v5271 = vpop.f32.mrb[0].mxu0
      %v5272 = vpop.f32.mrb[0].mxu0
      %v5273 = vadd.f32 %v4728, %v5272
      %v5274 = vpop.f32.mrb[0].mxu0
      %5275 = vmatprep.mubr.bf16.mxu0 0
      %5276 = vmatmul.mubr.bf16.gmra.mrb[0].mxu0 %v3367
      %v5277 = vpop.f32.mrb[0].mxu0
      %v5278 = vadd.f32 %v4733, %v5277
      %v5279 = vpop.f32.mrb[0].mxu0
      %v5280 = vpop.f32.mrb[0].mxu0
      %v5281 = vadd.f32 %v4736, %v5280
      %v5282 = vpop.f32.mrb[0].mxu0
      %5283 = vmatprep.mubr.bf16.mxu0 0
      %5284 = vmatmul.mubr.bf16.gmra.mrb[0].mxu0 %v3370
      %v5285 = vpop.f32.mrb[0].mxu0
      %v5286 = vadd.f32 %v4741, %v5285
      %v5287 = vpop.f32.mrb[0].mxu0
      %v5288 = vpop.f32.mrb[0].mxu0
      %v5289 = vadd.f32 %v4744, %v5288
      %v5290 = vpop.f32.mrb[0].mxu0
      %5291 = vmatprep.mubr.bf16.mxu0 0
      %5292 = vmatmul.mubr.bf16.gmra.mrb[0].mxu0 %v3373
      %v5293 = vpop.f32.mrb[0].mxu0
      %v5294 = vadd.f32 %v4749, %v5293
      %v5295 = vpop.f32.mrb[0].mxu0
      %v5296 = vpop.f32.mrb[0].mxu0
      %v5297 = vadd.f32 %v4752, %v5296
      %v5298 = vpop.f32.mrb[0].mxu0
      %5299 = vmatprep.mubr.bf16.mxu0 0
      %5300 = vmatmul.mubr.bf16.gmra.mrb[0].mxu0 %v3376
      %v5301 = vpop.f32.mrb[0].mxu0
      %v5302 = vadd.f32 %v4757, %v5301
      %v5303 = vpop.f32.mrb[0].mxu0
      %v5304 = vpop.f32.mrb[0].mxu0
      %v5305 = vadd.f32 %v4760, %v5304
      %v5306 = vpop.f32.mrb[0].mxu0
      %5307 = vmatprep.mubr.bf16.mxu0 0
      %5308 = vmatmul.mubr.bf16.gmra.mrb[0].mxu0 %v3379
      %v5309 = vpop.f32.mrb[0].mxu0
      %v5310 = vadd.f32 %v4765, %v5309
      %v5311 = vpop.f32.mrb[0].mxu0
      %v5312 = vpop.f32.mrb[0].mxu0
      %v5313 = vadd.f32 %v4768, %v5312
      %v5314 = vpop.f32.mrb[0].mxu0
      %5315 = vmatprep.mubr.bf16.mxu0 0
      %5316 = vmatmul.mubr.bf16.gmra.mrb[0].mxu0 %v3382
      %v5317 = vpop.f32.mrb[0].mxu0
      %v5318 = vadd.f32 %v4773, %v5317
      %v5319 = vpop.f32.mrb[0].mxu0
      %v5320 = vpop.f32.mrb[0].mxu0
      %v5321 = vadd.f32 %v4776, %v5320
      %v5322 = vpop.f32.mrb[0].mxu0
      %5323 = vmatprep.mubr.bf16.mxu0 0
      %5324 = vmatmul.mubr.bf16.gmra.mrb[0].mxu0 %v3385
      %v5325 = vpop.f32.mrb[0].mxu0
      %v5326 = vadd.f32 %v4781, %v5325
      %v5327 = vpop.f32.mrb[0].mxu0
      %v5328 = vpop.f32.mrb[0].mxu0
      %v5329 = vadd.f32 %v4784, %v5328
      %v5330 = vpop.f32.mrb[0].mxu0
      %5331 = vmatprep.mubr.bf16.mxu0 0
      %5332 = vmatmul.mubr.bf16.gmra.mrb[0].mxu0 %v3388
      %v5333 = vpop.f32.mrb[0].mxu0
      %v5334 = vadd.f32 %v4789, %v5333
      %v5335 = vpop.f32.mrb[0].mxu0
      %v5336 = vpop.f32.mrb[0].mxu0
      %v5337 = vadd.f32 %v4792, %v5336
      %v5338 = vpop.f32.mrb[0].mxu0
      %5339 = vmatprep.mubr.bf16.mxu0 0
      %5340 = vmatmul.mubr.bf16.gmra.mrb[0].mxu0 %v3391
      %v5341 = vpop.f32.mrb[0].mxu0
      %v5342 = vadd.f32 %v4797, %v5341
      %v5343 = vpop.f32.mrb[0].mxu0
      %v5344 = vpop.f32.mrb[0].mxu0
      %v5345 = vadd.f32 %v4800, %v5344
      %v5346 = vpop.f32.mrb[0].mxu0
      %5347 = vmatprep.mubr.bf16.mxu0 0
      %5348 = vmatmul.mubr.bf16.gmra.mrb[0].mxu0 %v3394
      %v5349 = vpop.f32.mrb[0].mxu0
      %v5350 = vadd.f32 %v4805, %v5349
      %v5351 = vpop.f32.mrb[0].mxu0
      %v5352 = vpop.f32.mrb[0].mxu0
      %v5353 = vadd.f32 %v4808, %v5352
      %v5354 = vpop.f32.mrb[0].mxu0
      %5355 = vmatprep.mubr.bf16.mxu0 0
      %5356 = vmatmul.mubr.bf16.gmra.mrb[0].mxu0 %v3397
      %v5357 = vpop.f32.mrb[0].mxu0
      %v5358 = vadd.f32 %v4813, %v5357
      %v5359 = vpop.f32.mrb[0].mxu0
      %v5360 = vpop.f32.mrb[0].mxu0
      %v5361 = vadd.f32 %v4816, %v5360
      %v5362 = vpop.f32.mrb[0].mxu0
      %5363 = vmatprep.mubr.bf16.mxu0 0
      %5364 = vmatmul.mubr.bf16.gmra.mrb[0].mxu0 %v3400
      %v5365 = vpop.f32.mrb[0].mxu0
      %v5366 = vadd.f32 %v4821, %v5365
      %v5367 = vpop.f32.mrb[0].mxu0
      %v5368 = vpop.f32.mrb[0].mxu0
      %v5369 = vadd.f32 %v4824, %v5368
      %v5370 = vpop.f32.mrb[0].mxu0
      %5371 = vmatprep.mubr.bf16.mxu0 0
      %5372 = vmatmul.mubr.bf16.gmra.mrb[0].mxu0 %v3403
      %v5373 = vpop.f32.mrb[0].mxu0
      %v5374 = vadd.f32 %v4829, %v5373
      %v5375 = vpop.f32.mrb[0].mxu0
      %v5376 = vpop.f32.mrb[0].mxu0
      %v5377 = vadd.f32 %v4832, %v5376
      %v5378 = vpop.f32.mrb[0].mxu0
      %5379 = vmatprep.mubr.bf16.mxu0 0
      %5380 = vmatmul.mubr.bf16.gmra.mrb[0].mxu0 %v3406
      %v5381 = vpop.f32.mrb[0].mxu0
      %v5382 = vadd.f32 %v4837, %v5381
      %v5383 = vpop.f32.mrb[0].mxu0
      %v5384 = vpop.f32.mrb[0].mxu0
      %v5385 = vadd.f32 %v4840, %v5384
      %v5386 = vpop.f32.mrb[0].mxu0
      %5387 = vmatprep.mubr.bf16.mxu0 0
      %5388 = vmatmul.mubr.bf16.gmra.mrb[0].mxu0 %v3409
      %v5389 = vpop.f32.mrb[0].mxu0
      %v5390 = vadd.f32 %v4845, %v5389
      %v5391 = vpop.f32.mrb[0].mxu0
      %v5392 = vpop.f32.mrb[0].mxu0
      %v5393 = vadd.f32 %v4848, %v5392
      %v5394 = vpop.f32.mrb[0].mxu0
      %5395 = vmatprep.mubr.bf16.mxu0 0
      %5396 = vmatmul.mubr.bf16.gmra.mrb[0].mxu0 %v3412
      %v5397 = vpop.f32.mrb[0].mxu0
      %v5398 = vadd.f32 %v4853, %v5397
      %v5399 = vpop.f32.mrb[0].mxu0
      %v5400 = vpop.f32.mrb[0].mxu0
      %v5401 = vadd.f32 %v4856, %v5400
      %v5402 = vpop.f32.mrb[0].mxu0
      %5403 = vmatprep.mubr.bf16.mxu0 0
      %5404 = vmatmul.mubr.bf16.gmra.mrb[0].mxu0 %v3415
      %v5405 = vpop.f32.mrb[0].mxu0
      %v5406 = vadd.f32 %v4861, %v5405
      %v5407 = vpop.f32.mrb[0].mxu0
      %v5408 = vpop.f32.mrb[0].mxu0
      %v5409 = vadd.f32 %v4864, %v5408
      %v5410 = vpop.f32.mrb[0].mxu0
      %5411 = vmatprep.mubr.bf16.mxu0 0
      %5412 = vmatmul.mubr.bf16.gmra.mrb[0].mxu0 %v3418
      %v5413 = vpop.f32.mrb[0].mxu0
      %v5414 = vadd.f32 %v4869, %v5413
      %v5415 = vpop.f32.mrb[0].mxu0
      %v5416 = vpop.f32.mrb[0].mxu0
      %v5417 = vadd.f32 %v4872, %v5416
      %v5418 = vpop.f32.mrb[0].mxu0
      %5419 = vmatprep.mubr.bf16.mxu0 0
      %5420 = vmatmul.mubr.bf16.gmra.mrb[0].mxu0 %v3421
      %v5421 = vpop.f32.mrb[0].mxu0
      %v5422 = vadd.f32 %v4877, %v5421
      %v5423 = vpop.f32.mrb[0].mxu0
      %v5424 = vpop.f32.mrb[0].mxu0
      %v5425 = vadd.f32 %v4880, %v5424
      %v5426 = vpop.f32.mrb[0].mxu0
      %5427 = vmatprep.mubr.bf16.mxu0 0
      %5428 = vmatmul.mubr.bf16.gmra.mrb[0].mxu0 %v3424
      %v5429 = vpop.f32.mrb[0].mxu0
      %v5430 = vadd.f32 %v4885, %v5429
      %v5431 = vpop.f32.mrb[0].mxu0
      %v5432 = vpop.f32.mrb[0].mxu0
      %v5433 = vadd.f32 %v4888, %v5432
      %v5434 = vpop.f32.mrb[0].mxu0
      %5435 = vmatprep.mubr.bf16.mxu0 0
      %5436 = vmatmul.mubr.bf16.gmra.mrb[0].mxu0 %v3427
      %v5437 = vpop.f32.mrb[0].mxu0
      %v5438 = vadd.f32 %v4893, %v5437
      %v5439 = vpop.f32.mrb[0].mxu0
      %v5440 = vpop.f32.mrb[0].mxu0
      %v5441 = vadd.f32 %v4896, %v5440
      %v5442 = vpop.f32.mrb[0].mxu0
      %5443 = vmatprep.mubr.bf16.mxu0 0
      %5444 = vmatmul.mubr.bf16.gmra.mrb[0].mxu0 %v3430
      %v5445 = vpop.f32.mrb[0].mxu0
      %v5446 = vadd.f32 %v4901, %v5445
      %v5447 = vpop.f32.mrb[0].mxu0
      %v5448 = vpop.f32.mrb[0].mxu0
      %v5449 = vadd.f32 %v4904, %v5448
      %v5450 = vpop.f32.mrb[0].mxu0
      %5451 = vmatprep.mubr.bf16.mxu0 0
      %5452 = vmatmul.mubr.bf16.gmra.mrb[0].mxu0 %v3433
      %v5453 = vpop.f32.mrb[0].mxu0
      %v5454 = vadd.f32 %v4909, %v5453
      %v5455 = vpop.f32.mrb[0].mxu0
      %v5456 = vpop.f32.mrb[0].mxu0
      %v5457 = vadd.f32 %v4912, %v5456
      %v5458 = vpop.f32.mrb[0].mxu0
      %5459 = vmatprep.mubr.bf16.mxu0 0
      %5460 = vmatmul.mubr.bf16.gmra.mrb[0].mxu0 %v3436
      %v5461 = vpop.f32.mrb[0].mxu0
      %v5462 = vadd.f32 %v4917, %v5461
      %v5463 = vpop.f32.mrb[0].mxu0
      %v5464 = vpop.f32.mrb[0].mxu0
      %v5465 = vadd.f32 %v4920, %v5464
      %v5466 = vpop.f32.mrb[0].mxu0
      %5467 = vmatprep.mubr.bf16.mxu0 0
      %5468 = vmatmul.mubr.bf16.gmra.mrb[0].mxu0 %v3439
      %v5469 = vpop.f32.mrb[0].mxu0
      %v5470 = vadd.f32 %v4925, %v5469
      %v5471 = vpop.f32.mrb[0].mxu0
      %v5472 = vpop.f32.mrb[0].mxu0
      %v5473 = vadd.f32 %v4928, %v5472
      %v5474 = vpop.f32.mrb[0].mxu0
      %5475 = vmatprep.mubr.bf16.mxu0 0
      %5476 = vmatmul.mubr.bf16.gmra.mrb[0].mxu0 %v3442
      %v5477 = vpop.f32.mrb[0].mxu0
      %v5478 = vadd.f32 %v4933, %v5477
      %v5479 = vpop.f32.mrb[0].mxu0
      %v5480 = vpop.f32.mrb[0].mxu0
      %v5481 = vadd.f32 %v4936, %v5480
      %v5482 = vpop.f32.mrb[0].mxu0
      %5483 = vmatprep.mubr.bf16.mxu0 0
      %5484 = vmatmul.mubr.bf16.gmra.mrb[0].mxu0 %v3445
      %v5485 = vpop.f32.mrb[0].mxu0
      %v5486 = vadd.f32 %v4941, %v5485
      %v5487 = vpop.f32.mrb[0].mxu0
      %v5488 = vpop.f32.mrb[0].mxu0
      %v5489 = vadd.f32 %v4944, %v5488
      %v5490 = vpop.f32.mrb[0].mxu0
      %5491 = vmatprep.mubr.bf16.mxu0 0
      %5492 = vmatmul.mubr.bf16.gmra.mrb[0].mxu0 %v3448
      %v5493 = vpop.f32.mrb[0].mxu0
      %v5494 = vadd.f32 %v4949, %v5493
      %v5495 = vpop.f32.mrb[0].mxu0
      %v5496 = vpop.f32.mrb[0].mxu0
      %v5497 = vadd.f32 %v4952, %v5496
      %v5498 = vpop.f32.mrb[0].mxu0
      %5499 = vmatprep.mubr.bf16.mxu0 0
      %5500 = vmatmul.mubr.bf16.gmra.mrb[0].mxu0 %v3451
      %v5501 = vpop.f32.mrb[0].mxu0
      %v5502 = vadd.f32 %v4957, %v5501
      %v5503 = vpop.f32.mrb[0].mxu0
      %v5504 = vpop.f32.mrb[0].mxu0
      %v5505 = vadd.f32 %v4960, %v5504
      %v5506 = vpop.f32.mrb[0].mxu0
      %5507 = vmatprep.mubr.bf16.mxu0 0
      %5508 = vmatmul.mubr.bf16.gmra.mrb[0].mxu0 %v3454
      %v5509 = vpop.f32.mrb[0].mxu0
      %v5510 = vadd.f32 %v4965, %v5509
      %v5511 = vpop.f32.mrb[0].mxu0
      %v5512 = vpop.f32.mrb[0].mxu0
      %v5513 = vadd.f32 %v4968, %v5512
      %v5514 = vpop.f32.mrb[0].mxu0
      %5515 = vmatprep.mubr.bf16.mxu0 0
      %5516 = vmatmul.mubr.bf16.gmra.mrb[0].mxu0 %v3457
      %v5517 = vpop.f32.mrb[0].mxu0
      %v5518 = vadd.f32 %v4973, %v5517
      %v5519 = vpop.f32.mrb[0].mxu0
      %v5520 = vpop.f32.mrb[0].mxu0
      %v5521 = vadd.f32 %v4976, %v5520
      %v5522 = vpop.f32.mrb[0].mxu0
      %5523 = vmatprep.mubr.bf16.mxu0 0
      %5524 = vmatmul.mubr.bf16.gmra.mrb[0].mxu0 %v3460
      %v5525 = vpop.f32.mrb[0].mxu0
      %v5526 = vadd.f32 %v4981, %v5525
      %v5527 = vpop.f32.mrb[0].mxu0
      %v5528 = vpop.f32.mrb[0].mxu0
      %v5529 = vadd.f32 %v4984, %v5528
      %v5530 = vpop.f32.mrb[0].mxu0
      %5531 = vmatprep.mubr.bf16.mxu0 0
      %5532 = vmatmul.mubr.bf16.gmra.mrb[0].mxu0 %v3463
      %v5533 = vpop.f32.mrb[0].mxu0
      %v5534 = vadd.f32 %v4989, %v5533
      %v5535 = vpop.f32.mrb[0].mxu0
      %v5536 = vpop.f32.mrb[0].mxu0
      %v5537 = vadd.f32 %v4992, %v5536
      %v5538 = vpop.f32.mrb[0].mxu0
      %5539 = vmatprep.mubr.bf16.mxu0 0
      %5540 = vmatmul.mubr.bf16.gmra.mrb[0].mxu0 %v3466
      %v5541 = vpop.f32.mrb[0].mxu0
      %v5542 = vadd.f32 %v4997, %v5541
      %v5543 = vpop.f32.mrb[0].mxu0
      %v5544 = vpop.f32.mrb[0].mxu0
      %v5545 = vadd.f32 %v5000, %v5544
      %v5546 = vpop.f32.mrb[0].mxu0
      %5547 = vmatprep.mubr.bf16.mxu0 0
      %5548 = vmatmul.mubr.bf16.gmra.mrb[0].mxu0 %v3469
      %v5549 = vpop.f32.mrb[0].mxu0
      %v5550 = vadd.f32 %v5005, %v5549
      %v5551 = vpop.f32.mrb[0].mxu0
      %v5552 = vpop.f32.mrb[0].mxu0
      %v5553 = vadd.f32 %v5008, %v5552
      %v5554 = vpop.f32.mrb[0].mxu0
      %5555 = vmatprep.mubr.bf16.mxu0 0
      %5556 = vmatmul.mubr.bf16.gmra.mrb[0].mxu0 %v3472
      %v5557 = vpop.f32.mrb[0].mxu0
      %v5558 = vadd.f32 %v5013, %v5557
      %v5559 = vpop.f32.mrb[0].mxu0
      %v5560 = vpop.f32.mrb[0].mxu0
      %v5561 = vadd.f32 %v5016, %v5560
      %v5562 = vpop.f32.mrb[0].mxu0
      %5563 = vmatprep.mubr.bf16.mxu0 0
      %5564 = vmatmul.mubr.bf16.gmra.mrb[0].mxu0 %v3475
      %v5565 = vpop.f32.mrb[0].mxu0
      %v5566 = vadd.f32 %v5021, %v5565
      %v5567 = vpop.f32.mrb[0].mxu0
      %v5568 = vpop.f32.mrb[0].mxu0
      %v5569 = vadd.f32 %v5024, %v5568
      %v5570 = vpop.f32.mrb[0].mxu0
      %5571 = vmatprep.mubr.bf16.mxu0 0
      %5572 = vmatmul.mubr.bf16.gmra.mrb[0].mxu0 %v3478
      %v5573 = vpop.f32.mrb[0].mxu0
      %v5574 = vadd.f32 %v5029, %v5573
      %v5575 = vpop.f32.mrb[0].mxu0
      %v5576 = vpop.f32.mrb[0].mxu0
      %v5577 = vadd.f32 %v5032, %v5576
      %v5578 = vpop.f32.mrb[0].mxu0
      %5579 = vmatprep.mubr.bf16.mxu0 0
      %5580 = vmatmul.mubr.bf16.gmra.mrb[0].mxu0 %v3481
      %v5581 = vpop.f32.mrb[0].mxu0
      %v5582 = vadd.f32 %v5037, %v5581
      %v5583 = vpop.f32.mrb[0].mxu0
      %v5584 = vpop.f32.mrb[0].mxu0
      %v5585 = vadd.f32 %v5040, %v5584
      %v5586 = vpop.f32.mrb[0].mxu0
      %5587 = vmatprep.mubr.bf16.mxu0 0
      %5588 = vmatmul.mubr.bf16.gmra.mrb[0].mxu0 %v3484
      %v5589 = vpop.f32.mrb[0].mxu0
      %v5590 = vadd.f32 %v5045, %v5589
      %v5591 = vpop.f32.mrb[0].mxu0
      %v5592 = vpop.f32.mrb[0].mxu0
      %v5593 = vadd.f32 %v5048, %v5592
      %v5594 = vpop.f32.mrb[0].mxu0
      %5595 = vmatprep.mubr.bf16.mxu0 0
      %5596 = vmatmul.mubr.bf16.gmra.mrb[0].mxu0 %v3487
      %v5597 = vpop.f32.mrb[0].mxu0
      %v5598 = vadd.f32 %v5053, %v5597
      %v5599 = vpop.f32.mrb[0].mxu0
      %v5600 = vpop.f32.mrb[0].mxu0
      %v5601 = vadd.f32 %v5056, %v5600
      %v5602 = vpop.f32.mrb[0].mxu0
      %5603 = vmatprep.mubr.bf16.mxu0 0
      %5604 = vmatmul.mubr.bf16.gmra.mrb[0].mxu0 %v3490
      %v5605 = vpop.f32.mrb[0].mxu0
      %v5606 = vadd.f32 %v5061, %v5605
      %v5607 = vpop.f32.mrb[0].mxu0
      %v5608 = vpop.f32.mrb[0].mxu0
      %v5609 = vadd.f32 %v5064, %v5608
      %v5610 = vpop.f32.mrb[0].mxu0
      %5611 = vmatprep.mubr.bf16.mxu0 0
      %5612 = vmatmul.mubr.bf16.gmra.mrb[0].mxu0 %v3493
      %v5613 = vpop.f32.mrb[0].mxu0
      %v5614 = vadd.f32 %v5069, %v5613
      %v5615 = vpop.f32.mrb[0].mxu0
      %v5616 = vpop.f32.mrb[0].mxu0
      %v5617 = vadd.f32 %v5072, %v5616
      %v5618 = vpop.f32.mrb[0].mxu0
      %5619 = vmatprep.mubr.bf16.mxu0 0
      %5620 = vmatmul.mubr.bf16.gmra.mrb[0].mxu0 %v3496
      %v5621 = vpop.f32.mrb[0].mxu0
      %v5622 = vadd.f32 %v5077, %v5621
      %v5623 = vpop.f32.mrb[0].mxu0
      %v5624 = vpop.f32.mrb[0].mxu0
      %v5625 = vadd.f32 %v5080, %v5624
      %v5626 = vpop.f32.mrb[0].mxu0
      %5627 = vmatprep.mubr.bf16.mxu0 0
      %5628 = vmatmul.mubr.bf16.gmra.mrb[0].mxu0 %v3499
      %v5629 = vpop.f32.mrb[0].mxu0
      %v5630 = vadd.f32 %v5085, %v5629
      %v5631 = vpop.f32.mrb[0].mxu0
      %v5632 = vpop.f32.mrb[0].mxu0
      %v5633 = vadd.f32 %v5088, %v5632
      %v5634 = vpop.f32.mrb[0].mxu0
      %5635 = vmatprep.mubr.bf16.mxu0 0
      %5636 = vmatmul.mubr.bf16.gmra.mrb[0].mxu0 %v3502
      %v5637 = vpop.f32.mrb[0].mxu0
      %v5638 = vadd.f32 %v5093, %v5637
      %v5639 = vpop.f32.mrb[0].mxu0
      %v5640 = vpop.f32.mrb[0].mxu0
      %v5641 = vadd.f32 %v5096, %v5640
      %v5642 = vpop.f32.mrb[0].mxu0
      %5643 = vmatprep.mubr.bf16.mxu0 0
      %5644 = vmatmul.mubr.bf16.gmra.mrb[0].mxu0 %v3505
      %v5645 = vpop.f32.mrb[0].mxu0
      %v5646 = vadd.f32 %v5101, %v5645
      %v5647 = vpop.f32.mrb[0].mxu0
      %v5648 = vpop.f32.mrb[0].mxu0
      %v5649 = vadd.f32 %v5104, %v5648
      %v5650 = vpop.f32.mrb[0].mxu0
      %5651 = vmatprep.mubr.bf16.mxu0 0
      %5652 = vmatmul.mubr.bf16.gmra.mrb[0].mxu0 %v3508
      %v5653 = vpop.f32.mrb[0].mxu0
      %v5654 = vadd.f32 %v5109, %v5653
      %v5655 = vpop.f32.mrb[0].mxu0
      %v5656 = vpop.f32.mrb[0].mxu0
      %v5657 = vadd.f32 %v5112, %v5656
      %v5658 = vpop.f32.mrb[0].mxu0
      %5659 = vmatprep.mubr.bf16.mxu0 0
      %5660 = vmatmul.mubr.bf16.gmra.mrb[0].mxu0 %v3511
      %v5661 = vpop.f32.mrb[0].mxu0
      %v5662 = vadd.f32 %v5117, %v5661
      %v5663 = vpop.f32.mrb[0].mxu0
      %v5664 = vpop.f32.mrb[0].mxu0
      %v5665 = vadd.f32 %v5120, %v5664
      %v5666 = vpop.f32.mrb[0].mxu0
      %5667 = vmatprep.mubr.bf16.mxu0 0
      %5668 = vmatmul.mubr.bf16.gmra.mrb[0].mxu0 %v3514
      %v5669 = vpop.f32.mrb[0].mxu0
      %v5670 = vadd.f32 %v5125, %v5669
      %v5671 = vpop.f32.mrb[0].mxu0
      %v5672 = vpop.f32.mrb[0].mxu0
      %v5673 = vadd.f32 %v5128, %v5672
      %v5674 = vpop.f32.mrb[0].mxu0
      %5675 = vmatprep.mubr.bf16.mxu0 0
      %5676 = vmatmul.mubr.bf16.gmra.mrb[0].mxu0 %v3517
      %v5677 = vpop.f32.mrb[0].mxu0
      %v5678 = vadd.f32 %v5133, %v5677
      %v5679 = vpop.f32.mrb[0].mxu0
      %v5680 = vpop.f32.mrb[0].mxu0
      %v5681 = vadd.f32 %v5136, %v5680
      %v5682 = vpop.f32.mrb[0].mxu0
      %5683 = vmatprep.mubr.bf16.mxu0 0
      %5684 = vmatmul.mubr.bf16.gmra.mrb[0].mxu0 %v3520
      %v5685 = vpop.f32.mrb[0].mxu0
      %v5686 = vadd.f32 %v5141, %v5685
      %v5687 = vpop.f32.mrb[0].mxu0
      %v5688 = vpop.f32.mrb[0].mxu0
      %v5689 = vadd.f32 %v5144, %v5688
      %v5690 = vpop.f32.mrb[0].mxu0
      %5691 = vmatprep.mubr.bf16.mxu0 0
      %5692 = vmatmul.mubr.bf16.gmra.mrb[0].mxu0 %v3523
      %v5693 = vpop.f32.mrb[0].mxu0
      %v5694 = vadd.f32 %v5149, %v5693
      %v5695 = vpop.f32.mrb[0].mxu0
      %v5696 = vpop.f32.mrb[0].mxu0
      %v5697 = vadd.f32 %v5152, %v5696
      %v5698 = vpop.f32.mrb[0].mxu0
      %5699 = vmatprep.mubr.bf16.mxu0 0
      %5700 = vmatmul.mubr.bf16.gmra.mrb[0].mxu0 %v3526
      %v5701 = vpop.f32.mrb[0].mxu0
      %v5702 = vadd.f32 %v5157, %v5701
      %v5703 = vpop.f32.mrb[0].mxu0
      %v5704 = vpop.f32.mrb[0].mxu0
      %v5705 = vadd.f32 %v5160, %v5704
      %v5706 = vpop.f32.mrb[0].mxu0
      %5707 = vdwg.mxu0
      %v5708 = vmax.f32 %v5198, 0.0
      %v5709 = vmax.f32 %v5201, 0.0
      %v5710 = vmax.f32 %v5206, 0.0
      %v5711 = vmax.f32 %v5209, 0.0
      %v5712 = vmax.f32 %v5214, 0.0
      %v5713 = vmax.f32 %v5217, 0.0
      %v5714 = vmax.f32 %v5222, 0.0
      %v5715 = vmax.f32 %v5225, 0.0
      %v5716 = vmax.f32 %v5230, 0.0
      %v5717 = vmax.f32 %v5233, 0.0
      %v5718 = vmax.f32 %v5238, 0.0
      %v5719 = vmax.f32 %v5241, 0.0
      %v5720 = vmax.f32 %v5246, 0.0
      %v5721 = vmax.f32 %v5249, 0.0
      %v5722 = vmax.f32 %v5254, 0.0
      %v5723 = vmax.f32 %v5257, 0.0
      %v5724 = vmax.f32 %v5262, 0.0
      %v5725 = vmax.f32 %v5265, 0.0
      %v5726 = vmax.f32 %v5270, 0.0
      %v5727 = vmax.f32 %v5273, 0.0
      %v5728 = vmax.f32 %v5278, 0.0
      %v5729 = vmax.f32 %v5281, 0.0
      %v5730 = vmax.f32 %v5286, 0.0
      %v5731 = vmax.f32 %v5289, 0.0
      %v5732 = vmax.f32 %v5294, 0.0
      %v5733 = vmax.f32 %v5297, 0.0
      %v5734 = vmax.f32 %v5302, 0.0
      %v5735 = vmax.f32 %v5305, 0.0
      %v5736 = vmax.f32 %v5310, 0.0
      %v5737 = vmax.f32 %v5313, 0.0
      %v5738 = vmax.f32 %v5318, 0.0
      %v5739 = vmax.f32 %v5321, 0.0
      %v5740 = vmax.f32 %v5326, 0.0
      %v5741 = vmax.f32 %v5329, 0.0
      %v5742 = vmax.f32 %v5334, 0.0
      %v5743 = vmax.f32 %v5337, 0.0
      %v5744 = vmax.f32 %v5342, 0.0
      %v5745 = vmax.f32 %v5345, 0.0
      %v5746 = vmax.f32 %v5350, 0.0
      %v5747 = vmax.f32 %v5353, 0.0
      %v5748 = vmax.f32 %v5358, 0.0
      %v5749 = vmax.f32 %v5361, 0.0
      %v5750 = vmax.f32 %v5366, 0.0
      %v5751 = vmax.f32 %v5369, 0.0
      %v5752 = vmax.f32 %v5374, 0.0
      %v5753 = vmax.f32 %v5377, 0.0
      %v5754 = vmax.f32 %v5382, 0.0
      %v5755 = vmax.f32 %v5385, 0.0
      %v5756 = vmax.f32 %v5390, 0.0
      %v5757 = vmax.f32 %v5393, 0.0
      %v5758 = vmax.f32 %v5398, 0.0
      %v5759 = vmax.f32 %v5401, 0.0
      %v5760 = vmax.f32 %v5406, 0.0
      %v5761 = vmax.f32 %v5409, 0.0
      %v5762 = vmax.f32 %v5414, 0.0
      %v5763 = vmax.f32 %v5417, 0.0
      %v5764 = vmax.f32 %v5422, 0.0
      %v5765 = vmax.f32 %v5425, 0.0
      %v5766 = vmax.f32 %v5430, 0.0
      %v5767 = vmax.f32 %v5433, 0.0
      %v5768 = vmax.f32 %v5438, 0.0
      %v5769 = vmax.f32 %v5441, 0.0
      %v5770 = vmax.f32 %v5446, 0.0
      %v5771 = vmax.f32 %v5449, 0.0
      %v5772 = vmax.f32 %v5454, 0.0
      %v5773 = vmax.f32 %v5457, 0.0
      %v5774 = vmax.f32 %v5462, 0.0
      %v5775 = vmax.f32 %v5465, 0.0
      %v5776 = vmax.f32 %v5470, 0.0
      %v5777 = vmax.f32 %v5473, 0.0
      %v5778 = vmax.f32 %v5478, 0.0
      %v5779 = vmax.f32 %v5481, 0.0
      %v5780 = vmax.f32 %v5486, 0.0
      %v5781 = vmax.f32 %v5489, 0.0
      %v5782 = vmax.f32 %v5494, 0.0
      %v5783 = vmax.f32 %v5497, 0.0
      %v5784 = vmax.f32 %v5502, 0.0
      %v5785 = vmax.f32 %v5505, 0.0
      %v5786 = vmax.f32 %v5510, 0.0
      %v5787 = vmax.f32 %v5513, 0.0
      %v5788 = vmax.f32 %v5518, 0.0
      %v5789 = vmax.f32 %v5521, 0.0
      %v5790 = vmax.f32 %v5526, 0.0
      %v5791 = vmax.f32 %v5529, 0.0
      %v5792 = vmax.f32 %v5534, 0.0
      %v5793 = vmax.f32 %v5537, 0.0
      %v5794 = vmax.f32 %v5542, 0.0
      %v5795 = vmax.f32 %v5545, 0.0
      %v5796 = vmax.f32 %v5550, 0.0
      %v5797 = vmax.f32 %v5553, 0.0
      %v5798 = vmax.f32 %v5558, 0.0
      %v5799 = vmax.f32 %v5561, 0.0
      %v5800 = vmax.f32 %v5566, 0.0
      %v5801 = vmax.f32 %v5569, 0.0
      %v5802 = vmax.f32 %v5574, 0.0
      %v5803 = vmax.f32 %v5577, 0.0
      %v5804 = vmax.f32 %v5582, 0.0
      %v5805 = vmax.f32 %v5585, 0.0
      %v5806 = vmax.f32 %v5590, 0.0
      %v5807 = vmax.f32 %v5593, 0.0
      %v5808 = vmax.f32 %v5598, 0.0
      %v5809 = vmax.f32 %v5601, 0.0
      %v5810 = vmax.f32 %v5606, 0.0
      %v5811 = vmax.f32 %v5609, 0.0
      %v5812 = vmax.f32 %v5614, 0.0
      %v5813 = vmax.f32 %v5617, 0.0
      %v5814 = vmax.f32 %v5622, 0.0
      %v5815 = vmax.f32 %v5625, 0.0
      %v5816 = vmax.f32 %v5630, 0.0
      %v5817 = vmax.f32 %v5633, 0.0
      %v5818 = vmax.f32 %v5638, 0.0
      %v5819 = vmax.f32 %v5641, 0.0
      %v5820 = vmax.f32 %v5646, 0.0
      %v5821 = vmax.f32 %v5649, 0.0
      %v5822 = vmax.f32 %v5654, 0.0
      %v5823 = vmax.f32 %v5657, 0.0
      %v5824 = vmax.f32 %v5662, 0.0
      %v5825 = vmax.f32 %v5665, 0.0
      %v5826 = vmax.f32 %v5670, 0.0
      %v5827 = vmax.f32 %v5673, 0.0
      %v5828 = vmax.f32 %v5678, 0.0
      %v5829 = vmax.f32 %v5681, 0.0
      %v5830 = vmax.f32 %v5686, 0.0
      %v5831 = vmax.f32 %v5689, 0.0
      %v5832 = vmax.f32 %v5694, 0.0
      %v5833 = vmax.f32 %v5697, 0.0
      %v5834 = vmax.f32 %v5702, 0.0
      %v5835 = vmax.f32 %v5705, 0.0
      %v5836 = vpack.c.bf16 %v5709, %v5708
      %v5837 = vpack.c.bf16 %v5711, %v5710
      %v5838 = vpack.c.bf16 %v5713, %v5712
      %v5839 = vpack.c.bf16 %v5715, %v5714
      %v5840 = vpack.c.bf16 %v5717, %v5716
      %v5841 = vpack.c.bf16 %v5719, %v5718
      %v5842 = vpack.c.bf16 %v5721, %v5720
      %v5843 = vpack.c.bf16 %v5723, %v5722
      %v5844 = vpack.c.bf16 %v5725, %v5724
      %v5845 = vpack.c.bf16 %v5727, %v5726
      %v5846 = vpack.c.bf16 %v5729, %v5728
      %v5847 = vpack.c.bf16 %v5731, %v5730
      %v5848 = vpack.c.bf16 %v5733, %v5732
      %v5849 = vpack.c.bf16 %v5735, %v5734
      %v5850 = vpack.c.bf16 %v5737, %v5736
      %v5851 = vpack.c.bf16 %v5739, %v5738
      %v5852 = vpack.c.bf16 %v5741, %v5740
      %v5853 = vpack.c.bf16 %v5743, %v5742
      %v5854 = vpack.c.bf16 %v5745, %v5744
      %v5855 = vpack.c.bf16 %v5747, %v5746
      %v5856 = vpack.c.bf16 %v5749, %v5748
      %v5857 = vpack.c.bf16 %v5751, %v5750
      %v5858 = vpack.c.bf16 %v5753, %v5752
      %v5859 = vpack.c.bf16 %v5755, %v5754
      %v5860 = vpack.c.bf16 %v5757, %v5756
      %v5861 = vpack.c.bf16 %v5759, %v5758
      %v5862 = vpack.c.bf16 %v5761, %v5760
      %v5863 = vpack.c.bf16 %v5763, %v5762
      %v5864 = vpack.c.bf16 %v5765, %v5764
      %v5865 = vpack.c.bf16 %v5767, %v5766
      %v5866 = vpack.c.bf16 %v5769, %v5768
      %v5867 = vpack.c.bf16 %v5771, %v5770
      %v5868 = vpack.c.bf16 %v5773, %v5772
      %v5869 = vpack.c.bf16 %v5775, %v5774
      %v5870 = vpack.c.bf16 %v5777, %v5776
      %v5871 = vpack.c.bf16 %v5779, %v5778
      %v5872 = vpack.c.bf16 %v5781, %v5780
      %v5873 = vpack.c.bf16 %v5783, %v5782
      %v5874 = vpack.c.bf16 %v5785, %v5784
      %v5875 = vpack.c.bf16 %v5787, %v5786
      %v5876 = vpack.c.bf16 %v5789, %v5788
      %v5877 = vpack.c.bf16 %v5791, %v5790
      %v5878 = vpack.c.bf16 %v5793, %v5792
      %v5879 = vpack.c.bf16 %v5795, %v5794
      %v5880 = vpack.c.bf16 %v5797, %v5796
      %v5881 = vpack.c.bf16 %v5799, %v5798
      %v5882 = vpack.c.bf16 %v5801, %v5800
      %v5883 = vpack.c.bf16 %v5803, %v5802
      %v5884 = vpack.c.bf16 %v5805, %v5804
      %v5885 = vpack.c.bf16 %v5807, %v5806
      %v5886 = vpack.c.bf16 %v5809, %v5808
      %v5887 = vpack.c.bf16 %v5811, %v5810
      %v5888 = vpack.c.bf16 %v5813, %v5812
      %v5889 = vpack.c.bf16 %v5815, %v5814
      %v5890 = vpack.c.bf16 %v5817, %v5816
      %v5891 = vpack.c.bf16 %v5819, %v5818
      %v5892 = vpack.c.bf16 %v5821, %v5820
      %v5893 = vpack.c.bf16 %v5823, %v5822
      %v5894 = vpack.c.bf16 %v5825, %v5824
      %v5895 = vpack.c.bf16 %v5827, %v5826
      %v5896 = vpack.c.bf16 %v5829, %v5828
      %v5897 = vpack.c.bf16 %v5831, %v5830
      %v5898 = vpack.c.bf16 %v5833, %v5832
      %v5899 = vpack.c.bf16 %v5835, %v5834
      %v5964 = vunpack.c.l.b16 %v5836
      %v5965 = vunpack.c.h.b16 %v5836
      %v5966 = vunpack.c.l.b16 %v5837
      %v5967 = vunpack.c.h.b16 %v5837
      %v5968 = vunpack.c.l.b16 %v5838
      %v5969 = vunpack.c.h.b16 %v5838
      %v5970 = vunpack.c.l.b16 %v5839
      %v5971 = vunpack.c.h.b16 %v5839
      %v5972 = vunpack.c.l.b16 %v5840
      %v5973 = vunpack.c.h.b16 %v5840
      %v5974 = vunpack.c.l.b16 %v5841
      %v5975 = vunpack.c.h.b16 %v5841
      %v5976 = vunpack.c.l.b16 %v5842
      %v5977 = vunpack.c.h.b16 %v5842
      %v5978 = vunpack.c.l.b16 %v5843
      %v5979 = vunpack.c.h.b16 %v5843
      %v5980 = vunpack.c.l.b16 %v5844
      %v5981 = vunpack.c.h.b16 %v5844
      %v5982 = vunpack.c.l.b16 %v5845
      %v5983 = vunpack.c.h.b16 %v5845
      %v5984 = vunpack.c.l.b16 %v5846
      %v5985 = vunpack.c.h.b16 %v5846
      %v5986 = vunpack.c.l.b16 %v5847
      %v5987 = vunpack.c.h.b16 %v5847
      %v5988 = vunpack.c.l.b16 %v5848
      %v5989 = vunpack.c.h.b16 %v5848
      %v5990 = vunpack.c.l.b16 %v5849
      %v5991 = vunpack.c.h.b16 %v5849
      %v5992 = vunpack.c.l.b16 %v5850
      %v5993 = vunpack.c.h.b16 %v5850
      %v5994 = vunpack.c.l.b16 %v5851
      %v5995 = vunpack.c.h.b16 %v5851
      %v5996 = vunpack.c.l.b16 %v5852
      %v5997 = vunpack.c.h.b16 %v5852
      %v5998 = vunpack.c.l.b16 %v5853
      %v5999 = vunpack.c.h.b16 %v5853
      %v6000 = vunpack.c.l.b16 %v5854
      %v6001 = vunpack.c.h.b16 %v5854
      %v6002 = vunpack.c.l.b16 %v5855
      %v6003 = vunpack.c.h.b16 %v5855
      %v6004 = vunpack.c.l.b16 %v5856
      %v6005 = vunpack.c.h.b16 %v5856
      %v6006 = vunpack.c.l.b16 %v5857
      %v6007 = vunpack.c.h.b16 %v5857
      %v6008 = vunpack.c.l.b16 %v5858
      %v6009 = vunpack.c.h.b16 %v5858
      %v6010 = vunpack.c.l.b16 %v5859
      %v6011 = vunpack.c.h.b16 %v5859
      %v6012 = vunpack.c.l.b16 %v5860
      %v6013 = vunpack.c.h.b16 %v5860
      %v6014 = vunpack.c.l.b16 %v5861
      %v6015 = vunpack.c.h.b16 %v5861
      %v6016 = vunpack.c.l.b16 %v5862
      %v6017 = vunpack.c.h.b16 %v5862
      %v6018 = vunpack.c.l.b16 %v5863
      %v6019 = vunpack.c.h.b16 %v5863
      %v6020 = vunpack.c.l.b16 %v5864
      %v6021 = vunpack.c.h.b16 %v5864
      %v6022 = vunpack.c.l.b16 %v5865
      %v6023 = vunpack.c.h.b16 %v5865
      %v6024 = vunpack.c.l.b16 %v5866
      %v6025 = vunpack.c.h.b16 %v5866
      %v6026 = vunpack.c.l.b16 %v5867
      %v6027 = vunpack.c.h.b16 %v5867
      %v6028 = vunpack.c.l.b16 %v5868
      %v6029 = vunpack.c.h.b16 %v5868
      %v6030 = vunpack.c.l.b16 %v5869
      %v6031 = vunpack.c.h.b16 %v5869
      %v6032 = vunpack.c.l.b16 %v5870
      %v6033 = vunpack.c.h.b16 %v5870
      %v6034 = vunpack.c.l.b16 %v5871
      %v6035 = vunpack.c.h.b16 %v5871
      %v6036 = vunpack.c.l.b16 %v5872
      %v6037 = vunpack.c.h.b16 %v5872
      %v6038 = vunpack.c.l.b16 %v5873
      %v6039 = vunpack.c.h.b16 %v5873
      %v6040 = vunpack.c.l.b16 %v5874
      %v6041 = vunpack.c.h.b16 %v5874
      %v6042 = vunpack.c.l.b16 %v5875
      %v6043 = vunpack.c.h.b16 %v5875
      %v6044 = vunpack.c.l.b16 %v5876
      %v6045 = vunpack.c.h.b16 %v5876
      %v6046 = vunpack.c.l.b16 %v5877
      %v6047 = vunpack.c.h.b16 %v5877
      %v6048 = vunpack.c.l.b16 %v5878
      %v6049 = vunpack.c.h.b16 %v5878
      %v6050 = vunpack.c.l.b16 %v5879
      %v6051 = vunpack.c.h.b16 %v5879
      %v6052 = vunpack.c.l.b16 %v5880
      %v6053 = vunpack.c.h.b16 %v5880
      %v6054 = vunpack.c.l.b16 %v5881
      %v6055 = vunpack.c.h.b16 %v5881
      %v6056 = vunpack.c.l.b16 %v5882
      %v6057 = vunpack.c.h.b16 %v5882
      %v6058 = vunpack.c.l.b16 %v5883
      %v6059 = vunpack.c.h.b16 %v5883
      %v6060 = vunpack.c.l.b16 %v5884
      %v6061 = vunpack.c.h.b16 %v5884
      %v6062 = vunpack.c.l.b16 %v5885
      %v6063 = vunpack.c.h.b16 %v5885
      %v6064 = vunpack.c.l.b16 %v5886
      %v6065 = vunpack.c.h.b16 %v5886
      %v6066 = vunpack.c.l.b16 %v5887
      %v6067 = vunpack.c.h.b16 %v5887
      %v6068 = vunpack.c.l.b16 %v5888
      %v6069 = vunpack.c.h.b16 %v5888
      %v6070 = vunpack.c.l.b16 %v5889
      %v6071 = vunpack.c.h.b16 %v5889
      %v6072 = vunpack.c.l.b16 %v5890
      %v6073 = vunpack.c.h.b16 %v5890
      %v6074 = vunpack.c.l.b16 %v5891
      %v6075 = vunpack.c.h.b16 %v5891
      %v6076 = vunpack.c.l.b16 %v5892
      %v6077 = vunpack.c.h.b16 %v5892
      %v6078 = vunpack.c.l.b16 %v5893
      %v6079 = vunpack.c.h.b16 %v5893
      %v6080 = vunpack.c.l.b16 %v5894
      %v6081 = vunpack.c.h.b16 %v5894
      %v6082 = vunpack.c.l.b16 %v5895
      %v6083 = vunpack.c.h.b16 %v5895
      %v6084 = vunpack.c.l.b16 %v5896
      %v6085 = vunpack.c.h.b16 %v5896
      %v6086 = vunpack.c.l.b16 %v5897
      %v6087 = vunpack.c.h.b16 %v5897
      %v6088 = vunpack.c.l.b16 %v5898
      %v6089 = vunpack.c.h.b16 %v5898
      %v6090 = vunpack.c.l.b16 %v5899
      %v6091 = vunpack.c.h.b16 %v5899
      %v6092 = vpack.c.b16 %v5964, %v5964
      %v6093 = vpack.c.b16 %v5965, %v5965
      %v6094 = vpack.c.b16 %v5966, %v5966
      %v6095 = vpack.c.b16 %v5967, %v5967
      %v6096 = vpack.c.b16 %v5968, %v5968
      %v6097 = vpack.c.b16 %v5969, %v5969
      %v6098 = vpack.c.b16 %v5970, %v5970
      %v6099 = vpack.c.b16 %v5971, %v5971
      %v6100 = vpack.c.b16 %v5972, %v5972
      %v6101 = vpack.c.b16 %v5973, %v5973
      %v6102 = vpack.c.b16 %v5974, %v5974
      %v6103 = vpack.c.b16 %v5975, %v5975
      %v6104 = vpack.c.b16 %v5976, %v5976
      %v6105 = vpack.c.b16 %v5977, %v5977
      %v6106 = vpack.c.b16 %v5978, %v5978
      %v6107 = vpack.c.b16 %v5979, %v5979
      %v6108 = vpack.c.b16 %v5980, %v5980
      %v6109 = vpack.c.b16 %v5981, %v5981
      %v6110 = vpack.c.b16 %v5982, %v5982
      %v6111 = vpack.c.b16 %v5983, %v5983
      %v6112 = vpack.c.b16 %v5984, %v5984
      %v6113 = vpack.c.b16 %v5985, %v5985
      %v6114 = vpack.c.b16 %v5986, %v5986
      %v6115 = vpack.c.b16 %v5987, %v5987
      %v6116 = vpack.c.b16 %v5988, %v5988
      %v6117 = vpack.c.b16 %v5989, %v5989
      %v6118 = vpack.c.b16 %v5990, %v5990
      %v6119 = vpack.c.b16 %v5991, %v5991
      %v6120 = vpack.c.b16 %v5992, %v5992
      %v6121 = vpack.c.b16 %v5993, %v5993
      %v6122 = vpack.c.b16 %v5994, %v5994
      %v6123 = vpack.c.b16 %v5995, %v5995
      %v6124 = vpack.c.b16 %v5996, %v5996
      %v6125 = vpack.c.b16 %v5997, %v5997
      %v6126 = vpack.c.b16 %v5998, %v5998
      %v6127 = vpack.c.b16 %v5999, %v5999
      %v6128 = vpack.c.b16 %v6000, %v6000
      %v6129 = vpack.c.b16 %v6001, %v6001
      %v6130 = vpack.c.b16 %v6002, %v6002
      %v6131 = vpack.c.b16 %v6003, %v6003
      %v6132 = vpack.c.b16 %v6004, %v6004
      %v6133 = vpack.c.b16 %v6005, %v6005
      %v6134 = vpack.c.b16 %v6006, %v6006
      %v6135 = vpack.c.b16 %v6007, %v6007
      %v6136 = vpack.c.b16 %v6008, %v6008
      %v6137 = vpack.c.b16 %v6009, %v6009
      %v6138 = vpack.c.b16 %v6010, %v6010
      %v6139 = vpack.c.b16 %v6011, %v6011
      %v6140 = vpack.c.b16 %v6012, %v6012
      %v6141 = vpack.c.b16 %v6013, %v6013
      %v6142 = vpack.c.b16 %v6014, %v6014
      %v6143 = vpack.c.b16 %v6015, %v6015
      %v6144 = vpack.c.b16 %v6016, %v6016
      %v6145 = vpack.c.b16 %v6017, %v6017
      %v6146 = vpack.c.b16 %v6018, %v6018
      %v6147 = vpack.c.b16 %v6019, %v6019
      %v6148 = vpack.c.b16 %v6020, %v6020
      %v6149 = vpack.c.b16 %v6021, %v6021
      %v6150 = vpack.c.b16 %v6022, %v6022
      %v6151 = vpack.c.b16 %v6023, %v6023
      %v6152 = vpack.c.b16 %v6024, %v6024
      %v6153 = vpack.c.b16 %v6025, %v6025
      %v6154 = vpack.c.b16 %v6026, %v6026
      %v6155 = vpack.c.b16 %v6027, %v6027
      %v6156 = vpack.c.b16 %v6028, %v6028
      %v6157 = vpack.c.b16 %v6029, %v6029
      %v6158 = vpack.c.b16 %v6030, %v6030
      %v6159 = vpack.c.b16 %v6031, %v6031
      %v6160 = vpack.c.b16 %v6032, %v6032
      %v6161 = vpack.c.b16 %v6033, %v6033
      %v6162 = vpack.c.b16 %v6034, %v6034
      %v6163 = vpack.c.b16 %v6035, %v6035
      %v6164 = vpack.c.b16 %v6036, %v6036
      %v6165 = vpack.c.b16 %v6037, %v6037
      %v6166 = vpack.c.b16 %v6038, %v6038
      %v6167 = vpack.c.b16 %v6039, %v6039
      %v6168 = vpack.c.b16 %v6040, %v6040
      %v6169 = vpack.c.b16 %v6041, %v6041
      %v6170 = vpack.c.b16 %v6042, %v6042
      %v6171 = vpack.c.b16 %v6043, %v6043
      %v6172 = vpack.c.b16 %v6044, %v6044
      %v6173 = vpack.c.b16 %v6045, %v6045
      %v6174 = vpack.c.b16 %v6046, %v6046
      %v6175 = vpack.c.b16 %v6047, %v6047
      %v6176 = vpack.c.b16 %v6048, %v6048
      %v6177 = vpack.c.b16 %v6049, %v6049
      %v6178 = vpack.c.b16 %v6050, %v6050
      %v6179 = vpack.c.b16 %v6051, %v6051
      %v6180 = vpack.c.b16 %v6052, %v6052
      %v6181 = vpack.c.b16 %v6053, %v6053
      %v6182 = vpack.c.b16 %v6054, %v6054
      %v6183 = vpack.c.b16 %v6055, %v6055
      %v6184 = vpack.c.b16 %v6056, %v6056
      %v6185 = vpack.c.b16 %v6057, %v6057
      %v6186 = vpack.c.b16 %v6058, %v6058
      %v6187 = vpack.c.b16 %v6059, %v6059
      %v6188 = vpack.c.b16 %v6060, %v6060
      %v6189 = vpack.c.b16 %v6061, %v6061
      %v6190 = vpack.c.b16 %v6062, %v6062
      %v6191 = vpack.c.b16 %v6063, %v6063
      %v6192 = vpack.c.b16 %v6064, %v6064
      %v6193 = vpack.c.b16 %v6065, %v6065
      %v6194 = vpack.c.b16 %v6066, %v6066
      %v6195 = vpack.c.b16 %v6067, %v6067
      %v6196 = vpack.c.b16 %v6068, %v6068
      %v6197 = vpack.c.b16 %v6069, %v6069
      %v6198 = vpack.c.b16 %v6070, %v6070
      %v6199 = vpack.c.b16 %v6071, %v6071
      %v6200 = vpack.c.b16 %v6072, %v6072
      %v6201 = vpack.c.b16 %v6073, %v6073
      %v6202 = vpack.c.b16 %v6074, %v6074
      %v6203 = vpack.c.b16 %v6075, %v6075
      %v6204 = vpack.c.b16 %v6076, %v6076
      %v6205 = vpack.c.b16 %v6077, %v6077
      %v6206 = vpack.c.b16 %v6078, %v6078
      %v6207 = vpack.c.b16 %v6079, %v6079
      %v6208 = vpack.c.b16 %v6080, %v6080
      %v6209 = vpack.c.b16 %v6081, %v6081
      %v6210 = vpack.c.b16 %v6082, %v6082
      %v6211 = vpack.c.b16 %v6083, %v6083
      %v6212 = vpack.c.b16 %v6084, %v6084
      %v6213 = vpack.c.b16 %v6085, %v6085
      %v6214 = vpack.c.b16 %v6086, %v6086
      %v6215 = vpack.c.b16 %v6087, %v6087
      %v6216 = vpack.c.b16 %v6088, %v6088
      %v6217 = vpack.c.b16 %v6089, %v6089
      %v6218 = vpack.c.b16 %v6090, %v6090
      %v6219 = vpack.c.b16 %v6091, %v6091
      %vm6348 = vcmask 60416
      %6349 = vst.msk [vmem:[%s148] sm:$0xf] %vm6348, %v6092
      %6350 = vst.msk [vmem:[%s148 + $0x4] sm:$0xf] %vm6348, %v6093
      %6351 = vst.msk [vmem:[%s148 + $0x8] sm:$0xf] %vm6348, %v6094
      %6352 = vst.msk [vmem:[%s148 + $0xc] sm:$0xf] %vm6348, %v6095
      %6353 = vst.msk [vmem:[%s148 + $0x10] sm:$0xf] %vm6348, %v6096
      %6354 = vst.msk [vmem:[%s148 + $0x14] sm:$0xf] %vm6348, %v6097
      %6355 = vst.msk [vmem:[%s148 + $0x18] sm:$0xf] %vm6348, %v6098
      %6356 = vst.msk [vmem:[%s148 + $0x1c] sm:$0xf] %vm6348, %v6099
      %6357 = vst.msk [vmem:[%s148 + $0x20] sm:$0xf] %vm6348, %v6100
      %6358 = vst.msk [vmem:[%s148 + $0x24] sm:$0xf] %vm6348, %v6101
      %6359 = vst.msk [vmem:[%s148 + $0x28] sm:$0xf] %vm6348, %v6102
      %6360 = vst.msk [vmem:[%s148 + $0x2c] sm:$0xf] %vm6348, %v6103
      %6361 = vst.msk [vmem:[%s148 + $0x30] sm:$0xf] %vm6348, %v6104
      %6362 = vst.msk [vmem:[%s148 + $0x34] sm:$0xf] %vm6348, %v6105
      %6363 = vst.msk [vmem:[%s148 + $0x38] sm:$0xf] %vm6348, %v6106
      %6364 = vst.msk [vmem:[%s148 + $0x3c] sm:$0xf] %vm6348, %v6107
      %6365 = vst.msk [vmem:[%s148 + $0x40] sm:$0xf] %vm6348, %v6108
      %6366 = vst.msk [vmem:[%s148 + $0x44] sm:$0xf] %vm6348, %v6109
      %6367 = vst.msk [vmem:[%s148 + $0x48] sm:$0xf] %vm6348, %v6110
      %6368 = vst.msk [vmem:[%s148 + $0x4c] sm:$0xf] %vm6348, %v6111
      %6369 = vst.msk [vmem:[%s148 + $0x50] sm:$0xf] %vm6348, %v6112
      %6370 = vst.msk [vmem:[%s148 + $0x54] sm:$0xf] %vm6348, %v6113
      %6371 = vst.msk [vmem:[%s148 + $0x58] sm:$0xf] %vm6348, %v6114
      %6372 = vst.msk [vmem:[%s148 + $0x5c] sm:$0xf] %vm6348, %v6115
      %6373 = vst.msk [vmem:[%s148 + $0x60] sm:$0xf] %vm6348, %v6116
      %6374 = vst.msk [vmem:[%s148 + $0x64] sm:$0xf] %vm6348, %v6117
      %6375 = vst.msk [vmem:[%s148 + $0x68] sm:$0xf] %vm6348, %v6118
      %6376 = vst.msk [vmem:[%s148 + $0x6c] sm:$0xf] %vm6348, %v6119
      %6377 = vst.msk [vmem:[%s148 + $0x70] sm:$0xf] %vm6348, %v6120
      %6378 = vst.msk [vmem:[%s148 + $0x74] sm:$0xf] %vm6348, %v6121
      %6379 = vst.msk [vmem:[%s148 + $0x78] sm:$0xf] %vm6348, %v6122
      %6380 = vst.msk [vmem:[%s148 + $0x7c] sm:$0xf] %vm6348, %v6123
      %6381 = vst.msk [vmem:[%s148 + $0x80] sm:$0xf] %vm6348, %v6124
      %6382 = vst.msk [vmem:[%s148 + $0x84] sm:$0xf] %vm6348, %v6125
      %6383 = vst.msk [vmem:[%s148 + $0x88] sm:$0xf] %vm6348, %v6126
      %6384 = vst.msk [vmem:[%s148 + $0x8c] sm:$0xf] %vm6348, %v6127
      %6385 = vst.msk [vmem:[%s148 + $0x90] sm:$0xf] %vm6348, %v6128
      %6386 = vst.msk [vmem:[%s148 + $0x94] sm:$0xf] %vm6348, %v6129
      %6387 = vst.msk [vmem:[%s148 + $0x98] sm:$0xf] %vm6348, %v6130
      %6388 = vst.msk [vmem:[%s148 + $0x9c] sm:$0xf] %vm6348, %v6131
      %6389 = vst.msk [vmem:[%s148 + $0xa0] sm:$0xf] %vm6348, %v6132
      %6390 = vst.msk [vmem:[%s148 + $0xa4] sm:$0xf] %vm6348, %v6133
      %6391 = vst.msk [vmem:[%s148 + $0xa8] sm:$0xf] %vm6348, %v6134
      %6392 = vst.msk [vmem:[%s148 + $0xac] sm:$0xf] %vm6348, %v6135
      %6393 = vst.msk [vmem:[%s148 + $0xb0] sm:$0xf] %vm6348, %v6136
      %6394 = vst.msk [vmem:[%s148 + $0xb4] sm:$0xf] %vm6348, %v6137
      %6395 = vst.msk [vmem:[%s148 + $0xb8] sm:$0xf] %vm6348, %v6138
      %6396 = vst.msk [vmem:[%s148 + $0xbc] sm:$0xf] %vm6348, %v6139
      %6397 = vst.msk [vmem:[%s148 + $0xc0] sm:$0xf] %vm6348, %v6140
      %6398 = vst.msk [vmem:[%s148 + $0xc4] sm:$0xf] %vm6348, %v6141
      %6399 = vst.msk [vmem:[%s148 + $0xc8] sm:$0xf] %vm6348, %v6142
      %6400 = vst.msk [vmem:[%s148 + $0xcc] sm:$0xf] %vm6348, %v6143
      %6401 = vst.msk [vmem:[%s148 + $0xd0] sm:$0xf] %vm6348, %v6144
      %6402 = vst.msk [vmem:[%s148 + $0xd4] sm:$0xf] %vm6348, %v6145
      %6403 = vst.msk [vmem:[%s148 + $0xd8] sm:$0xf] %vm6348, %v6146
      %6404 = vst.msk [vmem:[%s148 + $0xdc] sm:$0xf] %vm6348, %v6147
      %6405 = vst.msk [vmem:[%s148 + $0xe0] sm:$0xf] %vm6348, %v6148
      %6406 = vst.msk [vmem:[%s148 + $0xe4] sm:$0xf] %vm6348, %v6149
      %6407 = vst.msk [vmem:[%s148 + $0xe8] sm:$0xf] %vm6348, %v6150
      %6408 = vst.msk [vmem:[%s148 + $0xec] sm:$0xf] %vm6348, %v6151
      %6409 = vst.msk [vmem:[%s148 + $0xf0] sm:$0xf] %vm6348, %v6152
      %6410 = vst.msk [vmem:[%s148 + $0xf4] sm:$0xf] %vm6348, %v6153
      %6411 = vst.msk [vmem:[%s148 + $0xf8] sm:$0xf] %vm6348, %v6154
      %6412 = vst.msk [vmem:[%s148 + $0xfc] sm:$0xf] %vm6348, %v6155
      %6413 = vst.msk [vmem:[%s148 + $0x100] sm:$0xf] %vm6348, %v6156
      %6414 = vst.msk [vmem:[%s148 + $0x104] sm:$0xf] %vm6348, %v6157
      %6415 = vst.msk [vmem:[%s148 + $0x108] sm:$0xf] %vm6348, %v6158
      %6416 = vst.msk [vmem:[%s148 + $0x10c] sm:$0xf] %vm6348, %v6159
      %6417 = vst.msk [vmem:[%s148 + $0x110] sm:$0xf] %vm6348, %v6160
      %6418 = vst.msk [vmem:[%s148 + $0x114] sm:$0xf] %vm6348, %v6161
      %6419 = vst.msk [vmem:[%s148 + $0x118] sm:$0xf] %vm6348, %v6162
      %6420 = vst.msk [vmem:[%s148 + $0x11c] sm:$0xf] %vm6348, %v6163
      %6421 = vst.msk [vmem:[%s148 + $0x120] sm:$0xf] %vm6348, %v6164
      %6422 = vst.msk [vmem:[%s148 + $0x124] sm:$0xf] %vm6348, %v6165
      %6423 = vst.msk [vmem:[%s148 + $0x128] sm:$0xf] %vm6348, %v6166
      %6424 = vst.msk [vmem:[%s148 + $0x12c] sm:$0xf] %vm6348, %v6167
      %6425 = vst.msk [vmem:[%s148 + $0x130] sm:$0xf] %vm6348, %v6168
      %6426 = vst.msk [vmem:[%s148 + $0x134] sm:$0xf] %vm6348, %v6169
      %6427 = vst.msk [vmem:[%s148 + $0x138] sm:$0xf] %vm6348, %v6170
      %6428 = vst.msk [vmem:[%s148 + $0x13c] sm:$0xf] %vm6348, %v6171
      %6429 = vst.msk [vmem:[%s148 + $0x140] sm:$0xf] %vm6348, %v6172
      %6430 = vst.msk [vmem:[%s148 + $0x144] sm:$0xf] %vm6348, %v6173
      %6431 = vst.msk [vmem:[%s148 + $0x148] sm:$0xf] %vm6348, %v6174
      %6432 = vst.msk [vmem:[%s148 + $0x14c] sm:$0xf] %vm6348, %v6175
      %6433 = vst.msk [vmem:[%s148 + $0x150] sm:$0xf] %vm6348, %v6176
      %6434 = vst.msk [vmem:[%s148 + $0x154] sm:$0xf] %vm6348, %v6177
      %6435 = vst.msk [vmem:[%s148 + $0x158] sm:$0xf] %vm6348, %v6178
      %6436 = vst.msk [vmem:[%s148 + $0x15c] sm:$0xf] %vm6348, %v6179
      %6437 = vst.msk [vmem:[%s148 + $0x160] sm:$0xf] %vm6348, %v6180
      %6438 = vst.msk [vmem:[%s148 + $0x164] sm:$0xf] %vm6348, %v6181
      %6439 = vst.msk [vmem:[%s148 + $0x168] sm:$0xf] %vm6348, %v6182
      %6440 = vst.msk [vmem:[%s148 + $0x16c] sm:$0xf] %vm6348, %v6183
      %6441 = vst.msk [vmem:[%s148 + $0x170] sm:$0xf] %vm6348, %v6184
      %6442 = vst.msk [vmem:[%s148 + $0x174] sm:$0xf] %vm6348, %v6185
      %6443 = vst.msk [vmem:[%s148 + $0x178] sm:$0xf] %vm6348, %v6186
      %6444 = vst.msk [vmem:[%s148 + $0x17c] sm:$0xf] %vm6348, %v6187
      %6445 = vst.msk [vmem:[%s148 + $0x180] sm:$0xf] %vm6348, %v6188
      %6446 = vst.msk [vmem:[%s148 + $0x184] sm:$0xf] %vm6348, %v6189
      %6447 = vst.msk [vmem:[%s148 + $0x188] sm:$0xf] %vm6348, %v6190
      %6448 = vst.msk [vmem:[%s148 + $0x18c] sm:$0xf] %vm6348, %v6191
      %6449 = vst.msk [vmem:[%s148 + $0x190] sm:$0xf] %vm6348, %v6192
      %6450 = vst.msk [vmem:[%s148 + $0x194] sm:$0xf] %vm6348, %v6193
      %6451 = vst.msk [vmem:[%s148 + $0x198] sm:$0xf] %vm6348, %v6194
      %6452 = vst.msk [vmem:[%s148 + $0x19c] sm:$0xf] %vm6348, %v6195
      %6453 = vst.msk [vmem:[%s148 + $0x1a0] sm:$0xf] %vm6348, %v6196
      %6454 = vst.msk [vmem:[%s148 + $0x1a4] sm:$0xf] %vm6348, %v6197
      %6455 = vst.msk [vmem:[%s148 + $0x1a8] sm:$0xf] %vm6348, %v6198
      %6456 = vst.msk [vmem:[%s148 + $0x1ac] sm:$0xf] %vm6348, %v6199
      %6457 = vst.msk [vmem:[%s148 + $0x1b0] sm:$0xf] %vm6348, %v6200
      %6458 = vst.msk [vmem:[%s148 + $0x1b4] sm:$0xf] %vm6348, %v6201
      %6459 = vst.msk [vmem:[%s148 + $0x1b8] sm:$0xf] %vm6348, %v6202
      %6460 = vst.msk [vmem:[%s148 + $0x1bc] sm:$0xf] %vm6348, %v6203
      %6461 = vst.msk [vmem:[%s148 + $0x1c0] sm:$0xf] %vm6348, %v6204
      %6462 = vst.msk [vmem:[%s148 + $0x1c4] sm:$0xf] %vm6348, %v6205
      %6463 = vst.msk [vmem:[%s148 + $0x1c8] sm:$0xf] %vm6348, %v6206
      %6464 = vst.msk [vmem:[%s148 + $0x1cc] sm:$0xf] %vm6348, %v6207
      %6465 = vst.msk [vmem:[%s148 + $0x1d0] sm:$0xf] %vm6348, %v6208
      %6466 = vst.msk [vmem:[%s148 + $0x1d4] sm:$0xf] %vm6348, %v6209
      %6467 = vst.msk [vmem:[%s148 + $0x1d8] sm:$0xf] %vm6348, %v6210
      %6468 = vst.msk [vmem:[%s148 + $0x1dc] sm:$0xf] %vm6348, %v6211
      %6469 = vst.msk [vmem:[%s148 + $0x1e0] sm:$0xf] %vm6348, %v6212
      %6470 = vst.msk [vmem:[%s148 + $0x1e4] sm:$0xf] %vm6348, %v6213
      %6471 = vst.msk [vmem:[%s148 + $0x1e8] sm:$0xf] %vm6348, %v6214
      %6472 = vst.msk [vmem:[%s148 + $0x1ec] sm:$0xf] %vm6348, %v6215
      %6473 = vst.msk [vmem:[%s148 + $0x1f0] sm:$0xf] %vm6348, %v6216
      %6474 = vst.msk [vmem:[%s148 + $0x1f4] sm:$0xf] %vm6348, %v6217
      %6475 = vst.msk [vmem:[%s148 + $0x1f8] sm:$0xf] %vm6348, %v6218
      %6476 = vst.msk [vmem:[%s148 + $0x1fc] sm:$0xf] %vm6348, %v6219
      %s6477 = smul.u32 128, %s13
      %p6478 = scmp.lt.s32.totalorder %s6477, 255
      %s6479 = scalar_select %p6478, %s6477, 255
      %s6480 = smul.addr %s6479, 4
      %s6481 = scalar_lea.vmem %s2, %s6480
      // Predicated region
      $region29: #{cost_reg_forward.11} parent=27 // pred_check
        %p6482 = pneg %p78
      $region30: #{cost_reg_forward.11} parent=27 // pred_check_branch
        %6484 = sbr.rel (%p6482) target = $region32
      $region31: #{cost_reg_forward.11} parent=27 // pred_region
        %s6485 = smul.u32 128, %s13
      $region32: #{cost_reg_forward.11} parent=27 // pred_fallthru
        _
    $region28: #{cost_reg_forward.11} parent=5 // pred_fallthru
      _
    %p6486 = scmp.le.s32.totalorder 2, %s8
    // Predicated region
    $region33: #{cost_reg_forward.11} parent=5 // pred_check
      %p6487 = pneg %p6486
    $region34: #{cost_reg_forward.11} parent=5 // pred_check_branch
      %6489 = sbr.rel (%p6487) target = $region36
    $region35: #{cost_reg_forward.11} parent=5 // pred_region
      %s6490 = ssub.s32 %s8, 2
      // Predicated region
      $region37: #{cost_reg_forward.11} parent=35 // pred_check
        %p6491 = pneg %p84
      $region38: #{cost_reg_forward.11} parent=35 // pred_check_branch
        %6493 = sbr.rel (%p6491) target = $region40
      $region39: #{cost_reg_forward.11} parent=35 // pred_region
        %s6494 = smul.u32 128, %s14
        %p6495 = scmp.lt.s32.totalorder %s6494, 255
        %s6496 = scalar_select %p6495, %s6494, 255
        %s6497 = smul.addr %s6496, 4
        %s6498 = scalar_lea.vmem %s2, %s6497
      $region40: #{cost_reg_forward.11} parent=35 // pred_fallthru
        _
    $region36: #{cost_reg_forward.11} parent=5 // pred_fallthru
      _
  $region6: #{cost_reg_forward.11} parent=0 // loop_footer
    %s12 = sadd.s32 1, %s8
  $region7: #{cost_reg_forward.11} parent=0 // loop_footer_branch
    %7 = sbr.rel target = $region3
  $region8: #{cost_reg_forward.11} parent=0 // loop_exit
    _

// kernel: cost_reg_forward.12
$region0: #{cost_reg_forward.12}
  #allocation0 [shape = 'u32[]', space=smem, size = 0x4, offset = 0x4, fixed_abs, tag = 'smem constant byte address 0x4 - core index']
  #allocation1 [shape = 'u32[144,128]{1,0:T(1,128)}', space=vmem, size = 0x12000, scoped, tag = 'internal scratch']
  %s0 = inlined_call_operand.vmem [shape: bf16[256,216], index: 0, kind: input, shape index: {}]
  %s1 = inlined_call_operand.vmem [shape: bf16[216,16], index: 1, kind: input, shape index: {}]
  %s2 = inlined_call_operand.vmem [shape: bf16[256,16], index: 2, kind: output, shape index: {}]
  %s3 = sld [smem:[#allocation0]]
  $region18: #{cost_reg_forward.12} parent=0
    _
  %s5 = ssub.s32 1, %s3
  %s6 = scalar_select 0, %s5, %s3
  // Predicated region
  $region2: #{cost_reg_forward.12} parent=0 // pred_check
    _
  $region3: #{cost_reg_forward.12} parent=0 // pred_check_branch
    %8 = sbr.rel (0) target = $region5
  $region4: #{cost_reg_forward.12} parent=0 // pred_region
    _
  $region5: #{cost_reg_forward.12} parent=0 // pred_fallthru
    _
  // Predicated region
  $region6: #{cost_reg_forward.12} parent=0 // pred_check
    _
  $region7: #{cost_reg_forward.12} parent=0 // pred_check_branch
    %10 = sbr.rel (0) target = $region9
  $region8: #{cost_reg_forward.12} parent=0 // pred_region
    _
  $region9: #{cost_reg_forward.12} parent=0 // pred_fallthru
    _
  %v12 = vld [vmem:[%s0] sm:$0xff]
  %v13 = vld [vmem:[%s0 + $0x8] sm:$0xff]
  %v14 = vld [vmem:[%s0 + $0x10] sm:$0xff]
  %v15 = vld [vmem:[%s0 + $0x18] sm:$0xff]
  %v16 = vld [vmem:[%s0 + $0x20] sm:$0xff]
  %v17 = vld [vmem:[%s0 + $0x28] sm:$0xff]
  %v18 = vld [vmem:[%s0 + $0x30] sm:$0xff]
  %v19 = vld [vmem:[%s0 + $0x38] sm:$0xff]
  %v20 = vld [vmem:[%s0 + $0x40] sm:$0xff]
  %v21 = vld [vmem:[%s0 + $0x48] sm:$0xff]
  %v22 = vld [vmem:[%s0 + $0x50] sm:$0xff]
  %v23 = vld [vmem:[%s0 + $0x58] sm:$0xff]
  %v24 = vld [vmem:[%s0 + $0x60] sm:$0xff]
  %v25 = vld [vmem:[%s0 + $0x68] sm:$0xff]
  %v26 = vld [vmem:[%s0 + $0x70] sm:$0xff]
  %v27 = vld [vmem:[%s0 + $0x78] sm:$0xff]
  %v28 = vld [vmem:[%s0 + $0x80] sm:$0xff]
  %v29 = vld [vmem:[%s0 + $0x88] sm:$0xff]
  %v30 = vld [vmem:[%s0 + $0x90] sm:$0xff]
  %v31 = vld [vmem:[%s0 + $0x98] sm:$0xff]
  %v32 = vld [vmem:[%s0 + $0xa0] sm:$0xff]
  %v33 = vld [vmem:[%s0 + $0xa8] sm:$0xff]
  %v34 = vld [vmem:[%s0 + $0xb0] sm:$0xff]
  %v35 = vld [vmem:[%s0 + $0xb8] sm:$0xff]
  %v36 = vld [vmem:[%s0 + $0xc0] sm:$0xff]
  %v37 = vld [vmem:[%s0 + $0xc8] sm:$0xff]
  %v38 = vld [vmem:[%s0 + $0xd0] sm:$0xff]
  %v39 = vld [vmem:[%s0 + $0xd8] sm:$0xff]
  %v40 = vld [vmem:[%s0 + $0xe0] sm:$0xff]
  %v41 = vld [vmem:[%s0 + $0xe8] sm:$0xff]
  %v42 = vld [vmem:[%s0 + $0xf0] sm:$0xff]
  %v43 = vld [vmem:[%s0 + $0xf8] sm:$0xff]
  %v44 = vld [vmem:[%s1] sm:$0xf]
  %v45 = vld [vmem:[%s1 + $0x4] sm:$0xf]
  %v46 = vld [vmem:[%s1 + $0x8] sm:$0xf]
  %v47 = vld [vmem:[%s1 + $0xc] sm:$0xf]
  %v48 = vld [vmem:[%s1 + $0x10] sm:$0xf]
  %v49 = vld [vmem:[%s1 + $0x14] sm:$0xf]
  %v50 = vld [vmem:[%s1 + $0x18] sm:$0xf]
  %v51 = vld [vmem:[%s1 + $0x1c] sm:$0xf]
  %v52 = vld [vmem:[%s1 + $0x20] sm:$0xf]
  %v53 = vld [vmem:[%s1 + $0x24] sm:$0xf]
  %v54 = vld [vmem:[%s1 + $0x28] sm:$0xf]
  %v55 = vld [vmem:[%s1 + $0x2c] sm:$0xf]
  %v56 = vld [vmem:[%s1 + $0x30] sm:$0xf]
  %v57 = vld [vmem:[%s1 + $0x34] sm:$0xf]
  %v58 = vld [vmem:[%s1 + $0x38] sm:$0xf]
  %v59 = vld [vmem:[%s1 + $0x3c] sm:$0xf]
  %v60 = vld [vmem:[%s1 + $0x40] sm:$0xf]
  %v61 = vld [vmem:[%s1 + $0x44] sm:$0xf]
  %v62 = vld [vmem:[%s1 + $0x48] sm:$0xf]
  %v63 = vld [vmem:[%s1 + $0x4c] sm:$0xf]
  %v64 = vld [vmem:[%s1 + $0x50] sm:$0xf]
  %v65 = vld [vmem:[%s1 + $0x54] sm:$0xf]
  %v66 = vld [vmem:[%s1 + $0x58] sm:$0xf]
  %v67 = vld [vmem:[%s1 + $0x5c] sm:$0xf]
  %v68 = vld [vmem:[%s1 + $0x60] sm:$0xf]
  %v69 = vld [vmem:[%s1 + $0x64] sm:$0xf]
  %v70 = vld [vmem:[%s1 + $0x68] sm:$0xf]
  %v103 = vunpack.c.l.b16 %v12
  %v104 = vunpack.c.h.b16 %v12
  %v105 = vunpack.c.l.b16 %v13
  %v106 = vunpack.c.h.b16 %v13
  %v107 = vunpack.c.l.b16 %v14
  %v108 = vunpack.c.h.b16 %v14
  %v109 = vunpack.c.l.b16 %v15
  %v110 = vunpack.c.h.b16 %v15
  %v111 = vunpack.c.l.b16 %v16
  %v112 = vunpack.c.h.b16 %v16
  %v113 = vunpack.c.l.b16 %v17
  %v114 = vunpack.c.h.b16 %v17
  %v115 = vunpack.c.l.b16 %v18
  %v116 = vunpack.c.h.b16 %v18
  %v117 = vunpack.c.l.b16 %v19
  %v118 = vunpack.c.h.b16 %v19
  %v119 = vunpack.c.l.b16 %v20
  %v120 = vunpack.c.h.b16 %v20
  %v121 = vunpack.c.l.b16 %v21
  %v122 = vunpack.c.h.b16 %v21
  %v123 = vunpack.c.l.b16 %v22
  %v124 = vunpack.c.h.b16 %v22
  %v125 = vunpack.c.l.b16 %v23
  %v126 = vunpack.c.h.b16 %v23
  %v127 = vunpack.c.l.b16 %v24
  %v128 = vunpack.c.h.b16 %v24
  %v129 = vunpack.c.l.b16 %v25
  %v130 = vunpack.c.h.b16 %v25
  %v131 = vunpack.c.l.b16 %v26
  %v132 = vunpack.c.h.b16 %v26
  %v133 = vunpack.c.l.b16 %v27
  %v134 = vunpack.c.h.b16 %v27
  %v135 = vunpack.c.l.b16 %v28
  %v136 = vunpack.c.h.b16 %v28
  %v137 = vunpack.c.l.b16 %v29
  %v138 = vunpack.c.h.b16 %v29
  %v139 = vunpack.c.l.b16 %v30
  %v140 = vunpack.c.h.b16 %v30
  %v141 = vunpack.c.l.b16 %v31
  %v142 = vunpack.c.h.b16 %v31
  %v143 = vunpack.c.l.b16 %v32
  %v144 = vunpack.c.h.b16 %v32
  %v145 = vunpack.c.l.b16 %v33
  %v146 = vunpack.c.h.b16 %v33
  %v147 = vunpack.c.l.b16 %v34
  %v148 = vunpack.c.h.b16 %v34
  %v149 = vunpack.c.l.b16 %v35
  %v150 = vunpack.c.h.b16 %v35
  %v151 = vunpack.c.l.b16 %v36
  %v152 = vunpack.c.h.b16 %v36
  %v153 = vunpack.c.l.b16 %v37
  %v154 = vunpack.c.h.b16 %v37
  %v155 = vunpack.c.l.b16 %v38
  %v156 = vunpack.c.h.b16 %v38
  %v157 = vunpack.c.l.b16 %v39
  %v158 = vunpack.c.h.b16 %v39
  %v159 = vunpack.c.l.b16 %v40
  %v160 = vunpack.c.h.b16 %v40
  %v161 = vunpack.c.l.b16 %v41
  %v162 = vunpack.c.h.b16 %v41
  %v163 = vunpack.c.l.b16 %v42
  %v164 = vunpack.c.h.b16 %v42
  %v165 = vunpack.c.l.b16 %v43
  %v166 = vunpack.c.h.b16 %v43
  %v167 = vpack.c.b16 %v105, %v103
  %v168 = vpack.c.b16 %v106, %v104
  %v169 = vpack.c.b16 %v109, %v107
  %v170 = vpack.c.b16 %v110, %v108
  %v171 = vpack.c.b16 %v113, %v111
  %v172 = vpack.c.b16 %v114, %v112
  %v173 = vpack.c.b16 %v117, %v115
  %v174 = vpack.c.b16 %v118, %v116
  %v175 = vpack.c.b16 %v121, %v119
  %v176 = vpack.c.b16 %v122, %v120
  %v177 = vpack.c.b16 %v125, %v123
  %v178 = vpack.c.b16 %v126, %v124
  %v179 = vpack.c.b16 %v129, %v127
  %v180 = vpack.c.b16 %v130, %v128
  %v181 = vpack.c.b16 %v133, %v131
  %v182 = vpack.c.b16 %v134, %v132
  %v183 = vpack.c.b16 %v137, %v135
  %v184 = vpack.c.b16 %v138, %v136
  %v185 = vpack.c.b16 %v141, %v139
  %v186 = vpack.c.b16 %v142, %v140
  %v187 = vpack.c.b16 %v145, %v143
  %v188 = vpack.c.b16 %v146, %v144
  %v189 = vpack.c.b16 %v149, %v147
  %v190 = vpack.c.b16 %v150, %v148
  %v191 = vpack.c.b16 %v153, %v151
  %v192 = vpack.c.b16 %v154, %v152
  %v193 = vpack.c.b16 %v157, %v155
  %v194 = vpack.c.b16 %v158, %v156
  %v195 = vpack.c.b16 %v161, %v159
  %v196 = vpack.c.b16 %v162, %v160
  %v197 = vpack.c.b16 %v165, %v163
  %v198 = vpack.c.b16 %v166, %v164
  %v242 = vunpack.c.l.b16 %v44
  %v243 = vunpack.c.l.b16 %v45
  %v244 = vunpack.c.l.b16 %v46
  %v245 = vunpack.c.l.b16 %v47
  %v246 = vunpack.c.l.b16 %v48
  %v247 = vunpack.c.l.b16 %v49
  %v248 = vunpack.c.l.b16 %v50
  %v249 = vunpack.c.l.b16 %v51
  %v250 = vunpack.c.l.b16 %v52
  %v251 = vunpack.c.l.b16 %v53
  %v252 = vunpack.c.l.b16 %v54
  %v253 = vunpack.c.l.b16 %v55
  %v254 = vunpack.c.l.b16 %v56
  %v255 = vunpack.c.l.b16 %v57
  %v256 = vunpack.c.l.b16 %v58
  %v257 = vunpack.c.l.b16 %v59
  %v258 = vunpack.c.l.b16 %v60
  %v259 = vunpack.c.l.b16 %v61
  %v260 = vunpack.c.l.b16 %v62
  %v261 = vunpack.c.l.b16 %v63
  %v262 = vunpack.c.l.b16 %v64
  %v263 = vunpack.c.l.b16 %v65
  %v264 = vunpack.c.l.b16 %v66
  %v265 = vunpack.c.l.b16 %v67
  %v266 = vunpack.c.l.b16 %v68
  %v267 = vunpack.c.l.b16 %v69
  %v268 = vunpack.c.l.b16 %v70
  %v269 = vpack.c.b16 %v243, %v242
  %v270 = vpack.c.b16 %v245, %v244
  %v271 = vpack.c.b16 %v247, %v246
  %v272 = vpack.c.b16 %v249, %v248
  %v273 = vpack.c.b16 %v251, %v250
  %v274 = vpack.c.b16 %v253, %v252
  %v275 = vpack.c.b16 %v255, %v254
  %v276 = vpack.c.b16 %v257, %v256
  %v277 = vpack.c.b16 %v259, %v258
  %v278 = vpack.c.b16 %v261, %v260
  %v279 = vpack.c.b16 %v263, %v262
  %v280 = vpack.c.b16 %v265, %v264
  %v281 = vpack.c.b16 %v267, %v266
  %v282 = vpack.c.b16 %v268, %v268
  %vm296 = vcmask 719872
  %v298 = vsel %vm296, %v168, 0
  %v301 = vsel %vm296, %v170, 0
  %v304 = vsel %vm296, %v172, 0
  %v307 = vsel %vm296, %v174, 0
  %v310 = vsel %vm296, %v176, 0
  %v313 = vsel %vm296, %v178, 0
  %v316 = vsel %vm296, %v180, 0
  %v319 = vsel %vm296, %v182, 0
  %v322 = vsel %vm296, %v184, 0
  %v325 = vsel %vm296, %v186, 0
  %v328 = vsel %vm296, %v188, 0
  %v331 = vsel %vm296, %v190, 0
  %v334 = vsel %vm296, %v192, 0
  %v337 = vsel %vm296, %v194, 0
  %v340 = vsel %vm296, %v196, 0
  %v343 = vsel %vm296, %v198, 0
  %vm345 = vcmask 1043456
  %v347 = vsel %vm345, %v282, 0
  %349 = vmatprep.subr.bf16.mxu0 0
  %350 = vmatpush1.bf16.msra.mxu0 %v269
  %351 = vmatprep.subr.bf16.mxu0 0
  %352 = vmatpush1.bf16.msra.mxu0 %v270
  %353 = vmatprep.subr.bf16.mxu0 0
  %354 = vmatpush1.bf16.msra.mxu0 %v271
  %355 = vmatprep.subr.bf16.mxu0 0
  %356 = vmatpush1.bf16.msra.mxu0 %v272
  %357 = vmatprep.subr.bf16.mxu0 0
  %358 = vmatpush1.bf16.msra.mxu0 %v273
  %359 = vmatprep.subr.bf16.mxu0 0
  %360 = vmatpush1.bf16.msra.mxu0 %v274
  %361 = vmatprep.subr.bf16.mxu0 0
  %362 = vmatpush1.bf16.msra.mxu0 %v275
  %363 = vmatprep.subr.bf16.mxu0 0
  %364 = vmatpush1.bf16.msra.mxu0 %v276
  %365 = vmatprep.subr.bf16.mxu0 0
  %366 = vmatpush1.bf16.msra.mxu0 %v277
  %367 = vmatprep.subr.bf16.mxu0 0
  %368 = vmatpush1.bf16.msra.mxu0 %v278
  %369 = vmatprep.subr.bf16.mxu0 0
  %370 = vmatpush1.bf16.msra.mxu0 %v279
  %371 = vmatprep.subr.bf16.mxu0 0
  %372 = vmatpush1.bf16.msra.mxu0 %v280
  %373 = vmatprep.subr.bf16.mxu0 0
  %374 = vmatpush1.bf16.msra.mxu0 %v281
  %375 = vmatprep.subr.bf16.mxu0 0
  %376 = vmatpush1.bf16.msra.mxu0 %v347
  %377 = vmatprep.subr.bf16.mxu0 0
  %378 = vmatpush1.bf16.msra.mxu0 0
  %379 = vmatprep.subr.bf16.mxu0 0
  %380 = vmatpush1.bf16.msra.mxu0 0
  %381 = vmatprep.mubr.bf16.mxu0 %v298
  %382 = vmatmul.mubr.bf16.gmra.mrb[0].mxu0 %v167
  %v383 = vpop.f32.mrb[0].mxu0
  %v384 = vadd.f32 0.0, %v383
  %v385 = vpop.f32.mrb[0].mxu0
  %v386 = vpop.f32.mrb[0].mxu0
  %v387 = vadd.f32 0.0, %v386
  %v388 = vpop.f32.mrb[0].mxu0
  %389 = vmatprep.mubr.bf16.mxu0 %v301
  %390 = vmatmul.mubr.bf16.gmra.mrb[0].mxu0 %v169
  %v391 = vpop.f32.mrb[0].mxu0
  %v392 = vadd.f32 0.0, %v391
  %v393 = vpop.f32.mrb[0].mxu0
  %v394 = vpop.f32.mrb[0].mxu0
  %v395 = vadd.f32 0.0, %v394
  %v396 = vpop.f32.mrb[0].mxu0
  %397 = vmatprep.mubr.bf16.mxu0 %v304
  %398 = vmatmul.mubr.bf16.gmra.mrb[0].mxu0 %v171
  %v399 = vpop.f32.mrb[0].mxu0
  %v400 = vadd.f32 0.0, %v399
  %v401 = vpop.f32.mrb[0].mxu0
  %v402 = vpop.f32.mrb[0].mxu0
  %v403 = vadd.f32 0.0, %v402
  %v404 = vpop.f32.mrb[0].mxu0
  %405 = vmatprep.mubr.bf16.mxu0 %v307
  %406 = vmatmul.mubr.bf16.gmra.mrb[0].mxu0 %v173
  %v407 = vpop.f32.mrb[0].mxu0
  %v408 = vadd.f32 0.0, %v407
  %v409 = vpop.f32.mrb[0].mxu0
  %v410 = vpop.f32.mrb[0].mxu0
  %v411 = vadd.f32 0.0, %v410
  %v412 = vpop.f32.mrb[0].mxu0
  %413 = vmatprep.mubr.bf16.mxu0 %v310
  %414 = vmatmul.mubr.bf16.gmra.mrb[0].mxu0 %v175
  %v415 = vpop.f32.mrb[0].mxu0
  %v416 = vadd.f32 0.0, %v415
  %v417 = vpop.f32.mrb[0].mxu0
  %v418 = vpop.f32.mrb[0].mxu0
  %v419 = vadd.f32 0.0, %v418
  %v420 = vpop.f32.mrb[0].mxu0
  %421 = vmatprep.mubr.bf16.mxu0 %v313
  %422 = vmatmul.mubr.bf16.gmra.mrb[0].mxu0 %v177
  %v423 = vpop.f32.mrb[0].mxu0
  %v424 = vadd.f32 0.0, %v423
  %v425 = vpop.f32.mrb[0].mxu0
  %v426 = vpop.f32.mrb[0].mxu0
  %v427 = vadd.f32 0.0, %v426
  %v428 = vpop.f32.mrb[0].mxu0
  %429 = vmatprep.mubr.bf16.mxu0 %v316
  %430 = vmatmul.mubr.bf16.gmra.mrb[0].mxu0 %v179
  %v431 = vpop.f32.mrb[0].mxu0
  %v432 = vadd.f32 0.0, %v431
  %v433 = vpop.f32.mrb[0].mxu0
  %v434 = vpop.f32.mrb[0].mxu0
  %v435 = vadd.f32 0.0, %v434
  %v436 = vpop.f32.mrb[0].mxu0
  %437 = vmatprep.mubr.bf16.mxu0 %v319
  %438 = vmatmul.mubr.bf16.gmra.mrb[0].mxu0 %v181
  %v439 = vpop.f32.mrb[0].mxu0
  %v440 = vadd.f32 0.0, %v439
  %v441 = vpop.f32.mrb[0].mxu0
  %v442 = vpop.f32.mrb[0].mxu0
  %v443 = vadd.f32 0.0, %v442
  %v444 = vpop.f32.mrb[0].mxu0
  %445 = vmatprep.mubr.bf16.mxu0 %v322
  %446 = vmatmul.mubr.bf16.gmra.mrb[0].mxu0 %v183
  %v447 = vpop.f32.mrb[0].mxu0
  %v448 = vadd.f32 0.0, %v447
  %v449 = vpop.f32.mrb[0].mxu0
  %v450 = vpop.f32.mrb[0].mxu0
  %v451 = vadd.f32 0.0, %v450
  %v452 = vpop.f32.mrb[0].mxu0
  %453 = vmatprep.mubr.bf16.mxu0 %v325
  %454 = vmatmul.mubr.bf16.gmra.mrb[0].mxu0 %v185
  %v455 = vpop.f32.mrb[0].mxu0
  %v456 = vadd.f32 0.0, %v455
  %v457 = vpop.f32.mrb[0].mxu0
  %v458 = vpop.f32.mrb[0].mxu0
  %v459 = vadd.f32 0.0, %v458
  %v460 = vpop.f32.mrb[0].mxu0
  %461 = vmatprep.mubr.bf16.mxu0 %v328
  %462 = vmatmul.mubr.bf16.gmra.mrb[0].mxu0 %v187
  %v463 = vpop.f32.mrb[0].mxu0
  %v464 = vadd.f32 0.0, %v463
  %v465 = vpop.f32.mrb[0].mxu0
  %v466 = vpop.f32.mrb[0].mxu0
  %v467 = vadd.f32 0.0, %v466
  %v468 = vpop.f32.mrb[0].mxu0
  %469 = vmatprep.mubr.bf16.mxu0 %v331
  %470 = vmatmul.mubr.bf16.gmra.mrb[0].mxu0 %v189
  %v471 = vpop.f32.mrb[0].mxu0
  %v472 = vadd.f32 0.0, %v471
  %v473 = vpop.f32.mrb[0].mxu0
  %v474 = vpop.f32.mrb[0].mxu0
  %v475 = vadd.f32 0.0, %v474
  %v476 = vpop.f32.mrb[0].mxu0
  %477 = vmatprep.mubr.bf16.mxu0 %v334
  %478 = vmatmul.mubr.bf16.gmra.mrb[0].mxu0 %v191
  %v479 = vpop.f32.mrb[0].mxu0
  %v480 = vadd.f32 0.0, %v479
  %v481 = vpop.f32.mrb[0].mxu0
  %v482 = vpop.f32.mrb[0].mxu0
  %v483 = vadd.f32 0.0, %v482
  %v484 = vpop.f32.mrb[0].mxu0
  %485 = vmatprep.mubr.bf16.mxu0 %v337
  %486 = vmatmul.mubr.bf16.gmra.mrb[0].mxu0 %v193
  %v487 = vpop.f32.mrb[0].mxu0
  %v488 = vadd.f32 0.0, %v487
  %v489 = vpop.f32.mrb[0].mxu0
  %v490 = vpop.f32.mrb[0].mxu0
  %v491 = vadd.f32 0.0, %v490
  %v492 = vpop.f32.mrb[0].mxu0
  %493 = vmatprep.mubr.bf16.mxu0 %v340
  %494 = vmatmul.mubr.bf16.gmra.mrb[0].mxu0 %v195
  %v495 = vpop.f32.mrb[0].mxu0
  %v496 = vadd.f32 0.0, %v495
  %v497 = vpop.f32.mrb[0].mxu0
  %v498 = vpop.f32.mrb[0].mxu0
  %v499 = vadd.f32 0.0, %v498
  %v500 = vpop.f32.mrb[0].mxu0
  %501 = vmatprep.mubr.bf16.mxu0 %v343
  %502 = vmatmul.mubr.bf16.gmra.mrb[0].mxu0 %v197
  %v503 = vpop.f32.mrb[0].mxu0
  %v504 = vadd.f32 0.0, %v503
  %v505 = vpop.f32.mrb[0].mxu0
  %v506 = vpop.f32.mrb[0].mxu0
  %v507 = vadd.f32 0.0, %v506
  %v508 = vpop.f32.mrb[0].mxu0
  %509 = vdwg.mxu0
  %v510 = vmax.f32 %v384, 0.0
  %v511 = vmax.f32 %v387, 0.0
  %v512 = vmax.f32 %v392, 0.0
  %v513 = vmax.f32 %v395, 0.0
  %v514 = vmax.f32 %v400, 0.0
  %v515 = vmax.f32 %v403, 0.0
  %v516 = vmax.f32 %v408, 0.0
  %v517 = vmax.f32 %v411, 0.0
  %v518 = vmax.f32 %v416, 0.0
  %v519 = vmax.f32 %v419, 0.0
  %v520 = vmax.f32 %v424, 0.0
  %v521 = vmax.f32 %v427, 0.0
  %v522 = vmax.f32 %v432, 0.0
  %v523 = vmax.f32 %v435, 0.0
  %v524 = vmax.f32 %v440, 0.0
  %v525 = vmax.f32 %v443, 0.0
  %v526 = vmax.f32 %v448, 0.0
  %v527 = vmax.f32 %v451, 0.0
  %v528 = vmax.f32 %v456, 0.0
  %v529 = vmax.f32 %v459, 0.0
  %v530 = vmax.f32 %v464, 0.0
  %v531 = vmax.f32 %v467, 0.0
  %v532 = vmax.f32 %v472, 0.0
  %v533 = vmax.f32 %v475, 0.0
  %v534 = vmax.f32 %v480, 0.0
  %v535 = vmax.f32 %v483, 0.0
  %v536 = vmax.f32 %v488, 0.0
  %v537 = vmax.f32 %v491, 0.0
  %v538 = vmax.f32 %v496, 0.0
  %v539 = vmax.f32 %v499, 0.0
  %v540 = vmax.f32 %v504, 0.0
  %v541 = vmax.f32 %v507, 0.0
  %v542 = vpack.c.bf16 %v511, %v510
  %v543 = vpack.c.bf16 %v513, %v512
  %v544 = vpack.c.bf16 %v515, %v514
  %v545 = vpack.c.bf16 %v517, %v516
  %v546 = vpack.c.bf16 %v519, %v518
  %v547 = vpack.c.bf16 %v521, %v520
  %v548 = vpack.c.bf16 %v523, %v522
  %v549 = vpack.c.bf16 %v525, %v524
  %v550 = vpack.c.bf16 %v527, %v526
  %v551 = vpack.c.bf16 %v529, %v528
  %v552 = vpack.c.bf16 %v531, %v530
  %v553 = vpack.c.bf16 %v533, %v532
  %v554 = vpack.c.bf16 %v535, %v534
  %v555 = vpack.c.bf16 %v537, %v536
  %v556 = vpack.c.bf16 %v539, %v538
  %v557 = vpack.c.bf16 %v541, %v540
  %v574 = vunpack.c.l.b16 %v542
  %v575 = vunpack.c.h.b16 %v542
  %v576 = vunpack.c.l.b16 %v543
  %v577 = vunpack.c.h.b16 %v543
  %v578 = vunpack.c.l.b16 %v544
  %v579 = vunpack.c.h.b16 %v544
  %v580 = vunpack.c.l.b16 %v545
  %v581 = vunpack.c.h.b16 %v545
  %v582 = vunpack.c.l.b16 %v546
  %v583 = vunpack.c.h.b16 %v546
  %v584 = vunpack.c.l.b16 %v547
  %v585 = vunpack.c.h.b16 %v547
  %v586 = vunpack.c.l.b16 %v548
  %v587 = vunpack.c.h.b16 %v548
  %v588 = vunpack.c.l.b16 %v549
  %v589 = vunpack.c.h.b16 %v549
  %v590 = vunpack.c.l.b16 %v550
  %v591 = vunpack.c.h.b16 %v550
  %v592 = vunpack.c.l.b16 %v551
  %v593 = vunpack.c.h.b16 %v551
  %v594 = vunpack.c.l.b16 %v552
  %v595 = vunpack.c.h.b16 %v552
  %v596 = vunpack.c.l.b16 %v553
  %v597 = vunpack.c.h.b16 %v553
  %v598 = vunpack.c.l.b16 %v554
  %v599 = vunpack.c.h.b16 %v554
  %v600 = vunpack.c.l.b16 %v555
  %v601 = vunpack.c.h.b16 %v555
  %v602 = vunpack.c.l.b16 %v556
  %v603 = vunpack.c.h.b16 %v556
  %v604 = vunpack.c.l.b16 %v557
  %v605 = vunpack.c.h.b16 %v557
  %v606 = vpack.c.b16 %v574, %v574
  %v607 = vpack.c.b16 %v575, %v575
  %v608 = vpack.c.b16 %v576, %v576
  %v609 = vpack.c.b16 %v577, %v577
  %v610 = vpack.c.b16 %v578, %v578
  %v611 = vpack.c.b16 %v579, %v579
  %v612 = vpack.c.b16 %v580, %v580
  %v613 = vpack.c.b16 %v581, %v581
  %v614 = vpack.c.b16 %v582, %v582
  %v615 = vpack.c.b16 %v583, %v583
  %v616 = vpack.c.b16 %v584, %v584
  %v617 = vpack.c.b16 %v585, %v585
  %v618 = vpack.c.b16 %v586, %v586
  %v619 = vpack.c.b16 %v587, %v587
  %v620 = vpack.c.b16 %v588, %v588
  %v621 = vpack.c.b16 %v589, %v589
  %v622 = vpack.c.b16 %v590, %v590
  %v623 = vpack.c.b16 %v591, %v591
  %v624 = vpack.c.b16 %v592, %v592
  %v625 = vpack.c.b16 %v593, %v593
  %v626 = vpack.c.b16 %v594, %v594
  %v627 = vpack.c.b16 %v595, %v595
  %v628 = vpack.c.b16 %v596, %v596
  %v629 = vpack.c.b16 %v597, %v597
  %v630 = vpack.c.b16 %v598, %v598
  %v631 = vpack.c.b16 %v599, %v599
  %v632 = vpack.c.b16 %v600, %v600
  %v633 = vpack.c.b16 %v601, %v601
  %v634 = vpack.c.b16 %v602, %v602
  %v635 = vpack.c.b16 %v603, %v603
  %v636 = vpack.c.b16 %v604, %v604
  %v637 = vpack.c.b16 %v605, %v605
  %vm670 = vcmask 125952
  %671 = vst.msk [vmem:[%s2] sm:$0xf] %vm670, %v606
  %672 = vst.msk [vmem:[%s2 + $0x4] sm:$0xf] %vm670, %v607
  %673 = vst.msk [vmem:[%s2 + $0x8] sm:$0xf] %vm670, %v608
  %674 = vst.msk [vmem:[%s2 + $0xc] sm:$0xf] %vm670, %v609
  %675 = vst.msk [vmem:[%s2 + $0x10] sm:$0xf] %vm670, %v610
  %676 = vst.msk [vmem:[%s2 + $0x14] sm:$0xf] %vm670, %v611
  %677 = vst.msk [vmem:[%s2 + $0x18] sm:$0xf] %vm670, %v612
  %678 = vst.msk [vmem:[%s2 + $0x1c] sm:$0xf] %vm670, %v613
  %679 = vst.msk [vmem:[%s2 + $0x20] sm:$0xf] %vm670, %v614
  %680 = vst.msk [vmem:[%s2 + $0x24] sm:$0xf] %vm670, %v615
  %681 = vst.msk [vmem:[%s2 + $0x28] sm:$0xf] %vm670, %v616
  %682 = vst.msk [vmem:[%s2 + $0x2c] sm:$0xf] %vm670, %v617
  %683 = vst.msk [vmem:[%s2 + $0x30] sm:$0xf] %vm670, %v618
  %684 = vst.msk [vmem:[%s2 + $0x34] sm:$0xf] %vm670, %v619
  %685 = vst.msk [vmem:[%s2 + $0x38] sm:$0xf] %vm670, %v620
  %686 = vst.msk [vmem:[%s2 + $0x3c] sm:$0xf] %vm670, %v621
  %687 = vst.msk [vmem:[%s2 + $0x40] sm:$0xf] %vm670, %v622
  %688 = vst.msk [vmem:[%s2 + $0x44] sm:$0xf] %vm670, %v623
  %689 = vst.msk [vmem:[%s2 + $0x48] sm:$0xf] %vm670, %v624
  %690 = vst.msk [vmem:[%s2 + $0x4c] sm:$0xf] %vm670, %v625
  %691 = vst.msk [vmem:[%s2 + $0x50] sm:$0xf] %vm670, %v626
  %692 = vst.msk [vmem:[%s2 + $0x54] sm:$0xf] %vm670, %v627
  %693 = vst.msk [vmem:[%s2 + $0x58] sm:$0xf] %vm670, %v628
  %694 = vst.msk [vmem:[%s2 + $0x5c] sm:$0xf] %vm670, %v629
  %695 = vst.msk [vmem:[%s2 + $0x60] sm:$0xf] %vm670, %v630
  %696 = vst.msk [vmem:[%s2 + $0x64] sm:$0xf] %vm670, %v631
  %697 = vst.msk [vmem:[%s2 + $0x68] sm:$0xf] %vm670, %v632
  %698 = vst.msk [vmem:[%s2 + $0x6c] sm:$0xf] %vm670, %v633
  %699 = vst.msk [vmem:[%s2 + $0x70] sm:$0xf] %vm670, %v634
  %700 = vst.msk [vmem:[%s2 + $0x74] sm:$0xf] %vm670, %v635
  %701 = vst.msk [vmem:[%s2 + $0x78] sm:$0xf] %vm670, %v636
  %702 = vst.msk [vmem:[%s2 + $0x7c] sm:$0xf] %vm670, %v637
  // Predicated region
  $region10: #{cost_reg_forward.12} parent=0 // pred_check
    _
  $region11: #{cost_reg_forward.12} parent=0 // pred_check_branch
    %704 = sbr.rel (0) target = $region13
  $region12: #{cost_reg_forward.12} parent=0 // pred_region
    _
  $region13: #{cost_reg_forward.12} parent=0 // pred_fallthru
    _
  // Predicated region
  $region14: #{cost_reg_forward.12} parent=0 // pred_check
    _
  $region15: #{cost_reg_forward.12} parent=0 // pred_check_branch
    %706 = sbr.rel (0) target = $region17
  $region16: #{cost_reg_forward.12} parent=0 // pred_region
    _
  $region17: #{cost_reg_forward.12} parent=0 // pred_fallthru
    _

// kernel: cost_reg_forward.13
$region0: #{cost_reg_forward.13}
  #allocation0 [shape = 'u32[]', space=smem, size = 0x4, offset = 0x4, fixed_abs, tag = 'smem constant byte address 0x4 - core index']
  #allocation1 [shape = 'u32[144,128]{1,0:T(1,128)}', space=vmem, size = 0x12000, scoped, tag = 'internal scratch']
  %s0 = inlined_call_operand.vmem [shape: bf16[256,432], index: 0, kind: input, shape index: {}]
  %s1 = inlined_call_operand.vmem [shape: bf16[432,16], index: 1, kind: input, shape index: {}]
  %s2 = inlined_call_operand.vmem [shape: bf16[256,16], index: 2, kind: output, shape index: {}]
  %s3 = sld [smem:[#allocation0]]
  $region18: #{cost_reg_forward.13} parent=0
    _
  %s5 = ssub.s32 1, %s3
  %s6 = scalar_select 0, %s5, %s3
  // Predicated region
  $region2: #{cost_reg_forward.13} parent=0 // pred_check
    _
  $region3: #{cost_reg_forward.13} parent=0 // pred_check_branch
    %8 = sbr.rel (0) target = $region5
  $region4: #{cost_reg_forward.13} parent=0 // pred_region
    _
  $region5: #{cost_reg_forward.13} parent=0 // pred_fallthru
    _
  // Predicated region
  $region6: #{cost_reg_forward.13} parent=0 // pred_check
    _
  $region7: #{cost_reg_forward.13} parent=0 // pred_check_branch
    %10 = sbr.rel (0) target = $region9
  $region8: #{cost_reg_forward.13} parent=0 // pred_region
    _
  $region9: #{cost_reg_forward.13} parent=0 // pred_fallthru
    _
  %v12 = vld [vmem:[%s0] sm:$0xff]
  %v13 = vld [vmem:[%s0 + $0x8] sm:$0xff]
  %v14 = vld [vmem:[%s0 + $0x10] sm:$0xff]
  %v15 = vld [vmem:[%s0 + $0x18] sm:$0xff]
  %v16 = vld [vmem:[%s0 + $0x20] sm:$0xff]
  %v17 = vld [vmem:[%s0 + $0x28] sm:$0xff]
  %v18 = vld [vmem:[%s0 + $0x30] sm:$0xff]
  %v19 = vld [vmem:[%s0 + $0x38] sm:$0xff]
  %v20 = vld [vmem:[%s0 + $0x40] sm:$0xff]
  %v21 = vld [vmem:[%s0 + $0x48] sm:$0xff]
  %v22 = vld [vmem:[%s0 + $0x50] sm:$0xff]
  %v23 = vld [vmem:[%s0 + $0x58] sm:$0xff]
  %v24 = vld [vmem:[%s0 + $0x60] sm:$0xff]
  %v25 = vld [vmem:[%s0 + $0x68] sm:$0xff]
  %v26 = vld [vmem:[%s0 + $0x70] sm:$0xff]
  %v27 = vld [vmem:[%s0 + $0x78] sm:$0xff]
  %v28 = vld [vmem:[%s0 + $0x80] sm:$0xff]
  %v29 = vld [vmem:[%s0 + $0x88] sm:$0xff]
  %v30 = vld [vmem:[%s0 + $0x90] sm:$0xff]
  %v31 = vld [vmem:[%s0 + $0x98] sm:$0xff]
  %v32 = vld [vmem:[%s0 + $0xa0] sm:$0xff]
  %v33 = vld [vmem:[%s0 + $0xa8] sm:$0xff]
  %v34 = vld [vmem:[%s0 + $0xb0] sm:$0xff]
  %v35 = vld [vmem:[%s0 + $0xb8] sm:$0xff]
  %v36 = vld [vmem:[%s0 + $0xc0] sm:$0xff]
  %v37 = vld [vmem:[%s0 + $0xc8] sm:$0xff]
  %v38 = vld [vmem:[%s0 + $0xd0] sm:$0xff]
  %v39 = vld [vmem:[%s0 + $0xd8] sm:$0xff]
  %v40 = vld [vmem:[%s0 + $0xe0] sm:$0xff]
  %v41 = vld [vmem:[%s0 + $0xe8] sm:$0xff]
  %v42 = vld [vmem:[%s0 + $0xf0] sm:$0xff]
  %v43 = vld [vmem:[%s0 + $0xf8] sm:$0xff]
  %v44 = vld [vmem:[%s0 + $0x100] sm:$0xff]
  %v45 = vld [vmem:[%s0 + $0x108] sm:$0xff]
  %v46 = vld [vmem:[%s0 + $0x110] sm:$0xff]
  %v47 = vld [vmem:[%s0 + $0x118] sm:$0xff]
  %v48 = vld [vmem:[%s0 + $0x120] sm:$0xff]
  %v49 = vld [vmem:[%s0 + $0x128] sm:$0xff]
  %v50 = vld [vmem:[%s0 + $0x130] sm:$0xff]
  %v51 = vld [vmem:[%s0 + $0x138] sm:$0xff]
  %v52 = vld [vmem:[%s0 + $0x140] sm:$0xff]
  %v53 = vld [vmem:[%s0 + $0x148] sm:$0xff]
  %v54 = vld [vmem:[%s0 + $0x150] sm:$0xff]
  %v55 = vld [vmem:[%s0 + $0x158] sm:$0xff]
  %v56 = vld [vmem:[%s0 + $0x160] sm:$0xff]
  %v57 = vld [vmem:[%s0 + $0x168] sm:$0xff]
  %v58 = vld [vmem:[%s0 + $0x170] sm:$0xff]
  %v59 = vld [vmem:[%s0 + $0x178] sm:$0xff]
  %v60 = vld [vmem:[%s0 + $0x180] sm:$0xff]
  %v61 = vld [vmem:[%s0 + $0x188] sm:$0xff]
  %v62 = vld [vmem:[%s0 + $0x190] sm:$0xff]
  %v63 = vld [vmem:[%s0 + $0x198] sm:$0xff]
  %v64 = vld [vmem:[%s0 + $0x1a0] sm:$0xff]
  %v65 = vld [vmem:[%s0 + $0x1a8] sm:$0xff]
  %v66 = vld [vmem:[%s0 + $0x1b0] sm:$0xff]
  %v67 = vld [vmem:[%s0 + $0x1b8] sm:$0xff]
  %v68 = vld [vmem:[%s0 + $0x1c0] sm:$0xff]
  %v69 = vld [vmem:[%s0 + $0x1c8] sm:$0xff]
  %v70 = vld [vmem:[%s0 + $0x1d0] sm:$0xff]
  %v71 = vld [vmem:[%s0 + $0x1d8] sm:$0xff]
  %v72 = vld [vmem:[%s0 + $0x1e0] sm:$0xff]
  %v73 = vld [vmem:[%s0 + $0x1e8] sm:$0xff]
  %v74 = vld [vmem:[%s0 + $0x1f0] sm:$0xff]
  %v75 = vld [vmem:[%s0 + $0x1f8] sm:$0xff]
  %v76 = vld [vmem:[%s1] sm:$0xf]
  %v77 = vld [vmem:[%s1 + $0x4] sm:$0xf]
  %v78 = vld [vmem:[%s1 + $0x8] sm:$0xf]
  %v79 = vld [vmem:[%s1 + $0xc] sm:$0xf]
  %v80 = vld [vmem:[%s1 + $0x10] sm:$0xf]
  %v81 = vld [vmem:[%s1 + $0x14] sm:$0xf]
  %v82 = vld [vmem:[%s1 + $0x18] sm:$0xf]
  %v83 = vld [vmem:[%s1 + $0x1c] sm:$0xf]
  %v84 = vld [vmem:[%s1 + $0x20] sm:$0xf]
  %v85 = vld [vmem:[%s1 + $0x24] sm:$0xf]
  %v86 = vld [vmem:[%s1 + $0x28] sm:$0xf]
  %v87 = vld [vmem:[%s1 + $0x2c] sm:$0xf]
  %v88 = vld [vmem:[%s1 + $0x30] sm:$0xf]
  %v89 = vld [vmem:[%s1 + $0x34] sm:$0xf]
  %v90 = vld [vmem:[%s1 + $0x38] sm:$0xf]
  %v91 = vld [vmem:[%s1 + $0x3c] sm:$0xf]
  %v92 = vld [vmem:[%s1 + $0x40] sm:$0xf]
  %v93 = vld [vmem:[%s1 + $0x44] sm:$0xf]
  %v94 = vld [vmem:[%s1 + $0x48] sm:$0xf]
  %v95 = vld [vmem:[%s1 + $0x4c] sm:$0xf]
  %v96 = vld [vmem:[%s1 + $0x50] sm:$0xf]
  %v97 = vld [vmem:[%s1 + $0x54] sm:$0xf]
  %v98 = vld [vmem:[%s1 + $0x58] sm:$0xf]
  %v99 = vld [vmem:[%s1 + $0x5c] sm:$0xf]
  %v100 = vld [vmem:[%s1 + $0x60] sm:$0xf]
  %v101 = vld [vmem:[%s1 + $0x64] sm:$0xf]
  %v102 = vld [vmem:[%s1 + $0x68] sm:$0xf]
  %v103 = vld [vmem:[%s1 + $0x6c] sm:$0xf]
  %v104 = vld [vmem:[%s1 + $0x70] sm:$0xf]
  %v105 = vld [vmem:[%s1 + $0x74] sm:$0xf]
  %v106 = vld [vmem:[%s1 + $0x78] sm:$0xf]
  %v107 = vld [vmem:[%s1 + $0x7c] sm:$0xf]
  %v108 = vld [vmem:[%s1 + $0x80] sm:$0xf]
  %v109 = vld [vmem:[%s1 + $0x84] sm:$0xf]
  %v110 = vld [vmem:[%s1 + $0x88] sm:$0xf]
  %v111 = vld [vmem:[%s1 + $0x8c] sm:$0xf]
  %v112 = vld [vmem:[%s1 + $0x90] sm:$0xf]
  %v113 = vld [vmem:[%s1 + $0x94] sm:$0xf]
  %v114 = vld [vmem:[%s1 + $0x98] sm:$0xf]
  %v115 = vld [vmem:[%s1 + $0x9c] sm:$0xf]
  %v116 = vld [vmem:[%s1 + $0xa0] sm:$0xf]
  %v117 = vld [vmem:[%s1 + $0xa4] sm:$0xf]
  %v118 = vld [vmem:[%s1 + $0xa8] sm:$0xf]
  %v119 = vld [vmem:[%s1 + $0xac] sm:$0xf]
  %v120 = vld [vmem:[%s1 + $0xb0] sm:$0xf]
  %v121 = vld [vmem:[%s1 + $0xb4] sm:$0xf]
  %v122 = vld [vmem:[%s1 + $0xb8] sm:$0xf]
  %v123 = vld [vmem:[%s1 + $0xbc] sm:$0xf]
  %v124 = vld [vmem:[%s1 + $0xc0] sm:$0xf]
  %v125 = vld [vmem:[%s1 + $0xc4] sm:$0xf]
  %v126 = vld [vmem:[%s1 + $0xc8] sm:$0xf]
  %v127 = vld [vmem:[%s1 + $0xcc] sm:$0xf]
  %v128 = vld [vmem:[%s1 + $0xd0] sm:$0xf]
  %v129 = vld [vmem:[%s1 + $0xd4] sm:$0xf]
  %v194 = vunpack.c.l.b16 %v12
  %v195 = vunpack.c.h.b16 %v12
  %v196 = vunpack.c.l.b16 %v13
  %v197 = vunpack.c.h.b16 %v13
  %v198 = vunpack.c.l.b16 %v14
  %v199 = vunpack.c.h.b16 %v14
  %v200 = vunpack.c.l.b16 %v15
  %v201 = vunpack.c.h.b16 %v15
  %v202 = vunpack.c.l.b16 %v16
  %v203 = vunpack.c.h.b16 %v16
  %v204 = vunpack.c.l.b16 %v17
  %v205 = vunpack.c.h.b16 %v17
  %v206 = vunpack.c.l.b16 %v18
  %v207 = vunpack.c.h.b16 %v18
  %v208 = vunpack.c.l.b16 %v19
  %v209 = vunpack.c.h.b16 %v19
  %v210 = vunpack.c.l.b16 %v20
  %v211 = vunpack.c.h.b16 %v20
  %v212 = vunpack.c.l.b16 %v21
  %v213 = vunpack.c.h.b16 %v21
  %v214 = vunpack.c.l.b16 %v22
  %v215 = vunpack.c.h.b16 %v22
  %v216 = vunpack.c.l.b16 %v23
  %v217 = vunpack.c.h.b16 %v23
  %v218 = vunpack.c.l.b16 %v24
  %v219 = vunpack.c.h.b16 %v24
  %v220 = vunpack.c.l.b16 %v25
  %v221 = vunpack.c.h.b16 %v25
  %v222 = vunpack.c.l.b16 %v26
  %v223 = vunpack.c.h.b16 %v26
  %v224 = vunpack.c.l.b16 %v27
  %v225 = vunpack.c.h.b16 %v27
  %v226 = vunpack.c.l.b16 %v28
  %v227 = vunpack.c.h.b16 %v28
  %v228 = vunpack.c.l.b16 %v29
  %v229 = vunpack.c.h.b16 %v29
  %v230 = vunpack.c.l.b16 %v30
  %v231 = vunpack.c.h.b16 %v30
  %v232 = vunpack.c.l.b16 %v31
  %v233 = vunpack.c.h.b16 %v31
  %v234 = vunpack.c.l.b16 %v32
  %v235 = vunpack.c.h.b16 %v32
  %v236 = vunpack.c.l.b16 %v33
  %v237 = vunpack.c.h.b16 %v33
  %v238 = vunpack.c.l.b16 %v34
  %v239 = vunpack.c.h.b16 %v34
  %v240 = vunpack.c.l.b16 %v35
  %v241 = vunpack.c.h.b16 %v35
  %v242 = vunpack.c.l.b16 %v36
  %v243 = vunpack.c.h.b16 %v36
  %v244 = vunpack.c.l.b16 %v37
  %v245 = vunpack.c.h.b16 %v37
  %v246 = vunpack.c.l.b16 %v38
  %v247 = vunpack.c.h.b16 %v38
  %v248 = vunpack.c.l.b16 %v39
  %v249 = vunpack.c.h.b16 %v39
  %v250 = vunpack.c.l.b16 %v40
  %v251 = vunpack.c.h.b16 %v40
  %v252 = vunpack.c.l.b16 %v41
  %v253 = vunpack.c.h.b16 %v41
  %v254 = vunpack.c.l.b16 %v42
  %v255 = vunpack.c.h.b16 %v42
  %v256 = vunpack.c.l.b16 %v43
  %v257 = vunpack.c.h.b16 %v43
  %v258 = vunpack.c.l.b16 %v44
  %v259 = vunpack.c.h.b16 %v44
  %v260 = vunpack.c.l.b16 %v45
  %v261 = vunpack.c.h.b16 %v45
  %v262 = vunpack.c.l.b16 %v46
  %v263 = vunpack.c.h.b16 %v46
  %v264 = vunpack.c.l.b16 %v47
  %v265 = vunpack.c.h.b16 %v47
  %v266 = vunpack.c.l.b16 %v48
  %v267 = vunpack.c.h.b16 %v48
  %v268 = vunpack.c.l.b16 %v49
  %v269 = vunpack.c.h.b16 %v49
  %v270 = vunpack.c.l.b16 %v50
  %v271 = vunpack.c.h.b16 %v50
  %v272 = vunpack.c.l.b16 %v51
  %v273 = vunpack.c.h.b16 %v51
  %v274 = vunpack.c.l.b16 %v52
  %v275 = vunpack.c.h.b16 %v52
  %v276 = vunpack.c.l.b16 %v53
  %v277 = vunpack.c.h.b16 %v53
  %v278 = vunpack.c.l.b16 %v54
  %v279 = vunpack.c.h.b16 %v54
  %v280 = vunpack.c.l.b16 %v55
  %v281 = vunpack.c.h.b16 %v55
  %v282 = vunpack.c.l.b16 %v56
  %v283 = vunpack.c.h.b16 %v56
  %v284 = vunpack.c.l.b16 %v57
  %v285 = vunpack.c.h.b16 %v57
  %v286 = vunpack.c.l.b16 %v58
  %v287 = vunpack.c.h.b16 %v58
  %v288 = vunpack.c.l.b16 %v59
  %v289 = vunpack.c.h.b16 %v59
  %v290 = vunpack.c.l.b16 %v60
  %v291 = vunpack.c.h.b16 %v60
  %v292 = vunpack.c.l.b16 %v61
  %v293 = vunpack.c.h.b16 %v61
  %v294 = vunpack.c.l.b16 %v62
  %v295 = vunpack.c.h.b16 %v62
  %v296 = vunpack.c.l.b16 %v63
  %v297 = vunpack.c.h.b16 %v63
  %v298 = vunpack.c.l.b16 %v64
  %v299 = vunpack.c.h.b16 %v64
  %v300 = vunpack.c.l.b16 %v65
  %v301 = vunpack.c.h.b16 %v65
  %v302 = vunpack.c.l.b16 %v66
  %v303 = vunpack.c.h.b16 %v66
  %v304 = vunpack.c.l.b16 %v67
  %v305 = vunpack.c.h.b16 %v67
  %v306 = vunpack.c.l.b16 %v68
  %v307 = vunpack.c.h.b16 %v68
  %v308 = vunpack.c.l.b16 %v69
  %v309 = vunpack.c.h.b16 %v69
  %v310 = vunpack.c.l.b16 %v70
  %v311 = vunpack.c.h.b16 %v70
  %v312 = vunpack.c.l.b16 %v71
  %v313 = vunpack.c.h.b16 %v71
  %v314 = vunpack.c.l.b16 %v72
  %v315 = vunpack.c.h.b16 %v72
  %v316 = vunpack.c.l.b16 %v73
  %v317 = vunpack.c.h.b16 %v73
  %v318 = vunpack.c.l.b16 %v74
  %v319 = vunpack.c.h.b16 %v74
  %v320 = vunpack.c.l.b16 %v75
  %v321 = vunpack.c.h.b16 %v75
  %v322 = vpack.c.b16 %v198, %v194
  %v323 = vpack.c.b16 %v199, %v195
  %v324 = vpack.c.b16 %v200, %v196
  %v325 = vpack.c.b16 %v201, %v197
  %v326 = vpack.c.b16 %v206, %v202
  %v327 = vpack.c.b16 %v207, %v203
  %v328 = vpack.c.b16 %v208, %v204
  %v329 = vpack.c.b16 %v209, %v205
  %v330 = vpack.c.b16 %v214, %v210
  %v331 = vpack.c.b16 %v215, %v211
  %v332 = vpack.c.b16 %v216, %v212
  %v333 = vpack.c.b16 %v217, %v213
  %v334 = vpack.c.b16 %v222, %v218
  %v335 = vpack.c.b16 %v223, %v219
  %v336 = vpack.c.b16 %v224, %v220
  %v337 = vpack.c.b16 %v225, %v221
  %v338 = vpack.c.b16 %v230, %v226
  %v339 = vpack.c.b16 %v231, %v227
  %v340 = vpack.c.b16 %v232, %v228
  %v341 = vpack.c.b16 %v233, %v229
  %v342 = vpack.c.b16 %v238, %v234
  %v343 = vpack.c.b16 %v239, %v235
  %v344 = vpack.c.b16 %v240, %v236
  %v345 = vpack.c.b16 %v241, %v237
  %v346 = vpack.c.b16 %v246, %v242
  %v347 = vpack.c.b16 %v247, %v243
  %v348 = vpack.c.b16 %v248, %v244
  %v349 = vpack.c.b16 %v249, %v245
  %v350 = vpack.c.b16 %v254, %v250
  %v351 = vpack.c.b16 %v255, %v251
  %v352 = vpack.c.b16 %v256, %v252
  %v353 = vpack.c.b16 %v257, %v253
  %v354 = vpack.c.b16 %v262, %v258
  %v355 = vpack.c.b16 %v263, %v259
  %v356 = vpack.c.b16 %v264, %v260
  %v357 = vpack.c.b16 %v265, %v261
  %v358 = vpack.c.b16 %v270, %v266
  %v359 = vpack.c.b16 %v271, %v267
  %v360 = vpack.c.b16 %v272, %v268
  %v361 = vpack.c.b16 %v273, %v269
  %v362 = vpack.c.b16 %v278, %v274
  %v363 = vpack.c.b16 %v279, %v275
  %v364 = vpack.c.b16 %v280, %v276
  %v365 = vpack.c.b16 %v281, %v277
  %v366 = vpack.c.b16 %v286, %v282
  %v367 = vpack.c.b16 %v287, %v283
  %v368 = vpack.c.b16 %v288, %v284
  %v369 = vpack.c.b16 %v289, %v285
  %v370 = vpack.c.b16 %v294, %v290
  %v371 = vpack.c.b16 %v295, %v291
  %v372 = vpack.c.b16 %v296, %v292
  %v373 = vpack.c.b16 %v297, %v293
  %v374 = vpack.c.b16 %v302, %v298
  %v375 = vpack.c.b16 %v303, %v299
  %v376 = vpack.c.b16 %v304, %v300
  %v377 = vpack.c.b16 %v305, %v301
  %v378 = vpack.c.b16 %v310, %v306
  %v379 = vpack.c.b16 %v311, %v307
  %v380 = vpack.c.b16 %v312, %v308
  %v381 = vpack.c.b16 %v313, %v309
  %v382 = vpack.c.b16 %v318, %v314
  %v383 = vpack.c.b16 %v319, %v315
  %v384 = vpack.c.b16 %v320, %v316
  %v385 = vpack.c.b16 %v321, %v317
  %v488 = vunpack.c.l.b16 %v76
  %v489 = vunpack.c.l.b16 %v77
  %v490 = vunpack.c.l.b16 %v78
  %v491 = vunpack.c.l.b16 %v79
  %v492 = vunpack.c.l.b16 %v80
  %v493 = vunpack.c.l.b16 %v81
  %v494 = vunpack.c.l.b16 %v82
  %v495 = vunpack.c.l.b16 %v83
  %v496 = vunpack.c.l.b16 %v84
  %v497 = vunpack.c.l.b16 %v85
  %v498 = vunpack.c.l.b16 %v86
  %v499 = vunpack.c.l.b16 %v87
  %v500 = vunpack.c.l.b16 %v88
  %v501 = vunpack.c.l.b16 %v89
  %v502 = vunpack.c.l.b16 %v90
  %v503 = vunpack.c.l.b16 %v91
  %v504 = vunpack.c.l.b16 %v92
  %v505 = vunpack.c.l.b16 %v93
  %v506 = vunpack.c.l.b16 %v94
  %v507 = vunpack.c.l.b16 %v95
  %v508 = vunpack.c.l.b16 %v96
  %v509 = vunpack.c.l.b16 %v97
  %v510 = vunpack.c.l.b16 %v98
  %v511 = vunpack.c.l.b16 %v99
  %v512 = vunpack.c.l.b16 %v100
  %v513 = vunpack.c.l.b16 %v101
  %v514 = vunpack.c.l.b16 %v102
  %v515 = vunpack.c.l.b16 %v103
  %v516 = vunpack.c.l.b16 %v104
  %v517 = vunpack.c.l.b16 %v105
  %v518 = vunpack.c.l.b16 %v106
  %v519 = vunpack.c.l.b16 %v107
  %v520 = vunpack.c.l.b16 %v108
  %v521 = vunpack.c.l.b16 %v109
  %v522 = vunpack.c.l.b16 %v110
  %v523 = vunpack.c.l.b16 %v111
  %v524 = vunpack.c.l.b16 %v112
  %v525 = vunpack.c.l.b16 %v113
  %v526 = vunpack.c.l.b16 %v114
  %v527 = vunpack.c.l.b16 %v115
  %v528 = vunpack.c.l.b16 %v116
  %v529 = vunpack.c.l.b16 %v117
  %v530 = vunpack.c.l.b16 %v118
  %v531 = vunpack.c.l.b16 %v119
  %v532 = vunpack.c.l.b16 %v120
  %v533 = vunpack.c.l.b16 %v121
  %v534 = vunpack.c.l.b16 %v122
  %v535 = vunpack.c.l.b16 %v123
  %v536 = vunpack.c.l.b16 %v124
  %v537 = vunpack.c.l.b16 %v125
  %v538 = vunpack.c.l.b16 %v126
  %v539 = vunpack.c.l.b16 %v127
  %v540 = vunpack.c.l.b16 %v128
  %v541 = vunpack.c.l.b16 %v129
  %v542 = vpack.c.b16 %v489, %v488
  %v543 = vpack.c.b16 %v491, %v490
  %v544 = vpack.c.b16 %v493, %v492
  %v545 = vpack.c.b16 %v495, %v494
  %v546 = vpack.c.b16 %v497, %v496
  %v547 = vpack.c.b16 %v499, %v498
  %v548 = vpack.c.b16 %v501, %v500
  %v549 = vpack.c.b16 %v503, %v502
  %v550 = vpack.c.b16 %v505, %v504
  %v551 = vpack.c.b16 %v507, %v506
  %v552 = vpack.c.b16 %v509, %v508
  %v553 = vpack.c.b16 %v511, %v510
  %v554 = vpack.c.b16 %v513, %v512
  %v555 = vpack.c.b16 %v515, %v514
  %v556 = vpack.c.b16 %v517, %v516
  %v557 = vpack.c.b16 %v519, %v518
  %v558 = vpack.c.b16 %v521, %v520
  %v559 = vpack.c.b16 %v523, %v522
  %v560 = vpack.c.b16 %v525, %v524
  %v561 = vpack.c.b16 %v527, %v526
  %v562 = vpack.c.b16 %v529, %v528
  %v563 = vpack.c.b16 %v531, %v530
  %v564 = vpack.c.b16 %v533, %v532
  %v565 = vpack.c.b16 %v535, %v534
  %v566 = vpack.c.b16 %v537, %v536
  %v567 = vpack.c.b16 %v539, %v538
  %v568 = vpack.c.b16 %v541, %v540
  %vm596 = vcmask 392192
  %v598 = vsel %vm596, %v325, 0
  %v601 = vsel %vm596, %v329, 0
  %v604 = vsel %vm596, %v333, 0
  %v607 = vsel %vm596, %v337, 0
  %v610 = vsel %vm596, %v341, 0
  %v613 = vsel %vm596, %v345, 0
  %v616 = vsel %vm596, %v349, 0
  %v619 = vsel %vm596, %v353, 0
  %v622 = vsel %vm596, %v357, 0
  %v625 = vsel %vm596, %v361, 0
  %v628 = vsel %vm596, %v365, 0
  %v631 = vsel %vm596, %v369, 0
  %v634 = vsel %vm596, %v373, 0
  %v637 = vsel %vm596, %v377, 0
  %v640 = vsel %vm596, %v381, 0
  %v643 = vsel %vm596, %v385, 0
  %645 = vmatprep.subr.bf16.mxu0 0
  %646 = vmatpush1.bf16.msra.mxu0 %v542
  %647 = vmatprep.subr.bf16.mxu0 0
  %648 = vmatpush1.bf16.msra.mxu0 %v543
  %649 = vmatprep.subr.bf16.mxu0 0
  %650 = vmatpush1.bf16.msra.mxu0 %v544
  %651 = vmatprep.subr.bf16.mxu0 0
  %652 = vmatpush1.bf16.msra.mxu0 %v545
  %653 = vmatprep.subr.bf16.mxu0 0
  %654 = vmatpush1.bf16.msra.mxu0 %v546
  %655 = vmatprep.subr.bf16.mxu0 0
  %656 = vmatpush1.bf16.msra.mxu0 %v547
  %657 = vmatprep.subr.bf16.mxu0 0
  %658 = vmatpush1.bf16.msra.mxu0 %v548
  %659 = vmatprep.subr.bf16.mxu0 0
  %660 = vmatpush1.bf16.msra.mxu0 %v549
  %661 = vmatprep.subr.bf16.mxu0 0
  %662 = vmatpush1.bf16.msra.mxu0 %v550
  %663 = vmatprep.subr.bf16.mxu0 0
  %664 = vmatpush1.bf16.msra.mxu0 %v551
  %665 = vmatprep.subr.bf16.mxu0 0
  %666 = vmatpush1.bf16.msra.mxu0 %v552
  %667 = vmatprep.subr.bf16.mxu0 0
  %668 = vmatpush1.bf16.msra.mxu0 %v553
  %669 = vmatprep.subr.bf16.mxu0 0
  %670 = vmatpush1.bf16.msra.mxu0 %v554
  %671 = vmatprep.subr.bf16.mxu0 0
  %672 = vmatpush1.bf16.msra.mxu0 %v555
  %673 = vmatprep.subr.bf16.mxu0 0
  %674 = vmatpush1.bf16.msra.mxu0 %v556
  %675 = vmatprep.subr.bf16.mxu0 0
  %676 = vmatpush1.bf16.msra.mxu0 %v557
  %677 = vmatprep.mubr.bf16.mxu0 %v323
  %678 = vmatmul.mubr.bf16.gmra.mrb[0].mxu0 %v322
  %v679 = vpop.f32.mrb[0].mxu0
  %v680 = vadd.f32 0.0, %v679
  %v681 = vpop.f32.mrb[0].mxu0
  %v682 = vpop.f32.mrb[0].mxu0
  %v683 = vadd.f32 0.0, %v682
  %v684 = vpop.f32.mrb[0].mxu0
  %685 = vmatprep.mubr.bf16.mxu0 %v327
  %686 = vmatmul.mubr.bf16.gmra.mrb[0].mxu0 %v326
  %v687 = vpop.f32.mrb[0].mxu0
  %v688 = vadd.f32 0.0, %v687
  %v689 = vpop.f32.mrb[0].mxu0
  %v690 = vpop.f32.mrb[0].mxu0
  %v691 = vadd.f32 0.0, %v690
  %v692 = vpop.f32.mrb[0].mxu0
  %693 = vmatprep.mubr.bf16.mxu0 %v331
  %694 = vmatmul.mubr.bf16.gmra.mrb[0].mxu0 %v330
  %v695 = vpop.f32.mrb[0].mxu0
  %v696 = vadd.f32 0.0, %v695
  %v697 = vpop.f32.mrb[0].mxu0
  %v698 = vpop.f32.mrb[0].mxu0
  %v699 = vadd.f32 0.0, %v698
  %v700 = vpop.f32.mrb[0].mxu0
  %701 = vmatprep.mubr.bf16.mxu0 %v335
  %702 = vmatmul.mubr.bf16.gmra.mrb[0].mxu0 %v334
  %v703 = vpop.f32.mrb[0].mxu0
  %v704 = vadd.f32 0.0, %v703
  %v705 = vpop.f32.mrb[0].mxu0
  %v706 = vpop.f32.mrb[0].mxu0
  %v707 = vadd.f32 0.0, %v706
  %v708 = vpop.f32.mrb[0].mxu0
  %709 = vmatprep.mubr.bf16.mxu0 %v339
  %710 = vmatmul.mubr.bf16.gmra.mrb[0].mxu0 %v338
  %v711 = vpop.f32.mrb[0].mxu0
  %v712 = vadd.f32 0.0, %v711
  %v713 = vpop.f32.mrb[0].mxu0
  %v714 = vpop.f32.mrb[0].mxu0
  %v715 = vadd.f32 0.0, %v714
  %v716 = vpop.f32.mrb[0].mxu0
  %717 = vmatprep.mubr.bf16.mxu0 %v343
  %718 = vmatmul.mubr.bf16.gmra.mrb[0].mxu0 %v342
  %v719 = vpop.f32.mrb[0].mxu0
  %v720 = vadd.f32 0.0, %v719
  %v721 = vpop.f32.mrb[0].mxu0
  %v722 = vpop.f32.mrb[0].mxu0
  %v723 = vadd.f32 0.0, %v722
  %v724 = vpop.f32.mrb[0].mxu0
  %725 = vmatprep.mubr.bf16.mxu0 %v347
  %726 = vmatmul.mubr.bf16.gmra.mrb[0].mxu0 %v346
  %v727 = vpop.f32.mrb[0].mxu0
  %v728 = vadd.f32 0.0, %v727
  %v729 = vpop.f32.mrb[0].mxu0
  %v730 = vpop.f32.mrb[0].mxu0
  %v731 = vadd.f32 0.0, %v730
  %v732 = vpop.f32.mrb[0].mxu0
  %733 = vmatprep.mubr.bf16.mxu0 %v351
  %734 = vmatmul.mubr.bf16.gmra.mrb[0].mxu0 %v350
  %v735 = vpop.f32.mrb[0].mxu0
  %v736 = vadd.f32 0.0, %v735
  %v737 = vpop.f32.mrb[0].mxu0
  %v738 = vpop.f32.mrb[0].mxu0
  %v739 = vadd.f32 0.0, %v738
  %v740 = vpop.f32.mrb[0].mxu0
  %741 = vmatprep.mubr.bf16.mxu0 %v355
  %742 = vmatmul.mubr.bf16.gmra.mrb[0].mxu0 %v354
  %v743 = vpop.f32.mrb[0].mxu0
  %v744 = vadd.f32 0.0, %v743
  %v745 = vpop.f32.mrb[0].mxu0
  %v746 = vpop.f32.mrb[0].mxu0
  %v747 = vadd.f32 0.0, %v746
  %v748 = vpop.f32.mrb[0].mxu0
  %749 = vmatprep.mubr.bf16.mxu0 %v359
  %750 = vmatmul.mubr.bf16.gmra.mrb[0].mxu0 %v358
  %v751 = vpop.f32.mrb[0].mxu0
  %v752 = vadd.f32 0.0, %v751
  %v753 = vpop.f32.mrb[0].mxu0
  %v754 = vpop.f32.mrb[0].mxu0
  %v755 = vadd.f32 0.0, %v754
  %v756 = vpop.f32.mrb[0].mxu0
  %757 = vmatprep.mubr.bf16.mxu0 %v363
  %758 = vmatmul.mubr.bf16.gmra.mrb[0].mxu0 %v362
  %v759 = vpop.f32.mrb[0].mxu0
  %v760 = vadd.f32 0.0, %v759
  %v761 = vpop.f32.mrb[0].mxu0
  %v762 = vpop.f32.mrb[0].mxu0
  %v763 = vadd.f32 0.0, %v762
  %v764 = vpop.f32.mrb[0].mxu0
  %765 = vmatprep.mubr.bf16.mxu0 %v367
  %766 = vmatmul.mubr.bf16.gmra.mrb[0].mxu0 %v366
  %v767 = vpop.f32.mrb[0].mxu0
  %v768 = vadd.f32 0.0, %v767
  %v769 = vpop.f32.mrb[0].mxu0
  %v770 = vpop.f32.mrb[0].mxu0
  %v771 = vadd.f32 0.0, %v770
  %v772 = vpop.f32.mrb[0].mxu0
  %773 = vmatprep.mubr.bf16.mxu0 %v371
  %774 = vmatmul.mubr.bf16.gmra.mrb[0].mxu0 %v370
  %v775 = vpop.f32.mrb[0].mxu0
  %v776 = vadd.f32 0.0, %v775
  %v777 = vpop.f32.mrb[0].mxu0
  %v778 = vpop.f32.mrb[0].mxu0
  %v779 = vadd.f32 0.0, %v778
  %v780 = vpop.f32.mrb[0].mxu0
  %781 = vmatprep.mubr.bf16.mxu0 %v375
  %782 = vmatmul.mubr.bf16.gmra.mrb[0].mxu0 %v374
  %v783 = vpop.f32.mrb[0].mxu0
  %v784 = vadd.f32 0.0, %v783
  %v785 = vpop.f32.mrb[0].mxu0
  %v786 = vpop.f32.mrb[0].mxu0
  %v787 = vadd.f32 0.0, %v786
  %v788 = vpop.f32.mrb[0].mxu0
  %789 = vmatprep.mubr.bf16.mxu0 %v379
  %790 = vmatmul.mubr.bf16.gmra.mrb[0].mxu0 %v378
  %v791 = vpop.f32.mrb[0].mxu0
  %v792 = vadd.f32 0.0, %v791
  %v793 = vpop.f32.mrb[0].mxu0
  %v794 = vpop.f32.mrb[0].mxu0
  %v795 = vadd.f32 0.0, %v794
  %v796 = vpop.f32.mrb[0].mxu0
  %797 = vmatprep.mubr.bf16.mxu0 %v383
  %798 = vmatmul.mubr.bf16.gmra.mrb[0].mxu0 %v382
  %v799 = vpop.f32.mrb[0].mxu0
  %v800 = vadd.f32 0.0, %v799
  %v801 = vpop.f32.mrb[0].mxu0
  %v802 = vpop.f32.mrb[0].mxu0
  %v803 = vadd.f32 0.0, %v802
  %v804 = vpop.f32.mrb[0].mxu0
  %805 = vdwg.mxu0
  %806 = vmatprep.subr.bf16.mxu0 0
  %807 = vmatpush1.bf16.msra.mxu0 %v558
  %808 = vmatprep.subr.bf16.mxu0 0
  %809 = vmatpush1.bf16.msra.mxu0 %v559
  %810 = vmatprep.subr.bf16.mxu0 0
  %811 = vmatpush1.bf16.msra.mxu0 %v560
  %812 = vmatprep.subr.bf16.mxu0 0
  %813 = vmatpush1.bf16.msra.mxu0 %v561
  %814 = vmatprep.subr.bf16.mxu0 0
  %815 = vmatpush1.bf16.msra.mxu0 %v562
  %816 = vmatprep.subr.bf16.mxu0 0
  %817 = vmatpush1.bf16.msra.mxu0 %v563
  %818 = vmatprep.subr.bf16.mxu0 0
  %819 = vmatpush1.bf16.msra.mxu0 %v564
  %820 = vmatprep.subr.bf16.mxu0 0
  %821 = vmatpush1.bf16.msra.mxu0 %v565
  %822 = vmatprep.subr.bf16.mxu0 0
  %823 = vmatpush1.bf16.msra.mxu0 %v566
  %824 = vmatprep.subr.bf16.mxu0 0
  %825 = vmatpush1.bf16.msra.mxu0 %v567
  %826 = vmatprep.subr.bf16.mxu0 0
  %827 = vmatpush1.bf16.msra.mxu0 %v568
  %828 = vmatprep.subr.bf16.mxu0 0
  %829 = vmatpush1.bf16.msra.mxu0 0
  %830 = vmatprep.subr.bf16.mxu0 0
  %831 = vmatpush1.bf16.msra.mxu0 0
  %832 = vmatprep.subr.bf16.mxu0 0
  %833 = vmatpush1.bf16.msra.mxu0 0
  %834 = vmatprep.subr.bf16.mxu0 0
  %835 = vmatpush1.bf16.msra.mxu0 0
  %836 = vmatprep.subr.bf16.mxu0 0
  %837 = vmatpush1.bf16.msra.mxu0 0
  %838 = vmatprep.mubr.bf16.mxu0 %v598
  %839 = vmatmul.mubr.bf16.gmra.mrb[0].mxu0 %v324
  %v840 = vpop.f32.mrb[0].mxu0
  %v841 = vadd.f32 %v680, %v840
  %v842 = vpop.f32.mrb[0].mxu0
  %v843 = vpop.f32.mrb[0].mxu0
  %v844 = vadd.f32 %v683, %v843
  %v845 = vpop.f32.mrb[0].mxu0
  %846 = vmatprep.mubr.bf16.mxu0 %v601
  %847 = vmatmul.mubr.bf16.gmra.mrb[0].mxu0 %v328
  %v848 = vpop.f32.mrb[0].mxu0
  %v849 = vadd.f32 %v688, %v848
  %v850 = vpop.f32.mrb[0].mxu0
  %v851 = vpop.f32.mrb[0].mxu0
  %v852 = vadd.f32 %v691, %v851
  %v853 = vpop.f32.mrb[0].mxu0
  %854 = vmatprep.mubr.bf16.mxu0 %v604
  %855 = vmatmul.mubr.bf16.gmra.mrb[0].mxu0 %v332
  %v856 = vpop.f32.mrb[0].mxu0
  %v857 = vadd.f32 %v696, %v856
  %v858 = vpop.f32.mrb[0].mxu0
  %v859 = vpop.f32.mrb[0].mxu0
  %v860 = vadd.f32 %v699, %v859
  %v861 = vpop.f32.mrb[0].mxu0
  %862 = vmatprep.mubr.bf16.mxu0 %v607
  %863 = vmatmul.mubr.bf16.gmra.mrb[0].mxu0 %v336
  %v864 = vpop.f32.mrb[0].mxu0
  %v865 = vadd.f32 %v704, %v864
  %v866 = vpop.f32.mrb[0].mxu0
  %v867 = vpop.f32.mrb[0].mxu0
  %v868 = vadd.f32 %v707, %v867
  %v869 = vpop.f32.mrb[0].mxu0
  %870 = vmatprep.mubr.bf16.mxu0 %v610
  %871 = vmatmul.mubr.bf16.gmra.mrb[0].mxu0 %v340
  %v872 = vpop.f32.mrb[0].mxu0
  %v873 = vadd.f32 %v712, %v872
  %v874 = vpop.f32.mrb[0].mxu0
  %v875 = vpop.f32.mrb[0].mxu0
  %v876 = vadd.f32 %v715, %v875
  %v877 = vpop.f32.mrb[0].mxu0
  %878 = vmatprep.mubr.bf16.mxu0 %v613
  %879 = vmatmul.mubr.bf16.gmra.mrb[0].mxu0 %v344
  %v880 = vpop.f32.mrb[0].mxu0
  %v881 = vadd.f32 %v720, %v880
  %v882 = vpop.f32.mrb[0].mxu0
  %v883 = vpop.f32.mrb[0].mxu0
  %v884 = vadd.f32 %v723, %v883
  %v885 = vpop.f32.mrb[0].mxu0
  %886 = vmatprep.mubr.bf16.mxu0 %v616
  %887 = vmatmul.mubr.bf16.gmra.mrb[0].mxu0 %v348
  %v888 = vpop.f32.mrb[0].mxu0
  %v889 = vadd.f32 %v728, %v888
  %v890 = vpop.f32.mrb[0].mxu0
  %v891 = vpop.f32.mrb[0].mxu0
  %v892 = vadd.f32 %v731, %v891
  %v893 = vpop.f32.mrb[0].mxu0
  %894 = vmatprep.mubr.bf16.mxu0 %v619
  %895 = vmatmul.mubr.bf16.gmra.mrb[0].mxu0 %v352
  %v896 = vpop.f32.mrb[0].mxu0
  %v897 = vadd.f32 %v736, %v896
  %v898 = vpop.f32.mrb[0].mxu0
  %v899 = vpop.f32.mrb[0].mxu0
  %v900 = vadd.f32 %v739, %v899
  %v901 = vpop.f32.mrb[0].mxu0
  %902 = vmatprep.mubr.bf16.mxu0 %v622
  %903 = vmatmul.mubr.bf16.gmra.mrb[0].mxu0 %v356
  %v904 = vpop.f32.mrb[0].mxu0
  %v905 = vadd.f32 %v744, %v904
  %v906 = vpop.f32.mrb[0].mxu0
  %v907 = vpop.f32.mrb[0].mxu0
  %v908 = vadd.f32 %v747, %v907
  %v909 = vpop.f32.mrb[0].mxu0
  %910 = vmatprep.mubr.bf16.mxu0 %v625
  %911 = vmatmul.mubr.bf16.gmra.mrb[0].mxu0 %v360
  %v912 = vpop.f32.mrb[0].mxu0
  %v913 = vadd.f32 %v752, %v912
  %v914 = vpop.f32.mrb[0].mxu0
  %v915 = vpop.f32.mrb[0].mxu0
  %v916 = vadd.f32 %v755, %v915
  %v917 = vpop.f32.mrb[0].mxu0
  %918 = vmatprep.mubr.bf16.mxu0 %v628
  %919 = vmatmul.mubr.bf16.gmra.mrb[0].mxu0 %v364
  %v920 = vpop.f32.mrb[0].mxu0
  %v921 = vadd.f32 %v760, %v920
  %v922 = vpop.f32.mrb[0].mxu0
  %v923 = vpop.f32.mrb[0].mxu0
  %v924 = vadd.f32 %v763, %v923
  %v925 = vpop.f32.mrb[0].mxu0
  %926 = vmatprep.mubr.bf16.mxu0 %v631
  %927 = vmatmul.mubr.bf16.gmra.mrb[0].mxu0 %v368
  %v928 = vpop.f32.mrb[0].mxu0
  %v929 = vadd.f32 %v768, %v928
  %v930 = vpop.f32.mrb[0].mxu0
  %v931 = vpop.f32.mrb[0].mxu0
  %v932 = vadd.f32 %v771, %v931
  %v933 = vpop.f32.mrb[0].mxu0
  %934 = vmatprep.mubr.bf16.mxu0 %v634
  %935 = vmatmul.mubr.bf16.gmra.mrb[0].mxu0 %v372
  %v936 = vpop.f32.mrb[0].mxu0
  %v937 = vadd.f32 %v776, %v936
  %v938 = vpop.f32.mrb[0].mxu0
  %v939 = vpop.f32.mrb[0].mxu0
  %v940 = vadd.f32 %v779, %v939
  %v941 = vpop.f32.mrb[0].mxu0
  %942 = vmatprep.mubr.bf16.mxu0 %v637
  %943 = vmatmul.mubr.bf16.gmra.mrb[0].mxu0 %v376
  %v944 = vpop.f32.mrb[0].mxu0
  %v945 = vadd.f32 %v784, %v944
  %v946 = vpop.f32.mrb[0].mxu0
  %v947 = vpop.f32.mrb[0].mxu0
  %v948 = vadd.f32 %v787, %v947
  %v949 = vpop.f32.mrb[0].mxu0
  %950 = vmatprep.mubr.bf16.mxu0 %v640
  %951 = vmatmul.mubr.bf16.gmra.mrb[0].mxu0 %v380
  %v952 = vpop.f32.mrb[0].mxu0
  %v953 = vadd.f32 %v792, %v952
  %v954 = vpop.f32.mrb[0].mxu0
  %v955 = vpop.f32.mrb[0].mxu0
  %v956 = vadd.f32 %v795, %v955
  %v957 = vpop.f32.mrb[0].mxu0
  %958 = vmatprep.mubr.bf16.mxu0 %v643
  %959 = vmatmul.mubr.bf16.gmra.mrb[0].mxu0 %v384
  %v960 = vpop.f32.mrb[0].mxu0
  %v961 = vadd.f32 %v800, %v960
  %v962 = vpop.f32.mrb[0].mxu0
  %v963 = vpop.f32.mrb[0].mxu0
  %v964 = vadd.f32 %v803, %v963
  %v965 = vpop.f32.mrb[0].mxu0
  %966 = vdwg.mxu0
  %v967 = vmax.f32 %v841, 0.0
  %v968 = vmax.f32 %v844, 0.0
  %v969 = vmax.f32 %v849, 0.0
  %v970 = vmax.f32 %v852, 0.0
  %v971 = vmax.f32 %v857, 0.0
  %v972 = vmax.f32 %v860, 0.0
  %v973 = vmax.f32 %v865, 0.0
  %v974 = vmax.f32 %v868, 0.0
  %v975 = vmax.f32 %v873, 0.0
  %v976 = vmax.f32 %v876, 0.0
  %v977 = vmax.f32 %v881, 0.0
  %v978 = vmax.f32 %v884, 0.0
  %v979 = vmax.f32 %v889, 0.0
  %v980 = vmax.f32 %v892, 0.0
  %v981 = vmax.f32 %v897, 0.0
  %v982 = vmax.f32 %v900, 0.0
  %v983 = vmax.f32 %v905, 0.0
  %v984 = vmax.f32 %v908, 0.0
  %v985 = vmax.f32 %v913, 0.0
  %v986 = vmax.f32 %v916, 0.0
  %v987 = vmax.f32 %v921, 0.0
  %v988 = vmax.f32 %v924, 0.0
  %v989 = vmax.f32 %v929, 0.0
  %v990 = vmax.f32 %v932, 0.0
  %v991 = vmax.f32 %v937, 0.0
  %v992 = vmax.f32 %v940, 0.0
  %v993 = vmax.f32 %v945, 0.0
  %v994 = vmax.f32 %v948, 0.0
  %v995 = vmax.f32 %v953, 0.0
  %v996 = vmax.f32 %v956, 0.0
  %v997 = vmax.f32 %v961, 0.0
  %v998 = vmax.f32 %v964, 0.0
  %v999 = vpack.c.bf16 %v968, %v967
  %v1000 = vpack.c.bf16 %v970, %v969
  %v1001 = vpack.c.bf16 %v972, %v971
  %v1002 = vpack.c.bf16 %v974, %v973
  %v1003 = vpack.c.bf16 %v976, %v975
  %v1004 = vpack.c.bf16 %v978, %v977
  %v1005 = vpack.c.bf16 %v980, %v979
  %v1006 = vpack.c.bf16 %v982, %v981
  %v1007 = vpack.c.bf16 %v984, %v983
  %v1008 = vpack.c.bf16 %v986, %v985
  %v1009 = vpack.c.bf16 %v988, %v987
  %v1010 = vpack.c.bf16 %v990, %v989
  %v1011 = vpack.c.bf16 %v992, %v991
  %v1012 = vpack.c.bf16 %v994, %v993
  %v1013 = vpack.c.bf16 %v996, %v995
  %v1014 = vpack.c.bf16 %v998, %v997
  %v1031 = vunpack.c.l.b16 %v999
  %v1032 = vunpack.c.h.b16 %v999
  %v1033 = vunpack.c.l.b16 %v1000
  %v1034 = vunpack.c.h.b16 %v1000
  %v1035 = vunpack.c.l.b16 %v1001
  %v1036 = vunpack.c.h.b16 %v1001
  %v1037 = vunpack.c.l.b16 %v1002
  %v1038 = vunpack.c.h.b16 %v1002
  %v1039 = vunpack.c.l.b16 %v1003
  %v1040 = vunpack.c.h.b16 %v1003
  %v1041 = vunpack.c.l.b16 %v1004
  %v1042 = vunpack.c.h.b16 %v1004
  %v1043 = vunpack.c.l.b16 %v1005
  %v1044 = vunpack.c.h.b16 %v1005
  %v1045 = vunpack.c.l.b16 %v1006
  %v1046 = vunpack.c.h.b16 %v1006
  %v1047 = vunpack.c.l.b16 %v1007
  %v1048 = vunpack.c.h.b16 %v1007
  %v1049 = vunpack.c.l.b16 %v1008
  %v1050 = vunpack.c.h.b16 %v1008
  %v1051 = vunpack.c.l.b16 %v1009
  %v1052 = vunpack.c.h.b16 %v1009
  %v1053 = vunpack.c.l.b16 %v1010
  %v1054 = vunpack.c.h.b16 %v1010
  %v1055 = vunpack.c.l.b16 %v1011
  %v1056 = vunpack.c.h.b16 %v1011
  %v1057 = vunpack.c.l.b16 %v1012
  %v1058 = vunpack.c.h.b16 %v1012
  %v1059 = vunpack.c.l.b16 %v1013
  %v1060 = vunpack.c.h.b16 %v1013
  %v1061 = vunpack.c.l.b16 %v1014
  %v1062 = vunpack.c.h.b16 %v1014
  %v1063 = vpack.c.b16 %v1031, %v1031
  %v1064 = vpack.c.b16 %v1032, %v1032
  %v1065 = vpack.c.b16 %v1033, %v1033
  %v1066 = vpack.c.b16 %v1034, %v1034
  %v1067 = vpack.c.b16 %v1035, %v1035
  %v1068 = vpack.c.b16 %v1036, %v1036
  %v1069 = vpack.c.b16 %v1037, %v1037
  %v1070 = vpack.c.b16 %v1038, %v1038
  %v1071 = vpack.c.b16 %v1039, %v1039
  %v1072 = vpack.c.b16 %v1040, %v1040
  %v1073 = vpack.c.b16 %v1041, %v1041
  %v1074 = vpack.c.b16 %v1042, %v1042
  %v1075 = vpack.c.b16 %v1043, %v1043
  %v1076 = vpack.c.b16 %v1044, %v1044
  %v1077 = vpack.c.b16 %v1045, %v1045
  %v1078 = vpack.c.b16 %v1046, %v1046
  %v1079 = vpack.c.b16 %v1047, %v1047
  %v1080 = vpack.c.b16 %v1048, %v1048
  %v1081 = vpack.c.b16 %v1049, %v1049
  %v1082 = vpack.c.b16 %v1050, %v1050
  %v1083 = vpack.c.b16 %v1051, %v1051
  %v1084 = vpack.c.b16 %v1052, %v1052
  %v1085 = vpack.c.b16 %v1053, %v1053
  %v1086 = vpack.c.b16 %v1054, %v1054
  %v1087 = vpack.c.b16 %v1055, %v1055
  %v1088 = vpack.c.b16 %v1056, %v1056
  %v1089 = vpack.c.b16 %v1057, %v1057
  %v1090 = vpack.c.b16 %v1058, %v1058
  %v1091 = vpack.c.b16 %v1059, %v1059
  %v1092 = vpack.c.b16 %v1060, %v1060
  %v1093 = vpack.c.b16 %v1061, %v1061
  %v1094 = vpack.c.b16 %v1062, %v1062
  %vm1127 = vcmask 125952
  %1128 = vst.msk [vmem:[%s2] sm:$0xf] %vm1127, %v1063
  %1129 = vst.msk [vmem:[%s2 + $0x4] sm:$0xf] %vm1127, %v1064
  %1130 = vst.msk [vmem:[%s2 + $0x8] sm:$0xf] %vm1127, %v1065
  %1131 = vst.msk [vmem:[%s2 + $0xc] sm:$0xf] %vm1127, %v1066
  %1132 = vst.msk [vmem:[%s2 + $0x10] sm:$0xf] %vm1127, %v1067
  %1133 = vst.msk [vmem:[%s2 + $0x14] sm:$0xf] %vm1127, %v1068
  %1134 = vst.msk [vmem:[%s2 + $0x18] sm:$0xf] %vm1127, %v1069
  %1135 = vst.msk [vmem:[%s2 + $0x1c] sm:$0xf] %vm1127, %v1070
  %1136 = vst.msk [vmem:[%s2 + $0x20] sm:$0xf] %vm1127, %v1071
  %1137 = vst.msk [vmem:[%s2 + $0x24] sm:$0xf] %vm1127, %v1072
  %1138 = vst.msk [vmem:[%s2 + $0x28] sm:$0xf] %vm1127, %v1073
  %1139 = vst.msk [vmem:[%s2 + $0x2c] sm:$0xf] %vm1127, %v1074
  %1140 = vst.msk [vmem:[%s2 + $0x30] sm:$0xf] %vm1127, %v1075
  %1141 = vst.msk [vmem:[%s2 + $0x34] sm:$0xf] %vm1127, %v1076
  %1142 = vst.msk [vmem:[%s2 + $0x38] sm:$0xf] %vm1127, %v1077
  %1143 = vst.msk [vmem:[%s2 + $0x3c] sm:$0xf] %vm1127, %v1078
  %1144 = vst.msk [vmem:[%s2 + $0x40] sm:$0xf] %vm1127, %v1079
  %1145 = vst.msk [vmem:[%s2 + $0x44] sm:$0xf] %vm1127, %v1080
  %1146 = vst.msk [vmem:[%s2 + $0x48] sm:$0xf] %vm1127, %v1081
  %1147 = vst.msk [vmem:[%s2 + $0x4c] sm:$0xf] %vm1127, %v1082
  %1148 = vst.msk [vmem:[%s2 + $0x50] sm:$0xf] %vm1127, %v1083
  %1149 = vst.msk [vmem:[%s2 + $0x54] sm:$0xf] %vm1127, %v1084
  %1150 = vst.msk [vmem:[%s2 + $0x58] sm:$0xf] %vm1127, %v1085
  %1151 = vst.msk [vmem:[%s2 + $0x5c] sm:$0xf] %vm1127, %v1086
  %1152 = vst.msk [vmem:[%s2 + $0x60] sm:$0xf] %vm1127, %v1087
  %1153 = vst.msk [vmem:[%s2 + $0x64] sm:$0xf] %vm1127, %v1088
  %1154 = vst.msk [vmem:[%s2 + $0x68] sm:$0xf] %vm1127, %v1089
  %1155 = vst.msk [vmem:[%s2 + $0x6c] sm:$0xf] %vm1127, %v1090
  %1156 = vst.msk [vmem:[%s2 + $0x70] sm:$0xf] %vm1127, %v1091
  %1157 = vst.msk [vmem:[%s2 + $0x74] sm:$0xf] %vm1127, %v1092
  %1158 = vst.msk [vmem:[%s2 + $0x78] sm:$0xf] %vm1127, %v1093
  %1159 = vst.msk [vmem:[%s2 + $0x7c] sm:$0xf] %vm1127, %v1094
  // Predicated region
  $region10: #{cost_reg_forward.13} parent=0 // pred_check
    _
  $region11: #{cost_reg_forward.13} parent=0 // pred_check_branch
    %1161 = sbr.rel (0) target = $region13
  $region12: #{cost_reg_forward.13} parent=0 // pred_region
    _
  $region13: #{cost_reg_forward.13} parent=0 // pred_fallthru
    _
  // Predicated region
  $region14: #{cost_reg_forward.13} parent=0 // pred_check
    _
  $region15: #{cost_reg_forward.13} parent=0 // pred_check_branch
    %1163 = sbr.rel (0) target = $region17
  $region16: #{cost_reg_forward.13} parent=0 // pred_region
    _
  $region17: #{cost_reg_forward.13} parent=0 // pred_fallthru
    _

// kernel: cost_reg_forward.14
$region0: #{cost_reg_forward.14}
  #allocation0 [shape = 'u32[]', space=smem, size = 0x4, offset = 0x4, fixed_abs, tag = 'smem constant byte address 0x4 - core index']
  #allocation1 [shape = 'u32[144,128]{1,0:T(1,128)}', space=vmem, size = 0x12000, scoped, tag = 'internal scratch']
  %s0 = inlined_call_operand.vmem [shape: bf16[32,432], index: 0, kind: input, shape index: {}]
  %s1 = inlined_call_operand.vmem [shape: bf16[432,32], index: 1, kind: input, shape index: {}]
  %s2 = inlined_call_operand.vmem [shape: bf16[32,32], index: 2, kind: output, shape index: {}]
  %s3 = sld [smem:[#allocation0]]
  $region18: #{cost_reg_forward.14} parent=0
    _
  %s5 = ssub.s32 1, %s3
  %s6 = scalar_select 0, %s5, %s3
  // Predicated region
  $region2: #{cost_reg_forward.14} parent=0 // pred_check
    _
  $region3: #{cost_reg_forward.14} parent=0 // pred_check_branch
    %8 = sbr.rel (0) target = $region5
  $region4: #{cost_reg_forward.14} parent=0 // pred_region
    _
  $region5: #{cost_reg_forward.14} parent=0 // pred_fallthru
    _
  // Predicated region
  $region6: #{cost_reg_forward.14} parent=0 // pred_check
    _
  $region7: #{cost_reg_forward.14} parent=0 // pred_check_branch
    %10 = sbr.rel (0) target = $region9
  $region8: #{cost_reg_forward.14} parent=0 // pred_region
    _
  $region9: #{cost_reg_forward.14} parent=0 // pred_fallthru
    _
  %v12 = vld [vmem:[%s0] sm:$0xff]
  %v13 = vld [vmem:[%s0 + $0x8] sm:$0xff]
  %v14 = vld [vmem:[%s0 + $0x10] sm:$0xff]
  %v15 = vld [vmem:[%s0 + $0x18] sm:$0xff]
  %v16 = vld [vmem:[%s0 + $0x20] sm:$0xff]
  %v17 = vld [vmem:[%s0 + $0x28] sm:$0xff]
  %v18 = vld [vmem:[%s0 + $0x30] sm:$0xff]
  %v19 = vld [vmem:[%s0 + $0x38] sm:$0xff]
  %v20 = vld [vmem:[%s1] sm:$0xf]
  %v21 = vld [vmem:[%s1 + $0x4] sm:$0xf]
  %v22 = vld [vmem:[%s1 + $0x8] sm:$0xf]
  %v23 = vld [vmem:[%s1 + $0xc] sm:$0xf]
  %v24 = vld [vmem:[%s1 + $0x10] sm:$0xf]
  %v25 = vld [vmem:[%s1 + $0x14] sm:$0xf]
  %v26 = vld [vmem:[%s1 + $0x18] sm:$0xf]
  %v27 = vld [vmem:[%s1 + $0x1c] sm:$0xf]
  %v28 = vld [vmem:[%s1 + $0x20] sm:$0xf]
  %v29 = vld [vmem:[%s1 + $0x24] sm:$0xf]
  %v30 = vld [vmem:[%s1 + $0x28] sm:$0xf]
  %v31 = vld [vmem:[%s1 + $0x2c] sm:$0xf]
  %v32 = vld [vmem:[%s1 + $0x30] sm:$0xf]
  %v33 = vld [vmem:[%s1 + $0x34] sm:$0xf]
  %v34 = vld [vmem:[%s1 + $0x38] sm:$0xf]
  %v35 = vld [vmem:[%s1 + $0x3c] sm:$0xf]
  %v36 = vld [vmem:[%s1 + $0x40] sm:$0xf]
  %v37 = vld [vmem:[%s1 + $0x44] sm:$0xf]
  %v38 = vld [vmem:[%s1 + $0x48] sm:$0xf]
  %v39 = vld [vmem:[%s1 + $0x4c] sm:$0xf]
  %v40 = vld [vmem:[%s1 + $0x50] sm:$0xf]
  %v41 = vld [vmem:[%s1 + $0x54] sm:$0xf]
  %v42 = vld [vmem:[%s1 + $0x58] sm:$0xf]
  %v43 = vld [vmem:[%s1 + $0x5c] sm:$0xf]
  %v44 = vld [vmem:[%s1 + $0x60] sm:$0xf]
  %v45 = vld [vmem:[%s1 + $0x64] sm:$0xf]
  %v46 = vld [vmem:[%s1 + $0x68] sm:$0xf]
  %v47 = vld [vmem:[%s1 + $0x6c] sm:$0xf]
  %v48 = vld [vmem:[%s1 + $0x70] sm:$0xf]
  %v49 = vld [vmem:[%s1 + $0x74] sm:$0xf]
  %v50 = vld [vmem:[%s1 + $0x78] sm:$0xf]
  %v51 = vld [vmem:[%s1 + $0x7c] sm:$0xf]
  %v52 = vld [vmem:[%s1 + $0x80] sm:$0xf]
  %v53 = vld [vmem:[%s1 + $0x84] sm:$0xf]
  %v54 = vld [vmem:[%s1 + $0x88] sm:$0xf]
  %v55 = vld [vmem:[%s1 + $0x8c] sm:$0xf]
  %v56 = vld [vmem:[%s1 + $0x90] sm:$0xf]
  %v57 = vld [vmem:[%s1 + $0x94] sm:$0xf]
  %v58 = vld [vmem:[%s1 + $0x98] sm:$0xf]
  %v59 = vld [vmem:[%s1 + $0x9c] sm:$0xf]
  %v60 = vld [vmem:[%s1 + $0xa0] sm:$0xf]
  %v61 = vld [vmem:[%s1 + $0xa4] sm:$0xf]
  %v62 = vld [vmem:[%s1 + $0xa8] sm:$0xf]
  %v63 = vld [vmem:[%s1 + $0xac] sm:$0xf]
  %v64 = vld [vmem:[%s1 + $0xb0] sm:$0xf]
  %v65 = vld [vmem:[%s1 + $0xb4] sm:$0xf]
  %v66 = vld [vmem:[%s1 + $0xb8] sm:$0xf]
  %v67 = vld [vmem:[%s1 + $0xbc] sm:$0xf]
  %v68 = vld [vmem:[%s1 + $0xc0] sm:$0xf]
  %v69 = vld [vmem:[%s1 + $0xc4] sm:$0xf]
  %v70 = vld [vmem:[%s1 + $0xc8] sm:$0xf]
  %v71 = vld [vmem:[%s1 + $0xcc] sm:$0xf]
  %v72 = vld [vmem:[%s1 + $0xd0] sm:$0xf]
  %v73 = vld [vmem:[%s1 + $0xd4] sm:$0xf]
  %v82 = vunpack.c.l.b16 %v12
  %v83 = vunpack.c.h.b16 %v12
  %v84 = vunpack.c.l.b16 %v13
  %v85 = vunpack.c.h.b16 %v13
  %v86 = vunpack.c.l.b16 %v14
  %v87 = vunpack.c.h.b16 %v14
  %v88 = vunpack.c.l.b16 %v15
  %v89 = vunpack.c.h.b16 %v15
  %v90 = vunpack.c.l.b16 %v16
  %v91 = vunpack.c.h.b16 %v16
  %v92 = vunpack.c.l.b16 %v17
  %v93 = vunpack.c.h.b16 %v17
  %v94 = vunpack.c.l.b16 %v18
  %v95 = vunpack.c.h.b16 %v18
  %v96 = vunpack.c.l.b16 %v19
  %v97 = vunpack.c.h.b16 %v19
  %v98 = vpack.c.b16 %v86, %v82
  %v99 = vpack.c.b16 %v87, %v83
  %v100 = vpack.c.b16 %v88, %v84
  %v101 = vpack.c.b16 %v89, %v85
  %v102 = vpack.c.b16 %v94, %v90
  %v103 = vpack.c.b16 %v95, %v91
  %v104 = vpack.c.b16 %v96, %v92
  %v105 = vpack.c.b16 %v97, %v93
  %v166 = vunpack.c.l.b16 %v20
  %v167 = vunpack.c.l.b16 %v21
  %v168 = vunpack.c.l.b16 %v22
  %v169 = vunpack.c.l.b16 %v23
  %v170 = vunpack.c.l.b16 %v24
  %v171 = vunpack.c.l.b16 %v25
  %v172 = vunpack.c.l.b16 %v26
  %v173 = vunpack.c.l.b16 %v27
  %v174 = vunpack.c.l.b16 %v28
  %v175 = vunpack.c.l.b16 %v29
  %v176 = vunpack.c.l.b16 %v30
  %v177 = vunpack.c.l.b16 %v31
  %v178 = vunpack.c.l.b16 %v32
  %v179 = vunpack.c.l.b16 %v33
  %v180 = vunpack.c.l.b16 %v34
  %v181 = vunpack.c.l.b16 %v35
  %v182 = vunpack.c.l.b16 %v36
  %v183 = vunpack.c.l.b16 %v37
  %v184 = vunpack.c.l.b16 %v38
  %v185 = vunpack.c.l.b16 %v39
  %v186 = vunpack.c.l.b16 %v40
  %v187 = vunpack.c.l.b16 %v41
  %v188 = vunpack.c.l.b16 %v42
  %v189 = vunpack.c.l.b16 %v43
  %v190 = vunpack.c.l.b16 %v44
  %v191 = vunpack.c.l.b16 %v45
  %v192 = vunpack.c.l.b16 %v46
  %v193 = vunpack.c.l.b16 %v47
  %v194 = vunpack.c.l.b16 %v48
  %v195 = vunpack.c.l.b16 %v49
  %v196 = vunpack.c.l.b16 %v50
  %v197 = vunpack.c.l.b16 %v51
  %v198 = vunpack.c.l.b16 %v52
  %v199 = vunpack.c.l.b16 %v53
  %v200 = vunpack.c.l.b16 %v54
  %v201 = vunpack.c.l.b16 %v55
  %v202 = vunpack.c.l.b16 %v56
  %v203 = vunpack.c.l.b16 %v57
  %v204 = vunpack.c.l.b16 %v58
  %v205 = vunpack.c.l.b16 %v59
  %v206 = vunpack.c.l.b16 %v60
  %v207 = vunpack.c.l.b16 %v61
  %v208 = vunpack.c.l.b16 %v62
  %v209 = vunpack.c.l.b16 %v63
  %v210 = vunpack.c.l.b16 %v64
  %v211 = vunpack.c.l.b16 %v65
  %v212 = vunpack.c.l.b16 %v66
  %v213 = vunpack.c.l.b16 %v67
  %v214 = vunpack.c.l.b16 %v68
  %v215 = vunpack.c.l.b16 %v69
  %v216 = vunpack.c.l.b16 %v70
  %v217 = vunpack.c.l.b16 %v71
  %v218 = vunpack.c.l.b16 %v72
  %v219 = vunpack.c.l.b16 %v73
  %v220 = vpack.c.b16 %v167, %v166
  %v221 = vpack.c.b16 %v169, %v168
  %v222 = vpack.c.b16 %v171, %v170
  %v223 = vpack.c.b16 %v173, %v172
  %v224 = vpack.c.b16 %v175, %v174
  %v225 = vpack.c.b16 %v177, %v176
  %v226 = vpack.c.b16 %v179, %v178
  %v227 = vpack.c.b16 %v181, %v180
  %v228 = vpack.c.b16 %v183, %v182
  %v229 = vpack.c.b16 %v185, %v184
  %v230 = vpack.c.b16 %v187, %v186
  %v231 = vpack.c.b16 %v189, %v188
  %v232 = vpack.c.b16 %v191, %v190
  %v233 = vpack.c.b16 %v193, %v192
  %v234 = vpack.c.b16 %v195, %v194
  %v235 = vpack.c.b16 %v197, %v196
  %v236 = vpack.c.b16 %v199, %v198
  %v237 = vpack.c.b16 %v201, %v200
  %v238 = vpack.c.b16 %v203, %v202
  %v239 = vpack.c.b16 %v205, %v204
  %v240 = vpack.c.b16 %v207, %v206
  %v241 = vpack.c.b16 %v209, %v208
  %v242 = vpack.c.b16 %v211, %v210
  %v243 = vpack.c.b16 %v213, %v212
  %v244 = vpack.c.b16 %v215, %v214
  %v245 = vpack.c.b16 %v217, %v216
  %v246 = vpack.c.b16 %v219, %v218
  %vm274 = vcmask 392192
  %v276 = vsel %vm274, %v101, 0
  %v279 = vsel %vm274, %v105, 0
  %281 = vmatprep.subr.bf16.mxu0 0
  %282 = vmatpush1.bf16.msra.mxu0 %v220
  %283 = vmatprep.subr.bf16.mxu0 0
  %284 = vmatpush1.bf16.msra.mxu0 %v221
  %285 = vmatprep.subr.bf16.mxu0 0
  %286 = vmatpush1.bf16.msra.mxu0 %v222
  %287 = vmatprep.subr.bf16.mxu0 0
  %288 = vmatpush1.bf16.msra.mxu0 %v223
  %289 = vmatprep.subr.bf16.mxu0 0
  %290 = vmatpush1.bf16.msra.mxu0 %v224
  %291 = vmatprep.subr.bf16.mxu0 0
  %292 = vmatpush1.bf16.msra.mxu0 %v225
  %293 = vmatprep.subr.bf16.mxu0 0
  %294 = vmatpush1.bf16.msra.mxu0 %v226
  %295 = vmatprep.subr.bf16.mxu0 0
  %296 = vmatpush1.bf16.msra.mxu0 %v227
  %297 = vmatprep.subr.bf16.mxu0 0
  %298 = vmatpush1.bf16.msra.mxu0 %v228
  %299 = vmatprep.subr.bf16.mxu0 0
  %300 = vmatpush1.bf16.msra.mxu0 %v229
  %301 = vmatprep.subr.bf16.mxu0 0
  %302 = vmatpush1.bf16.msra.mxu0 %v230
  %303 = vmatprep.subr.bf16.mxu0 0
  %304 = vmatpush1.bf16.msra.mxu0 %v231
  %305 = vmatprep.subr.bf16.mxu0 0
  %306 = vmatpush1.bf16.msra.mxu0 %v232
  %307 = vmatprep.subr.bf16.mxu0 0
  %308 = vmatpush1.bf16.msra.mxu0 %v233
  %309 = vmatprep.subr.bf16.mxu0 0
  %310 = vmatpush1.bf16.msra.mxu0 %v234
  %311 = vmatprep.subr.bf16.mxu0 0
  %312 = vmatpush1.bf16.msra.mxu0 %v235
  %313 = vmatprep.mubr.bf16.mxu0 %v99
  %314 = vmatmul.mubr.bf16.gmra.mrb[0].mxu0 %v98
  %v315 = vpop.f32.mrb[0].mxu0
  %v316 = vadd.f32 0.0, %v315
  %v317 = vpop.f32.mrb[0].mxu0
  %v318 = vpop.f32.mrb[0].mxu0
  %v319 = vadd.f32 0.0, %v318
  %v320 = vpop.f32.mrb[0].mxu0
  %321 = vmatprep.mubr.bf16.mxu0 %v103
  %322 = vmatmul.mubr.bf16.gmra.mrb[0].mxu0 %v102
  %v323 = vpop.f32.mrb[0].mxu0
  %v324 = vadd.f32 0.0, %v323
  %v325 = vpop.f32.mrb[0].mxu0
  %v326 = vpop.f32.mrb[0].mxu0
  %v327 = vadd.f32 0.0, %v326
  %v328 = vpop.f32.mrb[0].mxu0
  %329 = vdwg.mxu0
  %330 = vmatprep.subr.bf16.mxu0 0
  %331 = vmatpush1.bf16.msra.mxu0 %v236
  %332 = vmatprep.subr.bf16.mxu0 0
  %333 = vmatpush1.bf16.msra.mxu0 %v237
  %334 = vmatprep.subr.bf16.mxu0 0
  %335 = vmatpush1.bf16.msra.mxu0 %v238
  %336 = vmatprep.subr.bf16.mxu0 0
  %337 = vmatpush1.bf16.msra.mxu0 %v239
  %338 = vmatprep.subr.bf16.mxu0 0
  %339 = vmatpush1.bf16.msra.mxu0 %v240
  %340 = vmatprep.subr.bf16.mxu0 0
  %341 = vmatpush1.bf16.msra.mxu0 %v241
  %342 = vmatprep.subr.bf16.mxu0 0
  %343 = vmatpush1.bf16.msra.mxu0 %v242
  %344 = vmatprep.subr.bf16.mxu0 0
  %345 = vmatpush1.bf16.msra.mxu0 %v243
  %346 = vmatprep.subr.bf16.mxu0 0
  %347 = vmatpush1.bf16.msra.mxu0 %v244
  %348 = vmatprep.subr.bf16.mxu0 0
  %349 = vmatpush1.bf16.msra.mxu0 %v245
  %350 = vmatprep.subr.bf16.mxu0 0
  %351 = vmatpush1.bf16.msra.mxu0 %v246
  %352 = vmatprep.subr.bf16.mxu0 0
  %353 = vmatpush1.bf16.msra.mxu0 0
  %354 = vmatprep.subr.bf16.mxu0 0
  %355 = vmatpush1.bf16.msra.mxu0 0
  %356 = vmatprep.subr.bf16.mxu0 0
  %357 = vmatpush1.bf16.msra.mxu0 0
  %358 = vmatprep.subr.bf16.mxu0 0
  %359 = vmatpush1.bf16.msra.mxu0 0
  %360 = vmatprep.subr.bf16.mxu0 0
  %361 = vmatpush1.bf16.msra.mxu0 0
  %362 = vmatprep.mubr.bf16.mxu0 %v276
  %363 = vmatmul.mubr.bf16.gmra.mrb[0].mxu0 %v100
  %v364 = vpop.f32.mrb[0].mxu0
  %v365 = vadd.f32 %v316, %v364
  %v366 = vpop.f32.mrb[0].mxu0
  %v367 = vpop.f32.mrb[0].mxu0
  %v368 = vadd.f32 %v319, %v367
  %v369 = vpop.f32.mrb[0].mxu0
  %370 = vmatprep.mubr.bf16.mxu0 %v279
  %371 = vmatmul.mubr.bf16.gmra.mrb[0].mxu0 %v104
  %v372 = vpop.f32.mrb[0].mxu0
  %v373 = vadd.f32 %v324, %v372
  %v374 = vpop.f32.mrb[0].mxu0
  %v375 = vpop.f32.mrb[0].mxu0
  %v376 = vadd.f32 %v327, %v375
  %v377 = vpop.f32.mrb[0].mxu0
  %378 = vdwg.mxu0
  %v379 = vmax.f32 %v365, 0.0
  %v380 = vmax.f32 %v368, 0.0
  %v381 = vmax.f32 %v373, 0.0
  %v382 = vmax.f32 %v376, 0.0
  %v383 = vpack.c.bf16 %v380, %v379
  %v384 = vpack.c.bf16 %v382, %v381
  %v387 = vunpack.c.l.b16 %v383
  %v388 = vunpack.c.h.b16 %v383
  %v389 = vunpack.c.l.b16 %v384
  %v390 = vunpack.c.h.b16 %v384
  %v391 = vpack.c.b16 %v387, %v387
  %v392 = vpack.c.b16 %v388, %v388
  %v393 = vpack.c.b16 %v389, %v389
  %v394 = vpack.c.b16 %v390, %v390
  %vm399 = vcmask 257024
  %400 = vst.msk [vmem:[%s2] sm:$0xf] %vm399, %v391
  %401 = vst.msk [vmem:[%s2 + $0x4] sm:$0xf] %vm399, %v392
  %402 = vst.msk [vmem:[%s2 + $0x8] sm:$0xf] %vm399, %v393
  %403 = vst.msk [vmem:[%s2 + $0xc] sm:$0xf] %vm399, %v394
  // Predicated region
  $region10: #{cost_reg_forward.14} parent=0 // pred_check
    _
  $region11: #{cost_reg_forward.14} parent=0 // pred_check_branch
    %405 = sbr.rel (0) target = $region13
  $region12: #{cost_reg_forward.14} parent=0 // pred_region
    _
  $region13: #{cost_reg_forward.14} parent=0 // pred_fallthru
    _
  // Predicated region
  $region14: #{cost_reg_forward.14} parent=0 // pred_check
    _
  $region15: #{cost_reg_forward.14} parent=0 // pred_check_branch
    %407 = sbr.rel (0) target = $region17
  $region16: #{cost_reg_forward.14} parent=0 // pred_region
    _
  $region17: #{cost_reg_forward.14} parent=0 // pred_fallthru
    _

// kernel: cost_reg_forward.15
$region0: #{cost_reg_forward.15}
  #allocation0 [shape = 'u32[]', space=smem, size = 0x4, offset = 0x4, fixed_abs, tag = 'smem constant byte address 0x4 - core index']
  #allocation1 [shape = 'u32[144,128]{1,0:T(1,128)}', space=vmem, size = 0x12000, scoped, tag = 'internal scratch']
  %s0 = inlined_call_operand.vmem [shape: bf16[32,864], index: 0, kind: input, shape index: {}]
  %s1 = inlined_call_operand.vmem [shape: bf16[864,32], index: 1, kind: input, shape index: {}]
  %s2 = inlined_call_operand.vmem [shape: bf16[32,32], index: 2, kind: output, shape index: {}]
  %s3 = sld [smem:[#allocation0]]
  $region18: #{cost_reg_forward.15} parent=0
    _
  %s5 = ssub.s32 1, %s3
  %s6 = scalar_select 0, %s5, %s3
  // Predicated region
  $region2: #{cost_reg_forward.15} parent=0 // pred_check
    _
  $region3: #{cost_reg_forward.15} parent=0 // pred_check_branch
    %8 = sbr.rel (0) target = $region5
  $region4: #{cost_reg_forward.15} parent=0 // pred_region
    _
  $region5: #{cost_reg_forward.15} parent=0 // pred_fallthru
    _
  // Predicated region
  $region6: #{cost_reg_forward.15} parent=0 // pred_check
    _
  $region7: #{cost_reg_forward.15} parent=0 // pred_check_branch
    %10 = sbr.rel (0) target = $region9
  $region8: #{cost_reg_forward.15} parent=0 // pred_region
    _
  $region9: #{cost_reg_forward.15} parent=0 // pred_fallthru
    _
  %v12 = vld [vmem:[%s0] sm:$0xff]
  %v13 = vld [vmem:[%s0 + $0x8] sm:$0xff]
  %v14 = vld [vmem:[%s0 + $0x10] sm:$0xff]
  %v15 = vld [vmem:[%s0 + $0x18] sm:$0xf]
  %v16 = vld [vmem:[%s0 + $0x1c] sm:$0xff]
  %v17 = vld [vmem:[%s0 + $0x24] sm:$0xff]
  %v18 = vld [vmem:[%s0 + $0x2c] sm:$0xff]
  %v19 = vld [vmem:[%s0 + $0x34] sm:$0xf]
  %v20 = vld [vmem:[%s0 + $0x38] sm:$0xff]
  %v21 = vld [vmem:[%s0 + $0x40] sm:$0xff]
  %v22 = vld [vmem:[%s0 + $0x48] sm:$0xff]
  %v23 = vld [vmem:[%s0 + $0x50] sm:$0xf]
  %v24 = vld [vmem:[%s0 + $0x54] sm:$0xff]
  %v25 = vld [vmem:[%s0 + $0x5c] sm:$0xff]
  %v26 = vld [vmem:[%s0 + $0x64] sm:$0xff]
  %v27 = vld [vmem:[%s0 + $0x6c] sm:$0xf]
  %v28 = vld [vmem:[%s1] sm:$0xf]
  %v29 = vld [vmem:[%s1 + $0x4] sm:$0xf]
  %v30 = vld [vmem:[%s1 + $0x8] sm:$0xf]
  %v31 = vld [vmem:[%s1 + $0xc] sm:$0xf]
  %v32 = vld [vmem:[%s1 + $0x10] sm:$0xf]
  %v33 = vld [vmem:[%s1 + $0x14] sm:$0xf]
  %v34 = vld [vmem:[%s1 + $0x18] sm:$0xf]
  %v35 = vld [vmem:[%s1 + $0x1c] sm:$0xf]
  %v36 = vld [vmem:[%s1 + $0x20] sm:$0xf]
  %v37 = vld [vmem:[%s1 + $0x24] sm:$0xf]
  %v38 = vld [vmem:[%s1 + $0x28] sm:$0xf]
  %v39 = vld [vmem:[%s1 + $0x2c] sm:$0xf]
  %v40 = vld [vmem:[%s1 + $0x30] sm:$0xf]
  %v41 = vld [vmem:[%s1 + $0x34] sm:$0xf]
  %v42 = vld [vmem:[%s1 + $0x38] sm:$0xf]
  %v43 = vld [vmem:[%s1 + $0x3c] sm:$0xf]
  %v44 = vld [vmem:[%s1 + $0x40] sm:$0xf]
  %v45 = vld [vmem:[%s1 + $0x44] sm:$0xf]
  %v46 = vld [vmem:[%s1 + $0x48] sm:$0xf]
  %v47 = vld [vmem:[%s1 + $0x4c] sm:$0xf]
  %v48 = vld [vmem:[%s1 + $0x50] sm:$0xf]
  %v49 = vld [vmem:[%s1 + $0x54] sm:$0xf]
  %v50 = vld [vmem:[%s1 + $0x58] sm:$0xf]
  %v51 = vld [vmem:[%s1 + $0x5c] sm:$0xf]
  %v52 = vld [vmem:[%s1 + $0x60] sm:$0xf]
  %v53 = vld [vmem:[%s1 + $0x64] sm:$0xf]
  %v54 = vld [vmem:[%s1 + $0x68] sm:$0xf]
  %v55 = vld [vmem:[%s1 + $0x6c] sm:$0xf]
  %v56 = vld [vmem:[%s1 + $0x70] sm:$0xf]
  %v57 = vld [vmem:[%s1 + $0x74] sm:$0xf]
  %v58 = vld [vmem:[%s1 + $0x78] sm:$0xf]
  %v59 = vld [vmem:[%s1 + $0x7c] sm:$0xf]
  %v60 = vld [vmem:[%s1 + $0x80] sm:$0xf]
  %v61 = vld [vmem:[%s1 + $0x84] sm:$0xf]
  %v62 = vld [vmem:[%s1 + $0x88] sm:$0xf]
  %v63 = vld [vmem:[%s1 + $0x8c] sm:$0xf]
  %v64 = vld [vmem:[%s1 + $0x90] sm:$0xf]
  %v65 = vld [vmem:[%s1 + $0x94] sm:$0xf]
  %v66 = vld [vmem:[%s1 + $0x98] sm:$0xf]
  %v67 = vld [vmem:[%s1 + $0x9c] sm:$0xf]
  %v68 = vld [vmem:[%s1 + $0xa0] sm:$0xf]
  %v69 = vld [vmem:[%s1 + $0xa4] sm:$0xf]
  %v70 = vld [vmem:[%s1 + $0xa8] sm:$0xf]
  %v71 = vld [vmem:[%s1 + $0xac] sm:$0xf]
  %v72 = vld [vmem:[%s1 + $0xb0] sm:$0xf]
  %v73 = vld [vmem:[%s1 + $0xb4] sm:$0xf]
  %v74 = vld [vmem:[%s1 + $0xb8] sm:$0xf]
  %v75 = vld [vmem:[%s1 + $0xbc] sm:$0xf]
  %v76 = vld [vmem:[%s1 + $0xc0] sm:$0xf]
  %v77 = vld [vmem:[%s1 + $0xc4] sm:$0xf]
  %v78 = vld [vmem:[%s1 + $0xc8] sm:$0xf]
  %v79 = vld [vmem:[%s1 + $0xcc] sm:$0xf]
  %v80 = vld [vmem:[%s1 + $0xd0] sm:$0xf]
  %v81 = vld [vmem:[%s1 + $0xd4] sm:$0xf]
  %v82 = vld [vmem:[%s1 + $0xd8] sm:$0xf]
  %v83 = vld [vmem:[%s1 + $0xdc] sm:$0xf]
  %v84 = vld [vmem:[%s1 + $0xe0] sm:$0xf]
  %v85 = vld [vmem:[%s1 + $0xe4] sm:$0xf]
  %v86 = vld [vmem:[%s1 + $0xe8] sm:$0xf]
  %v87 = vld [vmem:[%s1 + $0xec] sm:$0xf]
  %v88 = vld [vmem:[%s1 + $0xf0] sm:$0xf]
  %v89 = vld [vmem:[%s1 + $0xf4] sm:$0xf]
  %v90 = vld [vmem:[%s1 + $0xf8] sm:$0xf]
  %v91 = vld [vmem:[%s1 + $0xfc] sm:$0xf]
  %v92 = vld [vmem:[%s1 + $0x100] sm:$0xf]
  %v93 = vld [vmem:[%s1 + $0x104] sm:$0xf]
  %v94 = vld [vmem:[%s1 + $0x108] sm:$0xf]
  %v95 = vld [vmem:[%s1 + $0x10c] sm:$0xf]
  %v96 = vld [vmem:[%s1 + $0x110] sm:$0xf]
  %v97 = vld [vmem:[%s1 + $0x114] sm:$0xf]
  %v98 = vld [vmem:[%s1 + $0x118] sm:$0xf]
  %v99 = vld [vmem:[%s1 + $0x11c] sm:$0xf]
  %v100 = vld [vmem:[%s1 + $0x120] sm:$0xf]
  %v101 = vld [vmem:[%s1 + $0x124] sm:$0xf]
  %v102 = vld [vmem:[%s1 + $0x128] sm:$0xf]
  %v103 = vld [vmem:[%s1 + $0x12c] sm:$0xf]
  %v104 = vld [vmem:[%s1 + $0x130] sm:$0xf]
  %v105 = vld [vmem:[%s1 + $0x134] sm:$0xf]
  %v106 = vld [vmem:[%s1 + $0x138] sm:$0xf]
  %v107 = vld [vmem:[%s1 + $0x13c] sm:$0xf]
  %v108 = vld [vmem:[%s1 + $0x140] sm:$0xf]
  %v109 = vld [vmem:[%s1 + $0x144] sm:$0xf]
  %v110 = vld [vmem:[%s1 + $0x148] sm:$0xf]
  %v111 = vld [vmem:[%s1 + $0x14c] sm:$0xf]
  %v112 = vld [vmem:[%s1 + $0x150] sm:$0xf]
  %v113 = vld [vmem:[%s1 + $0x154] sm:$0xf]
  %v114 = vld [vmem:[%s1 + $0x158] sm:$0xf]
  %v115 = vld [vmem:[%s1 + $0x15c] sm:$0xf]
  %v116 = vld [vmem:[%s1 + $0x160] sm:$0xf]
  %v117 = vld [vmem:[%s1 + $0x164] sm:$0xf]
  %v118 = vld [vmem:[%s1 + $0x168] sm:$0xf]
  %v119 = vld [vmem:[%s1 + $0x16c] sm:$0xf]
  %v120 = vld [vmem:[%s1 + $0x170] sm:$0xf]
  %v121 = vld [vmem:[%s1 + $0x174] sm:$0xf]
  %v122 = vld [vmem:[%s1 + $0x178] sm:$0xf]
  %v123 = vld [vmem:[%s1 + $0x17c] sm:$0xf]
  %v124 = vld [vmem:[%s1 + $0x180] sm:$0xf]
  %v125 = vld [vmem:[%s1 + $0x184] sm:$0xf]
  %v126 = vld [vmem:[%s1 + $0x188] sm:$0xf]
  %v127 = vld [vmem:[%s1 + $0x18c] sm:$0xf]
  %v128 = vld [vmem:[%s1 + $0x190] sm:$0xf]
  %v129 = vld [vmem:[%s1 + $0x194] sm:$0xf]
  %v130 = vld [vmem:[%s1 + $0x198] sm:$0xf]
  %v131 = vld [vmem:[%s1 + $0x19c] sm:$0xf]
  %v132 = vld [vmem:[%s1 + $0x1a0] sm:$0xf]
  %v133 = vld [vmem:[%s1 + $0x1a4] sm:$0xf]
  %v134 = vld [vmem:[%s1 + $0x1a8] sm:$0xf]
  %v135 = vld [vmem:[%s1 + $0x1ac] sm:$0xf]
  %v152 = vunpack.c.l.b16 %v12
  %v153 = vunpack.c.h.b16 %v12
  %v154 = vunpack.c.l.b16 %v13
  %v155 = vunpack.c.h.b16 %v13
  %v156 = vunpack.c.l.b16 %v14
  %v157 = vunpack.c.h.b16 %v14
  %v158 = vunpack.c.l.b16 %v15
  %v159 = vunpack.c.l.b16 %v16
  %v160 = vunpack.c.h.b16 %v16
  %v161 = vunpack.c.l.b16 %v17
  %v162 = vunpack.c.h.b16 %v17
  %v163 = vunpack.c.l.b16 %v18
  %v164 = vunpack.c.h.b16 %v18
  %v165 = vunpack.c.l.b16 %v19
  %v166 = vunpack.c.l.b16 %v20
  %v167 = vunpack.c.h.b16 %v20
  %v168 = vunpack.c.l.b16 %v21
  %v169 = vunpack.c.h.b16 %v21
  %v170 = vunpack.c.l.b16 %v22
  %v171 = vunpack.c.h.b16 %v22
  %v172 = vunpack.c.l.b16 %v23
  %v173 = vunpack.c.l.b16 %v24
  %v174 = vunpack.c.h.b16 %v24
  %v175 = vunpack.c.l.b16 %v25
  %v176 = vunpack.c.h.b16 %v25
  %v177 = vunpack.c.l.b16 %v26
  %v178 = vunpack.c.h.b16 %v26
  %v179 = vunpack.c.l.b16 %v27
  %v180 = vpack.c.b16 %v159, %v152
  %v181 = vpack.c.b16 %v160, %v153
  %v182 = vpack.c.b16 %v161, %v154
  %v183 = vpack.c.b16 %v162, %v155
  %v184 = vpack.c.b16 %v163, %v156
  %v185 = vpack.c.b16 %v164, %v157
  %v186 = vpack.c.b16 %v165, %v158
  %v187 = vpack.c.b16 %v173, %v166
  %v188 = vpack.c.b16 %v174, %v167
  %v189 = vpack.c.b16 %v175, %v168
  %v190 = vpack.c.b16 %v176, %v169
  %v191 = vpack.c.b16 %v177, %v170
  %v192 = vpack.c.b16 %v178, %v171
  %v193 = vpack.c.b16 %v179, %v172
  %v314 = vunpack.c.l.b16 %v28
  %v315 = vunpack.c.l.b16 %v29
  %v316 = vunpack.c.l.b16 %v30
  %v317 = vunpack.c.l.b16 %v31
  %v318 = vunpack.c.l.b16 %v32
  %v319 = vunpack.c.l.b16 %v33
  %v320 = vunpack.c.l.b16 %v34
  %v321 = vunpack.c.l.b16 %v35
  %v322 = vunpack.c.l.b16 %v36
  %v323 = vunpack.c.l.b16 %v37
  %v324 = vunpack.c.l.b16 %v38
  %v325 = vunpack.c.l.b16 %v39
  %v326 = vunpack.c.l.b16 %v40
  %v327 = vunpack.c.l.b16 %v41
  %v328 = vunpack.c.l.b16 %v42
  %v329 = vunpack.c.l.b16 %v43
  %v330 = vunpack.c.l.b16 %v44
  %v331 = vunpack.c.l.b16 %v45
  %v332 = vunpack.c.l.b16 %v46
  %v333 = vunpack.c.l.b16 %v47
  %v334 = vunpack.c.l.b16 %v48
  %v335 = vunpack.c.l.b16 %v49
  %v336 = vunpack.c.l.b16 %v50
  %v337 = vunpack.c.l.b16 %v51
  %v338 = vunpack.c.l.b16 %v52
  %v339 = vunpack.c.l.b16 %v53
  %v340 = vunpack.c.l.b16 %v54
  %v341 = vunpack.c.l.b16 %v55
  %v342 = vunpack.c.l.b16 %v56
  %v343 = vunpack.c.l.b16 %v57
  %v344 = vunpack.c.l.b16 %v58
  %v345 = vunpack.c.l.b16 %v59
  %v346 = vunpack.c.l.b16 %v60
  %v347 = vunpack.c.l.b16 %v61
  %v348 = vunpack.c.l.b16 %v62
  %v349 = vunpack.c.l.b16 %v63
  %v350 = vunpack.c.l.b16 %v64
  %v351 = vunpack.c.l.b16 %v65
  %v352 = vunpack.c.l.b16 %v66
  %v353 = vunpack.c.l.b16 %v67
  %v354 = vunpack.c.l.b16 %v68
  %v355 = vunpack.c.l.b16 %v69
  %v356 = vunpack.c.l.b16 %v70
  %v357 = vunpack.c.l.b16 %v71
  %v358 = vunpack.c.l.b16 %v72
  %v359 = vunpack.c.l.b16 %v73
  %v360 = vunpack.c.l.b16 %v74
  %v361 = vunpack.c.l.b16 %v75
  %v362 = vunpack.c.l.b16 %v76
  %v363 = vunpack.c.l.b16 %v77
  %v364 = vunpack.c.l.b16 %v78
  %v365 = vunpack.c.l.b16 %v79
  %v366 = vunpack.c.l.b16 %v80
  %v367 = vunpack.c.l.b16 %v81
  %v368 = vunpack.c.l.b16 %v82
  %v369 = vunpack.c.l.b16 %v83
  %v370 = vunpack.c.l.b16 %v84
  %v371 = vunpack.c.l.b16 %v85
  %v372 = vunpack.c.l.b16 %v86
  %v373 = vunpack.c.l.b16 %v87
  %v374 = vunpack.c.l.b16 %v88
  %v375 = vunpack.c.l.b16 %v89
  %v376 = vunpack.c.l.b16 %v90
  %v377 = vunpack.c.l.b16 %v91
  %v378 = vunpack.c.l.b16 %v92
  %v379 = vunpack.c.l.b16 %v93
  %v380 = vunpack.c.l.b16 %v94
  %v381 = vunpack.c.l.b16 %v95
  %v382 = vunpack.c.l.b16 %v96
  %v383 = vunpack.c.l.b16 %v97
  %v384 = vunpack.c.l.b16 %v98
  %v385 = vunpack.c.l.b16 %v99
  %v386 = vunpack.c.l.b16 %v100
  %v387 = vunpack.c.l.b16 %v101
  %v388 = vunpack.c.l.b16 %v102
  %v389 = vunpack.c.l.b16 %v103
  %v390 = vunpack.c.l.b16 %v104
  %v391 = vunpack.c.l.b16 %v105
  %v392 = vunpack.c.l.b16 %v106
  %v393 = vunpack.c.l.b16 %v107
  %v394 = vunpack.c.l.b16 %v108
  %v395 = vunpack.c.l.b16 %v109
  %v396 = vunpack.c.l.b16 %v110
  %v397 = vunpack.c.l.b16 %v111
  %v398 = vunpack.c.l.b16 %v112
  %v399 = vunpack.c.l.b16 %v113
  %v400 = vunpack.c.l.b16 %v114
  %v401 = vunpack.c.l.b16 %v115
  %v402 = vunpack.c.l.b16 %v116
  %v403 = vunpack.c.l.b16 %v117
  %v404 = vunpack.c.l.b16 %v118
  %v405 = vunpack.c.l.b16 %v119
  %v406 = vunpack.c.l.b16 %v120
  %v407 = vunpack.c.l.b16 %v121
  %v408 = vunpack.c.l.b16 %v122
  %v409 = vunpack.c.l.b16 %v123
  %v410 = vunpack.c.l.b16 %v124
  %v411 = vunpack.c.l.b16 %v125
  %v412 = vunpack.c.l.b16 %v126
  %v413 = vunpack.c.l.b16 %v127
  %v414 = vunpack.c.l.b16 %v128
  %v415 = vunpack.c.l.b16 %v129
  %v416 = vunpack.c.l.b16 %v130
  %v417 = vunpack.c.l.b16 %v131
  %v418 = vunpack.c.l.b16 %v132
  %v419 = vunpack.c.l.b16 %v133
  %v420 = vunpack.c.l.b16 %v134
  %v421 = vunpack.c.l.b16 %v135
  %v422 = vpack.c.b16 %v315, %v314
  %v423 = vpack.c.b16 %v317, %v316
  %v424 = vpack.c.b16 %v319, %v318
  %v425 = vpack.c.b16 %v321, %v320
  %v426 = vpack.c.b16 %v323, %v322
  %v427 = vpack.c.b16 %v325, %v324
  %v428 = vpack.c.b16 %v327, %v326
  %v429 = vpack.c.b16 %v329, %v328
  %v430 = vpack.c.b16 %v331, %v330
  %v431 = vpack.c.b16 %v333, %v332
  %v432 = vpack.c.b16 %v335, %v334
  %v433 = vpack.c.b16 %v337, %v336
  %v434 = vpack.c.b16 %v339, %v338
  %v435 = vpack.c.b16 %v341, %v340
  %v436 = vpack.c.b16 %v343, %v342
  %v437 = vpack.c.b16 %v345, %v344
  %v438 = vpack.c.b16 %v347, %v346
  %v439 = vpack.c.b16 %v349, %v348
  %v440 = vpack.c.b16 %v351, %v350
  %v441 = vpack.c.b16 %v353, %v352
  %v442 = vpack.c.b16 %v355, %v354
  %v443 = vpack.c.b16 %v357, %v356
  %v444 = vpack.c.b16 %v359, %v358
  %v445 = vpack.c.b16 %v361, %v360
  %v446 = vpack.c.b16 %v363, %v362
  %v447 = vpack.c.b16 %v365, %v364
  %v448 = vpack.c.b16 %v367, %v366
  %v449 = vpack.c.b16 %v369, %v368
  %v450 = vpack.c.b16 %v371, %v370
  %v451 = vpack.c.b16 %v373, %v372
  %v452 = vpack.c.b16 %v375, %v374
  %v453 = vpack.c.b16 %v377, %v376
  %v454 = vpack.c.b16 %v379, %v378
  %v455 = vpack.c.b16 %v381, %v380
  %v456 = vpack.c.b16 %v383, %v382
  %v457 = vpack.c.b16 %v385, %v384
  %v458 = vpack.c.b16 %v387, %v386
  %v459 = vpack.c.b16 %v389, %v388
  %v460 = vpack.c.b16 %v391, %v390
  %v461 = vpack.c.b16 %v393, %v392
  %v462 = vpack.c.b16 %v395, %v394
  %v463 = vpack.c.b16 %v397, %v396
  %v464 = vpack.c.b16 %v399, %v398
  %v465 = vpack.c.b16 %v401, %v400
  %v466 = vpack.c.b16 %v403, %v402
  %v467 = vpack.c.b16 %v405, %v404
  %v468 = vpack.c.b16 %v407, %v406
  %v469 = vpack.c.b16 %v409, %v408
  %v470 = vpack.c.b16 %v411, %v410
  %v471 = vpack.c.b16 %v413, %v412
  %v472 = vpack.c.b16 %v415, %v414
  %v473 = vpack.c.b16 %v417, %v416
  %v474 = vpack.c.b16 %v419, %v418
  %v475 = vpack.c.b16 %v421, %v420
  %vm530 = vcmask 785408
  %v532 = vsel %vm530, %v186, 0
  %v535 = vsel %vm530, %v193, 0
  %537 = vmatprep.subr.bf16.mxu0 0
  %538 = vmatpush1.bf16.msra.mxu0 %v422
  %539 = vmatprep.subr.bf16.mxu0 0
  %540 = vmatpush1.bf16.msra.mxu0 %v423
  %541 = vmatprep.subr.bf16.mxu0 0
  %542 = vmatpush1.bf16.msra.mxu0 %v424
  %543 = vmatprep.subr.bf16.mxu0 0
  %544 = vmatpush1.bf16.msra.mxu0 %v425
  %545 = vmatprep.subr.bf16.mxu0 0
  %546 = vmatpush1.bf16.msra.mxu0 %v426
  %547 = vmatprep.subr.bf16.mxu0 0
  %548 = vmatpush1.bf16.msra.mxu0 %v427
  %549 = vmatprep.subr.bf16.mxu0 0
  %550 = vmatpush1.bf16.msra.mxu0 %v428
  %551 = vmatprep.subr.bf16.mxu0 0
  %552 = vmatpush1.bf16.msra.mxu0 %v429
  %553 = vmatprep.subr.bf16.mxu0 0
  %554 = vmatpush1.bf16.msra.mxu0 %v430
  %555 = vmatprep.subr.bf16.mxu0 0
  %556 = vmatpush1.bf16.msra.mxu0 %v431
  %557 = vmatprep.subr.bf16.mxu0 0
  %558 = vmatpush1.bf16.msra.mxu0 %v432
  %559 = vmatprep.subr.bf16.mxu0 0
  %560 = vmatpush1.bf16.msra.mxu0 %v433
  %561 = vmatprep.subr.bf16.mxu0 0
  %562 = vmatpush1.bf16.msra.mxu0 %v434
  %563 = vmatprep.subr.bf16.mxu0 0
  %564 = vmatpush1.bf16.msra.mxu0 %v435
  %565 = vmatprep.subr.bf16.mxu0 0
  %566 = vmatpush1.bf16.msra.mxu0 %v436
  %567 = vmatprep.subr.bf16.mxu0 0
  %568 = vmatpush1.bf16.msra.mxu0 %v437
  %569 = vmatprep.mubr.bf16.mxu0 %v181
  %570 = vmatmul.mubr.bf16.gmra.mrb[0].mxu0 %v180
  %v571 = vpop.f32.mrb[0].mxu0
  %v572 = vadd.f32 0.0, %v571
  %v573 = vpop.f32.mrb[0].mxu0
  %v574 = vpop.f32.mrb[0].mxu0
  %v575 = vadd.f32 0.0, %v574
  %v576 = vpop.f32.mrb[0].mxu0
  %577 = vmatprep.mubr.bf16.mxu0 %v188
  %578 = vmatmul.mubr.bf16.gmra.mrb[0].mxu0 %v187
  %v579 = vpop.f32.mrb[0].mxu0
  %v580 = vadd.f32 0.0, %v579
  %v581 = vpop.f32.mrb[0].mxu0
  %v582 = vpop.f32.mrb[0].mxu0
  %v583 = vadd.f32 0.0, %v582
  %v584 = vpop.f32.mrb[0].mxu0
  %585 = vdwg.mxu0
  %586 = vmatprep.subr.bf16.mxu0 0
  %587 = vmatpush1.bf16.msra.mxu0 %v438
  %588 = vmatprep.subr.bf16.mxu0 0
  %589 = vmatpush1.bf16.msra.mxu0 %v439
  %590 = vmatprep.subr.bf16.mxu0 0
  %591 = vmatpush1.bf16.msra.mxu0 %v440
  %592 = vmatprep.subr.bf16.mxu0 0
  %593 = vmatpush1.bf16.msra.mxu0 %v441
  %594 = vmatprep.subr.bf16.mxu0 0
  %595 = vmatpush1.bf16.msra.mxu0 %v442
  %596 = vmatprep.subr.bf16.mxu0 0
  %597 = vmatpush1.bf16.msra.mxu0 %v443
  %598 = vmatprep.subr.bf16.mxu0 0
  %599 = vmatpush1.bf16.msra.mxu0 %v444
  %600 = vmatprep.subr.bf16.mxu0 0
  %601 = vmatpush1.bf16.msra.mxu0 %v445
  %602 = vmatprep.subr.bf16.mxu0 0
  %603 = vmatpush1.bf16.msra.mxu0 %v446
  %604 = vmatprep.subr.bf16.mxu0 0
  %605 = vmatpush1.bf16.msra.mxu0 %v447
  %606 = vmatprep.subr.bf16.mxu0 0
  %607 = vmatpush1.bf16.msra.mxu0 %v448
  %608 = vmatprep.subr.bf16.mxu0 0
  %609 = vmatpush1.bf16.msra.mxu0 %v449
  %610 = vmatprep.subr.bf16.mxu0 0
  %611 = vmatpush1.bf16.msra.mxu0 %v450
  %612 = vmatprep.subr.bf16.mxu0 0
  %613 = vmatpush1.bf16.msra.mxu0 %v451
  %614 = vmatprep.subr.bf16.mxu0 0
  %615 = vmatpush1.bf16.msra.mxu0 %v452
  %616 = vmatprep.subr.bf16.mxu0 0
  %617 = vmatpush1.bf16.msra.mxu0 %v453
  %618 = vmatprep.mubr.bf16.mxu0 %v183
  %619 = vmatmul.mubr.bf16.gmra.mrb[0].mxu0 %v182
  %v620 = vpop.f32.mrb[0].mxu0
  %v621 = vadd.f32 %v572, %v620
  %v622 = vpop.f32.mrb[0].mxu0
  %v623 = vpop.f32.mrb[0].mxu0
  %v624 = vadd.f32 %v575, %v623
  %v625 = vpop.f32.mrb[0].mxu0
  %626 = vmatprep.mubr.bf16.mxu0 %v190
  %627 = vmatmul.mubr.bf16.gmra.mrb[0].mxu0 %v189
  %v628 = vpop.f32.mrb[0].mxu0
  %v629 = vadd.f32 %v580, %v628
  %v630 = vpop.f32.mrb[0].mxu0
  %v631 = vpop.f32.mrb[0].mxu0
  %v632 = vadd.f32 %v583, %v631
  %v633 = vpop.f32.mrb[0].mxu0
  %634 = vdwg.mxu0
  %635 = vmatprep.subr.bf16.mxu0 0
  %636 = vmatpush1.bf16.msra.mxu0 %v454
  %637 = vmatprep.subr.bf16.mxu0 0
  %638 = vmatpush1.bf16.msra.mxu0 %v455
  %639 = vmatprep.subr.bf16.mxu0 0
  %640 = vmatpush1.bf16.msra.mxu0 %v456
  %641 = vmatprep.subr.bf16.mxu0 0
  %642 = vmatpush1.bf16.msra.mxu0 %v457
  %643 = vmatprep.subr.bf16.mxu0 0
  %644 = vmatpush1.bf16.msra.mxu0 %v458
  %645 = vmatprep.subr.bf16.mxu0 0
  %646 = vmatpush1.bf16.msra.mxu0 %v459
  %647 = vmatprep.subr.bf16.mxu0 0
  %648 = vmatpush1.bf16.msra.mxu0 %v460
  %649 = vmatprep.subr.bf16.mxu0 0
  %650 = vmatpush1.bf16.msra.mxu0 %v461
  %651 = vmatprep.subr.bf16.mxu0 0
  %652 = vmatpush1.bf16.msra.mxu0 %v462
  %653 = vmatprep.subr.bf16.mxu0 0
  %654 = vmatpush1.bf16.msra.mxu0 %v463
  %655 = vmatprep.subr.bf16.mxu0 0
  %656 = vmatpush1.bf16.msra.mxu0 %v464
  %657 = vmatprep.subr.bf16.mxu0 0
  %658 = vmatpush1.bf16.msra.mxu0 %v465
  %659 = vmatprep.subr.bf16.mxu0 0
  %660 = vmatpush1.bf16.msra.mxu0 %v466
  %661 = vmatprep.subr.bf16.mxu0 0
  %662 = vmatpush1.bf16.msra.mxu0 %v467
  %663 = vmatprep.subr.bf16.mxu0 0
  %664 = vmatpush1.bf16.msra.mxu0 %v468
  %665 = vmatprep.subr.bf16.mxu0 0
  %666 = vmatpush1.bf16.msra.mxu0 %v469
  %667 = vmatprep.mubr.bf16.mxu0 %v185
  %668 = vmatmul.mubr.bf16.gmra.mrb[0].mxu0 %v184
  %v669 = vpop.f32.mrb[0].mxu0
  %v670 = vadd.f32 %v621, %v669
  %v671 = vpop.f32.mrb[0].mxu0
  %v672 = vpop.f32.mrb[0].mxu0
  %v673 = vadd.f32 %v624, %v672
  %v674 = vpop.f32.mrb[0].mxu0
  %675 = vmatprep.mubr.bf16.mxu0 %v192
  %676 = vmatmul.mubr.bf16.gmra.mrb[0].mxu0 %v191
  %v677 = vpop.f32.mrb[0].mxu0
  %v678 = vadd.f32 %v629, %v677
  %v679 = vpop.f32.mrb[0].mxu0
  %v680 = vpop.f32.mrb[0].mxu0
  %v681 = vadd.f32 %v632, %v680
  %v682 = vpop.f32.mrb[0].mxu0
  %683 = vdwg.mxu0
  %684 = vmatprep.subr.bf16.mxu0 0
  %685 = vmatpush1.bf16.msra.mxu0 %v470
  %686 = vmatprep.subr.bf16.mxu0 0
  %687 = vmatpush1.bf16.msra.mxu0 %v471
  %688 = vmatprep.subr.bf16.mxu0 0
  %689 = vmatpush1.bf16.msra.mxu0 %v472
  %690 = vmatprep.subr.bf16.mxu0 0
  %691 = vmatpush1.bf16.msra.mxu0 %v473
  %692 = vmatprep.subr.bf16.mxu0 0
  %693 = vmatpush1.bf16.msra.mxu0 %v474
  %694 = vmatprep.subr.bf16.mxu0 0
  %695 = vmatpush1.bf16.msra.mxu0 %v475
  %696 = vmatprep.subr.bf16.mxu0 0
  %697 = vmatpush1.bf16.msra.mxu0 0
  %698 = vmatprep.subr.bf16.mxu0 0
  %699 = vmatpush1.bf16.msra.mxu0 0
  %700 = vmatprep.subr.bf16.mxu0 0
  %701 = vmatpush1.bf16.msra.mxu0 0
  %702 = vmatprep.subr.bf16.mxu0 0
  %703 = vmatpush1.bf16.msra.mxu0 0
  %704 = vmatprep.subr.bf16.mxu0 0
  %705 = vmatpush1.bf16.msra.mxu0 0
  %706 = vmatprep.subr.bf16.mxu0 0
  %707 = vmatpush1.bf16.msra.mxu0 0
  %708 = vmatprep.subr.bf16.mxu0 0
  %709 = vmatpush1.bf16.msra.mxu0 0
  %710 = vmatprep.subr.bf16.mxu0 0
  %711 = vmatpush1.bf16.msra.mxu0 0
  %712 = vmatprep.subr.bf16.mxu0 0
  %713 = vmatpush1.bf16.msra.mxu0 0
  %714 = vmatprep.subr.bf16.mxu0 0
  %715 = vmatpush1.bf16.msra.mxu0 0
  %716 = vmatprep.mubr.bf16.mxu0 0
  %717 = vmatmul.mubr.bf16.gmra.mrb[0].mxu0 %v532
  %v718 = vpop.f32.mrb[0].mxu0
  %v719 = vadd.f32 %v670, %v718
  %v720 = vpop.f32.mrb[0].mxu0
  %v721 = vpop.f32.mrb[0].mxu0
  %v722 = vadd.f32 %v673, %v721
  %v723 = vpop.f32.mrb[0].mxu0
  %724 = vmatprep.mubr.bf16.mxu0 0
  %725 = vmatmul.mubr.bf16.gmra.mrb[0].mxu0 %v535
  %v726 = vpop.f32.mrb[0].mxu0
  %v727 = vadd.f32 %v678, %v726
  %v728 = vpop.f32.mrb[0].mxu0
  %v729 = vpop.f32.mrb[0].mxu0
  %v730 = vadd.f32 %v681, %v729
  %v731 = vpop.f32.mrb[0].mxu0
  %732 = vdwg.mxu0
  %v733 = vmax.f32 %v719, 0.0
  %v734 = vmax.f32 %v722, 0.0
  %v735 = vmax.f32 %v727, 0.0
  %v736 = vmax.f32 %v730, 0.0
  %v737 = vpack.c.bf16 %v734, %v733
  %v738 = vpack.c.bf16 %v736, %v735
  %v741 = vunpack.c.l.b16 %v737
  %v742 = vunpack.c.h.b16 %v737
  %v743 = vunpack.c.l.b16 %v738
  %v744 = vunpack.c.h.b16 %v738
  %v745 = vpack.c.b16 %v741, %v741
  %v746 = vpack.c.b16 %v742, %v742
  %v747 = vpack.c.b16 %v743, %v743
  %v748 = vpack.c.b16 %v744, %v744
  %vm753 = vcmask 257024
  %754 = vst.msk [vmem:[%s2] sm:$0xf] %vm753, %v745
  %755 = vst.msk [vmem:[%s2 + $0x4] sm:$0xf] %vm753, %v746
  %756 = vst.msk [vmem:[%s2 + $0x8] sm:$0xf] %vm753, %v747
  %757 = vst.msk [vmem:[%s2 + $0xc] sm:$0xf] %vm753, %v748
  // Predicated region
  $region10: #{cost_reg_forward.15} parent=0 // pred_check
    _
  $region11: #{cost_reg_forward.15} parent=0 // pred_check_branch
    %759 = sbr.rel (0) target = $region13
  $region12: #{cost_reg_forward.15} parent=0 // pred_region
    _
  $region13: #{cost_reg_forward.15} parent=0 // pred_fallthru
    _
  // Predicated region
  $region14: #{cost_reg_forward.15} parent=0 // pred_check
    _
  $region15: #{cost_reg_forward.15} parent=0 // pred_check_branch
    %761 = sbr.rel (0) target = $region17
  $region16: #{cost_reg_forward.15} parent=0 // pred_region
    _
  $region17: #{cost_reg_forward.15} parent=0 // pred_fallthru
    _

// kernel: cost_reg_forward.16
$region0: #{cost_reg_forward.16}
  #allocation0 [shape = 'u32[]', space=smem, size = 0x4, offset = 0x4, fixed_abs, tag = 'smem constant byte address 0x4 - core index']
  #allocation1 [shape = 'u32[144,128]{1,0:T(1,128)}', space=vmem, size = 0x12000, scoped, tag = 'internal scratch']
  %s0 = inlined_call_operand.vmem [shape: bf16[4,864], index: 0, kind: input, shape index: {}]
  %s1 = inlined_call_operand.vmem [shape: bf16[864,64], index: 1, kind: input, shape index: {}]
  %s2 = inlined_call_operand.vmem [shape: bf16[4,64], index: 2, kind: output, shape index: {}]
  %s3 = sld [smem:[#allocation0]]
  $region18: #{cost_reg_forward.16} parent=0
    _
  %s5 = ssub.s32 1, %s3
  %s6 = scalar_select 0, %s5, %s3
  // Predicated region
  $region2: #{cost_reg_forward.16} parent=0 // pred_check
    _
  $region3: #{cost_reg_forward.16} parent=0 // pred_check_branch
    %8 = sbr.rel (0) target = $region5
  $region4: #{cost_reg_forward.16} parent=0 // pred_region
    _
  $region5: #{cost_reg_forward.16} parent=0 // pred_fallthru
    _
  // Predicated region
  $region6: #{cost_reg_forward.16} parent=0 // pred_check
    _
  $region7: #{cost_reg_forward.16} parent=0 // pred_check_branch
    %10 = sbr.rel (0) target = $region9
  $region8: #{cost_reg_forward.16} parent=0 // pred_region
    _
  $region9: #{cost_reg_forward.16} parent=0 // pred_fallthru
    _
  %v12 = vld [vmem:[%s0] sm:$0xff]
  %v13 = vld [vmem:[%s0 + $0x8] sm:$0x3f]
  %v14 = vld [vmem:[%s1] sm:$0xf]
  %v15 = vld [vmem:[%s1 + $0x4] sm:$0xf]
  %v16 = vld [vmem:[%s1 + $0x8] sm:$0xf]
  %v17 = vld [vmem:[%s1 + $0xc] sm:$0xf]
  %v18 = vld [vmem:[%s1 + $0x10] sm:$0xf]
  %v19 = vld [vmem:[%s1 + $0x14] sm:$0xf]
  %v20 = vld [vmem:[%s1 + $0x18] sm:$0xf]
  %v21 = vld [vmem:[%s1 + $0x1c] sm:$0xf]
  %v22 = vld [vmem:[%s1 + $0x20] sm:$0xf]
  %v23 = vld [vmem:[%s1 + $0x24] sm:$0xf]
  %v24 = vld [vmem:[%s1 + $0x28] sm:$0xf]
  %v25 = vld [vmem:[%s1 + $0x2c] sm:$0xf]
  %v26 = vld [vmem:[%s1 + $0x30] sm:$0xf]
  %v27 = vld [vmem:[%s1 + $0x34] sm:$0xf]
  %v28 = vld [vmem:[%s1 + $0x38] sm:$0xf]
  %v29 = vld [vmem:[%s1 + $0x3c] sm:$0xf]
  %v30 = vld [vmem:[%s1 + $0x40] sm:$0xf]
  %v31 = vld [vmem:[%s1 + $0x44] sm:$0xf]
  %v32 = vld [vmem:[%s1 + $0x48] sm:$0xf]
  %v33 = vld [vmem:[%s1 + $0x4c] sm:$0xf]
  %v34 = vld [vmem:[%s1 + $0x50] sm:$0xf]
  %v35 = vld [vmem:[%s1 + $0x54] sm:$0xf]
  %v36 = vld [vmem:[%s1 + $0x58] sm:$0xf]
  %v37 = vld [vmem:[%s1 + $0x5c] sm:$0xf]
  %v38 = vld [vmem:[%s1 + $0x60] sm:$0xf]
  %v39 = vld [vmem:[%s1 + $0x64] sm:$0xf]
  %v40 = vld [vmem:[%s1 + $0x68] sm:$0xf]
  %v41 = vld [vmem:[%s1 + $0x6c] sm:$0xf]
  %v42 = vld [vmem:[%s1 + $0x70] sm:$0xf]
  %v43 = vld [vmem:[%s1 + $0x74] sm:$0xf]
  %v44 = vld [vmem:[%s1 + $0x78] sm:$0xf]
  %v45 = vld [vmem:[%s1 + $0x7c] sm:$0xf]
  %v46 = vld [vmem:[%s1 + $0x80] sm:$0xf]
  %v47 = vld [vmem:[%s1 + $0x84] sm:$0xf]
  %v48 = vld [vmem:[%s1 + $0x88] sm:$0xf]
  %v49 = vld [vmem:[%s1 + $0x8c] sm:$0xf]
  %v50 = vld [vmem:[%s1 + $0x90] sm:$0xf]
  %v51 = vld [vmem:[%s1 + $0x94] sm:$0xf]
  %v52 = vld [vmem:[%s1 + $0x98] sm:$0xf]
  %v53 = vld [vmem:[%s1 + $0x9c] sm:$0xf]
  %v54 = vld [vmem:[%s1 + $0xa0] sm:$0xf]
  %v55 = vld [vmem:[%s1 + $0xa4] sm:$0xf]
  %v56 = vld [vmem:[%s1 + $0xa8] sm:$0xf]
  %v57 = vld [vmem:[%s1 + $0xac] sm:$0xf]
  %v58 = vld [vmem:[%s1 + $0xb0] sm:$0xf]
  %v59 = vld [vmem:[%s1 + $0xb4] sm:$0xf]
  %v60 = vld [vmem:[%s1 + $0xb8] sm:$0xf]
  %v61 = vld [vmem:[%s1 + $0xbc] sm:$0xf]
  %v62 = vld [vmem:[%s1 + $0xc0] sm:$0xf]
  %v63 = vld [vmem:[%s1 + $0xc4] sm:$0xf]
  %v64 = vld [vmem:[%s1 + $0xc8] sm:$0xf]
  %v65 = vld [vmem:[%s1 + $0xcc] sm:$0xf]
  %v66 = vld [vmem:[%s1 + $0xd0] sm:$0xf]
  %v67 = vld [vmem:[%s1 + $0xd4] sm:$0xf]
  %v68 = vld [vmem:[%s1 + $0xd8] sm:$0xf]
  %v69 = vld [vmem:[%s1 + $0xdc] sm:$0xf]
  %v70 = vld [vmem:[%s1 + $0xe0] sm:$0xf]
  %v71 = vld [vmem:[%s1 + $0xe4] sm:$0xf]
  %v72 = vld [vmem:[%s1 + $0xe8] sm:$0xf]
  %v73 = vld [vmem:[%s1 + $0xec] sm:$0xf]
  %v74 = vld [vmem:[%s1 + $0xf0] sm:$0xf]
  %v75 = vld [vmem:[%s1 + $0xf4] sm:$0xf]
  %v76 = vld [vmem:[%s1 + $0xf8] sm:$0xf]
  %v77 = vld [vmem:[%s1 + $0xfc] sm:$0xf]
  %v78 = vld [vmem:[%s1 + $0x100] sm:$0xf]
  %v79 = vld [vmem:[%s1 + $0x104] sm:$0xf]
  %v80 = vld [vmem:[%s1 + $0x108] sm:$0xf]
  %v81 = vld [vmem:[%s1 + $0x10c] sm:$0xf]
  %v82 = vld [vmem:[%s1 + $0x110] sm:$0xf]
  %v83 = vld [vmem:[%s1 + $0x114] sm:$0xf]
  %v84 = vld [vmem:[%s1 + $0x118] sm:$0xf]
  %v85 = vld [vmem:[%s1 + $0x11c] sm:$0xf]
  %v86 = vld [vmem:[%s1 + $0x120] sm:$0xf]
  %v87 = vld [vmem:[%s1 + $0x124] sm:$0xf]
  %v88 = vld [vmem:[%s1 + $0x128] sm:$0xf]
  %v89 = vld [vmem:[%s1 + $0x12c] sm:$0xf]
  %v90 = vld [vmem:[%s1 + $0x130] sm:$0xf]
  %v91 = vld [vmem:[%s1 + $0x134] sm:$0xf]
  %v92 = vld [vmem:[%s1 + $0x138] sm:$0xf]
  %v93 = vld [vmem:[%s1 + $0x13c] sm:$0xf]
  %v94 = vld [vmem:[%s1 + $0x140] sm:$0xf]
  %v95 = vld [vmem:[%s1 + $0x144] sm:$0xf]
  %v96 = vld [vmem:[%s1 + $0x148] sm:$0xf]
  %v97 = vld [vmem:[%s1 + $0x14c] sm:$0xf]
  %v98 = vld [vmem:[%s1 + $0x150] sm:$0xf]
  %v99 = vld [vmem:[%s1 + $0x154] sm:$0xf]
  %v100 = vld [vmem:[%s1 + $0x158] sm:$0xf]
  %v101 = vld [vmem:[%s1 + $0x15c] sm:$0xf]
  %v102 = vld [vmem:[%s1 + $0x160] sm:$0xf]
  %v103 = vld [vmem:[%s1 + $0x164] sm:$0xf]
  %v104 = vld [vmem:[%s1 + $0x168] sm:$0xf]
  %v105 = vld [vmem:[%s1 + $0x16c] sm:$0xf]
  %v106 = vld [vmem:[%s1 + $0x170] sm:$0xf]
  %v107 = vld [vmem:[%s1 + $0x174] sm:$0xf]
  %v108 = vld [vmem:[%s1 + $0x178] sm:$0xf]
  %v109 = vld [vmem:[%s1 + $0x17c] sm:$0xf]
  %v110 = vld [vmem:[%s1 + $0x180] sm:$0xf]
  %v111 = vld [vmem:[%s1 + $0x184] sm:$0xf]
  %v112 = vld [vmem:[%s1 + $0x188] sm:$0xf]
  %v113 = vld [vmem:[%s1 + $0x18c] sm:$0xf]
  %v114 = vld [vmem:[%s1 + $0x190] sm:$0xf]
  %v115 = vld [vmem:[%s1 + $0x194] sm:$0xf]
  %v116 = vld [vmem:[%s1 + $0x198] sm:$0xf]
  %v117 = vld [vmem:[%s1 + $0x19c] sm:$0xf]
  %v118 = vld [vmem:[%s1 + $0x1a0] sm:$0xf]
  %v119 = vld [vmem:[%s1 + $0x1a4] sm:$0xf]
  %v120 = vld [vmem:[%s1 + $0x1a8] sm:$0xf]
  %v121 = vld [vmem:[%s1 + $0x1ac] sm:$0xf]
  %v124 = vcombine.high %v12, %v12
  %v126 = vunpack.c.l.s4 1983009808
  %v127 = vunpack.c.0.s8 %v126
  %v128 = vlaneseq
  %v129 = vshrl.u32 %v128, 7
  %v130 = vsub.s32 %v127, %v129
  %v131 = vrot.slane %v12, %v130
  %v133 = vunpack.c.l.s4 1983009808
  %v134 = vunpack.c.0.s8 %v133
  %v135 = vlaneseq
  %v136 = vshrl.u32 %v135, 7
  %v137 = vsub.s32 %v134, %v136
  %v138 = vrot.slane %v124, %v137
  %v139 = vcombine.high %v131, %v131
  %v140 = vcombine.high %v138, %v138
  %v141 = vcombine.high %v13, %v13
  %v143 = vunpack.c.l.s4 1983009808
  %v144 = vunpack.c.0.s8 %v143
  %v145 = vlaneseq
  %v146 = vshrl.u32 %v145, 7
  %v147 = vsub.s32 %v144, %v146
  %v148 = vrot.slane %v13, %v147
  %v150 = vunpack.c.l.s4 1983009808
  %v151 = vunpack.c.0.s8 %v150
  %v152 = vlaneseq
  %v153 = vshrl.u32 %v152, 7
  %v154 = vsub.s32 %v151, %v153
  %v155 = vrot.slane %v141, %v154
  %v156 = vcombine.high %v148, %v148
  %v271 = vunpack.c.l.b16 %v14
  %v272 = vunpack.c.l.b16 %v15
  %v273 = vunpack.c.l.b16 %v16
  %v274 = vunpack.c.l.b16 %v17
  %v275 = vunpack.c.l.b16 %v18
  %v276 = vunpack.c.l.b16 %v19
  %v277 = vunpack.c.l.b16 %v20
  %v278 = vunpack.c.l.b16 %v21
  %v279 = vunpack.c.l.b16 %v22
  %v280 = vunpack.c.l.b16 %v23
  %v281 = vunpack.c.l.b16 %v24
  %v282 = vunpack.c.l.b16 %v25
  %v283 = vunpack.c.l.b16 %v26
  %v284 = vunpack.c.l.b16 %v27
  %v285 = vunpack.c.l.b16 %v28
  %v286 = vunpack.c.l.b16 %v29
  %v287 = vunpack.c.l.b16 %v30
  %v288 = vunpack.c.l.b16 %v31
  %v289 = vunpack.c.l.b16 %v32
  %v290 = vunpack.c.l.b16 %v33
  %v291 = vunpack.c.l.b16 %v34
  %v292 = vunpack.c.l.b16 %v35
  %v293 = vunpack.c.l.b16 %v36
  %v294 = vunpack.c.l.b16 %v37
  %v295 = vunpack.c.l.b16 %v38
  %v296 = vunpack.c.l.b16 %v39
  %v297 = vunpack.c.l.b16 %v40
  %v298 = vunpack.c.l.b16 %v41
  %v299 = vunpack.c.l.b16 %v42
  %v300 = vunpack.c.l.b16 %v43
  %v301 = vunpack.c.l.b16 %v44
  %v302 = vunpack.c.l.b16 %v45
  %v303 = vunpack.c.l.b16 %v46
  %v304 = vunpack.c.l.b16 %v47
  %v305 = vunpack.c.l.b16 %v48
  %v306 = vunpack.c.l.b16 %v49
  %v307 = vunpack.c.l.b16 %v50
  %v308 = vunpack.c.l.b16 %v51
  %v309 = vunpack.c.l.b16 %v52
  %v310 = vunpack.c.l.b16 %v53
  %v311 = vunpack.c.l.b16 %v54
  %v312 = vunpack.c.l.b16 %v55
  %v313 = vunpack.c.l.b16 %v56
  %v314 = vunpack.c.l.b16 %v57
  %v315 = vunpack.c.l.b16 %v58
  %v316 = vunpack.c.l.b16 %v59
  %v317 = vunpack.c.l.b16 %v60
  %v318 = vunpack.c.l.b16 %v61
  %v319 = vunpack.c.l.b16 %v62
  %v320 = vunpack.c.l.b16 %v63
  %v321 = vunpack.c.l.b16 %v64
  %v322 = vunpack.c.l.b16 %v65
  %v323 = vunpack.c.l.b16 %v66
  %v324 = vunpack.c.l.b16 %v67
  %v325 = vunpack.c.l.b16 %v68
  %v326 = vunpack.c.l.b16 %v69
  %v327 = vunpack.c.l.b16 %v70
  %v328 = vunpack.c.l.b16 %v71
  %v329 = vunpack.c.l.b16 %v72
  %v330 = vunpack.c.l.b16 %v73
  %v331 = vunpack.c.l.b16 %v74
  %v332 = vunpack.c.l.b16 %v75
  %v333 = vunpack.c.l.b16 %v76
  %v334 = vunpack.c.l.b16 %v77
  %v335 = vunpack.c.l.b16 %v78
  %v336 = vunpack.c.l.b16 %v79
  %v337 = vunpack.c.l.b16 %v80
  %v338 = vunpack.c.l.b16 %v81
  %v339 = vunpack.c.l.b16 %v82
  %v340 = vunpack.c.l.b16 %v83
  %v341 = vunpack.c.l.b16 %v84
  %v342 = vunpack.c.l.b16 %v85
  %v343 = vunpack.c.l.b16 %v86
  %v344 = vunpack.c.l.b16 %v87
  %v345 = vunpack.c.l.b16 %v88
  %v346 = vunpack.c.l.b16 %v89
  %v347 = vunpack.c.l.b16 %v90
  %v348 = vunpack.c.l.b16 %v91
  %v349 = vunpack.c.l.b16 %v92
  %v350 = vunpack.c.l.b16 %v93
  %v351 = vunpack.c.l.b16 %v94
  %v352 = vunpack.c.l.b16 %v95
  %v353 = vunpack.c.l.b16 %v96
  %v354 = vunpack.c.l.b16 %v97
  %v355 = vunpack.c.l.b16 %v98
  %v356 = vunpack.c.l.b16 %v99
  %v357 = vunpack.c.l.b16 %v100
  %v358 = vunpack.c.l.b16 %v101
  %v359 = vunpack.c.l.b16 %v102
  %v360 = vunpack.c.l.b16 %v103
  %v361 = vunpack.c.l.b16 %v104
  %v362 = vunpack.c.l.b16 %v105
  %v363 = vunpack.c.l.b16 %v106
  %v364 = vunpack.c.l.b16 %v107
  %v365 = vunpack.c.l.b16 %v108
  %v366 = vunpack.c.l.b16 %v109
  %v367 = vunpack.c.l.b16 %v110
  %v368 = vunpack.c.l.b16 %v111
  %v369 = vunpack.c.l.b16 %v112
  %v370 = vunpack.c.l.b16 %v113
  %v371 = vunpack.c.l.b16 %v114
  %v372 = vunpack.c.l.b16 %v115
  %v373 = vunpack.c.l.b16 %v116
  %v374 = vunpack.c.l.b16 %v117
  %v375 = vunpack.c.l.b16 %v118
  %v376 = vunpack.c.l.b16 %v119
  %v377 = vunpack.c.l.b16 %v120
  %v378 = vunpack.c.l.b16 %v121
  %v379 = vpack.c.b16 %v272, %v271
  %v380 = vpack.c.b16 %v274, %v273
  %v381 = vpack.c.b16 %v276, %v275
  %v382 = vpack.c.b16 %v278, %v277
  %v383 = vpack.c.b16 %v280, %v279
  %v384 = vpack.c.b16 %v282, %v281
  %v385 = vpack.c.b16 %v284, %v283
  %v386 = vpack.c.b16 %v286, %v285
  %v387 = vpack.c.b16 %v288, %v287
  %v388 = vpack.c.b16 %v290, %v289
  %v389 = vpack.c.b16 %v292, %v291
  %v390 = vpack.c.b16 %v294, %v293
  %v391 = vpack.c.b16 %v296, %v295
  %v392 = vpack.c.b16 %v298, %v297
  %v393 = vpack.c.b16 %v300, %v299
  %v394 = vpack.c.b16 %v302, %v301
  %v395 = vpack.c.b16 %v304, %v303
  %v396 = vpack.c.b16 %v306, %v305
  %v397 = vpack.c.b16 %v308, %v307
  %v398 = vpack.c.b16 %v310, %v309
  %v399 = vpack.c.b16 %v312, %v311
  %v400 = vpack.c.b16 %v314, %v313
  %v401 = vpack.c.b16 %v316, %v315
  %v402 = vpack.c.b16 %v318, %v317
  %v403 = vpack.c.b16 %v320, %v319
  %v404 = vpack.c.b16 %v322, %v321
  %v405 = vpack.c.b16 %v324, %v323
  %v406 = vpack.c.b16 %v326, %v325
  %v407 = vpack.c.b16 %v328, %v327
  %v408 = vpack.c.b16 %v330, %v329
  %v409 = vpack.c.b16 %v332, %v331
  %v410 = vpack.c.b16 %v334, %v333
  %v411 = vpack.c.b16 %v336, %v335
  %v412 = vpack.c.b16 %v338, %v337
  %v413 = vpack.c.b16 %v340, %v339
  %v414 = vpack.c.b16 %v342, %v341
  %v415 = vpack.c.b16 %v344, %v343
  %v416 = vpack.c.b16 %v346, %v345
  %v417 = vpack.c.b16 %v348, %v347
  %v418 = vpack.c.b16 %v350, %v349
  %v419 = vpack.c.b16 %v352, %v351
  %v420 = vpack.c.b16 %v354, %v353
  %v421 = vpack.c.b16 %v356, %v355
  %v422 = vpack.c.b16 %v358, %v357
  %v423 = vpack.c.b16 %v360, %v359
  %v424 = vpack.c.b16 %v362, %v361
  %v425 = vpack.c.b16 %v364, %v363
  %v426 = vpack.c.b16 %v366, %v365
  %v427 = vpack.c.b16 %v368, %v367
  %v428 = vpack.c.b16 %v370, %v369
  %v429 = vpack.c.b16 %v372, %v371
  %v430 = vpack.c.b16 %v374, %v373
  %v431 = vpack.c.b16 %v376, %v375
  %v432 = vpack.c.b16 %v378, %v377
  %vm487 = vcmask 785408
  %v489 = vsel %vm487, %v155, 0
  %491 = vmatprep.subr.bf16.mxu0 0
  %492 = vmatpush1.bf16.msra.mxu0 %v379
  %493 = vmatprep.subr.bf16.mxu0 0
  %494 = vmatpush1.bf16.msra.mxu0 %v380
  %495 = vmatprep.subr.bf16.mxu0 0
  %496 = vmatpush1.bf16.msra.mxu0 %v381
  %497 = vmatprep.subr.bf16.mxu0 0
  %498 = vmatpush1.bf16.msra.mxu0 %v382
  %499 = vmatprep.subr.bf16.mxu0 0
  %500 = vmatpush1.bf16.msra.mxu0 %v383
  %501 = vmatprep.subr.bf16.mxu0 0
  %502 = vmatpush1.bf16.msra.mxu0 %v384
  %503 = vmatprep.subr.bf16.mxu0 0
  %504 = vmatpush1.bf16.msra.mxu0 %v385
  %505 = vmatprep.subr.bf16.mxu0 0
  %506 = vmatpush1.bf16.msra.mxu0 %v386
  %507 = vmatprep.subr.bf16.mxu0 0
  %508 = vmatpush1.bf16.msra.mxu0 %v387
  %509 = vmatprep.subr.bf16.mxu0 0
  %510 = vmatpush1.bf16.msra.mxu0 %v388
  %511 = vmatprep.subr.bf16.mxu0 0
  %512 = vmatpush1.bf16.msra.mxu0 %v389
  %513 = vmatprep.subr.bf16.mxu0 0
  %514 = vmatpush1.bf16.msra.mxu0 %v390
  %515 = vmatprep.subr.bf16.mxu0 0
  %516 = vmatpush1.bf16.msra.mxu0 %v391
  %517 = vmatprep.subr.bf16.mxu0 0
  %518 = vmatpush1.bf16.msra.mxu0 %v392
  %519 = vmatprep.subr.bf16.mxu0 0
  %520 = vmatpush1.bf16.msra.mxu0 %v393
  %521 = vmatprep.subr.bf16.mxu0 0
  %522 = vmatpush1.bf16.msra.mxu0 %v394
  %523 = vmatprep.mubr.bf16.mxu0 %v139
  %524 = vmatmul.mubr.bf16.gmra.mrb[0].mxu0 %v131
  %v525 = vpop.f32.mrb[0].mxu0
  %v526 = vadd.f32 0.0, %v525
  %v527 = vpop.f32.mrb[0].mxu0
  %v528 = vpop.f32.mrb[0].mxu0
  %v529 = vpop.f32.mrb[0].mxu0
  %530 = vdwg.mxu0
  %531 = vmatprep.subr.bf16.mxu0 0
  %532 = vmatpush1.bf16.msra.mxu0 %v395
  %533 = vmatprep.subr.bf16.mxu0 0
  %534 = vmatpush1.bf16.msra.mxu0 %v396
  %535 = vmatprep.subr.bf16.mxu0 0
  %536 = vmatpush1.bf16.msra.mxu0 %v397
  %537 = vmatprep.subr.bf16.mxu0 0
  %538 = vmatpush1.bf16.msra.mxu0 %v398
  %539 = vmatprep.subr.bf16.mxu0 0
  %540 = vmatpush1.bf16.msra.mxu0 %v399
  %541 = vmatprep.subr.bf16.mxu0 0
  %542 = vmatpush1.bf16.msra.mxu0 %v400
  %543 = vmatprep.subr.bf16.mxu0 0
  %544 = vmatpush1.bf16.msra.mxu0 %v401
  %545 = vmatprep.subr.bf16.mxu0 0
  %546 = vmatpush1.bf16.msra.mxu0 %v402
  %547 = vmatprep.subr.bf16.mxu0 0
  %548 = vmatpush1.bf16.msra.mxu0 %v403
  %549 = vmatprep.subr.bf16.mxu0 0
  %550 = vmatpush1.bf16.msra.mxu0 %v404
  %551 = vmatprep.subr.bf16.mxu0 0
  %552 = vmatpush1.bf16.msra.mxu0 %v405
  %553 = vmatprep.subr.bf16.mxu0 0
  %554 = vmatpush1.bf16.msra.mxu0 %v406
  %555 = vmatprep.subr.bf16.mxu0 0
  %556 = vmatpush1.bf16.msra.mxu0 %v407
  %557 = vmatprep.subr.bf16.mxu0 0
  %558 = vmatpush1.bf16.msra.mxu0 %v408
  %559 = vmatprep.subr.bf16.mxu0 0
  %560 = vmatpush1.bf16.msra.mxu0 %v409
  %561 = vmatprep.subr.bf16.mxu0 0
  %562 = vmatpush1.bf16.msra.mxu0 %v410
  %563 = vmatprep.mubr.bf16.mxu0 %v140
  %564 = vmatmul.mubr.bf16.gmra.mrb[0].mxu0 %v138
  %v565 = vpop.f32.mrb[0].mxu0
  %v566 = vadd.f32 %v526, %v565
  %v567 = vpop.f32.mrb[0].mxu0
  %v568 = vpop.f32.mrb[0].mxu0
  %v569 = vpop.f32.mrb[0].mxu0
  %570 = vdwg.mxu0
  %571 = vmatprep.subr.bf16.mxu0 0
  %572 = vmatpush1.bf16.msra.mxu0 %v411
  %573 = vmatprep.subr.bf16.mxu0 0
  %574 = vmatpush1.bf16.msra.mxu0 %v412
  %575 = vmatprep.subr.bf16.mxu0 0
  %576 = vmatpush1.bf16.msra.mxu0 %v413
  %577 = vmatprep.subr.bf16.mxu0 0
  %578 = vmatpush1.bf16.msra.mxu0 %v414
  %579 = vmatprep.subr.bf16.mxu0 0
  %580 = vmatpush1.bf16.msra.mxu0 %v415
  %581 = vmatprep.subr.bf16.mxu0 0
  %582 = vmatpush1.bf16.msra.mxu0 %v416
  %583 = vmatprep.subr.bf16.mxu0 0
  %584 = vmatpush1.bf16.msra.mxu0 %v417
  %585 = vmatprep.subr.bf16.mxu0 0
  %586 = vmatpush1.bf16.msra.mxu0 %v418
  %587 = vmatprep.subr.bf16.mxu0 0
  %588 = vmatpush1.bf16.msra.mxu0 %v419
  %589 = vmatprep.subr.bf16.mxu0 0
  %590 = vmatpush1.bf16.msra.mxu0 %v420
  %591 = vmatprep.subr.bf16.mxu0 0
  %592 = vmatpush1.bf16.msra.mxu0 %v421
  %593 = vmatprep.subr.bf16.mxu0 0
  %594 = vmatpush1.bf16.msra.mxu0 %v422
  %595 = vmatprep.subr.bf16.mxu0 0
  %596 = vmatpush1.bf16.msra.mxu0 %v423
  %597 = vmatprep.subr.bf16.mxu0 0
  %598 = vmatpush1.bf16.msra.mxu0 %v424
  %599 = vmatprep.subr.bf16.mxu0 0
  %600 = vmatpush1.bf16.msra.mxu0 %v425
  %601 = vmatprep.subr.bf16.mxu0 0
  %602 = vmatpush1.bf16.msra.mxu0 %v426
  %603 = vmatprep.mubr.bf16.mxu0 %v156
  %604 = vmatmul.mubr.bf16.gmra.mrb[0].mxu0 %v148
  %v605 = vpop.f32.mrb[0].mxu0
  %v606 = vadd.f32 %v566, %v605
  %v607 = vpop.f32.mrb[0].mxu0
  %v608 = vpop.f32.mrb[0].mxu0
  %v609 = vpop.f32.mrb[0].mxu0
  %610 = vdwg.mxu0
  %611 = vmatprep.subr.bf16.mxu0 0
  %612 = vmatpush1.bf16.msra.mxu0 %v427
  %613 = vmatprep.subr.bf16.mxu0 0
  %614 = vmatpush1.bf16.msra.mxu0 %v428
  %615 = vmatprep.subr.bf16.mxu0 0
  %616 = vmatpush1.bf16.msra.mxu0 %v429
  %617 = vmatprep.subr.bf16.mxu0 0
  %618 = vmatpush1.bf16.msra.mxu0 %v430
  %619 = vmatprep.subr.bf16.mxu0 0
  %620 = vmatpush1.bf16.msra.mxu0 %v431
  %621 = vmatprep.subr.bf16.mxu0 0
  %622 = vmatpush1.bf16.msra.mxu0 %v432
  %623 = vmatprep.subr.bf16.mxu0 0
  %624 = vmatpush1.bf16.msra.mxu0 0
  %625 = vmatprep.subr.bf16.mxu0 0
  %626 = vmatpush1.bf16.msra.mxu0 0
  %627 = vmatprep.subr.bf16.mxu0 0
  %628 = vmatpush1.bf16.msra.mxu0 0
  %629 = vmatprep.subr.bf16.mxu0 0
  %630 = vmatpush1.bf16.msra.mxu0 0
  %631 = vmatprep.subr.bf16.mxu0 0
  %632 = vmatpush1.bf16.msra.mxu0 0
  %633 = vmatprep.subr.bf16.mxu0 0
  %634 = vmatpush1.bf16.msra.mxu0 0
  %635 = vmatprep.subr.bf16.mxu0 0
  %636 = vmatpush1.bf16.msra.mxu0 0
  %637 = vmatprep.subr.bf16.mxu0 0
  %638 = vmatpush1.bf16.msra.mxu0 0
  %639 = vmatprep.subr.bf16.mxu0 0
  %640 = vmatpush1.bf16.msra.mxu0 0
  %641 = vmatprep.subr.bf16.mxu0 0
  %642 = vmatpush1.bf16.msra.mxu0 0
  %643 = vmatprep.mubr.bf16.mxu0 0
  %644 = vmatmul.mubr.bf16.gmra.mrb[0].mxu0 %v489
  %v645 = vpop.f32.mrb[0].mxu0
  %v646 = vadd.f32 %v606, %v645
  %v647 = vpop.f32.mrb[0].mxu0
  %v648 = vpop.f32.mrb[0].mxu0
  %v649 = vpop.f32.mrb[0].mxu0
  %650 = vdwg.mxu0
  %v651 = vmax.f32 %v646, 0.0
  %v652 = vpack.c.bf16 %v651, %v651
  %vm653 = vcmask 517120
  %654 = vst.msk [vmem:[%s2] sm:$0x3] %vm653, %v652
  // Predicated region
  $region10: #{cost_reg_forward.16} parent=0 // pred_check
    _
  $region11: #{cost_reg_forward.16} parent=0 // pred_check_branch
    %656 = sbr.rel (0) target = $region13
  $region12: #{cost_reg_forward.16} parent=0 // pred_region
    _
  $region13: #{cost_reg_forward.16} parent=0 // pred_fallthru
    _
  // Predicated region
  $region14: #{cost_reg_forward.16} parent=0 // pred_check
    _
  $region15: #{cost_reg_forward.16} parent=0 // pred_check_branch
    %658 = sbr.rel (0) target = $region17
  $region16: #{cost_reg_forward.16} parent=0 // pred_region
    _
  $region17: #{cost_reg_forward.16} parent=0 // pred_fallthru
    _

// kernel: cost_reg_forward.17
$region0: #{cost_reg_forward.17}
  #allocation0 [shape = 'u32[]', space=smem, size = 0x4, offset = 0x4, fixed_abs, tag = 'smem constant byte address 0x4 - core index']
  #allocation1 [shape = 'u32[144,128]{1,0:T(1,128)}', space=vmem, size = 0x12000, scoped, tag = 'internal scratch']
  %s0 = inlined_call_operand.vmem [shape: bf16[4,1728], index: 0, kind: input, shape index: {}]
  %s1 = inlined_call_operand.vmem [shape: bf16[1728,64], index: 1, kind: input, shape index: {}]
  %s2 = inlined_call_operand.vmem [shape: bf16[4,64], index: 2, kind: output, shape index: {}]
  %s3 = sld [smem:[#allocation0]]
  $region18: #{cost_reg_forward.17} parent=0
    _
  %s5 = ssub.s32 1, %s3
  %s6 = scalar_select 0, %s5, %s3
  // Predicated region
  $region2: #{cost_reg_forward.17} parent=0 // pred_check
    _
  $region3: #{cost_reg_forward.17} parent=0 // pred_check_branch
    %8 = sbr.rel (0) target = $region5
  $region4: #{cost_reg_forward.17} parent=0 // pred_region
    _
  $region5: #{cost_reg_forward.17} parent=0 // pred_fallthru
    _
  // Predicated region
  $region6: #{cost_reg_forward.17} parent=0 // pred_check
    _
  $region7: #{cost_reg_forward.17} parent=0 // pred_check_branch
    %10 = sbr.rel (0) target = $region9
  $region8: #{cost_reg_forward.17} parent=0 // pred_region
    _
  $region9: #{cost_reg_forward.17} parent=0 // pred_fallthru
    _
  %v12 = vld [vmem:[%s0] sm:$0xff]
  %v13 = vld [vmem:[%s0 + $0x8] sm:$0xff]
  %v14 = vld [vmem:[%s0 + $0x10] sm:$0xff]
  %v15 = vld [vmem:[%s0 + $0x18] sm:$0xf]
  %v16 = vld [vmem:[%s1] sm:$0xf]
  %v17 = vld [vmem:[%s1 + $0x4] sm:$0xf]
  %v18 = vld [vmem:[%s1 + $0x8] sm:$0xf]
  %v19 = vld [vmem:[%s1 + $0xc] sm:$0xf]
  %v20 = vld [vmem:[%s1 + $0x10] sm:$0xf]
  %v21 = vld [vmem:[%s1 + $0x14] sm:$0xf]
  %v22 = vld [vmem:[%s1 + $0x18] sm:$0xf]
  %v23 = vld [vmem:[%s1 + $0x1c] sm:$0xf]
  %v24 = vld [vmem:[%s1 + $0x20] sm:$0xf]
  %v25 = vld [vmem:[%s1 + $0x24] sm:$0xf]
  %v26 = vld [vmem:[%s1 + $0x28] sm:$0xf]
  %v27 = vld [vmem:[%s1 + $0x2c] sm:$0xf]
  %v28 = vld [vmem:[%s1 + $0x30] sm:$0xf]
  %v29 = vld [vmem:[%s1 + $0x34] sm:$0xf]
  %v30 = vld [vmem:[%s1 + $0x38] sm:$0xf]
  %v31 = vld [vmem:[%s1 + $0x3c] sm:$0xf]
  %v32 = vld [vmem:[%s1 + $0x40] sm:$0xf]
  %v33 = vld [vmem:[%s1 + $0x44] sm:$0xf]
  %v34 = vld [vmem:[%s1 + $0x48] sm:$0xf]
  %v35 = vld [vmem:[%s1 + $0x4c] sm:$0xf]
  %v36 = vld [vmem:[%s1 + $0x50] sm:$0xf]
  %v37 = vld [vmem:[%s1 + $0x54] sm:$0xf]
  %v38 = vld [vmem:[%s1 + $0x58] sm:$0xf]
  %v39 = vld [vmem:[%s1 + $0x5c] sm:$0xf]
  %v40 = vld [vmem:[%s1 + $0x60] sm:$0xf]
  %v41 = vld [vmem:[%s1 + $0x64] sm:$0xf]
  %v42 = vld [vmem:[%s1 + $0x68] sm:$0xf]
  %v43 = vld [vmem:[%s1 + $0x6c] sm:$0xf]
  %v44 = vld [vmem:[%s1 + $0x70] sm:$0xf]
  %v45 = vld [vmem:[%s1 + $0x74] sm:$0xf]
  %v46 = vld [vmem:[%s1 + $0x78] sm:$0xf]
  %v47 = vld [vmem:[%s1 + $0x7c] sm:$0xf]
  %v48 = vld [vmem:[%s1 + $0x80] sm:$0xf]
  %v49 = vld [vmem:[%s1 + $0x84] sm:$0xf]
  %v50 = vld [vmem:[%s1 + $0x88] sm:$0xf]
  %v51 = vld [vmem:[%s1 + $0x8c] sm:$0xf]
  %v52 = vld [vmem:[%s1 + $0x90] sm:$0xf]
  %v53 = vld [vmem:[%s1 + $0x94] sm:$0xf]
  %v54 = vld [vmem:[%s1 + $0x98] sm:$0xf]
  %v55 = vld [vmem:[%s1 + $0x9c] sm:$0xf]
  %v56 = vld [vmem:[%s1 + $0xa0] sm:$0xf]
  %v57 = vld [vmem:[%s1 + $0xa4] sm:$0xf]
  %v58 = vld [vmem:[%s1 + $0xa8] sm:$0xf]
  %v59 = vld [vmem:[%s1 + $0xac] sm:$0xf]
  %v60 = vld [vmem:[%s1 + $0xb0] sm:$0xf]
  %v61 = vld [vmem:[%s1 + $0xb4] sm:$0xf]
  %v62 = vld [vmem:[%s1 + $0xb8] sm:$0xf]
  %v63 = vld [vmem:[%s1 + $0xbc] sm:$0xf]
  %v64 = vld [vmem:[%s1 + $0xc0] sm:$0xf]
  %v65 = vld [vmem:[%s1 + $0xc4] sm:$0xf]
  %v66 = vld [vmem:[%s1 + $0xc8] sm:$0xf]
  %v67 = vld [vmem:[%s1 + $0xcc] sm:$0xf]
  %v68 = vld [vmem:[%s1 + $0xd0] sm:$0xf]
  %v69 = vld [vmem:[%s1 + $0xd4] sm:$0xf]
  %v70 = vld [vmem:[%s1 + $0xd8] sm:$0xf]
  %v71 = vld [vmem:[%s1 + $0xdc] sm:$0xf]
  %v72 = vld [vmem:[%s1 + $0xe0] sm:$0xf]
  %v73 = vld [vmem:[%s1 + $0xe4] sm:$0xf]
  %v74 = vld [vmem:[%s1 + $0xe8] sm:$0xf]
  %v75 = vld [vmem:[%s1 + $0xec] sm:$0xf]
  %v76 = vld [vmem:[%s1 + $0xf0] sm:$0xf]
  %v77 = vld [vmem:[%s1 + $0xf4] sm:$0xf]
  %v78 = vld [vmem:[%s1 + $0xf8] sm:$0xf]
  %v79 = vld [vmem:[%s1 + $0xfc] sm:$0xf]
  %v80 = vld [vmem:[%s1 + $0x100] sm:$0xf]
  %v81 = vld [vmem:[%s1 + $0x104] sm:$0xf]
  %v82 = vld [vmem:[%s1 + $0x108] sm:$0xf]
  %v83 = vld [vmem:[%s1 + $0x10c] sm:$0xf]
  %v84 = vld [vmem:[%s1 + $0x110] sm:$0xf]
  %v85 = vld [vmem:[%s1 + $0x114] sm:$0xf]
  %v86 = vld [vmem:[%s1 + $0x118] sm:$0xf]
  %v87 = vld [vmem:[%s1 + $0x11c] sm:$0xf]
  %v88 = vld [vmem:[%s1 + $0x120] sm:$0xf]
  %v89 = vld [vmem:[%s1 + $0x124] sm:$0xf]
  %v90 = vld [vmem:[%s1 + $0x128] sm:$0xf]
  %v91 = vld [vmem:[%s1 + $0x12c] sm:$0xf]
  %v92 = vld [vmem:[%s1 + $0x130] sm:$0xf]
  %v93 = vld [vmem:[%s1 + $0x134] sm:$0xf]
  %v94 = vld [vmem:[%s1 + $0x138] sm:$0xf]
  %v95 = vld [vmem:[%s1 + $0x13c] sm:$0xf]
  %v96 = vld [vmem:[%s1 + $0x140] sm:$0xf]
  %v97 = vld [vmem:[%s1 + $0x144] sm:$0xf]
  %v98 = vld [vmem:[%s1 + $0x148] sm:$0xf]
  %v99 = vld [vmem:[%s1 + $0x14c] sm:$0xf]
  %v100 = vld [vmem:[%s1 + $0x150] sm:$0xf]
  %v101 = vld [vmem:[%s1 + $0x154] sm:$0xf]
  %v102 = vld [vmem:[%s1 + $0x158] sm:$0xf]
  %v103 = vld [vmem:[%s1 + $0x15c] sm:$0xf]
  %v104 = vld [vmem:[%s1 + $0x160] sm:$0xf]
  %v105 = vld [vmem:[%s1 + $0x164] sm:$0xf]
  %v106 = vld [vmem:[%s1 + $0x168] sm:$0xf]
  %v107 = vld [vmem:[%s1 + $0x16c] sm:$0xf]
  %v108 = vld [vmem:[%s1 + $0x170] sm:$0xf]
  %v109 = vld [vmem:[%s1 + $0x174] sm:$0xf]
  %v110 = vld [vmem:[%s1 + $0x178] sm:$0xf]
  %v111 = vld [vmem:[%s1 + $0x17c] sm:$0xf]
  %v112 = vld [vmem:[%s1 + $0x180] sm:$0xf]
  %v113 = vld [vmem:[%s1 + $0x184] sm:$0xf]
  %v114 = vld [vmem:[%s1 + $0x188] sm:$0xf]
  %v115 = vld [vmem:[%s1 + $0x18c] sm:$0xf]
  %v116 = vld [vmem:[%s1 + $0x190] sm:$0xf]
  %v117 = vld [vmem:[%s1 + $0x194] sm:$0xf]
  %v118 = vld [vmem:[%s1 + $0x198] sm:$0xf]
  %v119 = vld [vmem:[%s1 + $0x19c] sm:$0xf]
  %v120 = vld [vmem:[%s1 + $0x1a0] sm:$0xf]
  %v121 = vld [vmem:[%s1 + $0x1a4] sm:$0xf]
  %v122 = vld [vmem:[%s1 + $0x1a8] sm:$0xf]
  %v123 = vld [vmem:[%s1 + $0x1ac] sm:$0xf]
  %v124 = vld [vmem:[%s1 + $0x1b0] sm:$0xf]
  %v125 = vld [vmem:[%s1 + $0x1b4] sm:$0xf]
  %v126 = vld [vmem:[%s1 + $0x1b8] sm:$0xf]
  %v127 = vld [vmem:[%s1 + $0x1bc] sm:$0xf]
  %v128 = vld [vmem:[%s1 + $0x1c0] sm:$0xf]
  %v129 = vld [vmem:[%s1 + $0x1c4] sm:$0xf]
  %v130 = vld [vmem:[%s1 + $0x1c8] sm:$0xf]
  %v131 = vld [vmem:[%s1 + $0x1cc] sm:$0xf]
  %v132 = vld [vmem:[%s1 + $0x1d0] sm:$0xf]
  %v133 = vld [vmem:[%s1 + $0x1d4] sm:$0xf]
  %v134 = vld [vmem:[%s1 + $0x1d8] sm:$0xf]
  %v135 = vld [vmem:[%s1 + $0x1dc] sm:$0xf]
  %v136 = vld [vmem:[%s1 + $0x1e0] sm:$0xf]
  %v137 = vld [vmem:[%s1 + $0x1e4] sm:$0xf]
  %v138 = vld [vmem:[%s1 + $0x1e8] sm:$0xf]
  %v139 = vld [vmem:[%s1 + $0x1ec] sm:$0xf]
  %v140 = vld [vmem:[%s1 + $0x1f0] sm:$0xf]
  %v141 = vld [vmem:[%s1 + $0x1f4] sm:$0xf]
  %v142 = vld [vmem:[%s1 + $0x1f8] sm:$0xf]
  %v143 = vld [vmem:[%s1 + $0x1fc] sm:$0xf]
  %v144 = vld [vmem:[%s1 + $0x200] sm:$0xf]
  %v145 = vld [vmem:[%s1 + $0x204] sm:$0xf]
  %v146 = vld [vmem:[%s1 + $0x208] sm:$0xf]
  %v147 = vld [vmem:[%s1 + $0x20c] sm:$0xf]
  %v148 = vld [vmem:[%s1 + $0x210] sm:$0xf]
  %v149 = vld [vmem:[%s1 + $0x214] sm:$0xf]
  %v150 = vld [vmem:[%s1 + $0x218] sm:$0xf]
  %v151 = vld [vmem:[%s1 + $0x21c] sm:$0xf]
  %v152 = vld [vmem:[%s1 + $0x220] sm:$0xf]
  %v153 = vld [vmem:[%s1 + $0x224] sm:$0xf]
  %v154 = vld [vmem:[%s1 + $0x228] sm:$0xf]
  %v155 = vld [vmem:[%s1 + $0x22c] sm:$0xf]
  %v156 = vld [vmem:[%s1 + $0x230] sm:$0xf]
  %v157 = vld [vmem:[%s1 + $0x234] sm:$0xf]
  %v158 = vld [vmem:[%s1 + $0x238] sm:$0xf]
  %v159 = vld [vmem:[%s1 + $0x23c] sm:$0xf]
  %v160 = vld [vmem:[%s1 + $0x240] sm:$0xf]
  %v161 = vld [vmem:[%s1 + $0x244] sm:$0xf]
  %v162 = vld [vmem:[%s1 + $0x248] sm:$0xf]
  %v163 = vld [vmem:[%s1 + $0x24c] sm:$0xf]
  %v164 = vld [vmem:[%s1 + $0x250] sm:$0xf]
  %v165 = vld [vmem:[%s1 + $0x254] sm:$0xf]
  %v166 = vld [vmem:[%s1 + $0x258] sm:$0xf]
  %v167 = vld [vmem:[%s1 + $0x25c] sm:$0xf]
  %v168 = vld [vmem:[%s1 + $0x260] sm:$0xf]
  %v169 = vld [vmem:[%s1 + $0x264] sm:$0xf]
  %v170 = vld [vmem:[%s1 + $0x268] sm:$0xf]
  %v171 = vld [vmem:[%s1 + $0x26c] sm:$0xf]
  %v172 = vld [vmem:[%s1 + $0x270] sm:$0xf]
  %v173 = vld [vmem:[%s1 + $0x274] sm:$0xf]
  %v174 = vld [vmem:[%s1 + $0x278] sm:$0xf]
  %v175 = vld [vmem:[%s1 + $0x27c] sm:$0xf]
  %v176 = vld [vmem:[%s1 + $0x280] sm:$0xf]
  %v177 = vld [vmem:[%s1 + $0x284] sm:$0xf]
  %v178 = vld [vmem:[%s1 + $0x288] sm:$0xf]
  %v179 = vld [vmem:[%s1 + $0x28c] sm:$0xf]
  %v180 = vld [vmem:[%s1 + $0x290] sm:$0xf]
  %v181 = vld [vmem:[%s1 + $0x294] sm:$0xf]
  %v182 = vld [vmem:[%s1 + $0x298] sm:$0xf]
  %v183 = vld [vmem:[%s1 + $0x29c] sm:$0xf]
  %v184 = vld [vmem:[%s1 + $0x2a0] sm:$0xf]
  %v185 = vld [vmem:[%s1 + $0x2a4] sm:$0xf]
  %v186 = vld [vmem:[%s1 + $0x2a8] sm:$0xf]
  %v187 = vld [vmem:[%s1 + $0x2ac] sm:$0xf]
  %v188 = vld [vmem:[%s1 + $0x2b0] sm:$0xf]
  %v189 = vld [vmem:[%s1 + $0x2b4] sm:$0xf]
  %v190 = vld [vmem:[%s1 + $0x2b8] sm:$0xf]
  %v191 = vld [vmem:[%s1 + $0x2bc] sm:$0xf]
  %v192 = vld [vmem:[%s1 + $0x2c0] sm:$0xf]
  %v193 = vld [vmem:[%s1 + $0x2c4] sm:$0xf]
  %v194 = vld [vmem:[%s1 + $0x2c8] sm:$0xf]
  %v195 = vld [vmem:[%s1 + $0x2cc] sm:$0xf]
  %v196 = vld [vmem:[%s1 + $0x2d0] sm:$0xf]
  %v197 = vld [vmem:[%s1 + $0x2d4] sm:$0xf]
  %v198 = vld [vmem:[%s1 + $0x2d8] sm:$0xf]
  %v199 = vld [vmem:[%s1 + $0x2dc] sm:$0xf]
  %v200 = vld [vmem:[%s1 + $0x2e0] sm:$0xf]
  %v201 = vld [vmem:[%s1 + $0x2e4] sm:$0xf]
  %v202 = vld [vmem:[%s1 + $0x2e8] sm:$0xf]
  %v203 = vld [vmem:[%s1 + $0x2ec] sm:$0xf]
  %v204 = vld [vmem:[%s1 + $0x2f0] sm:$0xf]
  %v205 = vld [vmem:[%s1 + $0x2f4] sm:$0xf]
  %v206 = vld [vmem:[%s1 + $0x2f8] sm:$0xf]
  %v207 = vld [vmem:[%s1 + $0x2fc] sm:$0xf]
  %v208 = vld [vmem:[%s1 + $0x300] sm:$0xf]
  %v209 = vld [vmem:[%s1 + $0x304] sm:$0xf]
  %v210 = vld [vmem:[%s1 + $0x308] sm:$0xf]
  %v211 = vld [vmem:[%s1 + $0x30c] sm:$0xf]
  %v212 = vld [vmem:[%s1 + $0x310] sm:$0xf]
  %v213 = vld [vmem:[%s1 + $0x314] sm:$0xf]
  %v214 = vld [vmem:[%s1 + $0x318] sm:$0xf]
  %v215 = vld [vmem:[%s1 + $0x31c] sm:$0xf]
  %v216 = vld [vmem:[%s1 + $0x320] sm:$0xf]
  %v217 = vld [vmem:[%s1 + $0x324] sm:$0xf]
  %v218 = vld [vmem:[%s1 + $0x328] sm:$0xf]
  %v219 = vld [vmem:[%s1 + $0x32c] sm:$0xf]
  %v220 = vld [vmem:[%s1 + $0x330] sm:$0xf]
  %v221 = vld [vmem:[%s1 + $0x334] sm:$0xf]
  %v222 = vld [vmem:[%s1 + $0x338] sm:$0xf]
  %v223 = vld [vmem:[%s1 + $0x33c] sm:$0xf]
  %v224 = vld [vmem:[%s1 + $0x340] sm:$0xf]
  %v225 = vld [vmem:[%s1 + $0x344] sm:$0xf]
  %v226 = vld [vmem:[%s1 + $0x348] sm:$0xf]
  %v227 = vld [vmem:[%s1 + $0x34c] sm:$0xf]
  %v228 = vld [vmem:[%s1 + $0x350] sm:$0xf]
  %v229 = vld [vmem:[%s1 + $0x354] sm:$0xf]
  %v230 = vld [vmem:[%s1 + $0x358] sm:$0xf]
  %v231 = vld [vmem:[%s1 + $0x35c] sm:$0xf]
  %v236 = vcombine.high %v12, %v12
  %v238 = vunpack.c.l.s4 1983009808
  %v239 = vunpack.c.0.s8 %v238
  %v240 = vlaneseq
  %v241 = vshrl.u32 %v240, 7
  %v242 = vsub.s32 %v239, %v241
  %v243 = vrot.slane %v12, %v242
  %v245 = vunpack.c.l.s4 1983009808
  %v246 = vunpack.c.0.s8 %v245
  %v247 = vlaneseq
  %v248 = vshrl.u32 %v247, 7
  %v249 = vsub.s32 %v246, %v248
  %v250 = vrot.slane %v236, %v249
  %v251 = vcombine.high %v243, %v243
  %v252 = vcombine.high %v250, %v250
  %v253 = vcombine.high %v13, %v13
  %v255 = vunpack.c.l.s4 1983009808
  %v256 = vunpack.c.0.s8 %v255
  %v257 = vlaneseq
  %v258 = vshrl.u32 %v257, 7
  %v259 = vsub.s32 %v256, %v258
  %v260 = vrot.slane %v13, %v259
  %v262 = vunpack.c.l.s4 1983009808
  %v263 = vunpack.c.0.s8 %v262
  %v264 = vlaneseq
  %v265 = vshrl.u32 %v264, 7
  %v266 = vsub.s32 %v263, %v265
  %v267 = vrot.slane %v253, %v266
  %v268 = vcombine.high %v260, %v260
  %v269 = vcombine.high %v267, %v267
  %v270 = vcombine.high %v14, %v14
  %v272 = vunpack.c.l.s4 1983009808
  %v273 = vunpack.c.0.s8 %v272
  %v274 = vlaneseq
  %v275 = vshrl.u32 %v274, 7
  %v276 = vsub.s32 %v273, %v275
  %v277 = vrot.slane %v14, %v276
  %v279 = vunpack.c.l.s4 1983009808
  %v280 = vunpack.c.0.s8 %v279
  %v281 = vlaneseq
  %v282 = vshrl.u32 %v281, 7
  %v283 = vsub.s32 %v280, %v282
  %v284 = vrot.slane %v270, %v283
  %v285 = vcombine.high %v277, %v277
  %v286 = vcombine.high %v284, %v284
  %v288 = vunpack.c.l.s4 1983009808
  %v289 = vunpack.c.0.s8 %v288
  %v290 = vlaneseq
  %v291 = vshrl.u32 %v290, 7
  %v292 = vsub.s32 %v289, %v291
  %v293 = vrot.slane %v15, %v292
  %v294 = vcombine.high %v293, %v293
  %v524 = vunpack.c.l.b16 %v16
  %v525 = vunpack.c.l.b16 %v17
  %v526 = vunpack.c.l.b16 %v18
  %v527 = vunpack.c.l.b16 %v19
  %v528 = vunpack.c.l.b16 %v20
  %v529 = vunpack.c.l.b16 %v21
  %v530 = vunpack.c.l.b16 %v22
  %v531 = vunpack.c.l.b16 %v23
  %v532 = vunpack.c.l.b16 %v24
  %v533 = vunpack.c.l.b16 %v25
  %v534 = vunpack.c.l.b16 %v26
  %v535 = vunpack.c.l.b16 %v27
  %v536 = vunpack.c.l.b16 %v28
  %v537 = vunpack.c.l.b16 %v29
  %v538 = vunpack.c.l.b16 %v30
  %v539 = vunpack.c.l.b16 %v31
  %v540 = vunpack.c.l.b16 %v32
  %v541 = vunpack.c.l.b16 %v33
  %v542 = vunpack.c.l.b16 %v34
  %v543 = vunpack.c.l.b16 %v35
  %v544 = vunpack.c.l.b16 %v36
  %v545 = vunpack.c.l.b16 %v37
  %v546 = vunpack.c.l.b16 %v38
  %v547 = vunpack.c.l.b16 %v39
  %v548 = vunpack.c.l.b16 %v40
  %v549 = vunpack.c.l.b16 %v41
  %v550 = vunpack.c.l.b16 %v42
  %v551 = vunpack.c.l.b16 %v43
  %v552 = vunpack.c.l.b16 %v44
  %v553 = vunpack.c.l.b16 %v45
  %v554 = vunpack.c.l.b16 %v46
  %v555 = vunpack.c.l.b16 %v47
  %v556 = vunpack.c.l.b16 %v48
  %v557 = vunpack.c.l.b16 %v49
  %v558 = vunpack.c.l.b16 %v50
  %v559 = vunpack.c.l.b16 %v51
  %v560 = vunpack.c.l.b16 %v52
  %v561 = vunpack.c.l.b16 %v53
  %v562 = vunpack.c.l.b16 %v54
  %v563 = vunpack.c.l.b16 %v55
  %v564 = vunpack.c.l.b16 %v56
  %v565 = vunpack.c.l.b16 %v57
  %v566 = vunpack.c.l.b16 %v58
  %v567 = vunpack.c.l.b16 %v59
  %v568 = vunpack.c.l.b16 %v60
  %v569 = vunpack.c.l.b16 %v61
  %v570 = vunpack.c.l.b16 %v62
  %v571 = vunpack.c.l.b16 %v63
  %v572 = vunpack.c.l.b16 %v64
  %v573 = vunpack.c.l.b16 %v65
  %v574 = vunpack.c.l.b16 %v66
  %v575 = vunpack.c.l.b16 %v67
  %v576 = vunpack.c.l.b16 %v68
  %v577 = vunpack.c.l.b16 %v69
  %v578 = vunpack.c.l.b16 %v70
  %v579 = vunpack.c.l.b16 %v71
  %v580 = vunpack.c.l.b16 %v72
  %v581 = vunpack.c.l.b16 %v73
  %v582 = vunpack.c.l.b16 %v74
  %v583 = vunpack.c.l.b16 %v75
  %v584 = vunpack.c.l.b16 %v76
  %v585 = vunpack.c.l.b16 %v77
  %v586 = vunpack.c.l.b16 %v78
  %v587 = vunpack.c.l.b16 %v79
  %v588 = vunpack.c.l.b16 %v80
  %v589 = vunpack.c.l.b16 %v81
  %v590 = vunpack.c.l.b16 %v82
  %v591 = vunpack.c.l.b16 %v83
  %v592 = vunpack.c.l.b16 %v84
  %v593 = vunpack.c.l.b16 %v85
  %v594 = vunpack.c.l.b16 %v86
  %v595 = vunpack.c.l.b16 %v87
  %v596 = vunpack.c.l.b16 %v88
  %v597 = vunpack.c.l.b16 %v89
  %v598 = vunpack.c.l.b16 %v90
  %v599 = vunpack.c.l.b16 %v91
  %v600 = vunpack.c.l.b16 %v92
  %v601 = vunpack.c.l.b16 %v93
  %v602 = vunpack.c.l.b16 %v94
  %v603 = vunpack.c.l.b16 %v95
  %v604 = vunpack.c.l.b16 %v96
  %v605 = vunpack.c.l.b16 %v97
  %v606 = vunpack.c.l.b16 %v98
  %v607 = vunpack.c.l.b16 %v99
  %v608 = vunpack.c.l.b16 %v100
  %v609 = vunpack.c.l.b16 %v101
  %v610 = vunpack.c.l.b16 %v102
  %v611 = vunpack.c.l.b16 %v103
  %v612 = vunpack.c.l.b16 %v104
  %v613 = vunpack.c.l.b16 %v105
  %v614 = vunpack.c.l.b16 %v106
  %v615 = vunpack.c.l.b16 %v107
  %v616 = vunpack.c.l.b16 %v108
  %v617 = vunpack.c.l.b16 %v109
  %v618 = vunpack.c.l.b16 %v110
  %v619 = vunpack.c.l.b16 %v111
  %v620 = vunpack.c.l.b16 %v112
  %v621 = vunpack.c.l.b16 %v113
  %v622 = vunpack.c.l.b16 %v114
  %v623 = vunpack.c.l.b16 %v115
  %v624 = vunpack.c.l.b16 %v116
  %v625 = vunpack.c.l.b16 %v117
  %v626 = vunpack.c.l.b16 %v118
  %v627 = vunpack.c.l.b16 %v119
  %v628 = vunpack.c.l.b16 %v120
  %v629 = vunpack.c.l.b16 %v121
  %v630 = vunpack.c.l.b16 %v122
  %v631 = vunpack.c.l.b16 %v123
  %v632 = vunpack.c.l.b16 %v124
  %v633 = vunpack.c.l.b16 %v125
  %v634 = vunpack.c.l.b16 %v126
  %v635 = vunpack.c.l.b16 %v127
  %v636 = vunpack.c.l.b16 %v128
  %v637 = vunpack.c.l.b16 %v129
  %v638 = vunpack.c.l.b16 %v130
  %v639 = vunpack.c.l.b16 %v131
  %v640 = vunpack.c.l.b16 %v132
  %v641 = vunpack.c.l.b16 %v133
  %v642 = vunpack.c.l.b16 %v134
  %v643 = vunpack.c.l.b16 %v135
  %v644 = vunpack.c.l.b16 %v136
  %v645 = vunpack.c.l.b16 %v137
  %v646 = vunpack.c.l.b16 %v138
  %v647 = vunpack.c.l.b16 %v139
  %v648 = vunpack.c.l.b16 %v140
  %v649 = vunpack.c.l.b16 %v141
  %v650 = vunpack.c.l.b16 %v142
  %v651 = vunpack.c.l.b16 %v143
  %v652 = vunpack.c.l.b16 %v144
  %v653 = vunpack.c.l.b16 %v145
  %v654 = vunpack.c.l.b16 %v146
  %v655 = vunpack.c.l.b16 %v147
  %v656 = vunpack.c.l.b16 %v148
  %v657 = vunpack.c.l.b16 %v149
  %v658 = vunpack.c.l.b16 %v150
  %v659 = vunpack.c.l.b16 %v151
  %v660 = vunpack.c.l.b16 %v152
  %v661 = vunpack.c.l.b16 %v153
  %v662 = vunpack.c.l.b16 %v154
  %v663 = vunpack.c.l.b16 %v155
  %v664 = vunpack.c.l.b16 %v156
  %v665 = vunpack.c.l.b16 %v157
  %v666 = vunpack.c.l.b16 %v158
  %v667 = vunpack.c.l.b16 %v159
  %v668 = vunpack.c.l.b16 %v160
  %v669 = vunpack.c.l.b16 %v161
  %v670 = vunpack.c.l.b16 %v162
  %v671 = vunpack.c.l.b16 %v163
  %v672 = vunpack.c.l.b16 %v164
  %v673 = vunpack.c.l.b16 %v165
  %v674 = vunpack.c.l.b16 %v166
  %v675 = vunpack.c.l.b16 %v167
  %v676 = vunpack.c.l.b16 %v168
  %v677 = vunpack.c.l.b16 %v169
  %v678 = vunpack.c.l.b16 %v170
  %v679 = vunpack.c.l.b16 %v171
  %v680 = vunpack.c.l.b16 %v172
  %v681 = vunpack.c.l.b16 %v173
  %v682 = vunpack.c.l.b16 %v174
  %v683 = vunpack.c.l.b16 %v175
  %v684 = vunpack.c.l.b16 %v176
  %v685 = vunpack.c.l.b16 %v177
  %v686 = vunpack.c.l.b16 %v178
  %v687 = vunpack.c.l.b16 %v179
  %v688 = vunpack.c.l.b16 %v180
  %v689 = vunpack.c.l.b16 %v181
  %v690 = vunpack.c.l.b16 %v182
  %v691 = vunpack.c.l.b16 %v183
  %v692 = vunpack.c.l.b16 %v184
  %v693 = vunpack.c.l.b16 %v185
  %v694 = vunpack.c.l.b16 %v186
  %v695 = vunpack.c.l.b16 %v187
  %v696 = vunpack.c.l.b16 %v188
  %v697 = vunpack.c.l.b16 %v189
  %v698 = vunpack.c.l.b16 %v190
  %v699 = vunpack.c.l.b16 %v191
  %v700 = vunpack.c.l.b16 %v192
  %v701 = vunpack.c.l.b16 %v193
  %v702 = vunpack.c.l.b16 %v194
  %v703 = vunpack.c.l.b16 %v195
  %v704 = vunpack.c.l.b16 %v196
  %v705 = vunpack.c.l.b16 %v197
  %v706 = vunpack.c.l.b16 %v198
  %v707 = vunpack.c.l.b16 %v199
  %v708 = vunpack.c.l.b16 %v200
  %v709 = vunpack.c.l.b16 %v201
  %v710 = vunpack.c.l.b16 %v202
  %v711 = vunpack.c.l.b16 %v203
  %v712 = vunpack.c.l.b16 %v204
  %v713 = vunpack.c.l.b16 %v205
  %v714 = vunpack.c.l.b16 %v206
  %v715 = vunpack.c.l.b16 %v207
  %v716 = vunpack.c.l.b16 %v208
  %v717 = vunpack.c.l.b16 %v209
  %v718 = vunpack.c.l.b16 %v210
  %v719 = vunpack.c.l.b16 %v211
  %v720 = vunpack.c.l.b16 %v212
  %v721 = vunpack.c.l.b16 %v213
  %v722 = vunpack.c.l.b16 %v214
  %v723 = vunpack.c.l.b16 %v215
  %v724 = vunpack.c.l.b16 %v216
  %v725 = vunpack.c.l.b16 %v217
  %v726 = vunpack.c.l.b16 %v218
  %v727 = vunpack.c.l.b16 %v219
  %v728 = vunpack.c.l.b16 %v220
  %v729 = vunpack.c.l.b16 %v221
  %v730 = vunpack.c.l.b16 %v222
  %v731 = vunpack.c.l.b16 %v223
  %v732 = vunpack.c.l.b16 %v224
  %v733 = vunpack.c.l.b16 %v225
  %v734 = vunpack.c.l.b16 %v226
  %v735 = vunpack.c.l.b16 %v227
  %v736 = vunpack.c.l.b16 %v228
  %v737 = vunpack.c.l.b16 %v229
  %v738 = vunpack.c.l.b16 %v230
  %v739 = vunpack.c.l.b16 %v231
  %v740 = vpack.c.b16 %v525, %v524
  %v741 = vpack.c.b16 %v527, %v526
  %v742 = vpack.c.b16 %v529, %v528
  %v743 = vpack.c.b16 %v531, %v530
  %v744 = vpack.c.b16 %v533, %v532
  %v745 = vpack.c.b16 %v535, %v534
  %v746 = vpack.c.b16 %v537, %v536
  %v747 = vpack.c.b16 %v539, %v538
  %v748 = vpack.c.b16 %v541, %v540
  %v749 = vpack.c.b16 %v543, %v542
  %v750 = vpack.c.b16 %v545, %v544
  %v751 = vpack.c.b16 %v547, %v546
  %v752 = vpack.c.b16 %v549, %v548
  %v753 = vpack.c.b16 %v551, %v550
  %v754 = vpack.c.b16 %v553, %v552
  %v755 = vpack.c.b16 %v555, %v554
  %v756 = vpack.c.b16 %v557, %v556
  %v757 = vpack.c.b16 %v559, %v558
  %v758 = vpack.c.b16 %v561, %v560
  %v759 = vpack.c.b16 %v563, %v562
  %v760 = vpack.c.b16 %v565, %v564
  %v761 = vpack.c.b16 %v567, %v566
  %v762 = vpack.c.b16 %v569, %v568
  %v763 = vpack.c.b16 %v571, %v570
  %v764 = vpack.c.b16 %v573, %v572
  %v765 = vpack.c.b16 %v575, %v574
  %v766 = vpack.c.b16 %v577, %v576
  %v767 = vpack.c.b16 %v579, %v578
  %v768 = vpack.c.b16 %v581, %v580
  %v769 = vpack.c.b16 %v583, %v582
  %v770 = vpack.c.b16 %v585, %v584
  %v771 = vpack.c.b16 %v587, %v586
  %v772 = vpack.c.b16 %v589, %v588
  %v773 = vpack.c.b16 %v591, %v590
  %v774 = vpack.c.b16 %v593, %v592
  %v775 = vpack.c.b16 %v595, %v594
  %v776 = vpack.c.b16 %v597, %v596
  %v777 = vpack.c.b16 %v599, %v598
  %v778 = vpack.c.b16 %v601, %v600
  %v779 = vpack.c.b16 %v603, %v602
  %v780 = vpack.c.b16 %v605, %v604
  %v781 = vpack.c.b16 %v607, %v606
  %v782 = vpack.c.b16 %v609, %v608
  %v783 = vpack.c.b16 %v611, %v610
  %v784 = vpack.c.b16 %v613, %v612
  %v785 = vpack.c.b16 %v615, %v614
  %v786 = vpack.c.b16 %v617, %v616
  %v787 = vpack.c.b16 %v619, %v618
  %v788 = vpack.c.b16 %v621, %v620
  %v789 = vpack.c.b16 %v623, %v622
  %v790 = vpack.c.b16 %v625, %v624
  %v791 = vpack.c.b16 %v627, %v626
  %v792 = vpack.c.b16 %v629, %v628
  %v793 = vpack.c.b16 %v631, %v630
  %v794 = vpack.c.b16 %v633, %v632
  %v795 = vpack.c.b16 %v635, %v634
  %v796 = vpack.c.b16 %v637, %v636
  %v797 = vpack.c.b16 %v639, %v638
  %v798 = vpack.c.b16 %v641, %v640
  %v799 = vpack.c.b16 %v643, %v642
  %v800 = vpack.c.b16 %v645, %v644
  %v801 = vpack.c.b16 %v647, %v646
  %v802 = vpack.c.b16 %v649, %v648
  %v803 = vpack.c.b16 %v651, %v650
  %v804 = vpack.c.b16 %v653, %v652
  %v805 = vpack.c.b16 %v655, %v654
  %v806 = vpack.c.b16 %v657, %v656
  %v807 = vpack.c.b16 %v659, %v658
  %v808 = vpack.c.b16 %v661, %v660
  %v809 = vpack.c.b16 %v663, %v662
  %v810 = vpack.c.b16 %v665, %v664
  %v811 = vpack.c.b16 %v667, %v666
  %v812 = vpack.c.b16 %v669, %v668
  %v813 = vpack.c.b16 %v671, %v670
  %v814 = vpack.c.b16 %v673, %v672
  %v815 = vpack.c.b16 %v675, %v674
  %v816 = vpack.c.b16 %v677, %v676
  %v817 = vpack.c.b16 %v679, %v678
  %v818 = vpack.c.b16 %v681, %v680
  %v819 = vpack.c.b16 %v683, %v682
  %v820 = vpack.c.b16 %v685, %v684
  %v821 = vpack.c.b16 %v687, %v686
  %v822 = vpack.c.b16 %v689, %v688
  %v823 = vpack.c.b16 %v691, %v690
  %v824 = vpack.c.b16 %v693, %v692
  %v825 = vpack.c.b16 %v695, %v694
  %v826 = vpack.c.b16 %v697, %v696
  %v827 = vpack.c.b16 %v699, %v698
  %v828 = vpack.c.b16 %v701, %v700
  %v829 = vpack.c.b16 %v703, %v702
  %v830 = vpack.c.b16 %v705, %v704
  %v831 = vpack.c.b16 %v707, %v706
  %v832 = vpack.c.b16 %v709, %v708
  %v833 = vpack.c.b16 %v711, %v710
  %v834 = vpack.c.b16 %v713, %v712
  %v835 = vpack.c.b16 %v715, %v714
  %v836 = vpack.c.b16 %v717, %v716
  %v837 = vpack.c.b16 %v719, %v718
  %v838 = vpack.c.b16 %v721, %v720
  %v839 = vpack.c.b16 %v723, %v722
  %v840 = vpack.c.b16 %v725, %v724
  %v841 = vpack.c.b16 %v727, %v726
  %v842 = vpack.c.b16 %v729, %v728
  %v843 = vpack.c.b16 %v731, %v730
  %v844 = vpack.c.b16 %v733, %v732
  %v845 = vpack.c.b16 %v735, %v734
  %v846 = vpack.c.b16 %v737, %v736
  %v847 = vpack.c.b16 %v739, %v738
  %vm956 = vcmask 523264
  %v958 = vsel %vm956, %v294, 0
  %960 = vmatprep.subr.bf16.mxu0 0
  %961 = vmatpush1.bf16.msra.mxu0 %v740
  %962 = vmatprep.subr.bf16.mxu0 0
  %963 = vmatpush1.bf16.msra.mxu0 %v741
  %964 = vmatprep.subr.bf16.mxu0 0
  %965 = vmatpush1.bf16.msra.mxu0 %v742
  %966 = vmatprep.subr.bf16.mxu0 0
  %967 = vmatpush1.bf16.msra.mxu0 %v743
  %968 = vmatprep.subr.bf16.mxu0 0
  %969 = vmatpush1.bf16.msra.mxu0 %v744
  %970 = vmatprep.subr.bf16.mxu0 0
  %971 = vmatpush1.bf16.msra.mxu0 %v745
  %972 = vmatprep.subr.bf16.mxu0 0
  %973 = vmatpush1.bf16.msra.mxu0 %v746
  %974 = vmatprep.subr.bf16.mxu0 0
  %975 = vmatpush1.bf16.msra.mxu0 %v747
  %976 = vmatprep.subr.bf16.mxu0 0
  %977 = vmatpush1.bf16.msra.mxu0 %v748
  %978 = vmatprep.subr.bf16.mxu0 0
  %979 = vmatpush1.bf16.msra.mxu0 %v749
  %980 = vmatprep.subr.bf16.mxu0 0
  %981 = vmatpush1.bf16.msra.mxu0 %v750
  %982 = vmatprep.subr.bf16.mxu0 0
  %983 = vmatpush1.bf16.msra.mxu0 %v751
  %984 = vmatprep.subr.bf16.mxu0 0
  %985 = vmatpush1.bf16.msra.mxu0 %v752
  %986 = vmatprep.subr.bf16.mxu0 0
  %987 = vmatpush1.bf16.msra.mxu0 %v753
  %988 = vmatprep.subr.bf16.mxu0 0
  %989 = vmatpush1.bf16.msra.mxu0 %v754
  %990 = vmatprep.subr.bf16.mxu0 0
  %991 = vmatpush1.bf16.msra.mxu0 %v755
  %992 = vmatprep.mubr.bf16.mxu0 %v251
  %993 = vmatmul.mubr.bf16.gmra.mrb[0].mxu0 %v243
  %v994 = vpop.f32.mrb[0].mxu0
  %v995 = vadd.f32 0.0, %v994
  %v996 = vpop.f32.mrb[0].mxu0
  %v997 = vpop.f32.mrb[0].mxu0
  %v998 = vpop.f32.mrb[0].mxu0
  %999 = vdwg.mxu0
  %1000 = vmatprep.subr.bf16.mxu0 0
  %1001 = vmatpush1.bf16.msra.mxu0 %v756
  %1002 = vmatprep.subr.bf16.mxu0 0
  %1003 = vmatpush1.bf16.msra.mxu0 %v757
  %1004 = vmatprep.subr.bf16.mxu0 0
  %1005 = vmatpush1.bf16.msra.mxu0 %v758
  %1006 = vmatprep.subr.bf16.mxu0 0
  %1007 = vmatpush1.bf16.msra.mxu0 %v759
  %1008 = vmatprep.subr.bf16.mxu0 0
  %1009 = vmatpush1.bf16.msra.mxu0 %v760
  %1010 = vmatprep.subr.bf16.mxu0 0
  %1011 = vmatpush1.bf16.msra.mxu0 %v761
  %1012 = vmatprep.subr.bf16.mxu0 0
  %1013 = vmatpush1.bf16.msra.mxu0 %v762
  %1014 = vmatprep.subr.bf16.mxu0 0
  %1015 = vmatpush1.bf16.msra.mxu0 %v763
  %1016 = vmatprep.subr.bf16.mxu0 0
  %1017 = vmatpush1.bf16.msra.mxu0 %v764
  %1018 = vmatprep.subr.bf16.mxu0 0
  %1019 = vmatpush1.bf16.msra.mxu0 %v765
  %1020 = vmatprep.subr.bf16.mxu0 0
  %1021 = vmatpush1.bf16.msra.mxu0 %v766
  %1022 = vmatprep.subr.bf16.mxu0 0
  %1023 = vmatpush1.bf16.msra.mxu0 %v767
  %1024 = vmatprep.subr.bf16.mxu0 0
  %1025 = vmatpush1.bf16.msra.mxu0 %v768
  %1026 = vmatprep.subr.bf16.mxu0 0
  %1027 = vmatpush1.bf16.msra.mxu0 %v769
  %1028 = vmatprep.subr.bf16.mxu0 0
  %1029 = vmatpush1.bf16.msra.mxu0 %v770
  %1030 = vmatprep.subr.bf16.mxu0 0
  %1031 = vmatpush1.bf16.msra.mxu0 %v771
  %1032 = vmatprep.mubr.bf16.mxu0 %v252
  %1033 = vmatmul.mubr.bf16.gmra.mrb[0].mxu0 %v250
  %v1034 = vpop.f32.mrb[0].mxu0
  %v1035 = vadd.f32 %v995, %v1034
  %v1036 = vpop.f32.mrb[0].mxu0
  %v1037 = vpop.f32.mrb[0].mxu0
  %v1038 = vpop.f32.mrb[0].mxu0
  %1039 = vdwg.mxu0
  %1040 = vmatprep.subr.bf16.mxu0 0
  %1041 = vmatpush1.bf16.msra.mxu0 %v772
  %1042 = vmatprep.subr.bf16.mxu0 0
  %1043 = vmatpush1.bf16.msra.mxu0 %v773
  %1044 = vmatprep.subr.bf16.mxu0 0
  %1045 = vmatpush1.bf16.msra.mxu0 %v774
  %1046 = vmatprep.subr.bf16.mxu0 0
  %1047 = vmatpush1.bf16.msra.mxu0 %v775
  %1048 = vmatprep.subr.bf16.mxu0 0
  %1049 = vmatpush1.bf16.msra.mxu0 %v776
  %1050 = vmatprep.subr.bf16.mxu0 0
  %1051 = vmatpush1.bf16.msra.mxu0 %v777
  %1052 = vmatprep.subr.bf16.mxu0 0
  %1053 = vmatpush1.bf16.msra.mxu0 %v778
  %1054 = vmatprep.subr.bf16.mxu0 0
  %1055 = vmatpush1.bf16.msra.mxu0 %v779
  %1056 = vmatprep.subr.bf16.mxu0 0
  %1057 = vmatpush1.bf16.msra.mxu0 %v780
  %1058 = vmatprep.subr.bf16.mxu0 0
  %1059 = vmatpush1.bf16.msra.mxu0 %v781
  %1060 = vmatprep.subr.bf16.mxu0 0
  %1061 = vmatpush1.bf16.msra.mxu0 %v782
  %1062 = vmatprep.subr.bf16.mxu0 0
  %1063 = vmatpush1.bf16.msra.mxu0 %v783
  %1064 = vmatprep.subr.bf16.mxu0 0
  %1065 = vmatpush1.bf16.msra.mxu0 %v784
  %1066 = vmatprep.subr.bf16.mxu0 0
  %1067 = vmatpush1.bf16.msra.mxu0 %v785
  %1068 = vmatprep.subr.bf16.mxu0 0
  %1069 = vmatpush1.bf16.msra.mxu0 %v786
  %1070 = vmatprep.subr.bf16.mxu0 0
  %1071 = vmatpush1.bf16.msra.mxu0 %v787
  %1072 = vmatprep.mubr.bf16.mxu0 %v268
  %1073 = vmatmul.mubr.bf16.gmra.mrb[0].mxu0 %v260
  %v1074 = vpop.f32.mrb[0].mxu0
  %v1075 = vadd.f32 %v1035, %v1074
  %v1076 = vpop.f32.mrb[0].mxu0
  %v1077 = vpop.f32.mrb[0].mxu0
  %v1078 = vpop.f32.mrb[0].mxu0
  %1079 = vdwg.mxu0
  %1080 = vmatprep.subr.bf16.mxu0 0
  %1081 = vmatpush1.bf16.msra.mxu0 %v788
  %1082 = vmatprep.subr.bf16.mxu0 0
  %1083 = vmatpush1.bf16.msra.mxu0 %v789
  %1084 = vmatprep.subr.bf16.mxu0 0
  %1085 = vmatpush1.bf16.msra.mxu0 %v790
  %1086 = vmatprep.subr.bf16.mxu0 0
  %1087 = vmatpush1.bf16.msra.mxu0 %v791
  %1088 = vmatprep.subr.bf16.mxu0 0
  %1089 = vmatpush1.bf16.msra.mxu0 %v792
  %1090 = vmatprep.subr.bf16.mxu0 0
  %1091 = vmatpush1.bf16.msra.mxu0 %v793
  %1092 = vmatprep.subr.bf16.mxu0 0
  %1093 = vmatpush1.bf16.msra.mxu0 %v794
  %1094 = vmatprep.subr.bf16.mxu0 0
  %1095 = vmatpush1.bf16.msra.mxu0 %v795
  %1096 = vmatprep.subr.bf16.mxu0 0
  %1097 = vmatpush1.bf16.msra.mxu0 %v796
  %1098 = vmatprep.subr.bf16.mxu0 0
  %1099 = vmatpush1.bf16.msra.mxu0 %v797
  %1100 = vmatprep.subr.bf16.mxu0 0
  %1101 = vmatpush1.bf16.msra.mxu0 %v798
  %1102 = vmatprep.subr.bf16.mxu0 0
  %1103 = vmatpush1.bf16.msra.mxu0 %v799
  %1104 = vmatprep.subr.bf16.mxu0 0
  %1105 = vmatpush1.bf16.msra.mxu0 %v800
  %1106 = vmatprep.subr.bf16.mxu0 0
  %1107 = vmatpush1.bf16.msra.mxu0 %v801
  %1108 = vmatprep.subr.bf16.mxu0 0
  %1109 = vmatpush1.bf16.msra.mxu0 %v802
  %1110 = vmatprep.subr.bf16.mxu0 0
  %1111 = vmatpush1.bf16.msra.mxu0 %v803
  %1112 = vmatprep.mubr.bf16.mxu0 %v269
  %1113 = vmatmul.mubr.bf16.gmra.mrb[0].mxu0 %v267
  %v1114 = vpop.f32.mrb[0].mxu0
  %v1115 = vadd.f32 %v1075, %v1114
  %v1116 = vpop.f32.mrb[0].mxu0
  %v1117 = vpop.f32.mrb[0].mxu0
  %v1118 = vpop.f32.mrb[0].mxu0
  %1119 = vdwg.mxu0
  %1120 = vmatprep.subr.bf16.mxu0 0
  %1121 = vmatpush1.bf16.msra.mxu0 %v804
  %1122 = vmatprep.subr.bf16.mxu0 0
  %1123 = vmatpush1.bf16.msra.mxu0 %v805
  %1124 = vmatprep.subr.bf16.mxu0 0
  %1125 = vmatpush1.bf16.msra.mxu0 %v806
  %1126 = vmatprep.subr.bf16.mxu0 0
  %1127 = vmatpush1.bf16.msra.mxu0 %v807
  %1128 = vmatprep.subr.bf16.mxu0 0
  %1129 = vmatpush1.bf16.msra.mxu0 %v808
  %1130 = vmatprep.subr.bf16.mxu0 0
  %1131 = vmatpush1.bf16.msra.mxu0 %v809
  %1132 = vmatprep.subr.bf16.mxu0 0
  %1133 = vmatpush1.bf16.msra.mxu0 %v810
  %1134 = vmatprep.subr.bf16.mxu0 0
  %1135 = vmatpush1.bf16.msra.mxu0 %v811
  %1136 = vmatprep.subr.bf16.mxu0 0
  %1137 = vmatpush1.bf16.msra.mxu0 %v812
  %1138 = vmatprep.subr.bf16.mxu0 0
  %1139 = vmatpush1.bf16.msra.mxu0 %v813
  %1140 = vmatprep.subr.bf16.mxu0 0
  %1141 = vmatpush1.bf16.msra.mxu0 %v814
  %1142 = vmatprep.subr.bf16.mxu0 0
  %1143 = vmatpush1.bf16.msra.mxu0 %v815
  %1144 = vmatprep.subr.bf16.mxu0 0
  %1145 = vmatpush1.bf16.msra.mxu0 %v816
  %1146 = vmatprep.subr.bf16.mxu0 0
  %1147 = vmatpush1.bf16.msra.mxu0 %v817
  %1148 = vmatprep.subr.bf16.mxu0 0
  %1149 = vmatpush1.bf16.msra.mxu0 %v818
  %1150 = vmatprep.subr.bf16.mxu0 0
  %1151 = vmatpush1.bf16.msra.mxu0 %v819
  %1152 = vmatprep.mubr.bf16.mxu0 %v285
  %1153 = vmatmul.mubr.bf16.gmra.mrb[0].mxu0 %v277
  %v1154 = vpop.f32.mrb[0].mxu0
  %v1155 = vadd.f32 %v1115, %v1154
  %v1156 = vpop.f32.mrb[0].mxu0
  %v1157 = vpop.f32.mrb[0].mxu0
  %v1158 = vpop.f32.mrb[0].mxu0
  %1159 = vdwg.mxu0
  %1160 = vmatprep.subr.bf16.mxu0 0
  %1161 = vmatpush1.bf16.msra.mxu0 %v820
  %1162 = vmatprep.subr.bf16.mxu0 0
  %1163 = vmatpush1.bf16.msra.mxu0 %v821
  %1164 = vmatprep.subr.bf16.mxu0 0
  %1165 = vmatpush1.bf16.msra.mxu0 %v822
  %1166 = vmatprep.subr.bf16.mxu0 0
  %1167 = vmatpush1.bf16.msra.mxu0 %v823
  %1168 = vmatprep.subr.bf16.mxu0 0
  %1169 = vmatpush1.bf16.msra.mxu0 %v824
  %1170 = vmatprep.subr.bf16.mxu0 0
  %1171 = vmatpush1.bf16.msra.mxu0 %v825
  %1172 = vmatprep.subr.bf16.mxu0 0
  %1173 = vmatpush1.bf16.msra.mxu0 %v826
  %1174 = vmatprep.subr.bf16.mxu0 0
  %1175 = vmatpush1.bf16.msra.mxu0 %v827
  %1176 = vmatprep.subr.bf16.mxu0 0
  %1177 = vmatpush1.bf16.msra.mxu0 %v828
  %1178 = vmatprep.subr.bf16.mxu0 0
  %1179 = vmatpush1.bf16.msra.mxu0 %v829
  %1180 = vmatprep.subr.bf16.mxu0 0
  %1181 = vmatpush1.bf16.msra.mxu0 %v830
  %1182 = vmatprep.subr.bf16.mxu0 0
  %1183 = vmatpush1.bf16.msra.mxu0 %v831
  %1184 = vmatprep.subr.bf16.mxu0 0
  %1185 = vmatpush1.bf16.msra.mxu0 %v832
  %1186 = vmatprep.subr.bf16.mxu0 0
  %1187 = vmatpush1.bf16.msra.mxu0 %v833
  %1188 = vmatprep.subr.bf16.mxu0 0
  %1189 = vmatpush1.bf16.msra.mxu0 %v834
  %1190 = vmatprep.subr.bf16.mxu0 0
  %1191 = vmatpush1.bf16.msra.mxu0 %v835
  %1192 = vmatprep.mubr.bf16.mxu0 %v286
  %1193 = vmatmul.mubr.bf16.gmra.mrb[0].mxu0 %v284
  %v1194 = vpop.f32.mrb[0].mxu0
  %v1195 = vadd.f32 %v1155, %v1194
  %v1196 = vpop.f32.mrb[0].mxu0
  %v1197 = vpop.f32.mrb[0].mxu0
  %v1198 = vpop.f32.mrb[0].mxu0
  %1199 = vdwg.mxu0
  %1200 = vmatprep.subr.bf16.mxu0 0
  %1201 = vmatpush1.bf16.msra.mxu0 %v836
  %1202 = vmatprep.subr.bf16.mxu0 0
  %1203 = vmatpush1.bf16.msra.mxu0 %v837
  %1204 = vmatprep.subr.bf16.mxu0 0
  %1205 = vmatpush1.bf16.msra.mxu0 %v838
  %1206 = vmatprep.subr.bf16.mxu0 0
  %1207 = vmatpush1.bf16.msra.mxu0 %v839
  %1208 = vmatprep.subr.bf16.mxu0 0
  %1209 = vmatpush1.bf16.msra.mxu0 %v840
  %1210 = vmatprep.subr.bf16.mxu0 0
  %1211 = vmatpush1.bf16.msra.mxu0 %v841
  %1212 = vmatprep.subr.bf16.mxu0 0
  %1213 = vmatpush1.bf16.msra.mxu0 %v842
  %1214 = vmatprep.subr.bf16.mxu0 0
  %1215 = vmatpush1.bf16.msra.mxu0 %v843
  %1216 = vmatprep.subr.bf16.mxu0 0
  %1217 = vmatpush1.bf16.msra.mxu0 %v844
  %1218 = vmatprep.subr.bf16.mxu0 0
  %1219 = vmatpush1.bf16.msra.mxu0 %v845
  %1220 = vmatprep.subr.bf16.mxu0 0
  %1221 = vmatpush1.bf16.msra.mxu0 %v846
  %1222 = vmatprep.subr.bf16.mxu0 0
  %1223 = vmatpush1.bf16.msra.mxu0 %v847
  %1224 = vmatprep.subr.bf16.mxu0 0
  %1225 = vmatpush1.bf16.msra.mxu0 0
  %1226 = vmatprep.subr.bf16.mxu0 0
  %1227 = vmatpush1.bf16.msra.mxu0 0
  %1228 = vmatprep.subr.bf16.mxu0 0
  %1229 = vmatpush1.bf16.msra.mxu0 0
  %1230 = vmatprep.subr.bf16.mxu0 0
  %1231 = vmatpush1.bf16.msra.mxu0 0
  %1232 = vmatprep.mubr.bf16.mxu0 %v958
  %1233 = vmatmul.mubr.bf16.gmra.mrb[0].mxu0 %v293
  %v1234 = vpop.f32.mrb[0].mxu0
  %v1235 = vadd.f32 %v1195, %v1234
  %v1236 = vpop.f32.mrb[0].mxu0
  %v1237 = vpop.f32.mrb[0].mxu0
  %v1238 = vpop.f32.mrb[0].mxu0
  %1239 = vdwg.mxu0
  %v1240 = vmax.f32 %v1235, 0.0
  %v1241 = vpack.c.bf16 %v1240, %v1240
  %vm1242 = vcmask 517120
  %1243 = vst.msk [vmem:[%s2] sm:$0x3] %vm1242, %v1241
  // Predicated region
  $region10: #{cost_reg_forward.17} parent=0 // pred_check
    _
  $region11: #{cost_reg_forward.17} parent=0 // pred_check_branch
    %1245 = sbr.rel (0) target = $region13
  $region12: #{cost_reg_forward.17} parent=0 // pred_region
    _
  $region13: #{cost_reg_forward.17} parent=0 // pred_fallthru
    _
  // Predicated region
  $region14: #{cost_reg_forward.17} parent=0 // pred_check
    _
  $region15: #{cost_reg_forward.17} parent=0 // pred_check_branch
    %1247 = sbr.rel (0) target = $region17
  $region16: #{cost_reg_forward.17} parent=0 // pred_region
    _
  $region17: #{cost_reg_forward.17} parent=0 // pred_fallthru
    _

// kernel: cost_reg_forward.18
$region0: #{cost_reg_forward.18}
  #allocation0 [shape = 'u32[]', space=smem, size = 0x4, offset = 0x4, fixed_abs, tag = 'smem constant byte address 0x4 - core index']
  #allocation1 [shape = 'u32[144,128]{1,0:T(1,128)}', space=vmem, size = 0x12000, scoped, tag = 'internal scratch']
  %s0 = inlined_call_operand.vmem [shape: bf16[4,512], index: 0, kind: input, shape index: {}]
  %s1 = inlined_call_operand.vmem [shape: bf16[512,256], index: 1, kind: input, shape index: {}]
  %s2 = inlined_call_operand.vmem [shape: bf16[4,256], index: 2, kind: input, shape index: {}]
  %s3 = inlined_call_operand.vmem [shape: bf16[4,256], index: 3, kind: output, shape index: {}]
  %s4 = sld [smem:[#allocation0]]
  $region22: #{cost_reg_forward.18} parent=0
    _
  %s6 = ssub.s32 1, %s4
  %s7 = scalar_select 0, %s6, %s4
  // Predicated region
  $region2: #{cost_reg_forward.18} parent=0 // pred_check
    _
  $region3: #{cost_reg_forward.18} parent=0 // pred_check_branch
    %9 = sbr.rel (0) target = $region5
  $region4: #{cost_reg_forward.18} parent=0 // pred_region
    _
  $region5: #{cost_reg_forward.18} parent=0 // pred_fallthru
    _
  // Predicated region
  $region6: #{cost_reg_forward.18} parent=0 // pred_check
    _
  $region7: #{cost_reg_forward.18} parent=0 // pred_check_branch
    %11 = sbr.rel (0) target = $region9
  $region8: #{cost_reg_forward.18} parent=0 // pred_region
    _
  $region9: #{cost_reg_forward.18} parent=0 // pred_fallthru
    _
  // Predicated region
  $region10: #{cost_reg_forward.18} parent=0 // pred_check
    _
  $region11: #{cost_reg_forward.18} parent=0 // pred_check_branch
    %13 = sbr.rel (0) target = $region13
  $region12: #{cost_reg_forward.18} parent=0 // pred_region
    _
  $region13: #{cost_reg_forward.18} parent=0 // pred_fallthru
    _
  %v14 = vld [vmem:[%s0] sm:$0xff]
  %v15 = vld [vmem:[%s1] sm:$0xff]
  %v16 = vld [vmem:[%s1 + $0x8] sm:$0xff]
  %v17 = vld [vmem:[%s1 + $0x10] sm:$0xff]
  %v18 = vld [vmem:[%s1 + $0x18] sm:$0xff]
  %v19 = vld [vmem:[%s1 + $0x20] sm:$0xff]
  %v20 = vld [vmem:[%s1 + $0x28] sm:$0xff]
  %v21 = vld [vmem:[%s1 + $0x30] sm:$0xff]
  %v22 = vld [vmem:[%s1 + $0x38] sm:$0xff]
  %v23 = vld [vmem:[%s1 + $0x40] sm:$0xff]
  %v24 = vld [vmem:[%s1 + $0x48] sm:$0xff]
  %v25 = vld [vmem:[%s1 + $0x50] sm:$0xff]
  %v26 = vld [vmem:[%s1 + $0x58] sm:$0xff]
  %v27 = vld [vmem:[%s1 + $0x60] sm:$0xff]
  %v28 = vld [vmem:[%s1 + $0x68] sm:$0xff]
  %v29 = vld [vmem:[%s1 + $0x70] sm:$0xff]
  %v30 = vld [vmem:[%s1 + $0x78] sm:$0xff]
  %v31 = vld [vmem:[%s1 + $0x80] sm:$0xff]
  %v32 = vld [vmem:[%s1 + $0x88] sm:$0xff]
  %v33 = vld [vmem:[%s1 + $0x90] sm:$0xff]
  %v34 = vld [vmem:[%s1 + $0x98] sm:$0xff]
  %v35 = vld [vmem:[%s1 + $0xa0] sm:$0xff]
  %v36 = vld [vmem:[%s1 + $0xa8] sm:$0xff]
  %v37 = vld [vmem:[%s1 + $0xb0] sm:$0xff]
  %v38 = vld [vmem:[%s1 + $0xb8] sm:$0xff]
  %v39 = vld [vmem:[%s1 + $0xc0] sm:$0xff]
  %v40 = vld [vmem:[%s1 + $0xc8] sm:$0xff]
  %v41 = vld [vmem:[%s1 + $0xd0] sm:$0xff]
  %v42 = vld [vmem:[%s1 + $0xd8] sm:$0xff]
  %v43 = vld [vmem:[%s1 + $0xe0] sm:$0xff]
  %v44 = vld [vmem:[%s1 + $0xe8] sm:$0xff]
  %v45 = vld [vmem:[%s1 + $0xf0] sm:$0xff]
  %v46 = vld [vmem:[%s1 + $0xf8] sm:$0xff]
  %v47 = vld [vmem:[%s1 + $0x100] sm:$0xff]
  %v48 = vld [vmem:[%s1 + $0x108] sm:$0xff]
  %v49 = vld [vmem:[%s1 + $0x110] sm:$0xff]
  %v50 = vld [vmem:[%s1 + $0x118] sm:$0xff]
  %v51 = vld [vmem:[%s1 + $0x120] sm:$0xff]
  %v52 = vld [vmem:[%s1 + $0x128] sm:$0xff]
  %v53 = vld [vmem:[%s1 + $0x130] sm:$0xff]
  %v54 = vld [vmem:[%s1 + $0x138] sm:$0xff]
  %v55 = vld [vmem:[%s1 + $0x140] sm:$0xff]
  %v56 = vld [vmem:[%s1 + $0x148] sm:$0xff]
  %v57 = vld [vmem:[%s1 + $0x150] sm:$0xff]
  %v58 = vld [vmem:[%s1 + $0x158] sm:$0xff]
  %v59 = vld [vmem:[%s1 + $0x160] sm:$0xff]
  %v60 = vld [vmem:[%s1 + $0x168] sm:$0xff]
  %v61 = vld [vmem:[%s1 + $0x170] sm:$0xff]
  %v62 = vld [vmem:[%s1 + $0x178] sm:$0xff]
  %v63 = vld [vmem:[%s1 + $0x180] sm:$0xff]
  %v64 = vld [vmem:[%s1 + $0x188] sm:$0xff]
  %v65 = vld [vmem:[%s1 + $0x190] sm:$0xff]
  %v66 = vld [vmem:[%s1 + $0x198] sm:$0xff]
  %v67 = vld [vmem:[%s1 + $0x1a0] sm:$0xff]
  %v68 = vld [vmem:[%s1 + $0x1a8] sm:$0xff]
  %v69 = vld [vmem:[%s1 + $0x1b0] sm:$0xff]
  %v70 = vld [vmem:[%s1 + $0x1b8] sm:$0xff]
  %v71 = vld [vmem:[%s1 + $0x1c0] sm:$0xff]
  %v72 = vld [vmem:[%s1 + $0x1c8] sm:$0xff]
  %v73 = vld [vmem:[%s1 + $0x1d0] sm:$0xff]
  %v74 = vld [vmem:[%s1 + $0x1d8] sm:$0xff]
  %v75 = vld [vmem:[%s1 + $0x1e0] sm:$0xff]
  %v76 = vld [vmem:[%s1 + $0x1e8] sm:$0xff]
  %v77 = vld [vmem:[%s1 + $0x1f0] sm:$0xff]
  %v78 = vld [vmem:[%s1 + $0x1f8] sm:$0xff]
  %v80 = vcombine.high %v14, %v14
  %v82 = vunpack.c.l.s4 1983009808
  %v83 = vunpack.c.0.s8 %v82
  %v84 = vlaneseq
  %v85 = vshrl.u32 %v84, 7
  %v86 = vsub.s32 %v83, %v85
  %v87 = vrot.slane %v14, %v86
  %v89 = vunpack.c.l.s4 1983009808
  %v90 = vunpack.c.0.s8 %v89
  %v91 = vlaneseq
  %v92 = vshrl.u32 %v91, 7
  %v93 = vsub.s32 %v90, %v92
  %v94 = vrot.slane %v80, %v93
  %v95 = vcombine.high %v87, %v87
  %v96 = vcombine.high %v94, %v94
  %v165 = vunpack.c.l.b16 %v15
  %v166 = vunpack.c.h.b16 %v15
  %v167 = vunpack.c.l.b16 %v16
  %v168 = vunpack.c.h.b16 %v16
  %v169 = vunpack.c.l.b16 %v17
  %v170 = vunpack.c.h.b16 %v17
  %v171 = vunpack.c.l.b16 %v18
  %v172 = vunpack.c.h.b16 %v18
  %v173 = vunpack.c.l.b16 %v19
  %v174 = vunpack.c.h.b16 %v19
  %v175 = vunpack.c.l.b16 %v20
  %v176 = vunpack.c.h.b16 %v20
  %v177 = vunpack.c.l.b16 %v21
  %v178 = vunpack.c.h.b16 %v21
  %v179 = vunpack.c.l.b16 %v22
  %v180 = vunpack.c.h.b16 %v22
  %v181 = vunpack.c.l.b16 %v23
  %v182 = vunpack.c.h.b16 %v23
  %v183 = vunpack.c.l.b16 %v24
  %v184 = vunpack.c.h.b16 %v24
  %v185 = vunpack.c.l.b16 %v25
  %v186 = vunpack.c.h.b16 %v25
  %v187 = vunpack.c.l.b16 %v26
  %v188 = vunpack.c.h.b16 %v26
  %v189 = vunpack.c.l.b16 %v27
  %v190 = vunpack.c.h.b16 %v27
  %v191 = vunpack.c.l.b16 %v28
  %v192 = vunpack.c.h.b16 %v28
  %v193 = vunpack.c.l.b16 %v29
  %v194 = vunpack.c.h.b16 %v29
  %v195 = vunpack.c.l.b16 %v30
  %v196 = vunpack.c.h.b16 %v30
  %v197 = vunpack.c.l.b16 %v31
  %v198 = vunpack.c.h.b16 %v31
  %v199 = vunpack.c.l.b16 %v32
  %v200 = vunpack.c.h.b16 %v32
  %v201 = vunpack.c.l.b16 %v33
  %v202 = vunpack.c.h.b16 %v33
  %v203 = vunpack.c.l.b16 %v34
  %v204 = vunpack.c.h.b16 %v34
  %v205 = vunpack.c.l.b16 %v35
  %v206 = vunpack.c.h.b16 %v35
  %v207 = vunpack.c.l.b16 %v36
  %v208 = vunpack.c.h.b16 %v36
  %v209 = vunpack.c.l.b16 %v37
  %v210 = vunpack.c.h.b16 %v37
  %v211 = vunpack.c.l.b16 %v38
  %v212 = vunpack.c.h.b16 %v38
  %v213 = vunpack.c.l.b16 %v39
  %v214 = vunpack.c.h.b16 %v39
  %v215 = vunpack.c.l.b16 %v40
  %v216 = vunpack.c.h.b16 %v40
  %v217 = vunpack.c.l.b16 %v41
  %v218 = vunpack.c.h.b16 %v41
  %v219 = vunpack.c.l.b16 %v42
  %v220 = vunpack.c.h.b16 %v42
  %v221 = vunpack.c.l.b16 %v43
  %v222 = vunpack.c.h.b16 %v43
  %v223 = vunpack.c.l.b16 %v44
  %v224 = vunpack.c.h.b16 %v44
  %v225 = vunpack.c.l.b16 %v45
  %v226 = vunpack.c.h.b16 %v45
  %v227 = vunpack.c.l.b16 %v46
  %v228 = vunpack.c.h.b16 %v46
  %v229 = vunpack.c.l.b16 %v47
  %v230 = vunpack.c.h.b16 %v47
  %v231 = vunpack.c.l.b16 %v48
  %v232 = vunpack.c.h.b16 %v48
  %v233 = vunpack.c.l.b16 %v49
  %v234 = vunpack.c.h.b16 %v49
  %v235 = vunpack.c.l.b16 %v50
  %v236 = vunpack.c.h.b16 %v50
  %v237 = vunpack.c.l.b16 %v51
  %v238 = vunpack.c.h.b16 %v51
  %v239 = vunpack.c.l.b16 %v52
  %v240 = vunpack.c.h.b16 %v52
  %v241 = vunpack.c.l.b16 %v53
  %v242 = vunpack.c.h.b16 %v53
  %v243 = vunpack.c.l.b16 %v54
  %v244 = vunpack.c.h.b16 %v54
  %v245 = vunpack.c.l.b16 %v55
  %v246 = vunpack.c.h.b16 %v55
  %v247 = vunpack.c.l.b16 %v56
  %v248 = vunpack.c.h.b16 %v56
  %v249 = vunpack.c.l.b16 %v57
  %v250 = vunpack.c.h.b16 %v57
  %v251 = vunpack.c.l.b16 %v58
  %v252 = vunpack.c.h.b16 %v58
  %v253 = vunpack.c.l.b16 %v59
  %v254 = vunpack.c.h.b16 %v59
  %v255 = vunpack.c.l.b16 %v60
  %v256 = vunpack.c.h.b16 %v60
  %v257 = vunpack.c.l.b16 %v61
  %v258 = vunpack.c.h.b16 %v61
  %v259 = vunpack.c.l.b16 %v62
  %v260 = vunpack.c.h.b16 %v62
  %v261 = vunpack.c.l.b16 %v63
  %v262 = vunpack.c.h.b16 %v63
  %v263 = vunpack.c.l.b16 %v64
  %v264 = vunpack.c.h.b16 %v64
  %v265 = vunpack.c.l.b16 %v65
  %v266 = vunpack.c.h.b16 %v65
  %v267 = vunpack.c.l.b16 %v66
  %v268 = vunpack.c.h.b16 %v66
  %v269 = vunpack.c.l.b16 %v67
  %v270 = vunpack.c.h.b16 %v67
  %v271 = vunpack.c.l.b16 %v68
  %v272 = vunpack.c.h.b16 %v68
  %v273 = vunpack.c.l.b16 %v69
  %v274 = vunpack.c.h.b16 %v69
  %v275 = vunpack.c.l.b16 %v70
  %v276 = vunpack.c.h.b16 %v70
  %v277 = vunpack.c.l.b16 %v71
  %v278 = vunpack.c.h.b16 %v71
  %v279 = vunpack.c.l.b16 %v72
  %v280 = vunpack.c.h.b16 %v72
  %v281 = vunpack.c.l.b16 %v73
  %v282 = vunpack.c.h.b16 %v73
  %v283 = vunpack.c.l.b16 %v74
  %v284 = vunpack.c.h.b16 %v74
  %v285 = vunpack.c.l.b16 %v75
  %v286 = vunpack.c.h.b16 %v75
  %v287 = vunpack.c.l.b16 %v76
  %v288 = vunpack.c.h.b16 %v76
  %v289 = vunpack.c.l.b16 %v77
  %v290 = vunpack.c.h.b16 %v77
  %v291 = vunpack.c.l.b16 %v78
  %v292 = vunpack.c.h.b16 %v78
  %v293 = vpack.c.b16 %v167, %v165
  %v294 = vpack.c.b16 %v168, %v166
  %v295 = vpack.c.b16 %v171, %v169
  %v296 = vpack.c.b16 %v172, %v170
  %v297 = vpack.c.b16 %v175, %v173
  %v298 = vpack.c.b16 %v176, %v174
  %v299 = vpack.c.b16 %v179, %v177
  %v300 = vpack.c.b16 %v180, %v178
  %v301 = vpack.c.b16 %v183, %v181
  %v302 = vpack.c.b16 %v184, %v182
  %v303 = vpack.c.b16 %v187, %v185
  %v304 = vpack.c.b16 %v188, %v186
  %v305 = vpack.c.b16 %v191, %v189
  %v306 = vpack.c.b16 %v192, %v190
  %v307 = vpack.c.b16 %v195, %v193
  %v308 = vpack.c.b16 %v196, %v194
  %v309 = vpack.c.b16 %v199, %v197
  %v310 = vpack.c.b16 %v200, %v198
  %v311 = vpack.c.b16 %v203, %v201
  %v312 = vpack.c.b16 %v204, %v202
  %v313 = vpack.c.b16 %v207, %v205
  %v314 = vpack.c.b16 %v208, %v206
  %v315 = vpack.c.b16 %v211, %v209
  %v316 = vpack.c.b16 %v212, %v210
  %v317 = vpack.c.b16 %v215, %v213
  %v318 = vpack.c.b16 %v216, %v214
  %v319 = vpack.c.b16 %v219, %v217
  %v320 = vpack.c.b16 %v220, %v218
  %v321 = vpack.c.b16 %v223, %v221
  %v322 = vpack.c.b16 %v224, %v222
  %v323 = vpack.c.b16 %v227, %v225
  %v324 = vpack.c.b16 %v228, %v226
  %v325 = vpack.c.b16 %v231, %v229
  %v326 = vpack.c.b16 %v232, %v230
  %v327 = vpack.c.b16 %v235, %v233
  %v328 = vpack.c.b16 %v236, %v234
  %v329 = vpack.c.b16 %v239, %v237
  %v330 = vpack.c.b16 %v240, %v238
  %v331 = vpack.c.b16 %v243, %v241
  %v332 = vpack.c.b16 %v244, %v242
  %v333 = vpack.c.b16 %v247, %v245
  %v334 = vpack.c.b16 %v248, %v246
  %v335 = vpack.c.b16 %v251, %v249
  %v336 = vpack.c.b16 %v252, %v250
  %v337 = vpack.c.b16 %v255, %v253
  %v338 = vpack.c.b16 %v256, %v254
  %v339 = vpack.c.b16 %v259, %v257
  %v340 = vpack.c.b16 %v260, %v258
  %v341 = vpack.c.b16 %v263, %v261
  %v342 = vpack.c.b16 %v264, %v262
  %v343 = vpack.c.b16 %v267, %v265
  %v344 = vpack.c.b16 %v268, %v266
  %v345 = vpack.c.b16 %v271, %v269
  %v346 = vpack.c.b16 %v272, %v270
  %v347 = vpack.c.b16 %v275, %v273
  %v348 = vpack.c.b16 %v276, %v274
  %v349 = vpack.c.b16 %v279, %v277
  %v350 = vpack.c.b16 %v280, %v278
  %v351 = vpack.c.b16 %v283, %v281
  %v352 = vpack.c.b16 %v284, %v282
  %v353 = vpack.c.b16 %v287, %v285
  %v354 = vpack.c.b16 %v288, %v286
  %v355 = vpack.c.b16 %v291, %v289
  %v356 = vpack.c.b16 %v292, %v290
  %421 = vmatprep.subr.bf16.mxu0 %v294
  %422 = vmatpush1.bf16.msra.mxu0 %v293
  %423 = vmatprep.subr.bf16.mxu0 %v296
  %424 = vmatpush1.bf16.msra.mxu0 %v295
  %425 = vmatprep.subr.bf16.mxu0 %v298
  %426 = vmatpush1.bf16.msra.mxu0 %v297
  %427 = vmatprep.subr.bf16.mxu0 %v300
  %428 = vmatpush1.bf16.msra.mxu0 %v299
  %429 = vmatprep.subr.bf16.mxu0 %v302
  %430 = vmatpush1.bf16.msra.mxu0 %v301
  %431 = vmatprep.subr.bf16.mxu0 %v304
  %432 = vmatpush1.bf16.msra.mxu0 %v303
  %433 = vmatprep.subr.bf16.mxu0 %v306
  %434 = vmatpush1.bf16.msra.mxu0 %v305
  %435 = vmatprep.subr.bf16.mxu0 %v308
  %436 = vmatpush1.bf16.msra.mxu0 %v307
  %437 = vmatprep.subr.bf16.mxu0 %v310
  %438 = vmatpush1.bf16.msra.mxu0 %v309
  %439 = vmatprep.subr.bf16.mxu0 %v312
  %440 = vmatpush1.bf16.msra.mxu0 %v311
  %441 = vmatprep.subr.bf16.mxu0 %v314
  %442 = vmatpush1.bf16.msra.mxu0 %v313
  %443 = vmatprep.subr.bf16.mxu0 %v316
  %444 = vmatpush1.bf16.msra.mxu0 %v315
  %445 = vmatprep.subr.bf16.mxu0 %v318
  %446 = vmatpush1.bf16.msra.mxu0 %v317
  %447 = vmatprep.subr.bf16.mxu0 %v320
  %448 = vmatpush1.bf16.msra.mxu0 %v319
  %449 = vmatprep.subr.bf16.mxu0 %v322
  %450 = vmatpush1.bf16.msra.mxu0 %v321
  %451 = vmatprep.subr.bf16.mxu0 %v324
  %452 = vmatpush1.bf16.msra.mxu0 %v323
  %453 = vmatprep.mubr.bf16.mxu0 %v95
  %454 = vmatmul.mubr.bf16.gmra.mrb[0].mxu0 %v87
  %v455 = vpop.f32.mrb[0].mxu0
  %v456 = vadd.f32 0.0, %v455
  %v457 = vpop.f32.mrb[0].mxu0
  %v458 = vadd.f32 0.0, %v457
  %v459 = vpop.f32.mrb[0].mxu0
  %v460 = vpop.f32.mrb[0].mxu0
  %461 = vdwg.mxu0
  %462 = vmatprep.subr.bf16.mxu0 %v326
  %463 = vmatpush1.bf16.msra.mxu0 %v325
  %464 = vmatprep.subr.bf16.mxu0 %v328
  %465 = vmatpush1.bf16.msra.mxu0 %v327
  %466 = vmatprep.subr.bf16.mxu0 %v330
  %467 = vmatpush1.bf16.msra.mxu0 %v329
  %468 = vmatprep.subr.bf16.mxu0 %v332
  %469 = vmatpush1.bf16.msra.mxu0 %v331
  %470 = vmatprep.subr.bf16.mxu0 %v334
  %471 = vmatpush1.bf16.msra.mxu0 %v333
  %472 = vmatprep.subr.bf16.mxu0 %v336
  %473 = vmatpush1.bf16.msra.mxu0 %v335
  %474 = vmatprep.subr.bf16.mxu0 %v338
  %475 = vmatpush1.bf16.msra.mxu0 %v337
  %476 = vmatprep.subr.bf16.mxu0 %v340
  %477 = vmatpush1.bf16.msra.mxu0 %v339
  %478 = vmatprep.subr.bf16.mxu0 %v342
  %479 = vmatpush1.bf16.msra.mxu0 %v341
  %480 = vmatprep.subr.bf16.mxu0 %v344
  %481 = vmatpush1.bf16.msra.mxu0 %v343
  %482 = vmatprep.subr.bf16.mxu0 %v346
  %483 = vmatpush1.bf16.msra.mxu0 %v345
  %484 = vmatprep.subr.bf16.mxu0 %v348
  %485 = vmatpush1.bf16.msra.mxu0 %v347
  %486 = vmatprep.subr.bf16.mxu0 %v350
  %487 = vmatpush1.bf16.msra.mxu0 %v349
  %488 = vmatprep.subr.bf16.mxu0 %v352
  %489 = vmatpush1.bf16.msra.mxu0 %v351
  %490 = vmatprep.subr.bf16.mxu0 %v354
  %491 = vmatpush1.bf16.msra.mxu0 %v353
  %492 = vmatprep.subr.bf16.mxu0 %v356
  %493 = vmatpush1.bf16.msra.mxu0 %v355
  %494 = vmatprep.mubr.bf16.mxu0 %v96
  %495 = vmatmul.mubr.bf16.gmra.mrb[0].mxu0 %v94
  %v496 = vpop.f32.mrb[0].mxu0
  %v497 = vadd.f32 %v456, %v496
  %v498 = vpop.f32.mrb[0].mxu0
  %v499 = vadd.f32 %v458, %v498
  %v500 = vpop.f32.mrb[0].mxu0
  %v501 = vpop.f32.mrb[0].mxu0
  %502 = vdwg.mxu0
  %v503 = vmax.f32 %v497, 0.0
  %v504 = vmax.f32 %v499, 0.0
  %v505 = vld [vmem:[%s2] sm:$0xf]
  %v506 = vunpack.c.l.bf16 %v505
  %v508 = vcombine.high %v506, %v506
  %v510 = vadd.f32 %v503, %v506
  %v511 = vadd.f32 %v504, %v508
  %v512 = vpack.c.bf16 %v510, %v510
  %v513 = vpack.c.bf16 %v511, %v511
  %v516 = vcombine.low %v512, %v513
  %v518 = vunpack.c.l.s4 1983009808
  %v519 = vunpack.c.0.s8 %v518
  %v520 = vlaneseq
  %v521 = vshrl.u32 %v520, 7
  %v522 = vsub.s32 %v519, %v521
  %v523 = vrot.slane %v516, %v522
  %525 = vst [vmem:[%s3] sm:$0xf] %v523
  // Predicated region
  $region14: #{cost_reg_forward.18} parent=0 // pred_check
    _
  $region15: #{cost_reg_forward.18} parent=0 // pred_check_branch
    %527 = sbr.rel (0) target = $region17
  $region16: #{cost_reg_forward.18} parent=0 // pred_region
    _
  $region17: #{cost_reg_forward.18} parent=0 // pred_fallthru
    _
  // Predicated region
  $region18: #{cost_reg_forward.18} parent=0 // pred_check
    _
  $region19: #{cost_reg_forward.18} parent=0 // pred_check_branch
    %529 = sbr.rel (0) target = $region21
  $region20: #{cost_reg_forward.18} parent=0 // pred_region
    _
  $region21: #{cost_reg_forward.18} parent=0 // pred_fallthru
    _

// kernel: cost_reg_forward.19
$region0: #{cost_reg_forward.19}
  #allocation0 [shape = 'u32[]', space=smem, size = 0x4, offset = 0x4, fixed_abs, tag = 'smem constant byte address 0x4 - core index']
  #allocation1 [shape = 'u32[144,128]{1,0:T(1,128)}', space=vmem, size = 0x12000, scoped, tag = 'internal scratch']
  %s0 = inlined_call_operand.vmem [shape: bf16[32,256], index: 0, kind: input, shape index: {}]
  %s1 = inlined_call_operand.vmem [shape: bf16[256,128], index: 1, kind: input, shape index: {}]
  %s2 = inlined_call_operand.vmem [shape: bf16[32,128], index: 2, kind: input, shape index: {}]
  %s3 = inlined_call_operand.vmem [shape: bf16[32,128], index: 3, kind: output, shape index: {}]
  %s4 = sld [smem:[#allocation0]]
  $region22: #{cost_reg_forward.19} parent=0
    _
  %s6 = ssub.s32 1, %s4
  %s7 = scalar_select 0, %s6, %s4
  // Predicated region
  $region2: #{cost_reg_forward.19} parent=0 // pred_check
    _
  $region3: #{cost_reg_forward.19} parent=0 // pred_check_branch
    %9 = sbr.rel (0) target = $region5
  $region4: #{cost_reg_forward.19} parent=0 // pred_region
    _
  $region5: #{cost_reg_forward.19} parent=0 // pred_fallthru
    _
  // Predicated region
  $region6: #{cost_reg_forward.19} parent=0 // pred_check
    _
  $region7: #{cost_reg_forward.19} parent=0 // pred_check_branch
    %11 = sbr.rel (0) target = $region9
  $region8: #{cost_reg_forward.19} parent=0 // pred_region
    _
  $region9: #{cost_reg_forward.19} parent=0 // pred_fallthru
    _
  // Predicated region
  $region10: #{cost_reg_forward.19} parent=0 // pred_check
    _
  $region11: #{cost_reg_forward.19} parent=0 // pred_check_branch
    %13 = sbr.rel (0) target = $region13
  $region12: #{cost_reg_forward.19} parent=0 // pred_region
    _
  $region13: #{cost_reg_forward.19} parent=0 // pred_fallthru
    _
  %v15 = vld [vmem:[%s0] sm:$0xff]
  %v16 = vld [vmem:[%s0 + $0x8] sm:$0xff]
  %v17 = vld [vmem:[%s0 + $0x10] sm:$0xff]
  %v18 = vld [vmem:[%s0 + $0x18] sm:$0xff]
  %v19 = vld [vmem:[%s1] sm:$0xf]
  %v20 = vld [vmem:[%s1 + $0x4] sm:$0xf]
  %v21 = vld [vmem:[%s1 + $0x8] sm:$0xf]
  %v22 = vld [vmem:[%s1 + $0xc] sm:$0xf]
  %v23 = vld [vmem:[%s1 + $0x10] sm:$0xf]
  %v24 = vld [vmem:[%s1 + $0x14] sm:$0xf]
  %v25 = vld [vmem:[%s1 + $0x18] sm:$0xf]
  %v26 = vld [vmem:[%s1 + $0x1c] sm:$0xf]
  %v27 = vld [vmem:[%s1 + $0x20] sm:$0xf]
  %v28 = vld [vmem:[%s1 + $0x24] sm:$0xf]
  %v29 = vld [vmem:[%s1 + $0x28] sm:$0xf]
  %v30 = vld [vmem:[%s1 + $0x2c] sm:$0xf]
  %v31 = vld [vmem:[%s1 + $0x30] sm:$0xf]
  %v32 = vld [vmem:[%s1 + $0x34] sm:$0xf]
  %v33 = vld [vmem:[%s1 + $0x38] sm:$0xf]
  %v34 = vld [vmem:[%s1 + $0x3c] sm:$0xf]
  %v35 = vld [vmem:[%s1 + $0x40] sm:$0xf]
  %v36 = vld [vmem:[%s1 + $0x44] sm:$0xf]
  %v37 = vld [vmem:[%s1 + $0x48] sm:$0xf]
  %v38 = vld [vmem:[%s1 + $0x4c] sm:$0xf]
  %v39 = vld [vmem:[%s1 + $0x50] sm:$0xf]
  %v40 = vld [vmem:[%s1 + $0x54] sm:$0xf]
  %v41 = vld [vmem:[%s1 + $0x58] sm:$0xf]
  %v42 = vld [vmem:[%s1 + $0x5c] sm:$0xf]
  %v43 = vld [vmem:[%s1 + $0x60] sm:$0xf]
  %v44 = vld [vmem:[%s1 + $0x64] sm:$0xf]
  %v45 = vld [vmem:[%s1 + $0x68] sm:$0xf]
  %v46 = vld [vmem:[%s1 + $0x6c] sm:$0xf]
  %v47 = vld [vmem:[%s1 + $0x70] sm:$0xf]
  %v48 = vld [vmem:[%s1 + $0x74] sm:$0xf]
  %v49 = vld [vmem:[%s1 + $0x78] sm:$0xf]
  %v50 = vld [vmem:[%s1 + $0x7c] sm:$0xf]
  %v55 = vunpack.c.l.b16 %v15
  %v56 = vunpack.c.h.b16 %v15
  %v57 = vunpack.c.l.b16 %v16
  %v58 = vunpack.c.h.b16 %v16
  %v59 = vunpack.c.l.b16 %v17
  %v60 = vunpack.c.h.b16 %v17
  %v61 = vunpack.c.l.b16 %v18
  %v62 = vunpack.c.h.b16 %v18
  %v63 = vpack.c.b16 %v57, %v55
  %v64 = vpack.c.b16 %v58, %v56
  %v65 = vpack.c.b16 %v61, %v59
  %v66 = vpack.c.b16 %v62, %v60
  %v103 = vunpack.c.l.b16 %v19
  %v104 = vunpack.c.l.b16 %v20
  %v105 = vunpack.c.l.b16 %v21
  %v106 = vunpack.c.l.b16 %v22
  %v107 = vunpack.c.l.b16 %v23
  %v108 = vunpack.c.l.b16 %v24
  %v109 = vunpack.c.l.b16 %v25
  %v110 = vunpack.c.l.b16 %v26
  %v111 = vunpack.c.l.b16 %v27
  %v112 = vunpack.c.l.b16 %v28
  %v113 = vunpack.c.l.b16 %v29
  %v114 = vunpack.c.l.b16 %v30
  %v115 = vunpack.c.l.b16 %v31
  %v116 = vunpack.c.l.b16 %v32
  %v117 = vunpack.c.l.b16 %v33
  %v118 = vunpack.c.l.b16 %v34
  %v119 = vunpack.c.l.b16 %v35
  %v120 = vunpack.c.l.b16 %v36
  %v121 = vunpack.c.l.b16 %v37
  %v122 = vunpack.c.l.b16 %v38
  %v123 = vunpack.c.l.b16 %v39
  %v124 = vunpack.c.l.b16 %v40
  %v125 = vunpack.c.l.b16 %v41
  %v126 = vunpack.c.l.b16 %v42
  %v127 = vunpack.c.l.b16 %v43
  %v128 = vunpack.c.l.b16 %v44
  %v129 = vunpack.c.l.b16 %v45
  %v130 = vunpack.c.l.b16 %v46
  %v131 = vunpack.c.l.b16 %v47
  %v132 = vunpack.c.l.b16 %v48
  %v133 = vunpack.c.l.b16 %v49
  %v134 = vunpack.c.l.b16 %v50
  %v135 = vpack.c.b16 %v104, %v103
  %v136 = vpack.c.b16 %v106, %v105
  %v137 = vpack.c.b16 %v108, %v107
  %v138 = vpack.c.b16 %v110, %v109
  %v139 = vpack.c.b16 %v112, %v111
  %v140 = vpack.c.b16 %v114, %v113
  %v141 = vpack.c.b16 %v116, %v115
  %v142 = vpack.c.b16 %v118, %v117
  %v143 = vpack.c.b16 %v120, %v119
  %v144 = vpack.c.b16 %v122, %v121
  %v145 = vpack.c.b16 %v124, %v123
  %v146 = vpack.c.b16 %v126, %v125
  %v147 = vpack.c.b16 %v128, %v127
  %v148 = vpack.c.b16 %v130, %v129
  %v149 = vpack.c.b16 %v132, %v131
  %v150 = vpack.c.b16 %v134, %v133
  %167 = vmatprep.subr.bf16.mxu0 0
  %168 = vmatpush1.bf16.msra.mxu0 %v135
  %169 = vmatprep.subr.bf16.mxu0 0
  %170 = vmatpush1.bf16.msra.mxu0 %v136
  %171 = vmatprep.subr.bf16.mxu0 0
  %172 = vmatpush1.bf16.msra.mxu0 %v137
  %173 = vmatprep.subr.bf16.mxu0 0
  %174 = vmatpush1.bf16.msra.mxu0 %v138
  %175 = vmatprep.subr.bf16.mxu0 0
  %176 = vmatpush1.bf16.msra.mxu0 %v139
  %177 = vmatprep.subr.bf16.mxu0 0
  %178 = vmatpush1.bf16.msra.mxu0 %v140
  %179 = vmatprep.subr.bf16.mxu0 0
  %180 = vmatpush1.bf16.msra.mxu0 %v141
  %181 = vmatprep.subr.bf16.mxu0 0
  %182 = vmatpush1.bf16.msra.mxu0 %v142
  %183 = vmatprep.subr.bf16.mxu0 0
  %184 = vmatpush1.bf16.msra.mxu0 %v143
  %185 = vmatprep.subr.bf16.mxu0 0
  %186 = vmatpush1.bf16.msra.mxu0 %v144
  %187 = vmatprep.subr.bf16.mxu0 0
  %188 = vmatpush1.bf16.msra.mxu0 %v145
  %189 = vmatprep.subr.bf16.mxu0 0
  %190 = vmatpush1.bf16.msra.mxu0 %v146
  %191 = vmatprep.subr.bf16.mxu0 0
  %192 = vmatpush1.bf16.msra.mxu0 %v147
  %193 = vmatprep.subr.bf16.mxu0 0
  %194 = vmatpush1.bf16.msra.mxu0 %v148
  %195 = vmatprep.subr.bf16.mxu0 0
  %196 = vmatpush1.bf16.msra.mxu0 %v149
  %197 = vmatprep.subr.bf16.mxu0 0
  %198 = vmatpush1.bf16.msra.mxu0 %v150
  %199 = vmatprep.mubr.bf16.mxu0 %v64
  %200 = vmatmul.mubr.bf16.gmra.mrb[0].mxu0 %v63
  %v201 = vpop.f32.mrb[0].mxu0
  %v202 = vadd.f32 0.0, %v201
  %v203 = vpop.f32.mrb[0].mxu0
  %v204 = vpop.f32.mrb[0].mxu0
  %v205 = vadd.f32 0.0, %v204
  %v206 = vpop.f32.mrb[0].mxu0
  %207 = vmatprep.mubr.bf16.mxu0 %v66
  %208 = vmatmul.mubr.bf16.gmra.mrb[0].mxu0 %v65
  %v209 = vpop.f32.mrb[0].mxu0
  %v210 = vadd.f32 0.0, %v209
  %v211 = vpop.f32.mrb[0].mxu0
  %v212 = vpop.f32.mrb[0].mxu0
  %v213 = vadd.f32 0.0, %v212
  %v214 = vpop.f32.mrb[0].mxu0
  %215 = vdwg.mxu0
  %v216 = vmax.f32 %v202, 0.0
  %v217 = vmax.f32 %v205, 0.0
  %v218 = vmax.f32 %v210, 0.0
  %v219 = vmax.f32 %v213, 0.0
  %v220 = vld [vmem:[%s2] sm:$0xf]
  %v221 = vld [vmem:[%s2 + $0x4] sm:$0xf]
  %v222 = vld [vmem:[%s2 + $0x8] sm:$0xf]
  %v223 = vld [vmem:[%s2 + $0xc] sm:$0xf]
  %v224 = vunpack.c.l.bf16 %v220
  %v225 = vunpack.c.l.bf16 %v221
  %v226 = vunpack.c.l.bf16 %v222
  %v227 = vunpack.c.l.bf16 %v223
  %v228 = vadd.f32 %v216, %v224
  %v229 = vadd.f32 %v217, %v225
  %v230 = vadd.f32 %v218, %v226
  %v231 = vadd.f32 %v219, %v227
  %v232 = vpack.c.bf16 %v229, %v228
  %v233 = vpack.c.bf16 %v231, %v230
  %v236 = vunpack.c.l.b16 %v232
  %v237 = vunpack.c.h.b16 %v232
  %v238 = vunpack.c.l.b16 %v233
  %v239 = vunpack.c.h.b16 %v233
  %v240 = vpack.c.b16 %v236, %v236
  %v241 = vpack.c.b16 %v237, %v237
  %v242 = vpack.c.b16 %v238, %v238
  %v243 = vpack.c.b16 %v239, %v239
  %248 = vst [vmem:[%s3] sm:$0xf] %v240
  %249 = vst [vmem:[%s3 + $0x4] sm:$0xf] %v241
  %250 = vst [vmem:[%s3 + $0x8] sm:$0xf] %v242
  %251 = vst [vmem:[%s3 + $0xc] sm:$0xf] %v243
  // Predicated region
  $region14: #{cost_reg_forward.19} parent=0 // pred_check
    _
  $region15: #{cost_reg_forward.19} parent=0 // pred_check_branch
    %253 = sbr.rel (0) target = $region17
  $region16: #{cost_reg_forward.19} parent=0 // pred_region
    _
  $region17: #{cost_reg_forward.19} parent=0 // pred_fallthru
    _
  // Predicated region
  $region18: #{cost_reg_forward.19} parent=0 // pred_check
    _
  $region19: #{cost_reg_forward.19} parent=0 // pred_check_branch
    %255 = sbr.rel (0) target = $region21
  $region20: #{cost_reg_forward.19} parent=0 // pred_region
    _
  $region21: #{cost_reg_forward.19} parent=0 // pred_fallthru
    _

// kernel: cost_reg_forward.20
$region0: #{cost_reg_forward.20}
  #allocation0 [shape = 'u32[]', space=smem, size = 0x4, offset = 0x4, fixed_abs, tag = 'smem constant byte address 0x4 - core index']
  #allocation1 [shape = 'u32[144,128]{1,0:T(1,128)}', space=vmem, size = 0x12000, scoped, tag = 'internal scratch']
  %s0 = inlined_call_operand.vmem [shape: bf16[256,128], index: 0, kind: input, shape index: {}]
  %s1 = inlined_call_operand.vmem [shape: bf16[128,64], index: 1, kind: input, shape index: {}]
  %s2 = inlined_call_operand.vmem [shape: bf16[256,64], index: 2, kind: input, shape index: {}]
  %s3 = inlined_call_operand.vmem [shape: bf16[256,64], index: 3, kind: output, shape index: {}]
  %s4 = sld [smem:[#allocation0]]
  $region22: #{cost_reg_forward.20} parent=0
    _
  %s6 = ssub.s32 1, %s4
  %s7 = scalar_select 0, %s6, %s4
  // Predicated region
  $region2: #{cost_reg_forward.20} parent=0 // pred_check
    _
  $region3: #{cost_reg_forward.20} parent=0 // pred_check_branch
    %9 = sbr.rel (0) target = $region5
  $region4: #{cost_reg_forward.20} parent=0 // pred_region
    _
  $region5: #{cost_reg_forward.20} parent=0 // pred_fallthru
    _
  // Predicated region
  $region6: #{cost_reg_forward.20} parent=0 // pred_check
    _
  $region7: #{cost_reg_forward.20} parent=0 // pred_check_branch
    %11 = sbr.rel (0) target = $region9
  $region8: #{cost_reg_forward.20} parent=0 // pred_region
    _
  $region9: #{cost_reg_forward.20} parent=0 // pred_fallthru
    _
  // Predicated region
  $region10: #{cost_reg_forward.20} parent=0 // pred_check
    _
  $region11: #{cost_reg_forward.20} parent=0 // pred_check_branch
    %13 = sbr.rel (0) target = $region13
  $region12: #{cost_reg_forward.20} parent=0 // pred_region
    _
  $region13: #{cost_reg_forward.20} parent=0 // pred_fallthru
    _
  %v15 = vld [vmem:[%s0] sm:$0xf]
  %v16 = vld [vmem:[%s0 + $0x4] sm:$0xf]
  %v17 = vld [vmem:[%s0 + $0x8] sm:$0xf]
  %v18 = vld [vmem:[%s0 + $0xc] sm:$0xf]
  %v19 = vld [vmem:[%s0 + $0x10] sm:$0xf]
  %v20 = vld [vmem:[%s0 + $0x14] sm:$0xf]
  %v21 = vld [vmem:[%s0 + $0x18] sm:$0xf]
  %v22 = vld [vmem:[%s0 + $0x1c] sm:$0xf]
  %v23 = vld [vmem:[%s0 + $0x20] sm:$0xf]
  %v24 = vld [vmem:[%s0 + $0x24] sm:$0xf]
  %v25 = vld [vmem:[%s0 + $0x28] sm:$0xf]
  %v26 = vld [vmem:[%s0 + $0x2c] sm:$0xf]
  %v27 = vld [vmem:[%s0 + $0x30] sm:$0xf]
  %v28 = vld [vmem:[%s0 + $0x34] sm:$0xf]
  %v29 = vld [vmem:[%s0 + $0x38] sm:$0xf]
  %v30 = vld [vmem:[%s0 + $0x3c] sm:$0xf]
  %v31 = vld [vmem:[%s0 + $0x40] sm:$0xf]
  %v32 = vld [vmem:[%s0 + $0x44] sm:$0xf]
  %v33 = vld [vmem:[%s0 + $0x48] sm:$0xf]
  %v34 = vld [vmem:[%s0 + $0x4c] sm:$0xf]
  %v35 = vld [vmem:[%s0 + $0x50] sm:$0xf]
  %v36 = vld [vmem:[%s0 + $0x54] sm:$0xf]
  %v37 = vld [vmem:[%s0 + $0x58] sm:$0xf]
  %v38 = vld [vmem:[%s0 + $0x5c] sm:$0xf]
  %v39 = vld [vmem:[%s0 + $0x60] sm:$0xf]
  %v40 = vld [vmem:[%s0 + $0x64] sm:$0xf]
  %v41 = vld [vmem:[%s0 + $0x68] sm:$0xf]
  %v42 = vld [vmem:[%s0 + $0x6c] sm:$0xf]
  %v43 = vld [vmem:[%s0 + $0x70] sm:$0xf]
  %v44 = vld [vmem:[%s0 + $0x74] sm:$0xf]
  %v45 = vld [vmem:[%s0 + $0x78] sm:$0xf]
  %v46 = vld [vmem:[%s0 + $0x7c] sm:$0xf]
  %v47 = vld [vmem:[%s1] sm:$0xf]
  %v48 = vld [vmem:[%s1 + $0x4] sm:$0xf]
  %v49 = vld [vmem:[%s1 + $0x8] sm:$0xf]
  %v50 = vld [vmem:[%s1 + $0xc] sm:$0xf]
  %v51 = vld [vmem:[%s1 + $0x10] sm:$0xf]
  %v52 = vld [vmem:[%s1 + $0x14] sm:$0xf]
  %v53 = vld [vmem:[%s1 + $0x18] sm:$0xf]
  %v54 = vld [vmem:[%s1 + $0x1c] sm:$0xf]
  %v55 = vld [vmem:[%s1 + $0x20] sm:$0xf]
  %v56 = vld [vmem:[%s1 + $0x24] sm:$0xf]
  %v57 = vld [vmem:[%s1 + $0x28] sm:$0xf]
  %v58 = vld [vmem:[%s1 + $0x2c] sm:$0xf]
  %v59 = vld [vmem:[%s1 + $0x30] sm:$0xf]
  %v60 = vld [vmem:[%s1 + $0x34] sm:$0xf]
  %v61 = vld [vmem:[%s1 + $0x38] sm:$0xf]
  %v62 = vld [vmem:[%s1 + $0x3c] sm:$0xf]
  %v95 = vunpack.c.l.b16 %v15
  %v96 = vunpack.c.l.b16 %v16
  %v97 = vunpack.c.l.b16 %v17
  %v98 = vunpack.c.l.b16 %v18
  %v99 = vunpack.c.l.b16 %v19
  %v100 = vunpack.c.l.b16 %v20
  %v101 = vunpack.c.l.b16 %v21
  %v102 = vunpack.c.l.b16 %v22
  %v103 = vunpack.c.l.b16 %v23
  %v104 = vunpack.c.l.b16 %v24
  %v105 = vunpack.c.l.b16 %v25
  %v106 = vunpack.c.l.b16 %v26
  %v107 = vunpack.c.l.b16 %v27
  %v108 = vunpack.c.l.b16 %v28
  %v109 = vunpack.c.l.b16 %v29
  %v110 = vunpack.c.l.b16 %v30
  %v111 = vunpack.c.l.b16 %v31
  %v112 = vunpack.c.l.b16 %v32
  %v113 = vunpack.c.l.b16 %v33
  %v114 = vunpack.c.l.b16 %v34
  %v115 = vunpack.c.l.b16 %v35
  %v116 = vunpack.c.l.b16 %v36
  %v117 = vunpack.c.l.b16 %v37
  %v118 = vunpack.c.l.b16 %v38
  %v119 = vunpack.c.l.b16 %v39
  %v120 = vunpack.c.l.b16 %v40
  %v121 = vunpack.c.l.b16 %v41
  %v122 = vunpack.c.l.b16 %v42
  %v123 = vunpack.c.l.b16 %v43
  %v124 = vunpack.c.l.b16 %v44
  %v125 = vunpack.c.l.b16 %v45
  %v126 = vunpack.c.l.b16 %v46
  %v127 = vpack.c.b16 %v96, %v95
  %v128 = vpack.c.b16 %v98, %v97
  %v129 = vpack.c.b16 %v100, %v99
  %v130 = vpack.c.b16 %v102, %v101
  %v131 = vpack.c.b16 %v104, %v103
  %v132 = vpack.c.b16 %v106, %v105
  %v133 = vpack.c.b16 %v108, %v107
  %v134 = vpack.c.b16 %v110, %v109
  %v135 = vpack.c.b16 %v112, %v111
  %v136 = vpack.c.b16 %v114, %v113
  %v137 = vpack.c.b16 %v116, %v115
  %v138 = vpack.c.b16 %v118, %v117
  %v139 = vpack.c.b16 %v120, %v119
  %v140 = vpack.c.b16 %v122, %v121
  %v141 = vpack.c.b16 %v124, %v123
  %v142 = vpack.c.b16 %v126, %v125
  %v175 = vunpack.c.l.b16 %v47
  %v176 = vunpack.c.l.b16 %v48
  %v177 = vunpack.c.l.b16 %v49
  %v178 = vunpack.c.l.b16 %v50
  %v179 = vunpack.c.l.b16 %v51
  %v180 = vunpack.c.l.b16 %v52
  %v181 = vunpack.c.l.b16 %v53
  %v182 = vunpack.c.l.b16 %v54
  %v183 = vunpack.c.l.b16 %v55
  %v184 = vunpack.c.l.b16 %v56
  %v185 = vunpack.c.l.b16 %v57
  %v186 = vunpack.c.l.b16 %v58
  %v187 = vunpack.c.l.b16 %v59
  %v188 = vunpack.c.l.b16 %v60
  %v189 = vunpack.c.l.b16 %v61
  %v190 = vunpack.c.l.b16 %v62
  %v191 = vpack.c.b16 %v176, %v175
  %v192 = vpack.c.b16 %v178, %v177
  %v193 = vpack.c.b16 %v180, %v179
  %v194 = vpack.c.b16 %v182, %v181
  %v195 = vpack.c.b16 %v184, %v183
  %v196 = vpack.c.b16 %v186, %v185
  %v197 = vpack.c.b16 %v188, %v187
  %v198 = vpack.c.b16 %v190, %v189
  %207 = vmatprep.subr.bf16.mxu0 0
  %208 = vmatpush1.bf16.msra.mxu0 %v191
  %209 = vmatprep.subr.bf16.mxu0 0
  %210 = vmatpush1.bf16.msra.mxu0 %v192
  %211 = vmatprep.subr.bf16.mxu0 0
  %212 = vmatpush1.bf16.msra.mxu0 %v193
  %213 = vmatprep.subr.bf16.mxu0 0
  %214 = vmatpush1.bf16.msra.mxu0 %v194
  %215 = vmatprep.subr.bf16.mxu0 0
  %216 = vmatpush1.bf16.msra.mxu0 %v195
  %217 = vmatprep.subr.bf16.mxu0 0
  %218 = vmatpush1.bf16.msra.mxu0 %v196
  %219 = vmatprep.subr.bf16.mxu0 0
  %220 = vmatpush1.bf16.msra.mxu0 %v197
  %221 = vmatprep.subr.bf16.mxu0 0
  %222 = vmatpush1.bf16.msra.mxu0 %v198
  %223 = vmatprep.subr.bf16.mxu0 0
  %224 = vmatpush1.bf16.msra.mxu0 0
  %225 = vmatprep.subr.bf16.mxu0 0
  %226 = vmatpush1.bf16.msra.mxu0 0
  %227 = vmatprep.subr.bf16.mxu0 0
  %228 = vmatpush1.bf16.msra.mxu0 0
  %229 = vmatprep.subr.bf16.mxu0 0
  %230 = vmatpush1.bf16.msra.mxu0 0
  %231 = vmatprep.subr.bf16.mxu0 0
  %232 = vmatpush1.bf16.msra.mxu0 0
  %233 = vmatprep.subr.bf16.mxu0 0
  %234 = vmatpush1.bf16.msra.mxu0 0
  %235 = vmatprep.subr.bf16.mxu0 0
  %236 = vmatpush1.bf16.msra.mxu0 0
  %237 = vmatprep.subr.bf16.mxu0 0
  %238 = vmatpush1.bf16.msra.mxu0 0
  %239 = vmatprep.mubr.bf16.mxu0 0
  %240 = vmatmul.mubr.bf16.gmra.mrb[0].mxu0 %v127
  %v241 = vpop.f32.mrb[0].mxu0
  %v242 = vadd.f32 0.0, %v241
  %v243 = vpop.f32.mrb[0].mxu0
  %v244 = vpop.f32.mrb[0].mxu0
  %v245 = vadd.f32 0.0, %v244
  %v246 = vpop.f32.mrb[0].mxu0
  %247 = vmatprep.mubr.bf16.mxu0 0
  %248 = vmatmul.mubr.bf16.gmra.mrb[0].mxu0 %v128
  %v249 = vpop.f32.mrb[0].mxu0
  %v250 = vadd.f32 0.0, %v249
  %v251 = vpop.f32.mrb[0].mxu0
  %v252 = vpop.f32.mrb[0].mxu0
  %v253 = vadd.f32 0.0, %v252
  %v254 = vpop.f32.mrb[0].mxu0
  %255 = vmatprep.mubr.bf16.mxu0 0
  %256 = vmatmul.mubr.bf16.gmra.mrb[0].mxu0 %v129
  %v257 = vpop.f32.mrb[0].mxu0
  %v258 = vadd.f32 0.0, %v257
  %v259 = vpop.f32.mrb[0].mxu0
  %v260 = vpop.f32.mrb[0].mxu0
  %v261 = vadd.f32 0.0, %v260
  %v262 = vpop.f32.mrb[0].mxu0
  %263 = vmatprep.mubr.bf16.mxu0 0
  %264 = vmatmul.mubr.bf16.gmra.mrb[0].mxu0 %v130
  %v265 = vpop.f32.mrb[0].mxu0
  %v266 = vadd.f32 0.0, %v265
  %v267 = vpop.f32.mrb[0].mxu0
  %v268 = vpop.f32.mrb[0].mxu0
  %v269 = vadd.f32 0.0, %v268
  %v270 = vpop.f32.mrb[0].mxu0
  %271 = vmatprep.mubr.bf16.mxu0 0
  %272 = vmatmul.mubr.bf16.gmra.mrb[0].mxu0 %v131
  %v273 = vpop.f32.mrb[0].mxu0
  %v274 = vadd.f32 0.0, %v273
  %v275 = vpop.f32.mrb[0].mxu0
  %v276 = vpop.f32.mrb[0].mxu0
  %v277 = vadd.f32 0.0, %v276
  %v278 = vpop.f32.mrb[0].mxu0
  %279 = vmatprep.mubr.bf16.mxu0 0
  %280 = vmatmul.mubr.bf16.gmra.mrb[0].mxu0 %v132
  %v281 = vpop.f32.mrb[0].mxu0
  %v282 = vadd.f32 0.0, %v281
  %v283 = vpop.f32.mrb[0].mxu0
  %v284 = vpop.f32.mrb[0].mxu0
  %v285 = vadd.f32 0.0, %v284
  %v286 = vpop.f32.mrb[0].mxu0
  %287 = vmatprep.mubr.bf16.mxu0 0
  %288 = vmatmul.mubr.bf16.gmra.mrb[0].mxu0 %v133
  %v289 = vpop.f32.mrb[0].mxu0
  %v290 = vadd.f32 0.0, %v289
  %v291 = vpop.f32.mrb[0].mxu0
  %v292 = vpop.f32.mrb[0].mxu0
  %v293 = vadd.f32 0.0, %v292
  %v294 = vpop.f32.mrb[0].mxu0
  %295 = vmatprep.mubr.bf16.mxu0 0
  %296 = vmatmul.mubr.bf16.gmra.mrb[0].mxu0 %v134
  %v297 = vpop.f32.mrb[0].mxu0
  %v298 = vadd.f32 0.0, %v297
  %v299 = vpop.f32.mrb[0].mxu0
  %v300 = vpop.f32.mrb[0].mxu0
  %v301 = vadd.f32 0.0, %v300
  %v302 = vpop.f32.mrb[0].mxu0
  %303 = vmatprep.mubr.bf16.mxu0 0
  %304 = vmatmul.mubr.bf16.gmra.mrb[0].mxu0 %v135
  %v305 = vpop.f32.mrb[0].mxu0
  %v306 = vadd.f32 0.0, %v305
  %v307 = vpop.f32.mrb[0].mxu0
  %v308 = vpop.f32.mrb[0].mxu0
  %v309 = vadd.f32 0.0, %v308
  %v310 = vpop.f32.mrb[0].mxu0
  %311 = vmatprep.mubr.bf16.mxu0 0
  %312 = vmatmul.mubr.bf16.gmra.mrb[0].mxu0 %v136
  %v313 = vpop.f32.mrb[0].mxu0
  %v314 = vadd.f32 0.0, %v313
  %v315 = vpop.f32.mrb[0].mxu0
  %v316 = vpop.f32.mrb[0].mxu0
  %v317 = vadd.f32 0.0, %v316
  %v318 = vpop.f32.mrb[0].mxu0
  %319 = vmatprep.mubr.bf16.mxu0 0
  %320 = vmatmul.mubr.bf16.gmra.mrb[0].mxu0 %v137
  %v321 = vpop.f32.mrb[0].mxu0
  %v322 = vadd.f32 0.0, %v321
  %v323 = vpop.f32.mrb[0].mxu0
  %v324 = vpop.f32.mrb[0].mxu0
  %v325 = vadd.f32 0.0, %v324
  %v326 = vpop.f32.mrb[0].mxu0
  %327 = vmatprep.mubr.bf16.mxu0 0
  %328 = vmatmul.mubr.bf16.gmra.mrb[0].mxu0 %v138
  %v329 = vpop.f32.mrb[0].mxu0
  %v330 = vadd.f32 0.0, %v329
  %v331 = vpop.f32.mrb[0].mxu0
  %v332 = vpop.f32.mrb[0].mxu0
  %v333 = vadd.f32 0.0, %v332
  %v334 = vpop.f32.mrb[0].mxu0
  %335 = vmatprep.mubr.bf16.mxu0 0
  %336 = vmatmul.mubr.bf16.gmra.mrb[0].mxu0 %v139
  %v337 = vpop.f32.mrb[0].mxu0
  %v338 = vadd.f32 0.0, %v337
  %v339 = vpop.f32.mrb[0].mxu0
  %v340 = vpop.f32.mrb[0].mxu0
  %v341 = vadd.f32 0.0, %v340
  %v342 = vpop.f32.mrb[0].mxu0
  %343 = vmatprep.mubr.bf16.mxu0 0
  %344 = vmatmul.mubr.bf16.gmra.mrb[0].mxu0 %v140
  %v345 = vpop.f32.mrb[0].mxu0
  %v346 = vadd.f32 0.0, %v345
  %v347 = vpop.f32.mrb[0].mxu0
  %v348 = vpop.f32.mrb[0].mxu0
  %v349 = vadd.f32 0.0, %v348
  %v350 = vpop.f32.mrb[0].mxu0
  %351 = vmatprep.mubr.bf16.mxu0 0
  %352 = vmatmul.mubr.bf16.gmra.mrb[0].mxu0 %v141
  %v353 = vpop.f32.mrb[0].mxu0
  %v354 = vadd.f32 0.0, %v353
  %v355 = vpop.f32.mrb[0].mxu0
  %v356 = vpop.f32.mrb[0].mxu0
  %v357 = vadd.f32 0.0, %v356
  %v358 = vpop.f32.mrb[0].mxu0
  %359 = vmatprep.mubr.bf16.mxu0 0
  %360 = vmatmul.mubr.bf16.gmra.mrb[0].mxu0 %v142
  %v361 = vpop.f32.mrb[0].mxu0
  %v362 = vadd.f32 0.0, %v361
  %v363 = vpop.f32.mrb[0].mxu0
  %v364 = vpop.f32.mrb[0].mxu0
  %v365 = vadd.f32 0.0, %v364
  %v366 = vpop.f32.mrb[0].mxu0
  %367 = vdwg.mxu0
  %v368 = vmax.f32 %v242, 0.0
  %v369 = vmax.f32 %v245, 0.0
  %v370 = vmax.f32 %v250, 0.0
  %v371 = vmax.f32 %v253, 0.0
  %v372 = vmax.f32 %v258, 0.0
  %v373 = vmax.f32 %v261, 0.0
  %v374 = vmax.f32 %v266, 0.0
  %v375 = vmax.f32 %v269, 0.0
  %v376 = vmax.f32 %v274, 0.0
  %v377 = vmax.f32 %v277, 0.0
  %v378 = vmax.f32 %v282, 0.0
  %v379 = vmax.f32 %v285, 0.0
  %v380 = vmax.f32 %v290, 0.0
  %v381 = vmax.f32 %v293, 0.0
  %v382 = vmax.f32 %v298, 0.0
  %v383 = vmax.f32 %v301, 0.0
  %v384 = vmax.f32 %v306, 0.0
  %v385 = vmax.f32 %v309, 0.0
  %v386 = vmax.f32 %v314, 0.0
  %v387 = vmax.f32 %v317, 0.0
  %v388 = vmax.f32 %v322, 0.0
  %v389 = vmax.f32 %v325, 0.0
  %v390 = vmax.f32 %v330, 0.0
  %v391 = vmax.f32 %v333, 0.0
  %v392 = vmax.f32 %v338, 0.0
  %v393 = vmax.f32 %v341, 0.0
  %v394 = vmax.f32 %v346, 0.0
  %v395 = vmax.f32 %v349, 0.0
  %v396 = vmax.f32 %v354, 0.0
  %v397 = vmax.f32 %v357, 0.0
  %v398 = vmax.f32 %v362, 0.0
  %v399 = vmax.f32 %v365, 0.0
  %v400 = vld [vmem:[%s2] sm:$0xf]
  %v401 = vld [vmem:[%s2 + $0x4] sm:$0xf]
  %v402 = vld [vmem:[%s2 + $0x8] sm:$0xf]
  %v403 = vld [vmem:[%s2 + $0xc] sm:$0xf]
  %v404 = vld [vmem:[%s2 + $0x10] sm:$0xf]
  %v405 = vld [vmem:[%s2 + $0x14] sm:$0xf]
  %v406 = vld [vmem:[%s2 + $0x18] sm:$0xf]
  %v407 = vld [vmem:[%s2 + $0x1c] sm:$0xf]
  %v408 = vld [vmem:[%s2 + $0x20] sm:$0xf]
  %v409 = vld [vmem:[%s2 + $0x24] sm:$0xf]
  %v410 = vld [vmem:[%s2 + $0x28] sm:$0xf]
  %v411 = vld [vmem:[%s2 + $0x2c] sm:$0xf]
  %v412 = vld [vmem:[%s2 + $0x30] sm:$0xf]
  %v413 = vld [vmem:[%s2 + $0x34] sm:$0xf]
  %v414 = vld [vmem:[%s2 + $0x38] sm:$0xf]
  %v415 = vld [vmem:[%s2 + $0x3c] sm:$0xf]
  %v416 = vld [vmem:[%s2 + $0x40] sm:$0xf]
  %v417 = vld [vmem:[%s2 + $0x44] sm:$0xf]
  %v418 = vld [vmem:[%s2 + $0x48] sm:$0xf]
  %v419 = vld [vmem:[%s2 + $0x4c] sm:$0xf]
  %v420 = vld [vmem:[%s2 + $0x50] sm:$0xf]
  %v421 = vld [vmem:[%s2 + $0x54] sm:$0xf]
  %v422 = vld [vmem:[%s2 + $0x58] sm:$0xf]
  %v423 = vld [vmem:[%s2 + $0x5c] sm:$0xf]
  %v424 = vld [vmem:[%s2 + $0x60] sm:$0xf]
  %v425 = vld [vmem:[%s2 + $0x64] sm:$0xf]
  %v426 = vld [vmem:[%s2 + $0x68] sm:$0xf]
  %v427 = vld [vmem:[%s2 + $0x6c] sm:$0xf]
  %v428 = vld [vmem:[%s2 + $0x70] sm:$0xf]
  %v429 = vld [vmem:[%s2 + $0x74] sm:$0xf]
  %v430 = vld [vmem:[%s2 + $0x78] sm:$0xf]
  %v431 = vld [vmem:[%s2 + $0x7c] sm:$0xf]
  %v432 = vunpack.c.l.bf16 %v400
  %v433 = vunpack.c.l.bf16 %v401
  %v434 = vunpack.c.l.bf16 %v402
  %v435 = vunpack.c.l.bf16 %v403
  %v436 = vunpack.c.l.bf16 %v404
  %v437 = vunpack.c.l.bf16 %v405
  %v438 = vunpack.c.l.bf16 %v406
  %v439 = vunpack.c.l.bf16 %v407
  %v440 = vunpack.c.l.bf16 %v408
  %v441 = vunpack.c.l.bf16 %v409
  %v442 = vunpack.c.l.bf16 %v410
  %v443 = vunpack.c.l.bf16 %v411
  %v444 = vunpack.c.l.bf16 %v412
  %v445 = vunpack.c.l.bf16 %v413
  %v446 = vunpack.c.l.bf16 %v414
  %v447 = vunpack.c.l.bf16 %v415
  %v448 = vunpack.c.l.bf16 %v416
  %v449 = vunpack.c.l.bf16 %v417
  %v450 = vunpack.c.l.bf16 %v418
  %v451 = vunpack.c.l.bf16 %v419
  %v452 = vunpack.c.l.bf16 %v420
  %v453 = vunpack.c.l.bf16 %v421
  %v454 = vunpack.c.l.bf16 %v422
  %v455 = vunpack.c.l.bf16 %v423
  %v456 = vunpack.c.l.bf16 %v424
  %v457 = vunpack.c.l.bf16 %v425
  %v458 = vunpack.c.l.bf16 %v426
  %v459 = vunpack.c.l.bf16 %v427
  %v460 = vunpack.c.l.bf16 %v428
  %v461 = vunpack.c.l.bf16 %v429
  %v462 = vunpack.c.l.bf16 %v430
  %v463 = vunpack.c.l.bf16 %v431
  %v464 = vadd.f32 %v368, %v432
  %v465 = vadd.f32 %v369, %v433
  %v466 = vadd.f32 %v370, %v434
  %v467 = vadd.f32 %v371, %v435
  %v468 = vadd.f32 %v372, %v436
  %v469 = vadd.f32 %v373, %v437
  %v470 = vadd.f32 %v374, %v438
  %v471 = vadd.f32 %v375, %v439
  %v472 = vadd.f32 %v376, %v440
  %v473 = vadd.f32 %v377, %v441
  %v474 = vadd.f32 %v378, %v442
  %v475 = vadd.f32 %v379, %v443
  %v476 = vadd.f32 %v380, %v444
  %v477 = vadd.f32 %v381, %v445
  %v478 = vadd.f32 %v382, %v446
  %v479 = vadd.f32 %v383, %v447
  %v480 = vadd.f32 %v384, %v448
  %v481 = vadd.f32 %v385, %v449
  %v482 = vadd.f32 %v386, %v450
  %v483 = vadd.f32 %v387, %v451
  %v484 = vadd.f32 %v388, %v452
  %v485 = vadd.f32 %v389, %v453
  %v486 = vadd.f32 %v390, %v454
  %v487 = vadd.f32 %v391, %v455
  %v488 = vadd.f32 %v392, %v456
  %v489 = vadd.f32 %v393, %v457
  %v490 = vadd.f32 %v394, %v458
  %v491 = vadd.f32 %v395, %v459
  %v492 = vadd.f32 %v396, %v460
  %v493 = vadd.f32 %v397, %v461
  %v494 = vadd.f32 %v398, %v462
  %v495 = vadd.f32 %v399, %v463
  %v496 = vpack.c.bf16 %v465, %v464
  %v497 = vpack.c.bf16 %v467, %v466
  %v498 = vpack.c.bf16 %v469, %v468
  %v499 = vpack.c.bf16 %v471, %v470
  %v500 = vpack.c.bf16 %v473, %v472
  %v501 = vpack.c.bf16 %v475, %v474
  %v502 = vpack.c.bf16 %v477, %v476
  %v503 = vpack.c.bf16 %v479, %v478
  %v504 = vpack.c.bf16 %v481, %v480
  %v505 = vpack.c.bf16 %v483, %v482
  %v506 = vpack.c.bf16 %v485, %v484
  %v507 = vpack.c.bf16 %v487, %v486
  %v508 = vpack.c.bf16 %v489, %v488
  %v509 = vpack.c.bf16 %v491, %v490
  %v510 = vpack.c.bf16 %v493, %v492
  %v511 = vpack.c.bf16 %v495, %v494
  %v528 = vunpack.c.l.b16 %v496
  %v529 = vunpack.c.h.b16 %v496
  %v530 = vunpack.c.l.b16 %v497
  %v531 = vunpack.c.h.b16 %v497
  %v532 = vunpack.c.l.b16 %v498
  %v533 = vunpack.c.h.b16 %v498
  %v534 = vunpack.c.l.b16 %v499
  %v535 = vunpack.c.h.b16 %v499
  %v536 = vunpack.c.l.b16 %v500
  %v537 = vunpack.c.h.b16 %v500
  %v538 = vunpack.c.l.b16 %v501
  %v539 = vunpack.c.h.b16 %v501
  %v540 = vunpack.c.l.b16 %v502
  %v541 = vunpack.c.h.b16 %v502
  %v542 = vunpack.c.l.b16 %v503
  %v543 = vunpack.c.h.b16 %v503
  %v544 = vunpack.c.l.b16 %v504
  %v545 = vunpack.c.h.b16 %v504
  %v546 = vunpack.c.l.b16 %v505
  %v547 = vunpack.c.h.b16 %v505
  %v548 = vunpack.c.l.b16 %v506
  %v549 = vunpack.c.h.b16 %v506
  %v550 = vunpack.c.l.b16 %v507
  %v551 = vunpack.c.h.b16 %v507
  %v552 = vunpack.c.l.b16 %v508
  %v553 = vunpack.c.h.b16 %v508
  %v554 = vunpack.c.l.b16 %v509
  %v555 = vunpack.c.h.b16 %v509
  %v556 = vunpack.c.l.b16 %v510
  %v557 = vunpack.c.h.b16 %v510
  %v558 = vunpack.c.l.b16 %v511
  %v559 = vunpack.c.h.b16 %v511
  %v560 = vpack.c.b16 %v528, %v528
  %v561 = vpack.c.b16 %v529, %v529
  %v562 = vpack.c.b16 %v530, %v530
  %v563 = vpack.c.b16 %v531, %v531
  %v564 = vpack.c.b16 %v532, %v532
  %v565 = vpack.c.b16 %v533, %v533
  %v566 = vpack.c.b16 %v534, %v534
  %v567 = vpack.c.b16 %v535, %v535
  %v568 = vpack.c.b16 %v536, %v536
  %v569 = vpack.c.b16 %v537, %v537
  %v570 = vpack.c.b16 %v538, %v538
  %v571 = vpack.c.b16 %v539, %v539
  %v572 = vpack.c.b16 %v540, %v540
  %v573 = vpack.c.b16 %v541, %v541
  %v574 = vpack.c.b16 %v542, %v542
  %v575 = vpack.c.b16 %v543, %v543
  %v576 = vpack.c.b16 %v544, %v544
  %v577 = vpack.c.b16 %v545, %v545
  %v578 = vpack.c.b16 %v546, %v546
  %v579 = vpack.c.b16 %v547, %v547
  %v580 = vpack.c.b16 %v548, %v548
  %v581 = vpack.c.b16 %v549, %v549
  %v582 = vpack.c.b16 %v550, %v550
  %v583 = vpack.c.b16 %v551, %v551
  %v584 = vpack.c.b16 %v552, %v552
  %v585 = vpack.c.b16 %v553, %v553
  %v586 = vpack.c.b16 %v554, %v554
  %v587 = vpack.c.b16 %v555, %v555
  %v588 = vpack.c.b16 %v556, %v556
  %v589 = vpack.c.b16 %v557, %v557
  %v590 = vpack.c.b16 %v558, %v558
  %v591 = vpack.c.b16 %v559, %v559
  %vm624 = vcmask 519168
  %625 = vst.msk [vmem:[%s3] sm:$0xf] %vm624, %v560
  %626 = vst.msk [vmem:[%s3 + $0x4] sm:$0xf] %vm624, %v561
  %627 = vst.msk [vmem:[%s3 + $0x8] sm:$0xf] %vm624, %v562
  %628 = vst.msk [vmem:[%s3 + $0xc] sm:$0xf] %vm624, %v563
  %629 = vst.msk [vmem:[%s3 + $0x10] sm:$0xf] %vm624, %v564
  %630 = vst.msk [vmem:[%s3 + $0x14] sm:$0xf] %vm624, %v565
  %631 = vst.msk [vmem:[%s3 + $0x18] sm:$0xf] %vm624, %v566
  %632 = vst.msk [vmem:[%s3 + $0x1c] sm:$0xf] %vm624, %v567
  %633 = vst.msk [vmem:[%s3 + $0x20] sm:$0xf] %vm624, %v568
  %634 = vst.msk [vmem:[%s3 + $0x24] sm:$0xf] %vm624, %v569
  %635 = vst.msk [vmem:[%s3 + $0x28] sm:$0xf] %vm624, %v570
  %636 = vst.msk [vmem:[%s3 + $0x2c] sm:$0xf] %vm624, %v571
  %637 = vst.msk [vmem:[%s3 + $0x30] sm:$0xf] %vm624, %v572
  %638 = vst.msk [vmem:[%s3 + $0x34] sm:$0xf] %vm624, %v573
  %639 = vst.msk [vmem:[%s3 + $0x38] sm:$0xf] %vm624, %v574
  %640 = vst.msk [vmem:[%s3 + $0x3c] sm:$0xf] %vm624, %v575
  %641 = vst.msk [vmem:[%s3 + $0x40] sm:$0xf] %vm624, %v576
  %642 = vst.msk [vmem:[%s3 + $0x44] sm:$0xf] %vm624, %v577
  %643 = vst.msk [vmem:[%s3 + $0x48] sm:$0xf] %vm624, %v578
  %644 = vst.msk [vmem:[%s3 + $0x4c] sm:$0xf] %vm624, %v579
  %645 = vst.msk [vmem:[%s3 + $0x50] sm:$0xf] %vm624, %v580
  %646 = vst.msk [vmem:[%s3 + $0x54] sm:$0xf] %vm624, %v581
  %647 = vst.msk [vmem:[%s3 + $0x58] sm:$0xf] %vm624, %v582
  %648 = vst.msk [vmem:[%s3 + $0x5c] sm:$0xf] %vm624, %v583
  %649 = vst.msk [vmem:[%s3 + $0x60] sm:$0xf] %vm624, %v584
  %650 = vst.msk [vmem:[%s3 + $0x64] sm:$0xf] %vm624, %v585
  %651 = vst.msk [vmem:[%s3 + $0x68] sm:$0xf] %vm624, %v586
  %652 = vst.msk [vmem:[%s3 + $0x6c] sm:$0xf] %vm624, %v587
  %653 = vst.msk [vmem:[%s3 + $0x70] sm:$0xf] %vm624, %v588
  %654 = vst.msk [vmem:[%s3 + $0x74] sm:$0xf] %vm624, %v589
  %655 = vst.msk [vmem:[%s3 + $0x78] sm:$0xf] %vm624, %v590
  %656 = vst.msk [vmem:[%s3 + $0x7c] sm:$0xf] %vm624, %v591
  // Predicated region
  $region14: #{cost_reg_forward.20} parent=0 // pred_check
    _
  $region15: #{cost_reg_forward.20} parent=0 // pred_check_branch
    %658 = sbr.rel (0) target = $region17
  $region16: #{cost_reg_forward.20} parent=0 // pred_region
    _
  $region17: #{cost_reg_forward.20} parent=0 // pred_fallthru
    _
  // Predicated region
  $region18: #{cost_reg_forward.20} parent=0 // pred_check
    _
  $region19: #{cost_reg_forward.20} parent=0 // pred_check_branch
    %660 = sbr.rel (0) target = $region21
  $region20: #{cost_reg_forward.20} parent=0 // pred_region
    _
  $region21: #{cost_reg_forward.20} parent=0 // pred_fallthru
    _

// kernel: cost_reg_forward.21
$region0: #{cost_reg_forward.21}
  #allocation0 [shape = 'u32[]', space=smem, size = 0x4, offset = 0x4, fixed_abs, tag = 'smem constant byte address 0x4 - core index']
  #allocation1 [shape = 'u32[144,128]{1,0:T(1,128)}', space=vmem, size = 0x12000, scoped, tag = 'internal scratch']
  #allocation2 [shape = 'f32[1,1]{1,0:T(1,128)S(1)}', space=vmem, size = 0x200, scoped, tag = 'scoped memory for cost_reg_forward.21']
  %s0 = inlined_call_operand.vmem [shape: bf16[216,2048], index: 0, kind: input, shape index: {}]
  %s1 = inlined_call_operand.vmem [shape: bf16[1,216], index: 1, kind: input, shape index: {}]
  %s2 = inlined_call_operand.<no memory space> [shape: f32[1,1], index: 2, kind: input, shape index: {}]
  %s3 = inlined_call_operand.vmem [shape: f32[1,2048], index: 3, kind: output, shape index: {}]
  %s4 = sld [smem:[#allocation0]]
  $region22: #{cost_reg_forward.21} parent=0
    _
  %s6 = ssub.s32 1, %s4
  %s7 = scalar_select 0, %s6, %s4
  %v8 = vstv %s2
  %9 = vst [vmem:[#allocation2] sm:$0x1] %v8
  // Predicated region
  $region2: #{cost_reg_forward.21} parent=0 // pred_check
    _
  $region3: #{cost_reg_forward.21} parent=0 // pred_check_branch
    %11 = sbr.rel (0) target = $region5
  $region4: #{cost_reg_forward.21} parent=0 // pred_region
    _
  $region5: #{cost_reg_forward.21} parent=0 // pred_fallthru
    _
  // Predicated region
  $region6: #{cost_reg_forward.21} parent=0 // pred_check
    _
  $region7: #{cost_reg_forward.21} parent=0 // pred_check_branch
    %13 = sbr.rel (0) target = $region9
  $region8: #{cost_reg_forward.21} parent=0 // pred_region
    _
  $region9: #{cost_reg_forward.21} parent=0 // pred_fallthru
    _
  // Predicated region
  $region10: #{cost_reg_forward.21} parent=0 // pred_check
    _
  $region11: #{cost_reg_forward.21} parent=0 // pred_check_branch
    %15 = sbr.rel (0) target = $region13
  $region12: #{cost_reg_forward.21} parent=0 // pred_region
    _
  $region13: #{cost_reg_forward.21} parent=0 // pred_fallthru
    _
  %v17 = vld [vmem:[%s1] sm:$0x3]
  %v18 = vld [vmem:[%s0] sm:$0xff]
  %v19 = vld [vmem:[%s0 + $0x8] sm:$0xff]
  %v20 = vld [vmem:[%s0 + $0x10] sm:$0xff]
  %v21 = vld [vmem:[%s0 + $0x18] sm:$0xff]
  %v22 = vld [vmem:[%s0 + $0x20] sm:$0xff]
  %v23 = vld [vmem:[%s0 + $0x28] sm:$0xff]
  %v24 = vld [vmem:[%s0 + $0x30] sm:$0xff]
  %v25 = vld [vmem:[%s0 + $0x38] sm:$0xff]
  %v26 = vld [vmem:[%s0 + $0x40] sm:$0xff]
  %v27 = vld [vmem:[%s0 + $0x48] sm:$0xff]
  %v28 = vld [vmem:[%s0 + $0x50] sm:$0xff]
  %v29 = vld [vmem:[%s0 + $0x58] sm:$0xff]
  %v30 = vld [vmem:[%s0 + $0x60] sm:$0xff]
  %v31 = vld [vmem:[%s0 + $0x68] sm:$0xff]
  %v32 = vld [vmem:[%s0 + $0x70] sm:$0xff]
  %v33 = vld [vmem:[%s0 + $0x78] sm:$0xff]
  %v34 = vld [vmem:[%s0 + $0x80] sm:$0xff]
  %v35 = vld [vmem:[%s0 + $0x88] sm:$0xff]
  %v36 = vld [vmem:[%s0 + $0x90] sm:$0xff]
  %v37 = vld [vmem:[%s0 + $0x98] sm:$0xff]
  %v38 = vld [vmem:[%s0 + $0xa0] sm:$0xff]
  %v39 = vld [vmem:[%s0 + $0xa8] sm:$0xff]
  %v40 = vld [vmem:[%s0 + $0xb0] sm:$0xff]
  %v41 = vld [vmem:[%s0 + $0xb8] sm:$0xff]
  %v42 = vld [vmem:[%s0 + $0xc0] sm:$0xff]
  %v43 = vld [vmem:[%s0 + $0xc8] sm:$0xff]
  %v44 = vld [vmem:[%s0 + $0xd0] sm:$0xff]
  %v45 = vld [vmem:[%s0 + $0xd8] sm:$0xff]
  %v46 = vld [vmem:[%s0 + $0xe0] sm:$0xff]
  %v47 = vld [vmem:[%s0 + $0xe8] sm:$0xff]
  %v48 = vld [vmem:[%s0 + $0xf0] sm:$0xff]
  %v49 = vld [vmem:[%s0 + $0xf8] sm:$0xff]
  %v50 = vld [vmem:[%s0 + $0x100] sm:$0xff]
  %v51 = vld [vmem:[%s0 + $0x108] sm:$0xff]
  %v52 = vld [vmem:[%s0 + $0x110] sm:$0xff]
  %v53 = vld [vmem:[%s0 + $0x118] sm:$0xff]
  %v54 = vld [vmem:[%s0 + $0x120] sm:$0xff]
  %v55 = vld [vmem:[%s0 + $0x128] sm:$0xff]
  %v56 = vld [vmem:[%s0 + $0x130] sm:$0xff]
  %v57 = vld [vmem:[%s0 + $0x138] sm:$0xff]
  %v58 = vld [vmem:[%s0 + $0x140] sm:$0xff]
  %v59 = vld [vmem:[%s0 + $0x148] sm:$0xff]
  %v60 = vld [vmem:[%s0 + $0x150] sm:$0xff]
  %v61 = vld [vmem:[%s0 + $0x158] sm:$0xff]
  %v62 = vld [vmem:[%s0 + $0x160] sm:$0xff]
  %v63 = vld [vmem:[%s0 + $0x168] sm:$0xff]
  %v64 = vld [vmem:[%s0 + $0x170] sm:$0xff]
  %v65 = vld [vmem:[%s0 + $0x178] sm:$0xff]
  %v66 = vld [vmem:[%s0 + $0x180] sm:$0xff]
  %v67 = vld [vmem:[%s0 + $0x188] sm:$0xff]
  %v68 = vld [vmem:[%s0 + $0x190] sm:$0xff]
  %v69 = vld [vmem:[%s0 + $0x198] sm:$0xff]
  %v70 = vld [vmem:[%s0 + $0x1a0] sm:$0xff]
  %v71 = vld [vmem:[%s0 + $0x1a8] sm:$0xff]
  %v72 = vld [vmem:[%s0 + $0x1b0] sm:$0xff]
  %v73 = vld [vmem:[%s0 + $0x1b8] sm:$0xff]
  %v74 = vld [vmem:[%s0 + $0x1c0] sm:$0xff]
  %v75 = vld [vmem:[%s0 + $0x1c8] sm:$0xff]
  %v76 = vld [vmem:[%s0 + $0x1d0] sm:$0xff]
  %v77 = vld [vmem:[%s0 + $0x1d8] sm:$0xff]
  %v78 = vld [vmem:[%s0 + $0x1e0] sm:$0xff]
  %v79 = vld [vmem:[%s0 + $0x1e8] sm:$0xff]
  %v80 = vld [vmem:[%s0 + $0x1f0] sm:$0xff]
  %v81 = vld [vmem:[%s0 + $0x1f8] sm:$0xff]
  %v82 = vld [vmem:[%s0 + $0x200] sm:$0xff]
  %v83 = vld [vmem:[%s0 + $0x208] sm:$0xff]
  %v84 = vld [vmem:[%s0 + $0x210] sm:$0xff]
  %v85 = vld [vmem:[%s0 + $0x218] sm:$0xff]
  %v86 = vld [vmem:[%s0 + $0x220] sm:$0xff]
  %v87 = vld [vmem:[%s0 + $0x228] sm:$0xff]
  %v88 = vld [vmem:[%s0 + $0x230] sm:$0xff]
  %v89 = vld [vmem:[%s0 + $0x238] sm:$0xff]
  %v90 = vld [vmem:[%s0 + $0x240] sm:$0xff]
  %v91 = vld [vmem:[%s0 + $0x248] sm:$0xff]
  %v92 = vld [vmem:[%s0 + $0x250] sm:$0xff]
  %v93 = vld [vmem:[%s0 + $0x258] sm:$0xff]
  %v94 = vld [vmem:[%s0 + $0x260] sm:$0xff]
  %v95 = vld [vmem:[%s0 + $0x268] sm:$0xff]
  %v96 = vld [vmem:[%s0 + $0x270] sm:$0xff]
  %v97 = vld [vmem:[%s0 + $0x278] sm:$0xff]
  %v98 = vld [vmem:[%s0 + $0x280] sm:$0xff]
  %v99 = vld [vmem:[%s0 + $0x288] sm:$0xff]
  %v100 = vld [vmem:[%s0 + $0x290] sm:$0xff]
  %v101 = vld [vmem:[%s0 + $0x298] sm:$0xff]
  %v102 = vld [vmem:[%s0 + $0x2a0] sm:$0xff]
  %v103 = vld [vmem:[%s0 + $0x2a8] sm:$0xff]
  %v104 = vld [vmem:[%s0 + $0x2b0] sm:$0xff]
  %v105 = vld [vmem:[%s0 + $0x2b8] sm:$0xff]
  %v106 = vld [vmem:[%s0 + $0x2c0] sm:$0xff]
  %v107 = vld [vmem:[%s0 + $0x2c8] sm:$0xff]
  %v108 = vld [vmem:[%s0 + $0x2d0] sm:$0xff]
  %v109 = vld [vmem:[%s0 + $0x2d8] sm:$0xff]
  %v110 = vld [vmem:[%s0 + $0x2e0] sm:$0xff]
  %v111 = vld [vmem:[%s0 + $0x2e8] sm:$0xff]
  %v112 = vld [vmem:[%s0 + $0x2f0] sm:$0xff]
  %v113 = vld [vmem:[%s0 + $0x2f8] sm:$0xff]
  %v114 = vld [vmem:[%s0 + $0x300] sm:$0xff]
  %v115 = vld [vmem:[%s0 + $0x308] sm:$0xff]
  %v116 = vld [vmem:[%s0 + $0x310] sm:$0xff]
  %v117 = vld [vmem:[%s0 + $0x318] sm:$0xff]
  %v118 = vld [vmem:[%s0 + $0x320] sm:$0xff]
  %v119 = vld [vmem:[%s0 + $0x328] sm:$0xff]
  %v120 = vld [vmem:[%s0 + $0x330] sm:$0xff]
  %v121 = vld [vmem:[%s0 + $0x338] sm:$0xff]
  %v122 = vld [vmem:[%s0 + $0x340] sm:$0xff]
  %v123 = vld [vmem:[%s0 + $0x348] sm:$0xff]
  %v124 = vld [vmem:[%s0 + $0x350] sm:$0xff]
  %v125 = vld [vmem:[%s0 + $0x358] sm:$0xff]
  %v126 = vld [vmem:[%s0 + $0x360] sm:$0xff]
  %v127 = vld [vmem:[%s0 + $0x368] sm:$0xff]
  %v128 = vld [vmem:[%s0 + $0x370] sm:$0xff]
  %v129 = vld [vmem:[%s0 + $0x378] sm:$0xff]
  %v130 = vld [vmem:[%s0 + $0x380] sm:$0xff]
  %v131 = vld [vmem:[%s0 + $0x388] sm:$0xff]
  %v132 = vld [vmem:[%s0 + $0x390] sm:$0xff]
  %v133 = vld [vmem:[%s0 + $0x398] sm:$0xff]
  %v134 = vld [vmem:[%s0 + $0x3a0] sm:$0xff]
  %v135 = vld [vmem:[%s0 + $0x3a8] sm:$0xff]
  %v136 = vld [vmem:[%s0 + $0x3b0] sm:$0xff]
  %v137 = vld [vmem:[%s0 + $0x3b8] sm:$0xff]
  %v138 = vld [vmem:[%s0 + $0x3c0] sm:$0xff]
  %v139 = vld [vmem:[%s0 + $0x3c8] sm:$0xff]
  %v140 = vld [vmem:[%s0 + $0x3d0] sm:$0xff]
  %v141 = vld [vmem:[%s0 + $0x3d8] sm:$0xff]
  %v142 = vld [vmem:[%s0 + $0x3e0] sm:$0xff]
  %v143 = vld [vmem:[%s0 + $0x3e8] sm:$0xff]
  %v144 = vld [vmem:[%s0 + $0x3f0] sm:$0xff]
  %v145 = vld [vmem:[%s0 + $0x3f8] sm:$0xff]
  %v146 = vld [vmem:[%s0 + $0x400] sm:$0xff]
  %v147 = vld [vmem:[%s0 + $0x408] sm:$0xff]
  %v148 = vld [vmem:[%s0 + $0x410] sm:$0xff]
  %v149 = vld [vmem:[%s0 + $0x418] sm:$0xff]
  %v150 = vld [vmem:[%s0 + $0x420] sm:$0xff]
  %v151 = vld [vmem:[%s0 + $0x428] sm:$0xff]
  %v152 = vld [vmem:[%s0 + $0x430] sm:$0xff]
  %v153 = vld [vmem:[%s0 + $0x438] sm:$0xff]
  %v154 = vld [vmem:[%s0 + $0x440] sm:$0xff]
  %v155 = vld [vmem:[%s0 + $0x448] sm:$0xff]
  %v156 = vld [vmem:[%s0 + $0x450] sm:$0xff]
  %v157 = vld [vmem:[%s0 + $0x458] sm:$0xff]
  %v158 = vld [vmem:[%s0 + $0x460] sm:$0xff]
  %v159 = vld [vmem:[%s0 + $0x468] sm:$0xff]
  %v160 = vld [vmem:[%s0 + $0x470] sm:$0xff]
  %v161 = vld [vmem:[%s0 + $0x478] sm:$0xff]
  %v162 = vld [vmem:[%s0 + $0x480] sm:$0xff]
  %v163 = vld [vmem:[%s0 + $0x488] sm:$0xff]
  %v164 = vld [vmem:[%s0 + $0x490] sm:$0xff]
  %v165 = vld [vmem:[%s0 + $0x498] sm:$0xff]
  %v166 = vld [vmem:[%s0 + $0x4a0] sm:$0xff]
  %v167 = vld [vmem:[%s0 + $0x4a8] sm:$0xff]
  %v168 = vld [vmem:[%s0 + $0x4b0] sm:$0xff]
  %v169 = vld [vmem:[%s0 + $0x4b8] sm:$0xff]
  %v170 = vld [vmem:[%s0 + $0x4c0] sm:$0xff]
  %v171 = vld [vmem:[%s0 + $0x4c8] sm:$0xff]
  %v172 = vld [vmem:[%s0 + $0x4d0] sm:$0xff]
  %v173 = vld [vmem:[%s0 + $0x4d8] sm:$0xff]
  %v174 = vld [vmem:[%s0 + $0x4e0] sm:$0xff]
  %v175 = vld [vmem:[%s0 + $0x4e8] sm:$0xff]
  %v176 = vld [vmem:[%s0 + $0x4f0] sm:$0xff]
  %v177 = vld [vmem:[%s0 + $0x4f8] sm:$0xff]
  %v178 = vld [vmem:[%s0 + $0x500] sm:$0xff]
  %v179 = vld [vmem:[%s0 + $0x508] sm:$0xff]
  %v180 = vld [vmem:[%s0 + $0x510] sm:$0xff]
  %v181 = vld [vmem:[%s0 + $0x518] sm:$0xff]
  %v182 = vld [vmem:[%s0 + $0x520] sm:$0xff]
  %v183 = vld [vmem:[%s0 + $0x528] sm:$0xff]
  %v184 = vld [vmem:[%s0 + $0x530] sm:$0xff]
  %v185 = vld [vmem:[%s0 + $0x538] sm:$0xff]
  %v186 = vld [vmem:[%s0 + $0x540] sm:$0xff]
  %v187 = vld [vmem:[%s0 + $0x548] sm:$0xff]
  %v188 = vld [vmem:[%s0 + $0x550] sm:$0xff]
  %v189 = vld [vmem:[%s0 + $0x558] sm:$0xff]
  %v190 = vld [vmem:[%s0 + $0x560] sm:$0xff]
  %v191 = vld [vmem:[%s0 + $0x568] sm:$0xff]
  %v192 = vld [vmem:[%s0 + $0x570] sm:$0xff]
  %v193 = vld [vmem:[%s0 + $0x578] sm:$0xff]
  %v194 = vld [vmem:[%s0 + $0x580] sm:$0xff]
  %v195 = vld [vmem:[%s0 + $0x588] sm:$0xff]
  %v196 = vld [vmem:[%s0 + $0x590] sm:$0xff]
  %v197 = vld [vmem:[%s0 + $0x598] sm:$0xff]
  %v198 = vld [vmem:[%s0 + $0x5a0] sm:$0xff]
  %v199 = vld [vmem:[%s0 + $0x5a8] sm:$0xff]
  %v200 = vld [vmem:[%s0 + $0x5b0] sm:$0xff]
  %v201 = vld [vmem:[%s0 + $0x5b8] sm:$0xff]
  %v202 = vld [vmem:[%s0 + $0x5c0] sm:$0xff]
  %v203 = vld [vmem:[%s0 + $0x5c8] sm:$0xff]
  %v204 = vld [vmem:[%s0 + $0x5d0] sm:$0xff]
  %v205 = vld [vmem:[%s0 + $0x5d8] sm:$0xff]
  %v206 = vld [vmem:[%s0 + $0x5e0] sm:$0xff]
  %v207 = vld [vmem:[%s0 + $0x5e8] sm:$0xff]
  %v208 = vld [vmem:[%s0 + $0x5f0] sm:$0xff]
  %v209 = vld [vmem:[%s0 + $0x5f8] sm:$0xff]
  %v210 = vld [vmem:[%s0 + $0x600] sm:$0xff]
  %v211 = vld [vmem:[%s0 + $0x608] sm:$0xff]
  %v212 = vld [vmem:[%s0 + $0x610] sm:$0xff]
  %v213 = vld [vmem:[%s0 + $0x618] sm:$0xff]
  %v214 = vld [vmem:[%s0 + $0x620] sm:$0xff]
  %v215 = vld [vmem:[%s0 + $0x628] sm:$0xff]
  %v216 = vld [vmem:[%s0 + $0x630] sm:$0xff]
  %v217 = vld [vmem:[%s0 + $0x638] sm:$0xff]
  %v218 = vld [vmem:[%s0 + $0x640] sm:$0xff]
  %v219 = vld [vmem:[%s0 + $0x648] sm:$0xff]
  %v220 = vld [vmem:[%s0 + $0x650] sm:$0xff]
  %v221 = vld [vmem:[%s0 + $0x658] sm:$0xff]
  %v222 = vld [vmem:[%s0 + $0x660] sm:$0xff]
  %v223 = vld [vmem:[%s0 + $0x668] sm:$0xff]
  %v224 = vld [vmem:[%s0 + $0x670] sm:$0xff]
  %v225 = vld [vmem:[%s0 + $0x678] sm:$0xff]
  %v226 = vld [vmem:[%s0 + $0x680] sm:$0xff]
  %v227 = vld [vmem:[%s0 + $0x688] sm:$0xff]
  %v228 = vld [vmem:[%s0 + $0x690] sm:$0xff]
  %v229 = vld [vmem:[%s0 + $0x698] sm:$0xff]
  %v230 = vld [vmem:[%s0 + $0x6a0] sm:$0xff]
  %v231 = vld [vmem:[%s0 + $0x6a8] sm:$0xff]
  %v232 = vld [vmem:[%s0 + $0x6b0] sm:$0xff]
  %v233 = vld [vmem:[%s0 + $0x6b8] sm:$0xff]
  %v234 = vld [vmem:[#allocation2] sm:$0x1]
  %236 = vset.pattern.permute.xlu0 0
  %237 = vperm.xlu0 %236, %v234
  %v238 = vpop.permute.xlu0 %237
  %v240 = vlaneseq
  %v241 = vshrl.u32 %v240, 7
  %v242 = vsub.s32 0, %v241
  %v243 = vrot.slane %v238, %v242
  %v246 = vunpack.c.l.s4 1966171168
  %v247 = vunpack.c.0.s8 %v246
  %v248 = vlaneseq
  %v249 = vshrl.u32 %v248, 7
  %v250 = vsub.s32 %v247, %v249
  %v251 = vrot.slane %v17, %v250
  %v252 = vcombine.high %v251, %v251
  %v254 = vunpack.c.l.s4 1966171168
  %v255 = vunpack.c.0.s8 %v254
  %v256 = vlaneseq
  %v257 = vshrl.u32 %v256, 7
  %v258 = vsub.s32 %v255, %v257
  %v259 = vrot.slane %v251, %v258
  %v261 = vunpack.c.l.s4 1966171168
  %v262 = vunpack.c.0.s8 %v261
  %v263 = vlaneseq
  %v264 = vshrl.u32 %v263, 7
  %v265 = vsub.s32 %v262, %v264
  %v266 = vrot.slane %v252, %v265
  %v484 = vunpack.c.l.b16 %v18
  %v485 = vunpack.c.h.b16 %v18
  %v486 = vunpack.c.l.b16 %v19
  %v487 = vunpack.c.h.b16 %v19
  %v488 = vunpack.c.l.b16 %v20
  %v489 = vunpack.c.h.b16 %v20
  %v490 = vunpack.c.l.b16 %v21
  %v491 = vunpack.c.h.b16 %v21
  %v492 = vunpack.c.l.b16 %v22
  %v493 = vunpack.c.h.b16 %v22
  %v494 = vunpack.c.l.b16 %v23
  %v495 = vunpack.c.h.b16 %v23
  %v496 = vunpack.c.l.b16 %v24
  %v497 = vunpack.c.h.b16 %v24
  %v498 = vunpack.c.l.b16 %v25
  %v499 = vunpack.c.h.b16 %v25
  %v500 = vunpack.c.l.b16 %v26
  %v501 = vunpack.c.h.b16 %v26
  %v502 = vunpack.c.l.b16 %v27
  %v503 = vunpack.c.h.b16 %v27
  %v504 = vunpack.c.l.b16 %v28
  %v505 = vunpack.c.h.b16 %v28
  %v506 = vunpack.c.l.b16 %v29
  %v507 = vunpack.c.h.b16 %v29
  %v508 = vunpack.c.l.b16 %v30
  %v509 = vunpack.c.h.b16 %v30
  %v510 = vunpack.c.l.b16 %v31
  %v511 = vunpack.c.h.b16 %v31
  %v512 = vunpack.c.l.b16 %v32
  %v513 = vunpack.c.h.b16 %v32
  %v514 = vunpack.c.l.b16 %v33
  %v515 = vunpack.c.h.b16 %v33
  %v516 = vunpack.c.l.b16 %v34
  %v517 = vunpack.c.h.b16 %v34
  %v518 = vunpack.c.l.b16 %v35
  %v519 = vunpack.c.h.b16 %v35
  %v520 = vunpack.c.l.b16 %v36
  %v521 = vunpack.c.h.b16 %v36
  %v522 = vunpack.c.l.b16 %v37
  %v523 = vunpack.c.h.b16 %v37
  %v524 = vunpack.c.l.b16 %v38
  %v525 = vunpack.c.h.b16 %v38
  %v526 = vunpack.c.l.b16 %v39
  %v527 = vunpack.c.h.b16 %v39
  %v528 = vunpack.c.l.b16 %v40
  %v529 = vunpack.c.h.b16 %v40
  %v530 = vunpack.c.l.b16 %v41
  %v531 = vunpack.c.h.b16 %v41
  %v532 = vunpack.c.l.b16 %v42
  %v533 = vunpack.c.h.b16 %v42
  %v534 = vunpack.c.l.b16 %v43
  %v535 = vunpack.c.h.b16 %v43
  %v536 = vunpack.c.l.b16 %v44
  %v537 = vunpack.c.h.b16 %v44
  %v538 = vunpack.c.l.b16 %v45
  %v539 = vunpack.c.h.b16 %v45
  %v540 = vunpack.c.l.b16 %v46
  %v541 = vunpack.c.h.b16 %v46
  %v542 = vunpack.c.l.b16 %v47
  %v543 = vunpack.c.h.b16 %v47
  %v544 = vunpack.c.l.b16 %v48
  %v545 = vunpack.c.h.b16 %v48
  %v546 = vunpack.c.l.b16 %v49
  %v547 = vunpack.c.h.b16 %v49
  %v548 = vunpack.c.l.b16 %v50
  %v549 = vunpack.c.h.b16 %v50
  %v550 = vunpack.c.l.b16 %v51
  %v551 = vunpack.c.h.b16 %v51
  %v552 = vunpack.c.l.b16 %v52
  %v553 = vunpack.c.h.b16 %v52
  %v554 = vunpack.c.l.b16 %v53
  %v555 = vunpack.c.h.b16 %v53
  %v556 = vunpack.c.l.b16 %v54
  %v557 = vunpack.c.h.b16 %v54
  %v558 = vunpack.c.l.b16 %v55
  %v559 = vunpack.c.h.b16 %v55
  %v560 = vunpack.c.l.b16 %v56
  %v561 = vunpack.c.h.b16 %v56
  %v562 = vunpack.c.l.b16 %v57
  %v563 = vunpack.c.h.b16 %v57
  %v564 = vunpack.c.l.b16 %v58
  %v565 = vunpack.c.h.b16 %v58
  %v566 = vunpack.c.l.b16 %v59
  %v567 = vunpack.c.h.b16 %v59
  %v568 = vunpack.c.l.b16 %v60
  %v569 = vunpack.c.h.b16 %v60
  %v570 = vunpack.c.l.b16 %v61
  %v571 = vunpack.c.h.b16 %v61
  %v572 = vunpack.c.l.b16 %v62
  %v573 = vunpack.c.h.b16 %v62
  %v574 = vunpack.c.l.b16 %v63
  %v575 = vunpack.c.h.b16 %v63
  %v576 = vunpack.c.l.b16 %v64
  %v577 = vunpack.c.h.b16 %v64
  %v578 = vunpack.c.l.b16 %v65
  %v579 = vunpack.c.h.b16 %v65
  %v580 = vunpack.c.l.b16 %v66
  %v581 = vunpack.c.h.b16 %v66
  %v582 = vunpack.c.l.b16 %v67
  %v583 = vunpack.c.h.b16 %v67
  %v584 = vunpack.c.l.b16 %v68
  %v585 = vunpack.c.h.b16 %v68
  %v586 = vunpack.c.l.b16 %v69
  %v587 = vunpack.c.h.b16 %v69
  %v588 = vunpack.c.l.b16 %v70
  %v589 = vunpack.c.h.b16 %v70
  %v590 = vunpack.c.l.b16 %v71
  %v591 = vunpack.c.h.b16 %v71
  %v592 = vunpack.c.l.b16 %v72
  %v593 = vunpack.c.h.b16 %v72
  %v594 = vunpack.c.l.b16 %v73
  %v595 = vunpack.c.h.b16 %v73
  %v596 = vunpack.c.l.b16 %v74
  %v597 = vunpack.c.h.b16 %v74
  %v598 = vunpack.c.l.b16 %v75
  %v599 = vunpack.c.h.b16 %v75
  %v600 = vunpack.c.l.b16 %v76
  %v601 = vunpack.c.h.b16 %v76
  %v602 = vunpack.c.l.b16 %v77
  %v603 = vunpack.c.h.b16 %v77
  %v604 = vunpack.c.l.b16 %v78
  %v605 = vunpack.c.h.b16 %v78
  %v606 = vunpack.c.l.b16 %v79
  %v607 = vunpack.c.h.b16 %v79
  %v608 = vunpack.c.l.b16 %v80
  %v609 = vunpack.c.h.b16 %v80
  %v610 = vunpack.c.l.b16 %v81
  %v611 = vunpack.c.h.b16 %v81
  %v612 = vunpack.c.l.b16 %v82
  %v613 = vunpack.c.h.b16 %v82
  %v614 = vunpack.c.l.b16 %v83
  %v615 = vunpack.c.h.b16 %v83
  %v616 = vunpack.c.l.b16 %v84
  %v617 = vunpack.c.h.b16 %v84
  %v618 = vunpack.c.l.b16 %v85
  %v619 = vunpack.c.h.b16 %v85
  %v620 = vunpack.c.l.b16 %v86
  %v621 = vunpack.c.h.b16 %v86
  %v622 = vunpack.c.l.b16 %v87
  %v623 = vunpack.c.h.b16 %v87
  %v624 = vunpack.c.l.b16 %v88
  %v625 = vunpack.c.h.b16 %v88
  %v626 = vunpack.c.l.b16 %v89
  %v627 = vunpack.c.h.b16 %v89
  %v628 = vunpack.c.l.b16 %v90
  %v629 = vunpack.c.h.b16 %v90
  %v630 = vunpack.c.l.b16 %v91
  %v631 = vunpack.c.h.b16 %v91
  %v632 = vunpack.c.l.b16 %v92
  %v633 = vunpack.c.h.b16 %v92
  %v634 = vunpack.c.l.b16 %v93
  %v635 = vunpack.c.h.b16 %v93
  %v636 = vunpack.c.l.b16 %v94
  %v637 = vunpack.c.h.b16 %v94
  %v638 = vunpack.c.l.b16 %v95
  %v639 = vunpack.c.h.b16 %v95
  %v640 = vunpack.c.l.b16 %v96
  %v641 = vunpack.c.h.b16 %v96
  %v642 = vunpack.c.l.b16 %v97
  %v643 = vunpack.c.h.b16 %v97
  %v644 = vunpack.c.l.b16 %v98
  %v645 = vunpack.c.h.b16 %v98
  %v646 = vunpack.c.l.b16 %v99
  %v647 = vunpack.c.h.b16 %v99
  %v648 = vunpack.c.l.b16 %v100
  %v649 = vunpack.c.h.b16 %v100
  %v650 = vunpack.c.l.b16 %v101
  %v651 = vunpack.c.h.b16 %v101
  %v652 = vunpack.c.l.b16 %v102
  %v653 = vunpack.c.h.b16 %v102
  %v654 = vunpack.c.l.b16 %v103
  %v655 = vunpack.c.h.b16 %v103
  %v656 = vunpack.c.l.b16 %v104
  %v657 = vunpack.c.h.b16 %v104
  %v658 = vunpack.c.l.b16 %v105
  %v659 = vunpack.c.h.b16 %v105
  %v660 = vunpack.c.l.b16 %v106
  %v661 = vunpack.c.h.b16 %v106
  %v662 = vunpack.c.l.b16 %v107
  %v663 = vunpack.c.h.b16 %v107
  %v664 = vunpack.c.l.b16 %v108
  %v665 = vunpack.c.h.b16 %v108
  %v666 = vunpack.c.l.b16 %v109
  %v667 = vunpack.c.h.b16 %v109
  %v668 = vunpack.c.l.b16 %v110
  %v669 = vunpack.c.h.b16 %v110
  %v670 = vunpack.c.l.b16 %v111
  %v671 = vunpack.c.h.b16 %v111
  %v672 = vunpack.c.l.b16 %v112
  %v673 = vunpack.c.h.b16 %v112
  %v674 = vunpack.c.l.b16 %v113
  %v675 = vunpack.c.h.b16 %v113
  %v676 = vunpack.c.l.b16 %v114
  %v677 = vunpack.c.h.b16 %v114
  %v678 = vunpack.c.l.b16 %v115
  %v679 = vunpack.c.h.b16 %v115
  %v680 = vunpack.c.l.b16 %v116
  %v681 = vunpack.c.h.b16 %v116
  %v682 = vunpack.c.l.b16 %v117
  %v683 = vunpack.c.h.b16 %v117
  %v684 = vunpack.c.l.b16 %v118
  %v685 = vunpack.c.h.b16 %v118
  %v686 = vunpack.c.l.b16 %v119
  %v687 = vunpack.c.h.b16 %v119
  %v688 = vunpack.c.l.b16 %v120
  %v689 = vunpack.c.h.b16 %v120
  %v690 = vunpack.c.l.b16 %v121
  %v691 = vunpack.c.h.b16 %v121
  %v692 = vunpack.c.l.b16 %v122
  %v693 = vunpack.c.h.b16 %v122
  %v694 = vunpack.c.l.b16 %v123
  %v695 = vunpack.c.h.b16 %v123
  %v696 = vunpack.c.l.b16 %v124
  %v697 = vunpack.c.h.b16 %v124
  %v698 = vunpack.c.l.b16 %v125
  %v699 = vunpack.c.h.b16 %v125
  %v700 = vunpack.c.l.b16 %v126
  %v701 = vunpack.c.h.b16 %v126
  %v702 = vunpack.c.l.b16 %v127
  %v703 = vunpack.c.h.b16 %v127
  %v704 = vunpack.c.l.b16 %v128
  %v705 = vunpack.c.h.b16 %v128
  %v706 = vunpack.c.l.b16 %v129
  %v707 = vunpack.c.h.b16 %v129
  %v708 = vunpack.c.l.b16 %v130
  %v709 = vunpack.c.h.b16 %v130
  %v710 = vunpack.c.l.b16 %v131
  %v711 = vunpack.c.h.b16 %v131
  %v712 = vunpack.c.l.b16 %v132
  %v713 = vunpack.c.h.b16 %v132
  %v714 = vunpack.c.l.b16 %v133
  %v715 = vunpack.c.h.b16 %v133
  %v716 = vunpack.c.l.b16 %v134
  %v717 = vunpack.c.h.b16 %v134
  %v718 = vunpack.c.l.b16 %v135
  %v719 = vunpack.c.h.b16 %v135
  %v720 = vunpack.c.l.b16 %v136
  %v721 = vunpack.c.h.b16 %v136
  %v722 = vunpack.c.l.b16 %v137
  %v723 = vunpack.c.h.b16 %v137
  %v724 = vunpack.c.l.b16 %v138
  %v725 = vunpack.c.h.b16 %v138
  %v726 = vunpack.c.l.b16 %v139
  %v727 = vunpack.c.h.b16 %v139
  %v728 = vunpack.c.l.b16 %v140
  %v729 = vunpack.c.h.b16 %v140
  %v730 = vunpack.c.l.b16 %v141
  %v731 = vunpack.c.h.b16 %v141
  %v732 = vunpack.c.l.b16 %v142
  %v733 = vunpack.c.h.b16 %v142
  %v734 = vunpack.c.l.b16 %v143
  %v735 = vunpack.c.h.b16 %v143
  %v736 = vunpack.c.l.b16 %v144
  %v737 = vunpack.c.h.b16 %v144
  %v738 = vunpack.c.l.b16 %v145
  %v739 = vunpack.c.h.b16 %v145
  %v740 = vunpack.c.l.b16 %v146
  %v741 = vunpack.c.h.b16 %v146
  %v742 = vunpack.c.l.b16 %v147
  %v743 = vunpack.c.h.b16 %v147
  %v744 = vunpack.c.l.b16 %v148
  %v745 = vunpack.c.h.b16 %v148
  %v746 = vunpack.c.l.b16 %v149
  %v747 = vunpack.c.h.b16 %v149
  %v748 = vunpack.c.l.b16 %v150
  %v749 = vunpack.c.h.b16 %v150
  %v750 = vunpack.c.l.b16 %v151
  %v751 = vunpack.c.h.b16 %v151
  %v752 = vunpack.c.l.b16 %v152
  %v753 = vunpack.c.h.b16 %v152
  %v754 = vunpack.c.l.b16 %v153
  %v755 = vunpack.c.h.b16 %v153
  %v756 = vunpack.c.l.b16 %v154
  %v757 = vunpack.c.h.b16 %v154
  %v758 = vunpack.c.l.b16 %v155
  %v759 = vunpack.c.h.b16 %v155
  %v760 = vunpack.c.l.b16 %v156
  %v761 = vunpack.c.h.b16 %v156
  %v762 = vunpack.c.l.b16 %v157
  %v763 = vunpack.c.h.b16 %v157
  %v764 = vunpack.c.l.b16 %v158
  %v765 = vunpack.c.h.b16 %v158
  %v766 = vunpack.c.l.b16 %v159
  %v767 = vunpack.c.h.b16 %v159
  %v768 = vunpack.c.l.b16 %v160
  %v769 = vunpack.c.h.b16 %v160
  %v770 = vunpack.c.l.b16 %v161
  %v771 = vunpack.c.h.b16 %v161
  %v772 = vunpack.c.l.b16 %v162
  %v773 = vunpack.c.h.b16 %v162
  %v774 = vunpack.c.l.b16 %v163
  %v775 = vunpack.c.h.b16 %v163
  %v776 = vunpack.c.l.b16 %v164
  %v777 = vunpack.c.h.b16 %v164
  %v778 = vunpack.c.l.b16 %v165
  %v779 = vunpack.c.h.b16 %v165
  %v780 = vunpack.c.l.b16 %v166
  %v781 = vunpack.c.h.b16 %v166
  %v782 = vunpack.c.l.b16 %v167
  %v783 = vunpack.c.h.b16 %v167
  %v784 = vunpack.c.l.b16 %v168
  %v785 = vunpack.c.h.b16 %v168
  %v786 = vunpack.c.l.b16 %v169
  %v787 = vunpack.c.h.b16 %v169
  %v788 = vunpack.c.l.b16 %v170
  %v789 = vunpack.c.h.b16 %v170
  %v790 = vunpack.c.l.b16 %v171
  %v791 = vunpack.c.h.b16 %v171
  %v792 = vunpack.c.l.b16 %v172
  %v793 = vunpack.c.h.b16 %v172
  %v794 = vunpack.c.l.b16 %v173
  %v795 = vunpack.c.h.b16 %v173
  %v796 = vunpack.c.l.b16 %v174
  %v797 = vunpack.c.h.b16 %v174
  %v798 = vunpack.c.l.b16 %v175
  %v799 = vunpack.c.h.b16 %v175
  %v800 = vunpack.c.l.b16 %v176
  %v801 = vunpack.c.h.b16 %v176
  %v802 = vunpack.c.l.b16 %v177
  %v803 = vunpack.c.h.b16 %v177
  %v804 = vunpack.c.l.b16 %v178
  %v805 = vunpack.c.h.b16 %v178
  %v806 = vunpack.c.l.b16 %v179
  %v807 = vunpack.c.h.b16 %v179
  %v808 = vunpack.c.l.b16 %v180
  %v809 = vunpack.c.h.b16 %v180
  %v810 = vunpack.c.l.b16 %v181
  %v811 = vunpack.c.h.b16 %v181
  %v812 = vunpack.c.l.b16 %v182
  %v813 = vunpack.c.h.b16 %v182
  %v814 = vunpack.c.l.b16 %v183
  %v815 = vunpack.c.h.b16 %v183
  %v816 = vunpack.c.l.b16 %v184
  %v817 = vunpack.c.h.b16 %v184
  %v818 = vunpack.c.l.b16 %v185
  %v819 = vunpack.c.h.b16 %v185
  %v820 = vunpack.c.l.b16 %v186
  %v821 = vunpack.c.h.b16 %v186
  %v822 = vunpack.c.l.b16 %v187
  %v823 = vunpack.c.h.b16 %v187
  %v824 = vunpack.c.l.b16 %v188
  %v825 = vunpack.c.h.b16 %v188
  %v826 = vunpack.c.l.b16 %v189
  %v827 = vunpack.c.h.b16 %v189
  %v828 = vunpack.c.l.b16 %v190
  %v829 = vunpack.c.h.b16 %v190
  %v830 = vunpack.c.l.b16 %v191
  %v831 = vunpack.c.h.b16 %v191
  %v832 = vunpack.c.l.b16 %v192
  %v833 = vunpack.c.h.b16 %v192
  %v834 = vunpack.c.l.b16 %v193
  %v835 = vunpack.c.h.b16 %v193
  %v836 = vunpack.c.l.b16 %v194
  %v837 = vunpack.c.h.b16 %v194
  %v838 = vunpack.c.l.b16 %v195
  %v839 = vunpack.c.h.b16 %v195
  %v840 = vunpack.c.l.b16 %v196
  %v841 = vunpack.c.h.b16 %v196
  %v842 = vunpack.c.l.b16 %v197
  %v843 = vunpack.c.h.b16 %v197
  %v844 = vunpack.c.l.b16 %v198
  %v845 = vunpack.c.h.b16 %v198
  %v846 = vunpack.c.l.b16 %v199
  %v847 = vunpack.c.h.b16 %v199
  %v848 = vunpack.c.l.b16 %v200
  %v849 = vunpack.c.h.b16 %v200
  %v850 = vunpack.c.l.b16 %v201
  %v851 = vunpack.c.h.b16 %v201
  %v852 = vunpack.c.l.b16 %v202
  %v853 = vunpack.c.h.b16 %v202
  %v854 = vunpack.c.l.b16 %v203
  %v855 = vunpack.c.h.b16 %v203
  %v856 = vunpack.c.l.b16 %v204
  %v857 = vunpack.c.h.b16 %v204
  %v858 = vunpack.c.l.b16 %v205
  %v859 = vunpack.c.h.b16 %v205
  %v860 = vunpack.c.l.b16 %v206
  %v861 = vunpack.c.h.b16 %v206
  %v862 = vunpack.c.l.b16 %v207
  %v863 = vunpack.c.h.b16 %v207
  %v864 = vunpack.c.l.b16 %v208
  %v865 = vunpack.c.h.b16 %v208
  %v866 = vunpack.c.l.b16 %v209
  %v867 = vunpack.c.h.b16 %v209
  %v868 = vunpack.c.l.b16 %v210
  %v869 = vunpack.c.h.b16 %v210
  %v870 = vunpack.c.l.b16 %v211
  %v871 = vunpack.c.h.b16 %v211
  %v872 = vunpack.c.l.b16 %v212
  %v873 = vunpack.c.h.b16 %v212
  %v874 = vunpack.c.l.b16 %v213
  %v875 = vunpack.c.h.b16 %v213
  %v876 = vunpack.c.l.b16 %v214
  %v877 = vunpack.c.h.b16 %v214
  %v878 = vunpack.c.l.b16 %v215
  %v879 = vunpack.c.h.b16 %v215
  %v880 = vunpack.c.l.b16 %v216
  %v881 = vunpack.c.h.b16 %v216
  %v882 = vunpack.c.l.b16 %v217
  %v883 = vunpack.c.h.b16 %v217
  %v884 = vunpack.c.l.b16 %v218
  %v885 = vunpack.c.h.b16 %v218
  %v886 = vunpack.c.l.b16 %v219
  %v887 = vunpack.c.h.b16 %v219
  %v888 = vunpack.c.l.b16 %v220
  %v889 = vunpack.c.h.b16 %v220
  %v890 = vunpack.c.l.b16 %v221
  %v891 = vunpack.c.h.b16 %v221
  %v892 = vunpack.c.l.b16 %v222
  %v893 = vunpack.c.h.b16 %v222
  %v894 = vunpack.c.l.b16 %v223
  %v895 = vunpack.c.h.b16 %v223
  %v896 = vunpack.c.l.b16 %v224
  %v897 = vunpack.c.h.b16 %v224
  %v898 = vunpack.c.l.b16 %v225
  %v899 = vunpack.c.h.b16 %v225
  %v900 = vunpack.c.l.b16 %v226
  %v901 = vunpack.c.h.b16 %v226
  %v902 = vunpack.c.l.b16 %v227
  %v903 = vunpack.c.h.b16 %v227
  %v904 = vunpack.c.l.b16 %v228
  %v905 = vunpack.c.h.b16 %v228
  %v906 = vunpack.c.l.b16 %v229
  %v907 = vunpack.c.h.b16 %v229
  %v908 = vunpack.c.l.b16 %v230
  %v909 = vunpack.c.h.b16 %v230
  %v910 = vunpack.c.l.b16 %v231
  %v911 = vunpack.c.h.b16 %v231
  %v912 = vunpack.c.l.b16 %v232
  %v913 = vunpack.c.h.b16 %v232
  %v914 = vunpack.c.l.b16 %v233
  %v915 = vunpack.c.h.b16 %v233
  %v916 = vpack.c.b16 %v500, %v484
  %v917 = vpack.c.b16 %v501, %v485
  %v918 = vpack.c.b16 %v502, %v486
  %v919 = vpack.c.b16 %v503, %v487
  %v920 = vpack.c.b16 %v504, %v488
  %v921 = vpack.c.b16 %v505, %v489
  %v922 = vpack.c.b16 %v506, %v490
  %v923 = vpack.c.b16 %v507, %v491
  %v924 = vpack.c.b16 %v508, %v492
  %v925 = vpack.c.b16 %v509, %v493
  %v926 = vpack.c.b16 %v510, %v494
  %v927 = vpack.c.b16 %v511, %v495
  %v928 = vpack.c.b16 %v512, %v496
  %v929 = vpack.c.b16 %v513, %v497
  %v930 = vpack.c.b16 %v514, %v498
  %v931 = vpack.c.b16 %v515, %v499
  %v932 = vpack.c.b16 %v532, %v516
  %v933 = vpack.c.b16 %v533, %v517
  %v934 = vpack.c.b16 %v534, %v518
  %v935 = vpack.c.b16 %v535, %v519
  %v936 = vpack.c.b16 %v536, %v520
  %v937 = vpack.c.b16 %v537, %v521
  %v938 = vpack.c.b16 %v538, %v522
  %v939 = vpack.c.b16 %v539, %v523
  %v940 = vpack.c.b16 %v540, %v524
  %v941 = vpack.c.b16 %v541, %v525
  %v942 = vpack.c.b16 %v542, %v526
  %v943 = vpack.c.b16 %v543, %v527
  %v944 = vpack.c.b16 %v544, %v528
  %v945 = vpack.c.b16 %v545, %v529
  %v946 = vpack.c.b16 %v546, %v530
  %v947 = vpack.c.b16 %v547, %v531
  %v948 = vpack.c.b16 %v564, %v548
  %v949 = vpack.c.b16 %v565, %v549
  %v950 = vpack.c.b16 %v566, %v550
  %v951 = vpack.c.b16 %v567, %v551
  %v952 = vpack.c.b16 %v568, %v552
  %v953 = vpack.c.b16 %v569, %v553
  %v954 = vpack.c.b16 %v570, %v554
  %v955 = vpack.c.b16 %v571, %v555
  %v956 = vpack.c.b16 %v572, %v556
  %v957 = vpack.c.b16 %v573, %v557
  %v958 = vpack.c.b16 %v574, %v558
  %v959 = vpack.c.b16 %v575, %v559
  %v960 = vpack.c.b16 %v576, %v560
  %v961 = vpack.c.b16 %v577, %v561
  %v962 = vpack.c.b16 %v578, %v562
  %v963 = vpack.c.b16 %v579, %v563
  %v964 = vpack.c.b16 %v596, %v580
  %v965 = vpack.c.b16 %v597, %v581
  %v966 = vpack.c.b16 %v598, %v582
  %v967 = vpack.c.b16 %v599, %v583
  %v968 = vpack.c.b16 %v600, %v584
  %v969 = vpack.c.b16 %v601, %v585
  %v970 = vpack.c.b16 %v602, %v586
  %v971 = vpack.c.b16 %v603, %v587
  %v972 = vpack.c.b16 %v604, %v588
  %v973 = vpack.c.b16 %v605, %v589
  %v974 = vpack.c.b16 %v606, %v590
  %v975 = vpack.c.b16 %v607, %v591
  %v976 = vpack.c.b16 %v608, %v592
  %v977 = vpack.c.b16 %v609, %v593
  %v978 = vpack.c.b16 %v610, %v594
  %v979 = vpack.c.b16 %v611, %v595
  %v980 = vpack.c.b16 %v628, %v612
  %v981 = vpack.c.b16 %v629, %v613
  %v982 = vpack.c.b16 %v630, %v614
  %v983 = vpack.c.b16 %v631, %v615
  %v984 = vpack.c.b16 %v632, %v616
  %v985 = vpack.c.b16 %v633, %v617
  %v986 = vpack.c.b16 %v634, %v618
  %v987 = vpack.c.b16 %v635, %v619
  %v988 = vpack.c.b16 %v636, %v620
  %v989 = vpack.c.b16 %v637, %v621
  %v990 = vpack.c.b16 %v638, %v622
  %v991 = vpack.c.b16 %v639, %v623
  %v992 = vpack.c.b16 %v640, %v624
  %v993 = vpack.c.b16 %v641, %v625
  %v994 = vpack.c.b16 %v642, %v626
  %v995 = vpack.c.b16 %v643, %v627
  %v996 = vpack.c.b16 %v660, %v644
  %v997 = vpack.c.b16 %v661, %v645
  %v998 = vpack.c.b16 %v662, %v646
  %v999 = vpack.c.b16 %v663, %v647
  %v1000 = vpack.c.b16 %v664, %v648
  %v1001 = vpack.c.b16 %v665, %v649
  %v1002 = vpack.c.b16 %v666, %v650
  %v1003 = vpack.c.b16 %v667, %v651
  %v1004 = vpack.c.b16 %v668, %v652
  %v1005 = vpack.c.b16 %v669, %v653
  %v1006 = vpack.c.b16 %v670, %v654
  %v1007 = vpack.c.b16 %v671, %v655
  %v1008 = vpack.c.b16 %v672, %v656
  %v1009 = vpack.c.b16 %v673, %v657
  %v1010 = vpack.c.b16 %v674, %v658
  %v1011 = vpack.c.b16 %v675, %v659
  %v1012 = vpack.c.b16 %v692, %v676
  %v1013 = vpack.c.b16 %v693, %v677
  %v1014 = vpack.c.b16 %v694, %v678
  %v1015 = vpack.c.b16 %v695, %v679
  %v1016 = vpack.c.b16 %v696, %v680
  %v1017 = vpack.c.b16 %v697, %v681
  %v1018 = vpack.c.b16 %v698, %v682
  %v1019 = vpack.c.b16 %v699, %v683
  %v1020 = vpack.c.b16 %v700, %v684
  %v1021 = vpack.c.b16 %v701, %v685
  %v1022 = vpack.c.b16 %v702, %v686
  %v1023 = vpack.c.b16 %v703, %v687
  %v1024 = vpack.c.b16 %v704, %v688
  %v1025 = vpack.c.b16 %v705, %v689
  %v1026 = vpack.c.b16 %v706, %v690
  %v1027 = vpack.c.b16 %v707, %v691
  %v1028 = vpack.c.b16 %v724, %v708
  %v1029 = vpack.c.b16 %v725, %v709
  %v1030 = vpack.c.b16 %v726, %v710
  %v1031 = vpack.c.b16 %v727, %v711
  %v1032 = vpack.c.b16 %v728, %v712
  %v1033 = vpack.c.b16 %v729, %v713
  %v1034 = vpack.c.b16 %v730, %v714
  %v1035 = vpack.c.b16 %v731, %v715
  %v1036 = vpack.c.b16 %v732, %v716
  %v1037 = vpack.c.b16 %v733, %v717
  %v1038 = vpack.c.b16 %v734, %v718
  %v1039 = vpack.c.b16 %v735, %v719
  %v1040 = vpack.c.b16 %v736, %v720
  %v1041 = vpack.c.b16 %v737, %v721
  %v1042 = vpack.c.b16 %v738, %v722
  %v1043 = vpack.c.b16 %v739, %v723
  %v1044 = vpack.c.b16 %v756, %v740
  %v1045 = vpack.c.b16 %v757, %v741
  %v1046 = vpack.c.b16 %v758, %v742
  %v1047 = vpack.c.b16 %v759, %v743
  %v1048 = vpack.c.b16 %v760, %v744
  %v1049 = vpack.c.b16 %v761, %v745
  %v1050 = vpack.c.b16 %v762, %v746
  %v1051 = vpack.c.b16 %v763, %v747
  %v1052 = vpack.c.b16 %v764, %v748
  %v1053 = vpack.c.b16 %v765, %v749
  %v1054 = vpack.c.b16 %v766, %v750
  %v1055 = vpack.c.b16 %v767, %v751
  %v1056 = vpack.c.b16 %v768, %v752
  %v1057 = vpack.c.b16 %v769, %v753
  %v1058 = vpack.c.b16 %v770, %v754
  %v1059 = vpack.c.b16 %v771, %v755
  %v1060 = vpack.c.b16 %v788, %v772
  %v1061 = vpack.c.b16 %v789, %v773
  %v1062 = vpack.c.b16 %v790, %v774
  %v1063 = vpack.c.b16 %v791, %v775
  %v1064 = vpack.c.b16 %v792, %v776
  %v1065 = vpack.c.b16 %v793, %v777
  %v1066 = vpack.c.b16 %v794, %v778
  %v1067 = vpack.c.b16 %v795, %v779
  %v1068 = vpack.c.b16 %v796, %v780
  %v1069 = vpack.c.b16 %v797, %v781
  %v1070 = vpack.c.b16 %v798, %v782
  %v1071 = vpack.c.b16 %v799, %v783
  %v1072 = vpack.c.b16 %v800, %v784
  %v1073 = vpack.c.b16 %v801, %v785
  %v1074 = vpack.c.b16 %v802, %v786
  %v1075 = vpack.c.b16 %v803, %v787
  %v1076 = vpack.c.b16 %v820, %v804
  %v1077 = vpack.c.b16 %v821, %v805
  %v1078 = vpack.c.b16 %v822, %v806
  %v1079 = vpack.c.b16 %v823, %v807
  %v1080 = vpack.c.b16 %v824, %v808
  %v1081 = vpack.c.b16 %v825, %v809
  %v1082 = vpack.c.b16 %v826, %v810
  %v1083 = vpack.c.b16 %v827, %v811
  %v1084 = vpack.c.b16 %v828, %v812
  %v1085 = vpack.c.b16 %v829, %v813
  %v1086 = vpack.c.b16 %v830, %v814
  %v1087 = vpack.c.b16 %v831, %v815
  %v1088 = vpack.c.b16 %v832, %v816
  %v1089 = vpack.c.b16 %v833, %v817
  %v1090 = vpack.c.b16 %v834, %v818
  %v1091 = vpack.c.b16 %v835, %v819
  %v1092 = vpack.c.b16 %v852, %v836
  %v1093 = vpack.c.b16 %v853, %v837
  %v1094 = vpack.c.b16 %v854, %v838
  %v1095 = vpack.c.b16 %v855, %v839
  %v1096 = vpack.c.b16 %v856, %v840
  %v1097 = vpack.c.b16 %v857, %v841
  %v1098 = vpack.c.b16 %v858, %v842
  %v1099 = vpack.c.b16 %v859, %v843
  %v1100 = vpack.c.b16 %v860, %v844
  %v1101 = vpack.c.b16 %v861, %v845
  %v1102 = vpack.c.b16 %v862, %v846
  %v1103 = vpack.c.b16 %v863, %v847
  %v1104 = vpack.c.b16 %v864, %v848
  %v1105 = vpack.c.b16 %v865, %v849
  %v1106 = vpack.c.b16 %v866, %v850
  %v1107 = vpack.c.b16 %v867, %v851
  %v1108 = vpack.c.b16 %v884, %v868
  %v1109 = vpack.c.b16 %v885, %v869
  %v1110 = vpack.c.b16 %v886, %v870
  %v1111 = vpack.c.b16 %v887, %v871
  %v1112 = vpack.c.b16 %v888, %v872
  %v1113 = vpack.c.b16 %v889, %v873
  %v1114 = vpack.c.b16 %v890, %v874
  %v1115 = vpack.c.b16 %v891, %v875
  %v1116 = vpack.c.b16 %v892, %v876
  %v1117 = vpack.c.b16 %v893, %v877
  %v1118 = vpack.c.b16 %v894, %v878
  %v1119 = vpack.c.b16 %v895, %v879
  %v1120 = vpack.c.b16 %v896, %v880
  %v1121 = vpack.c.b16 %v897, %v881
  %v1122 = vpack.c.b16 %v898, %v882
  %v1123 = vpack.c.b16 %v899, %v883
  %v1124 = vpack.c.b16 %v900, %v900
  %v1125 = vpack.c.b16 %v901, %v901
  %v1126 = vpack.c.b16 %v902, %v902
  %v1127 = vpack.c.b16 %v903, %v903
  %v1128 = vpack.c.b16 %v904, %v904
  %v1129 = vpack.c.b16 %v905, %v905
  %v1130 = vpack.c.b16 %v906, %v906
  %v1131 = vpack.c.b16 %v907, %v907
  %v1132 = vpack.c.b16 %v908, %v908
  %v1133 = vpack.c.b16 %v909, %v909
  %v1134 = vpack.c.b16 %v910, %v910
  %v1135 = vpack.c.b16 %v911, %v911
  %v1136 = vpack.c.b16 %v912, %v912
  %v1137 = vpack.c.b16 %v913, %v913
  %v1138 = vpack.c.b16 %v914, %v914
  %v1139 = vpack.c.b16 %v915, %v915
  %vm1348 = vcmask 719872
  %v1350 = vsel %vm1348, %v266, 0
  %vm1352 = vcmask 1043456
  %v1354 = vsel %vm1352, %v1124, 0
  %v1357 = vsel %vm1352, %v1125, 0
  %v1360 = vsel %vm1352, %v1126, 0
  %v1363 = vsel %vm1352, %v1127, 0
  %v1366 = vsel %vm1352, %v1128, 0
  %v1369 = vsel %vm1352, %v1129, 0
  %v1372 = vsel %vm1352, %v1130, 0
  %v1375 = vsel %vm1352, %v1131, 0
  %v1378 = vsel %vm1352, %v1132, 0
  %v1381 = vsel %vm1352, %v1133, 0
  %v1384 = vsel %vm1352, %v1134, 0
  %v1387 = vsel %vm1352, %v1135, 0
  %v1390 = vsel %vm1352, %v1136, 0
  %v1393 = vsel %vm1352, %v1137, 0
  %v1396 = vsel %vm1352, %v1138, 0
  %v1399 = vsel %vm1352, %v1139, 0
  %1401 = vmatprep.subr.bf16.mxu0 %v917
  %1402 = vmatpush1.bf16.msra.mxu0 %v916
  %1403 = vmatprep.subr.bf16.mxu0 %v933
  %1404 = vmatpush1.bf16.msra.mxu0 %v932
  %1405 = vmatprep.subr.bf16.mxu0 %v949
  %1406 = vmatpush1.bf16.msra.mxu0 %v948
  %1407 = vmatprep.subr.bf16.mxu0 %v965
  %1408 = vmatpush1.bf16.msra.mxu0 %v964
  %1409 = vmatprep.subr.bf16.mxu0 %v981
  %1410 = vmatpush1.bf16.msra.mxu0 %v980
  %1411 = vmatprep.subr.bf16.mxu0 %v997
  %1412 = vmatpush1.bf16.msra.mxu0 %v996
  %1413 = vmatprep.subr.bf16.mxu0 %v1013
  %1414 = vmatpush1.bf16.msra.mxu0 %v1012
  %1415 = vmatprep.subr.bf16.mxu0 %v1029
  %1416 = vmatpush1.bf16.msra.mxu0 %v1028
  %1417 = vmatprep.subr.bf16.mxu0 %v1045
  %1418 = vmatpush1.bf16.msra.mxu0 %v1044
  %1419 = vmatprep.subr.bf16.mxu0 %v1061
  %1420 = vmatpush1.bf16.msra.mxu0 %v1060
  %1421 = vmatprep.subr.bf16.mxu0 %v1077
  %1422 = vmatpush1.bf16.msra.mxu0 %v1076
  %1423 = vmatprep.subr.bf16.mxu0 %v1093
  %1424 = vmatpush1.bf16.msra.mxu0 %v1092
  %1425 = vmatprep.subr.bf16.mxu0 %v1109
  %1426 = vmatpush1.bf16.msra.mxu0 %v1108
  %1427 = vmatprep.subr.bf16.mxu0 %v1357
  %1428 = vmatpush1.bf16.msra.mxu0 %v1354
  %1429 = vmatprep.subr.bf16.mxu0 0
  %1430 = vmatpush1.bf16.msra.mxu0 0
  %1431 = vmatprep.subr.bf16.mxu0 0
  %1432 = vmatpush1.bf16.msra.mxu0 0
  %1433 = vmatprep.mubr.bf16.mxu0 %v1350
  %1434 = vmatmul.mubr.bf16.gmra.mrb[0].mxu0 %v259
  %v1435 = vpop.f32.mrb[0].mxu0
  %v1436 = vadd.f32 %v243, %v1435
  %v1437 = vpop.f32.mrb[0].mxu0
  %v1438 = vadd.f32 %v243, %v1437
  %v1439 = vpop.f32.mrb[0].mxu0
  %v1440 = vpop.f32.mrb[0].mxu0
  %1441 = vdwg.mxu0
  %1442 = vmatprep.subr.bf16.mxu0 %v919
  %1443 = vmatpush1.bf16.msra.mxu0 %v918
  %1444 = vmatprep.subr.bf16.mxu0 %v935
  %1445 = vmatpush1.bf16.msra.mxu0 %v934
  %1446 = vmatprep.subr.bf16.mxu0 %v951
  %1447 = vmatpush1.bf16.msra.mxu0 %v950
  %1448 = vmatprep.subr.bf16.mxu0 %v967
  %1449 = vmatpush1.bf16.msra.mxu0 %v966
  %1450 = vmatprep.subr.bf16.mxu0 %v983
  %1451 = vmatpush1.bf16.msra.mxu0 %v982
  %1452 = vmatprep.subr.bf16.mxu0 %v999
  %1453 = vmatpush1.bf16.msra.mxu0 %v998
  %1454 = vmatprep.subr.bf16.mxu0 %v1015
  %1455 = vmatpush1.bf16.msra.mxu0 %v1014
  %1456 = vmatprep.subr.bf16.mxu0 %v1031
  %1457 = vmatpush1.bf16.msra.mxu0 %v1030
  %1458 = vmatprep.subr.bf16.mxu0 %v1047
  %1459 = vmatpush1.bf16.msra.mxu0 %v1046
  %1460 = vmatprep.subr.bf16.mxu0 %v1063
  %1461 = vmatpush1.bf16.msra.mxu0 %v1062
  %1462 = vmatprep.subr.bf16.mxu0 %v1079
  %1463 = vmatpush1.bf16.msra.mxu0 %v1078
  %1464 = vmatprep.subr.bf16.mxu0 %v1095
  %1465 = vmatpush1.bf16.msra.mxu0 %v1094
  %1466 = vmatprep.subr.bf16.mxu0 %v1111
  %1467 = vmatpush1.bf16.msra.mxu0 %v1110
  %1468 = vmatprep.subr.bf16.mxu0 %v1363
  %1469 = vmatpush1.bf16.msra.mxu0 %v1360
  %1470 = vmatprep.subr.bf16.mxu0 0
  %1471 = vmatpush1.bf16.msra.mxu0 0
  %1472 = vmatprep.subr.bf16.mxu0 0
  %1473 = vmatpush1.bf16.msra.mxu0 0
  %1474 = vmatprep.mubr.bf16.mxu0 %v1350
  %1475 = vmatmul.mubr.bf16.gmra.mrb[0].mxu0 %v259
  %v1476 = vpop.f32.mrb[0].mxu0
  %v1477 = vadd.f32 %v243, %v1476
  %v1478 = vpop.f32.mrb[0].mxu0
  %v1479 = vadd.f32 %v243, %v1478
  %v1480 = vpop.f32.mrb[0].mxu0
  %v1481 = vpop.f32.mrb[0].mxu0
  %1482 = vdwg.mxu0
  %1483 = vmatprep.subr.bf16.mxu0 %v921
  %1484 = vmatpush1.bf16.msra.mxu0 %v920
  %1485 = vmatprep.subr.bf16.mxu0 %v937
  %1486 = vmatpush1.bf16.msra.mxu0 %v936
  %1487 = vmatprep.subr.bf16.mxu0 %v953
  %1488 = vmatpush1.bf16.msra.mxu0 %v952
  %1489 = vmatprep.subr.bf16.mxu0 %v969
  %1490 = vmatpush1.bf16.msra.mxu0 %v968
  %1491 = vmatprep.subr.bf16.mxu0 %v985
  %1492 = vmatpush1.bf16.msra.mxu0 %v984
  %1493 = vmatprep.subr.bf16.mxu0 %v1001
  %1494 = vmatpush1.bf16.msra.mxu0 %v1000
  %1495 = vmatprep.subr.bf16.mxu0 %v1017
  %1496 = vmatpush1.bf16.msra.mxu0 %v1016
  %1497 = vmatprep.subr.bf16.mxu0 %v1033
  %1498 = vmatpush1.bf16.msra.mxu0 %v1032
  %1499 = vmatprep.subr.bf16.mxu0 %v1049
  %1500 = vmatpush1.bf16.msra.mxu0 %v1048
  %1501 = vmatprep.subr.bf16.mxu0 %v1065
  %1502 = vmatpush1.bf16.msra.mxu0 %v1064
  %1503 = vmatprep.subr.bf16.mxu0 %v1081
  %1504 = vmatpush1.bf16.msra.mxu0 %v1080
  %1505 = vmatprep.subr.bf16.mxu0 %v1097
  %1506 = vmatpush1.bf16.msra.mxu0 %v1096
  %1507 = vmatprep.subr.bf16.mxu0 %v1113
  %1508 = vmatpush1.bf16.msra.mxu0 %v1112
  %1509 = vmatprep.subr.bf16.mxu0 %v1369
  %1510 = vmatpush1.bf16.msra.mxu0 %v1366
  %1511 = vmatprep.subr.bf16.mxu0 0
  %1512 = vmatpush1.bf16.msra.mxu0 0
  %1513 = vmatprep.subr.bf16.mxu0 0
  %1514 = vmatpush1.bf16.msra.mxu0 0
  %1515 = vmatprep.mubr.bf16.mxu0 %v1350
  %1516 = vmatmul.mubr.bf16.gmra.mrb[0].mxu0 %v259
  %v1517 = vpop.f32.mrb[0].mxu0
  %v1518 = vadd.f32 %v243, %v1517
  %v1519 = vpop.f32.mrb[0].mxu0
  %v1520 = vadd.f32 %v243, %v1519
  %v1521 = vpop.f32.mrb[0].mxu0
  %v1522 = vpop.f32.mrb[0].mxu0
  %1523 = vdwg.mxu0
  %1524 = vmatprep.subr.bf16.mxu0 %v923
  %1525 = vmatpush1.bf16.msra.mxu0 %v922
  %1526 = vmatprep.subr.bf16.mxu0 %v939
  %1527 = vmatpush1.bf16.msra.mxu0 %v938
  %1528 = vmatprep.subr.bf16.mxu0 %v955
  %1529 = vmatpush1.bf16.msra.mxu0 %v954
  %1530 = vmatprep.subr.bf16.mxu0 %v971
  %1531 = vmatpush1.bf16.msra.mxu0 %v970
  %1532 = vmatprep.subr.bf16.mxu0 %v987
  %1533 = vmatpush1.bf16.msra.mxu0 %v986
  %1534 = vmatprep.subr.bf16.mxu0 %v1003
  %1535 = vmatpush1.bf16.msra.mxu0 %v1002
  %1536 = vmatprep.subr.bf16.mxu0 %v1019
  %1537 = vmatpush1.bf16.msra.mxu0 %v1018
  %1538 = vmatprep.subr.bf16.mxu0 %v1035
  %1539 = vmatpush1.bf16.msra.mxu0 %v1034
  %1540 = vmatprep.subr.bf16.mxu0 %v1051
  %1541 = vmatpush1.bf16.msra.mxu0 %v1050
  %1542 = vmatprep.subr.bf16.mxu0 %v1067
  %1543 = vmatpush1.bf16.msra.mxu0 %v1066
  %1544 = vmatprep.subr.bf16.mxu0 %v1083
  %1545 = vmatpush1.bf16.msra.mxu0 %v1082
  %1546 = vmatprep.subr.bf16.mxu0 %v1099
  %1547 = vmatpush1.bf16.msra.mxu0 %v1098
  %1548 = vmatprep.subr.bf16.mxu0 %v1115
  %1549 = vmatpush1.bf16.msra.mxu0 %v1114
  %1550 = vmatprep.subr.bf16.mxu0 %v1375
  %1551 = vmatpush1.bf16.msra.mxu0 %v1372
  %1552 = vmatprep.subr.bf16.mxu0 0
  %1553 = vmatpush1.bf16.msra.mxu0 0
  %1554 = vmatprep.subr.bf16.mxu0 0
  %1555 = vmatpush1.bf16.msra.mxu0 0
  %1556 = vmatprep.mubr.bf16.mxu0 %v1350
  %1557 = vmatmul.mubr.bf16.gmra.mrb[0].mxu0 %v259
  %v1558 = vpop.f32.mrb[0].mxu0
  %v1559 = vadd.f32 %v243, %v1558
  %v1560 = vpop.f32.mrb[0].mxu0
  %v1561 = vadd.f32 %v243, %v1560
  %v1562 = vpop.f32.mrb[0].mxu0
  %v1563 = vpop.f32.mrb[0].mxu0
  %1564 = vdwg.mxu0
  %1565 = vmatprep.subr.bf16.mxu0 %v925
  %1566 = vmatpush1.bf16.msra.mxu0 %v924
  %1567 = vmatprep.subr.bf16.mxu0 %v941
  %1568 = vmatpush1.bf16.msra.mxu0 %v940
  %1569 = vmatprep.subr.bf16.mxu0 %v957
  %1570 = vmatpush1.bf16.msra.mxu0 %v956
  %1571 = vmatprep.subr.bf16.mxu0 %v973
  %1572 = vmatpush1.bf16.msra.mxu0 %v972
  %1573 = vmatprep.subr.bf16.mxu0 %v989
  %1574 = vmatpush1.bf16.msra.mxu0 %v988
  %1575 = vmatprep.subr.bf16.mxu0 %v1005
  %1576 = vmatpush1.bf16.msra.mxu0 %v1004
  %1577 = vmatprep.subr.bf16.mxu0 %v1021
  %1578 = vmatpush1.bf16.msra.mxu0 %v1020
  %1579 = vmatprep.subr.bf16.mxu0 %v1037
  %1580 = vmatpush1.bf16.msra.mxu0 %v1036
  %1581 = vmatprep.subr.bf16.mxu0 %v1053
  %1582 = vmatpush1.bf16.msra.mxu0 %v1052
  %1583 = vmatprep.subr.bf16.mxu0 %v1069
  %1584 = vmatpush1.bf16.msra.mxu0 %v1068
  %1585 = vmatprep.subr.bf16.mxu0 %v1085
  %1586 = vmatpush1.bf16.msra.mxu0 %v1084
  %1587 = vmatprep.subr.bf16.mxu0 %v1101
  %1588 = vmatpush1.bf16.msra.mxu0 %v1100
  %1589 = vmatprep.subr.bf16.mxu0 %v1117
  %1590 = vmatpush1.bf16.msra.mxu0 %v1116
  %1591 = vmatprep.subr.bf16.mxu0 %v1381
  %1592 = vmatpush1.bf16.msra.mxu0 %v1378
  %1593 = vmatprep.subr.bf16.mxu0 0
  %1594 = vmatpush1.bf16.msra.mxu0 0
  %1595 = vmatprep.subr.bf16.mxu0 0
  %1596 = vmatpush1.bf16.msra.mxu0 0
  %1597 = vmatprep.mubr.bf16.mxu0 %v1350
  %1598 = vmatmul.mubr.bf16.gmra.mrb[0].mxu0 %v259
  %v1599 = vpop.f32.mrb[0].mxu0
  %v1600 = vadd.f32 %v243, %v1599
  %v1601 = vpop.f32.mrb[0].mxu0
  %v1602 = vadd.f32 %v243, %v1601
  %v1603 = vpop.f32.mrb[0].mxu0
  %v1604 = vpop.f32.mrb[0].mxu0
  %1605 = vdwg.mxu0
  %1606 = vmatprep.subr.bf16.mxu0 %v927
  %1607 = vmatpush1.bf16.msra.mxu0 %v926
  %1608 = vmatprep.subr.bf16.mxu0 %v943
  %1609 = vmatpush1.bf16.msra.mxu0 %v942
  %1610 = vmatprep.subr.bf16.mxu0 %v959
  %1611 = vmatpush1.bf16.msra.mxu0 %v958
  %1612 = vmatprep.subr.bf16.mxu0 %v975
  %1613 = vmatpush1.bf16.msra.mxu0 %v974
  %1614 = vmatprep.subr.bf16.mxu0 %v991
  %1615 = vmatpush1.bf16.msra.mxu0 %v990
  %1616 = vmatprep.subr.bf16.mxu0 %v1007
  %1617 = vmatpush1.bf16.msra.mxu0 %v1006
  %1618 = vmatprep.subr.bf16.mxu0 %v1023
  %1619 = vmatpush1.bf16.msra.mxu0 %v1022
  %1620 = vmatprep.subr.bf16.mxu0 %v1039
  %1621 = vmatpush1.bf16.msra.mxu0 %v1038
  %1622 = vmatprep.subr.bf16.mxu0 %v1055
  %1623 = vmatpush1.bf16.msra.mxu0 %v1054
  %1624 = vmatprep.subr.bf16.mxu0 %v1071
  %1625 = vmatpush1.bf16.msra.mxu0 %v1070
  %1626 = vmatprep.subr.bf16.mxu0 %v1087
  %1627 = vmatpush1.bf16.msra.mxu0 %v1086
  %1628 = vmatprep.subr.bf16.mxu0 %v1103
  %1629 = vmatpush1.bf16.msra.mxu0 %v1102
  %1630 = vmatprep.subr.bf16.mxu0 %v1119
  %1631 = vmatpush1.bf16.msra.mxu0 %v1118
  %1632 = vmatprep.subr.bf16.mxu0 %v1387
  %1633 = vmatpush1.bf16.msra.mxu0 %v1384
  %1634 = vmatprep.subr.bf16.mxu0 0
  %1635 = vmatpush1.bf16.msra.mxu0 0
  %1636 = vmatprep.subr.bf16.mxu0 0
  %1637 = vmatpush1.bf16.msra.mxu0 0
  %1638 = vmatprep.mubr.bf16.mxu0 %v1350
  %1639 = vmatmul.mubr.bf16.gmra.mrb[0].mxu0 %v259
  %v1640 = vpop.f32.mrb[0].mxu0
  %v1641 = vadd.f32 %v243, %v1640
  %v1642 = vpop.f32.mrb[0].mxu0
  %v1643 = vadd.f32 %v243, %v1642
  %v1644 = vpop.f32.mrb[0].mxu0
  %v1645 = vpop.f32.mrb[0].mxu0
  %1646 = vdwg.mxu0
  %1647 = vmatprep.subr.bf16.mxu0 %v929
  %1648 = vmatpush1.bf16.msra.mxu0 %v928
  %1649 = vmatprep.subr.bf16.mxu0 %v945
  %1650 = vmatpush1.bf16.msra.mxu0 %v944
  %1651 = vmatprep.subr.bf16.mxu0 %v961
  %1652 = vmatpush1.bf16.msra.mxu0 %v960
  %1653 = vmatprep.subr.bf16.mxu0 %v977
  %1654 = vmatpush1.bf16.msra.mxu0 %v976
  %1655 = vmatprep.subr.bf16.mxu0 %v993
  %1656 = vmatpush1.bf16.msra.mxu0 %v992
  %1657 = vmatprep.subr.bf16.mxu0 %v1009
  %1658 = vmatpush1.bf16.msra.mxu0 %v1008
  %1659 = vmatprep.subr.bf16.mxu0 %v1025
  %1660 = vmatpush1.bf16.msra.mxu0 %v1024
  %1661 = vmatprep.subr.bf16.mxu0 %v1041
  %1662 = vmatpush1.bf16.msra.mxu0 %v1040
  %1663 = vmatprep.subr.bf16.mxu0 %v1057
  %1664 = vmatpush1.bf16.msra.mxu0 %v1056
  %1665 = vmatprep.subr.bf16.mxu0 %v1073
  %1666 = vmatpush1.bf16.msra.mxu0 %v1072
  %1667 = vmatprep.subr.bf16.mxu0 %v1089
  %1668 = vmatpush1.bf16.msra.mxu0 %v1088
  %1669 = vmatprep.subr.bf16.mxu0 %v1105
  %1670 = vmatpush1.bf16.msra.mxu0 %v1104
  %1671 = vmatprep.subr.bf16.mxu0 %v1121
  %1672 = vmatpush1.bf16.msra.mxu0 %v1120
  %1673 = vmatprep.subr.bf16.mxu0 %v1393
  %1674 = vmatpush1.bf16.msra.mxu0 %v1390
  %1675 = vmatprep.subr.bf16.mxu0 0
  %1676 = vmatpush1.bf16.msra.mxu0 0
  %1677 = vmatprep.subr.bf16.mxu0 0
  %1678 = vmatpush1.bf16.msra.mxu0 0
  %1679 = vmatprep.mubr.bf16.mxu0 %v1350
  %1680 = vmatmul.mubr.bf16.gmra.mrb[0].mxu0 %v259
  %v1681 = vpop.f32.mrb[0].mxu0
  %v1682 = vadd.f32 %v243, %v1681
  %v1683 = vpop.f32.mrb[0].mxu0
  %v1684 = vadd.f32 %v243, %v1683
  %v1685 = vpop.f32.mrb[0].mxu0
  %v1686 = vpop.f32.mrb[0].mxu0
  %1687 = vdwg.mxu0
  %1688 = vmatprep.subr.bf16.mxu0 %v931
  %1689 = vmatpush1.bf16.msra.mxu0 %v930
  %1690 = vmatprep.subr.bf16.mxu0 %v947
  %1691 = vmatpush1.bf16.msra.mxu0 %v946
  %1692 = vmatprep.subr.bf16.mxu0 %v963
  %1693 = vmatpush1.bf16.msra.mxu0 %v962
  %1694 = vmatprep.subr.bf16.mxu0 %v979
  %1695 = vmatpush1.bf16.msra.mxu0 %v978
  %1696 = vmatprep.subr.bf16.mxu0 %v995
  %1697 = vmatpush1.bf16.msra.mxu0 %v994
  %1698 = vmatprep.subr.bf16.mxu0 %v1011
  %1699 = vmatpush1.bf16.msra.mxu0 %v1010
  %1700 = vmatprep.subr.bf16.mxu0 %v1027
  %1701 = vmatpush1.bf16.msra.mxu0 %v1026
  %1702 = vmatprep.subr.bf16.mxu0 %v1043
  %1703 = vmatpush1.bf16.msra.mxu0 %v1042
  %1704 = vmatprep.subr.bf16.mxu0 %v1059
  %1705 = vmatpush1.bf16.msra.mxu0 %v1058
  %1706 = vmatprep.subr.bf16.mxu0 %v1075
  %1707 = vmatpush1.bf16.msra.mxu0 %v1074
  %1708 = vmatprep.subr.bf16.mxu0 %v1091
  %1709 = vmatpush1.bf16.msra.mxu0 %v1090
  %1710 = vmatprep.subr.bf16.mxu0 %v1107
  %1711 = vmatpush1.bf16.msra.mxu0 %v1106
  %1712 = vmatprep.subr.bf16.mxu0 %v1123
  %1713 = vmatpush1.bf16.msra.mxu0 %v1122
  %1714 = vmatprep.subr.bf16.mxu0 %v1399
  %1715 = vmatpush1.bf16.msra.mxu0 %v1396
  %1716 = vmatprep.subr.bf16.mxu0 0
  %1717 = vmatpush1.bf16.msra.mxu0 0
  %1718 = vmatprep.subr.bf16.mxu0 0
  %1719 = vmatpush1.bf16.msra.mxu0 0
  %1720 = vmatprep.mubr.bf16.mxu0 %v1350
  %1721 = vmatmul.mubr.bf16.gmra.mrb[0].mxu0 %v259
  %v1722 = vpop.f32.mrb[0].mxu0
  %v1723 = vadd.f32 %v243, %v1722
  %v1724 = vpop.f32.mrb[0].mxu0
  %v1725 = vadd.f32 %v243, %v1724
  %v1726 = vpop.f32.mrb[0].mxu0
  %v1727 = vpop.f32.mrb[0].mxu0
  %1728 = vdwg.mxu0
  %v1745 = vcombine.low %v1436, %v1438
  %v1746 = vcombine.low %v1477, %v1479
  %v1747 = vcombine.low %v1518, %v1520
  %v1748 = vcombine.low %v1559, %v1561
  %v1750 = vunpack.c.l.s4 1966171168
  %v1751 = vunpack.c.0.s8 %v1750
  %v1752 = vlaneseq
  %v1753 = vshrl.u32 %v1752, 7
  %v1754 = vsub.s32 %v1751, %v1753
  %v1755 = vrot.slane %v1745, %v1754
  %v1757 = vunpack.c.l.s4 1966171168
  %v1758 = vunpack.c.0.s8 %v1757
  %v1759 = vlaneseq
  %v1760 = vshrl.u32 %v1759, 7
  %v1761 = vsub.s32 %v1758, %v1760
  %v1762 = vrot.slane %v1746, %v1761
  %v1764 = vunpack.c.l.s4 1966171168
  %v1765 = vunpack.c.0.s8 %v1764
  %v1766 = vlaneseq
  %v1767 = vshrl.u32 %v1766, 7
  %v1768 = vsub.s32 %v1765, %v1767
  %v1769 = vrot.slane %v1747, %v1768
  %v1771 = vunpack.c.l.s4 1966171168
  %v1772 = vunpack.c.0.s8 %v1771
  %v1773 = vlaneseq
  %v1774 = vshrl.u32 %v1773, 7
  %v1775 = vsub.s32 %v1772, %v1774
  %v1776 = vrot.slane %v1748, %v1775
  %v1777 = vcombine.low %v1755, %v1762
  %v1778 = vcombine.low %v1769, %v1776
  %v1780 = vunpack.c.l.s4 1966171168
  %v1781 = vunpack.c.0.s8 %v1780
  %v1782 = vlaneseq
  %v1783 = vshrl.u32 %v1782, 7
  %v1784 = vsub.s32 %v1781, %v1783
  %v1785 = vrot.slane %v1777, %v1784
  %v1787 = vunpack.c.l.s4 1966171168
  %v1788 = vunpack.c.0.s8 %v1787
  %v1789 = vlaneseq
  %v1790 = vshrl.u32 %v1789, 7
  %v1791 = vsub.s32 %v1788, %v1790
  %v1792 = vrot.slane %v1778, %v1791
  %v1793 = vcombine.low %v1785, %v1792
  %v1794 = vcombine.low %v1600, %v1602
  %v1795 = vcombine.low %v1641, %v1643
  %v1796 = vcombine.low %v1682, %v1684
  %v1797 = vcombine.low %v1723, %v1725
  %v1799 = vunpack.c.l.s4 1966171168
  %v1800 = vunpack.c.0.s8 %v1799
  %v1801 = vlaneseq
  %v1802 = vshrl.u32 %v1801, 7
  %v1803 = vsub.s32 %v1800, %v1802
  %v1804 = vrot.slane %v1794, %v1803
  %v1806 = vunpack.c.l.s4 1966171168
  %v1807 = vunpack.c.0.s8 %v1806
  %v1808 = vlaneseq
  %v1809 = vshrl.u32 %v1808, 7
  %v1810 = vsub.s32 %v1807, %v1809
  %v1811 = vrot.slane %v1795, %v1810
  %v1813 = vunpack.c.l.s4 1966171168
  %v1814 = vunpack.c.0.s8 %v1813
  %v1815 = vlaneseq
  %v1816 = vshrl.u32 %v1815, 7
  %v1817 = vsub.s32 %v1814, %v1816
  %v1818 = vrot.slane %v1796, %v1817
  %v1820 = vunpack.c.l.s4 1966171168
  %v1821 = vunpack.c.0.s8 %v1820
  %v1822 = vlaneseq
  %v1823 = vshrl.u32 %v1822, 7
  %v1824 = vsub.s32 %v1821, %v1823
  %v1825 = vrot.slane %v1797, %v1824
  %v1826 = vcombine.low %v1804, %v1811
  %v1827 = vcombine.low %v1818, %v1825
  %v1829 = vunpack.c.l.s4 1966171168
  %v1830 = vunpack.c.0.s8 %v1829
  %v1831 = vlaneseq
  %v1832 = vshrl.u32 %v1831, 7
  %v1833 = vsub.s32 %v1830, %v1832
  %v1834 = vrot.slane %v1826, %v1833
  %v1836 = vunpack.c.l.s4 1966171168
  %v1837 = vunpack.c.0.s8 %v1836
  %v1838 = vlaneseq
  %v1839 = vshrl.u32 %v1838, 7
  %v1840 = vsub.s32 %v1837, %v1839
  %v1841 = vrot.slane %v1827, %v1840
  %v1842 = vcombine.low %v1834, %v1841
  %1845 = vst [vmem:[%s3] sm:$0xff] %v1793
  %1846 = vst [vmem:[%s3 + $0x8] sm:$0xff] %v1842
  // Predicated region
  $region14: #{cost_reg_forward.21} parent=0 // pred_check
    _
  $region15: #{cost_reg_forward.21} parent=0 // pred_check_branch
    %1848 = sbr.rel (0) target = $region17
  $region16: #{cost_reg_forward.21} parent=0 // pred_region
    _
  $region17: #{cost_reg_forward.21} parent=0 // pred_fallthru
    _
  // Predicated region
  $region18: #{cost_reg_forward.21} parent=0 // pred_check
    _
  $region19: #{cost_reg_forward.21} parent=0 // pred_check_branch
    %1850 = sbr.rel (0) target = $region21
  $region20: #{cost_reg_forward.21} parent=0 // pred_region
    _
  $region21: #{cost_reg_forward.21} parent=0 // pred_fallthru
    _

</llo_original>
